<compile_context>
chip_gen: v7x
topology: tpu7x:2x2x1
jax: 0.10.0
libtpu: 0.0.40
codegen_flags: <defaults>
</compile_context>

<pallas_src>
import jax
import jax.numpy as jnp
from jax.experimental import pallas as pl
from jax.experimental.pallas import tpu as pltpu


_LANE = 128
_SLAB_COLS = 1024                  # 8 sublanes * 128 lanes -> wide unmasked vst
_SMALL_FALLBACK_ELEMS = 1 << 17    # below this, plain XLA beats a pallas_call
_KERNEL_DTYPES = frozenset(
    jnp.dtype(d) for d in (jnp.float32, jnp.bfloat16, jnp.float16))


def _round_up(x: int, m: int) -> int:
    return ((x + m - 1) // m) * m


def _sublane_multiple(dtype) -> int:
    # Minimum second-to-last block dim for packed sub-32-bit dtypes.
    itemsize = jnp.dtype(dtype).itemsize
    return {4: 8, 2: 16, 1: 32}.get(itemsize, 8)


def _tpu_generation():
    try:
        kind = jax.devices()[0].device_kind.lower()
    except Exception:
        return None
    if "v7" in kind or "tpu7" in kind or "7x" in kind:
        return "v7"
    if "v6" in kind:
        return "v6"
    if "v5" in kind:
        return "v5"
    return None


def _block_bytes_budget(gen) -> int:
    # v7x: 3.2 TB/s HBM makes the ~0.35us/grid-step overhead relatively large,
    # so use ~6 MiB blocks (4 double-buffered bufs = 24 MiB < 32 MiB scoped /
    # 64 MiB physical).  v5e/v6e have 128 MiB VMEM: 4 MiB blocks are free.
    return (6 << 20) if gen == "v7" else (4 << 20)


# ---------------------------------------------------------------------------
# Elementwise funcs + Pallas kernel
# ---------------------------------------------------------------------------
def _softplus(x):
    # Numerically stable softplus: max(x,0) + log1p(exp(-|x|)).
    return jnp.maximum(x, 0.0) + jnp.log1p(jnp.exp(-jnp.abs(x)))


_ELEMENTWISE_FUNCS = {"softplus": _softplus}


def _make_elementwise_kernel(fn, compute_dtype):
    def kernel(p_ref, o_ref):
        x = p_ref[...].astype(compute_dtype)
        o_ref[...] = fn(x).astype(o_ref.dtype)
    return kernel


# ---------------------------------------------------------------------------
# Wrapper that mirrors LearnableParams.forward()
# ---------------------------------------------------------------------------
def learnable_params_forward(param: jax.Array, func=None) -> jax.Array:
    """Equivalent of LearnableParams.forward(): returns func(param) (or param)."""
    if func is None:
        # Identity path: torch returns the parameter itself — no kernel, no copy.
        return param

    fn = _ELEMENTWISE_FUNCS[func] if isinstance(func, str) else func

    orig_shape = param.shape
    orig_dtype = jnp.dtype(param.dtype)
    n = param.size

    # Small / empty / non-{f32,bf16,f16} params: plain XLA.  Avoids the
    # pad-to-slab traffic inflation and the pallas_call launch overhead, and
    # applies `func` in the parameter's own dtype (f64, ints, ...) exactly
    # like the torch module.
    if n < _SMALL_FALLBACK_ELEMS or orig_dtype not in _KERNEL_DTYPES:
        return fn(param)

    gen = _tpu_generation()
    itemsize = orig_dtype.itemsize
    sub = _sublane_multiple(orig_dtype)
    cols = _SLAB_COLS

    # bf16 EUP path on v6e/v7x halves transcendental work (exp/log1p), which
    # keeps large bf16 params HBM-bound on v7x; f32 elsewhere (v5e has no
    # bf16 EUP) and for f32/f16 params.
    if orig_dtype == jnp.dtype(jnp.bfloat16) and gen in ("v6", "v7"):
        compute_dtype = jnp.bfloat16
    else:
        compute_dtype = jnp.float32

    rows_logical = pl.cdiv(n, cols)

    # Sublane-aligned row block within the per-generation byte budget.
    budget = _block_bytes_budget(gen)
    row_block_max = max(sub, (budget // (cols * itemsize)) // sub * sub)
    if gen == "v7":
        # Two TensorCores: split >=2 ways so megacore "parallel" sharding
        # actually has work for both cores.
        row_block = min(row_block_max,
                        max(sub, _round_up(pl.cdiv(rows_logical, 2), sub)))
    else:
        # Single TensorCore: one maximal block stream, fewer grid steps.
        row_block = min(row_block_max, max(sub, _round_up(rows_logical, sub)))

    # Pack as a lane-dense [rows, 1024] slab.
    if n % cols == 0:
        # No-repack fast path: free reshape in / free reshape out, no extra
        # HBM passes from jnp.pad or the [:n] slice.
        rows = rows_logical
        slab = param.reshape(rows, cols)
        needs_unpack = False
    else:
        # Pad up to whole blocks so every grid step writes a full tile.
        rows = _round_up(rows_logical, row_block)
        flat = jnp.pad(param.reshape(-1), (0, rows * cols - n))
        slab = flat.reshape(rows, cols)
        needs_unpack = True

    grid = (pl.cdiv(rows, row_block),)
    spec = pl.BlockSpec((row_block, cols), lambda i: (i, 0))

    # VMEM limit derived from the actual block size: 2 double-buffered bufs
    # each for input and output + headroom, clamped to 32 MiB (safe on all
    # generations, incl. v7x's 64 MiB physical / 32 MiB scoped default).
    block_bytes = row_block * cols * itemsize
    vmem_limit = int(min(max(4 * block_bytes + (4 << 20), 16 << 20), 32 << 20))

    out = pl.pallas_call(
        _make_elementwise_kernel(fn, compute_dtype),
        out_shape=jax.ShapeDtypeStruct((rows, cols), orig_dtype),
        grid_spec=pltpu.PrefetchScalarGridSpec(
            num_scalar_prefetch=0,
            grid=grid,
            in_specs=[spec],
            out_specs=spec,
        ),
        compiler_params=pltpu.CompilerParams(
            dimension_semantics=("parallel",),
            vmem_limit_bytes=vmem_limit,
        ),
    )(slab)

    if needs_unpack:
        return out.reshape(-1)[:n].reshape(orig_shape)
    return out.reshape(orig_shape)


class LearnableParams:
    """JAX/Pallas port of the torch LearnableParams module."""

    def __init__(self, init_val=None, shape=None, dtype=jnp.float32, func=None,
                 key=None):
        self.func = func
        if init_val is not None:
            self.param = jnp.asarray(init_val, dtype=dtype)
        elif shape is not None:
            # torch.randn(*shape) -> deterministic normal init here.
            key = jax.random.PRNGKey(0) if key is None else key
            self.param = jax.random.normal(key, shape, dtype=jnp.float32).astype(dtype)
        else:
            raise RuntimeError('[!] init_val and shape cannot be both None!')

    def __call__(self):
        return learnable_params_forward(self.param, self.func)


# ---------------------------------------------------------------------------
# Demo / self-test
# ---------------------------------------------------------------------------
if __name__ == "__main__":
    key = jax.random.PRNGKey(0)

    # Case 1: func=None -> forward returns the parameter unchanged (no kernel).
    mod_id = LearnableParams(shape=(16, 256), dtype=jnp.float32, func=None, key=key)
    out_id = jax.block_until_ready(mod_id())
    assert out_id.shape == (16, 256) and out_id.dtype == jnp.float32
    assert jnp.array_equal(out_id, mod_id.param)

    # Case 2: tiny bf16 odd shape -> XLA fallback path (no slab inflation).
    mod_tiny = LearnableParams(shape=(3, 5, 7), dtype=jnp.bfloat16,
                               func="softplus", key=key)
    out_tiny = jax.block_until_ready(mod_tiny())
    ref_tiny = jax.nn.softplus(mod_tiny.param.astype(jnp.float32))
    assert out_tiny.shape == (3, 5, 7) and out_tiny.dtype == jnp.bfloat16
    assert jnp.allclose(out_tiny.astype(jnp.float32), ref_tiny, atol=1e-2, rtol=1e-2)

    # Case 3: user-supplied callable func on a small param -> XLA path,
    # applied in the parameter's own dtype (torch semantics).
    mod_fn = LearnableParams(shape=(8, 32), dtype=jnp.float32,
                             func=lambda x: jnp.tanh(x), key=key)
    out_fn = jax.block_until_ready(mod_fn())
    assert jnp.allclose(out_fn, jnp.tanh(mod_fn.param), atol=1e-6)

    # Case 4: aligned f32 param (n % 1024 == 0) -> no-repack kernel fast path.
    mod_fast = LearnableParams(shape=(512, 1024), dtype=jnp.float32,
                               func="softplus", key=key)
    out_fast = jax.block_until_ready(mod_fast())
    ref_fast = jax.nn.softplus(mod_fast.param)
    assert out_fast.shape == (512, 1024) and out_fast.dtype == jnp.float32
    assert jnp.allclose(out_fast, ref_fast, atol=1e-5, rtol=1e-5)

    # Case 5: unaligned bf16 param above the fallback threshold -> padded slab
    # path (exercises bf16 sublane packing + the pad/unpack branch).
    mod_pad = LearnableParams(shape=(257, 1031), dtype=jnp.bfloat16,
                              func="softplus", key=key)
    out_pad = jax.block_until_ready(mod_pad())
    ref_pad = jax.nn.softplus(mod_pad.param.astype(jnp.float32))
    assert out_pad.shape == (257, 1031) and out_pad.dtype == jnp.bfloat16
    assert jnp.allclose(out_pad.astype(jnp.float32), ref_pad, atol=5e-2, rtol=2e-2)

    print("KERNEL_OK")
</pallas_src>

<mosaic_0001>
module attributes {stable_mosaic.version = 11 : i64} {
  func.func @kernel(%arg0: i32, %arg1: memref<512x1024xf32, #tpu.memory_space<vmem>>, %arg2: memref<512x1024xf32, #tpu.memory_space<vmem>>) attributes {dimension_semantics = [#tpu.dimension_semantics<parallel>], iteration_bounds = array<i64: 1>, scalar_prefetch = 0 : i64, scratch_operands = 0 : i64, tpu.core_type = #tpu.core_type<tc>, window_params = [{transform_indices = @transform_0, window_bounds = array<i64: 512, 1024>}, {transform_indices = @transform_1, window_bounds = array<i64: 512, 1024>}]} {
    %c0 = arith.constant 0 : index
    %c0_0 = arith.constant 0 : index
    %0 = vector.load %arg1[%c0, %c0_0] : memref<512x1024xf32, #tpu.memory_space<vmem>>, vector<512x1024xf32>
    %cst = arith.constant 0.000000e+00 : f32
    %1 = vector.broadcast %cst : f32 to vector<512x1024xf32>
    %2 = arith.maximumf %0, %1 : vector<512x1024xf32>
    %3 = math.absf %0 : vector<512x1024xf32>
    %cst_1 = arith.constant 0.000000e+00 : f32
    %4 = vector.broadcast %cst_1 : f32 to vector<512x1024xf32>
    %5 = arith.subf %4, %3 : vector<512x1024xf32>
    %6 = math.exp %5 : vector<512x1024xf32>
    %7 = math.log1p %6 : vector<512x1024xf32>
    %8 = arith.addf %2, %7 : vector<512x1024xf32>
    %c0_2 = arith.constant 0 : index
    %c0_3 = arith.constant 0 : index
    %9 = vector.load %arg2[%c0_2, %c0_3] : memref<512x1024xf32, #tpu.memory_space<vmem>>, vector<512x1024xf32>
    tpu.vector_store %arg2[%c0_2, %c0_3], %8 {strides = array<i32>} : memref<512x1024xf32, #tpu.memory_space<vmem>>, vector<512x1024xf32>,
    return
  }
  func.func @transform_0(%arg0: i32) -> (i32, i32) {
    %c0_i32 = arith.constant 0 : i32
    %c0_i32_0 = arith.constant 0 : i32
    return %arg0, %c0_i32 : i32, i32
  }
  func.func @transform_1(%arg0: i32) -> (i32, i32) {
    %c0_i32 = arith.constant 0 : i32
    %c0_i32_0 = arith.constant 0 : i32
    return %arg0, %c0_i32 : i32, i32
  }
}

</mosaic_0001>

<llo_original>
// kernel: tpu_custom_call.1
$region0: #{tpu_custom_call.1}
  #allocation0 [shape = 'u32[]', space=smem, size = 0x4, offset = 0x4, fixed_abs, tag = 'smem constant byte address 0x4 - core index']
  #allocation1 [shape = 'u32[144,128]{1,0:T(1,128)}', space=vmem, size = 0x12000, scoped, tag = 'internal scratch']
  %s0 = inlined_call_operand.hbm [shape: f32[512,1024], index: 0, kind: input, shape index: {}]
  %s1 = inlined_call_operand.hbm [shape: f32[512,1024], index: 1, kind: output, shape index: {}]
  %s2 = sld [smem:[#allocation0]]
  $region18: #{tpu_custom_call.1} parent=0
    _
  %s4 = ssub.s32 1, %s2
  %s5 = scalar_select 0, %s4, %s2
  $region1: #{tpu_custom_call.1} parent=0
    #allocation2 [shape = 'u8[2097152]{0}', space=vmem, size = 0x200000, scoped, tag = 'input window, operand 0, single buffered']
    #allocation3 [shape = 's32[1]{0}', space=sflag, size = 0x4, scoped, tag = 'scoped memory for tpu_custom_call.1']
    #allocation4 [shape = 's32[1]{0}', space=sflag, size = 0x4, scoped, tag = 'scoped memory for tpu_custom_call.1']
    #allocation5 [shape = 'u8[2097152]{0}', space=vmem, size = 0x200000, scoped, tag = 'output window, operand 0, single buffered']
    %6 = vsyncpa [#allocation3], 0
    %7 = vsyncpa [#allocation4], 0
    // Predicated region
    $region2: #{tpu_custom_call.1} parent=1 // pred_check
      _
    $region3: #{tpu_custom_call.1} parent=1 // pred_check_branch
      %9 = sbr.rel (0) target = $region5
    $region4: #{tpu_custom_call.1} parent=1 // pred_region
      %s11 = ssub.s32 65536, 65536
      %12 = vsyncadd [#allocation3], %s11
      %s13 = sshll.u32 [#allocation2], 4
      %s14 = int_to_ptr.vmem [resolvable:$true] %s13
      %19 = dma.hbm_to_vmem [thread:$0]  %s0, 65536, %s14, [#allocation3], 1024, 1024, 64
    $region5: #{tpu_custom_call.1} parent=1 // pred_fallthru
      _
    // Predicated region
    $region6: #{tpu_custom_call.1} parent=1 // pred_check
      _
    $region7: #{tpu_custom_call.1} parent=1 // pred_check_branch
      %21 = sbr.rel (0) target = $region9
    $region8: #{tpu_custom_call.1} parent=1 // pred_region
      %22 = dma.done [#allocation3], 65536
    $region9: #{tpu_custom_call.1} parent=1 // pred_fallthru
      _
    %v23 = vld [vmem:[#allocation2] sm:$0xff]
    %v24 = vld [vmem:[#allocation2 + $0x8] sm:$0xff]
    %v25 = vld [vmem:[#allocation2 + $0x10] sm:$0xff]
    %v26 = vld [vmem:[#allocation2 + $0x18] sm:$0xff]
    %v27 = vld [vmem:[#allocation2 + $0x20] sm:$0xff]
    %v28 = vld [vmem:[#allocation2 + $0x28] sm:$0xff]
    %v29 = vld [vmem:[#allocation2 + $0x30] sm:$0xff]
    %v30 = vld [vmem:[#allocation2 + $0x38] sm:$0xff]
    %v31 = vld [vmem:[#allocation2 + $0x40] sm:$0xff]
    %v32 = vld [vmem:[#allocation2 + $0x48] sm:$0xff]
    %v33 = vld [vmem:[#allocation2 + $0x50] sm:$0xff]
    %v34 = vld [vmem:[#allocation2 + $0x58] sm:$0xff]
    %v35 = vld [vmem:[#allocation2 + $0x60] sm:$0xff]
    %v36 = vld [vmem:[#allocation2 + $0x68] sm:$0xff]
    %v37 = vld [vmem:[#allocation2 + $0x70] sm:$0xff]
    %v38 = vld [vmem:[#allocation2 + $0x78] sm:$0xff]
    %v39 = vld [vmem:[#allocation2 + $0x80] sm:$0xff]
    %v40 = vld [vmem:[#allocation2 + $0x88] sm:$0xff]
    %v41 = vld [vmem:[#allocation2 + $0x90] sm:$0xff]
    %v42 = vld [vmem:[#allocation2 + $0x98] sm:$0xff]
    %v43 = vld [vmem:[#allocation2 + $0xa0] sm:$0xff]
    %v44 = vld [vmem:[#allocation2 + $0xa8] sm:$0xff]
    %v45 = vld [vmem:[#allocation2 + $0xb0] sm:$0xff]
    %v46 = vld [vmem:[#allocation2 + $0xb8] sm:$0xff]
    %v47 = vld [vmem:[#allocation2 + $0xc0] sm:$0xff]
    %v48 = vld [vmem:[#allocation2 + $0xc8] sm:$0xff]
    %v49 = vld [vmem:[#allocation2 + $0xd0] sm:$0xff]
    %v50 = vld [vmem:[#allocation2 + $0xd8] sm:$0xff]
    %v51 = vld [vmem:[#allocation2 + $0xe0] sm:$0xff]
    %v52 = vld [vmem:[#allocation2 + $0xe8] sm:$0xff]
    %v53 = vld [vmem:[#allocation2 + $0xf0] sm:$0xff]
    %v54 = vld [vmem:[#allocation2 + $0xf8] sm:$0xff]
    %v55 = vld [vmem:[#allocation2 + $0x100] sm:$0xff]
    %v56 = vld [vmem:[#allocation2 + $0x108] sm:$0xff]
    %v57 = vld [vmem:[#allocation2 + $0x110] sm:$0xff]
    %v58 = vld [vmem:[#allocation2 + $0x118] sm:$0xff]
    %v59 = vld [vmem:[#allocation2 + $0x120] sm:$0xff]
    %v60 = vld [vmem:[#allocation2 + $0x128] sm:$0xff]
    %v61 = vld [vmem:[#allocation2 + $0x130] sm:$0xff]
    %v62 = vld [vmem:[#allocation2 + $0x138] sm:$0xff]
    %v63 = vld [vmem:[#allocation2 + $0x140] sm:$0xff]
    %v64 = vld [vmem:[#allocation2 + $0x148] sm:$0xff]
    %v65 = vld [vmem:[#allocation2 + $0x150] sm:$0xff]
    %v66 = vld [vmem:[#allocation2 + $0x158] sm:$0xff]
    %v67 = vld [vmem:[#allocation2 + $0x160] sm:$0xff]
    %v68 = vld [vmem:[#allocation2 + $0x168] sm:$0xff]
    %v69 = vld [vmem:[#allocation2 + $0x170] sm:$0xff]
    %v70 = vld [vmem:[#allocation2 + $0x178] sm:$0xff]
    %v71 = vld [vmem:[#allocation2 + $0x180] sm:$0xff]
    %v72 = vld [vmem:[#allocation2 + $0x188] sm:$0xff]
    %v73 = vld [vmem:[#allocation2 + $0x190] sm:$0xff]
    %v74 = vld [vmem:[#allocation2 + $0x198] sm:$0xff]
    %v75 = vld [vmem:[#allocation2 + $0x1a0] sm:$0xff]
    %v76 = vld [vmem:[#allocation2 + $0x1a8] sm:$0xff]
    %v77 = vld [vmem:[#allocation2 + $0x1b0] sm:$0xff]
    %v78 = vld [vmem:[#allocation2 + $0x1b8] sm:$0xff]
    %v79 = vld [vmem:[#allocation2 + $0x1c0] sm:$0xff]
    %v80 = vld [vmem:[#allocation2 + $0x1c8] sm:$0xff]
    %v81 = vld [vmem:[#allocation2 + $0x1d0] sm:$0xff]
    %v82 = vld [vmem:[#allocation2 + $0x1d8] sm:$0xff]
    %v83 = vld [vmem:[#allocation2 + $0x1e0] sm:$0xff]
    %v84 = vld [vmem:[#allocation2 + $0x1e8] sm:$0xff]
    %v85 = vld [vmem:[#allocation2 + $0x1f0] sm:$0xff]
    %v86 = vld [vmem:[#allocation2 + $0x1f8] sm:$0xff]
    %v87 = vld [vmem:[#allocation2 + $0x200] sm:$0xff]
    %v88 = vld [vmem:[#allocation2 + $0x208] sm:$0xff]
    %v89 = vld [vmem:[#allocation2 + $0x210] sm:$0xff]
    %v90 = vld [vmem:[#allocation2 + $0x218] sm:$0xff]
    %v91 = vld [vmem:[#allocation2 + $0x220] sm:$0xff]
    %v92 = vld [vmem:[#allocation2 + $0x228] sm:$0xff]
    %v93 = vld [vmem:[#allocation2 + $0x230] sm:$0xff]
    %v94 = vld [vmem:[#allocation2 + $0x238] sm:$0xff]
    %v95 = vld [vmem:[#allocation2 + $0x240] sm:$0xff]
    %v96 = vld [vmem:[#allocation2 + $0x248] sm:$0xff]
    %v97 = vld [vmem:[#allocation2 + $0x250] sm:$0xff]
    %v98 = vld [vmem:[#allocation2 + $0x258] sm:$0xff]
    %v99 = vld [vmem:[#allocation2 + $0x260] sm:$0xff]
    %v100 = vld [vmem:[#allocation2 + $0x268] sm:$0xff]
    %v101 = vld [vmem:[#allocation2 + $0x270] sm:$0xff]
    %v102 = vld [vmem:[#allocation2 + $0x278] sm:$0xff]
    %v103 = vld [vmem:[#allocation2 + $0x280] sm:$0xff]
    %v104 = vld [vmem:[#allocation2 + $0x288] sm:$0xff]
    %v105 = vld [vmem:[#allocation2 + $0x290] sm:$0xff]
    %v106 = vld [vmem:[#allocation2 + $0x298] sm:$0xff]
    %v107 = vld [vmem:[#allocation2 + $0x2a0] sm:$0xff]
    %v108 = vld [vmem:[#allocation2 + $0x2a8] sm:$0xff]
    %v109 = vld [vmem:[#allocation2 + $0x2b0] sm:$0xff]
    %v110 = vld [vmem:[#allocation2 + $0x2b8] sm:$0xff]
    %v111 = vld [vmem:[#allocation2 + $0x2c0] sm:$0xff]
    %v112 = vld [vmem:[#allocation2 + $0x2c8] sm:$0xff]
    %v113 = vld [vmem:[#allocation2 + $0x2d0] sm:$0xff]
    %v114 = vld [vmem:[#allocation2 + $0x2d8] sm:$0xff]
    %v115 = vld [vmem:[#allocation2 + $0x2e0] sm:$0xff]
    %v116 = vld [vmem:[#allocation2 + $0x2e8] sm:$0xff]
    %v117 = vld [vmem:[#allocation2 + $0x2f0] sm:$0xff]
    %v118 = vld [vmem:[#allocation2 + $0x2f8] sm:$0xff]
    %v119 = vld [vmem:[#allocation2 + $0x300] sm:$0xff]
    %v120 = vld [vmem:[#allocation2 + $0x308] sm:$0xff]
    %v121 = vld [vmem:[#allocation2 + $0x310] sm:$0xff]
    %v122 = vld [vmem:[#allocation2 + $0x318] sm:$0xff]
    %v123 = vld [vmem:[#allocation2 + $0x320] sm:$0xff]
    %v124 = vld [vmem:[#allocation2 + $0x328] sm:$0xff]
    %v125 = vld [vmem:[#allocation2 + $0x330] sm:$0xff]
    %v126 = vld [vmem:[#allocation2 + $0x338] sm:$0xff]
    %v127 = vld [vmem:[#allocation2 + $0x340] sm:$0xff]
    %v128 = vld [vmem:[#allocation2 + $0x348] sm:$0xff]
    %v129 = vld [vmem:[#allocation2 + $0x350] sm:$0xff]
    %v130 = vld [vmem:[#allocation2 + $0x358] sm:$0xff]
    %v131 = vld [vmem:[#allocation2 + $0x360] sm:$0xff]
    %v132 = vld [vmem:[#allocation2 + $0x368] sm:$0xff]
    %v133 = vld [vmem:[#allocation2 + $0x370] sm:$0xff]
    %v134 = vld [vmem:[#allocation2 + $0x378] sm:$0xff]
    %v135 = vld [vmem:[#allocation2 + $0x380] sm:$0xff]
    %v136 = vld [vmem:[#allocation2 + $0x388] sm:$0xff]
    %v137 = vld [vmem:[#allocation2 + $0x390] sm:$0xff]
    %v138 = vld [vmem:[#allocation2 + $0x398] sm:$0xff]
    %v139 = vld [vmem:[#allocation2 + $0x3a0] sm:$0xff]
    %v140 = vld [vmem:[#allocation2 + $0x3a8] sm:$0xff]
    %v141 = vld [vmem:[#allocation2 + $0x3b0] sm:$0xff]
    %v142 = vld [vmem:[#allocation2 + $0x3b8] sm:$0xff]
    %v143 = vld [vmem:[#allocation2 + $0x3c0] sm:$0xff]
    %v144 = vld [vmem:[#allocation2 + $0x3c8] sm:$0xff]
    %v145 = vld [vmem:[#allocation2 + $0x3d0] sm:$0xff]
    %v146 = vld [vmem:[#allocation2 + $0x3d8] sm:$0xff]
    %v147 = vld [vmem:[#allocation2 + $0x3e0] sm:$0xff]
    %v148 = vld [vmem:[#allocation2 + $0x3e8] sm:$0xff]
    %v149 = vld [vmem:[#allocation2 + $0x3f0] sm:$0xff]
    %v150 = vld [vmem:[#allocation2 + $0x3f8] sm:$0xff]
    %v151 = vld [vmem:[#allocation2 + $0x400] sm:$0xff]
    %v152 = vld [vmem:[#allocation2 + $0x408] sm:$0xff]
    %v153 = vld [vmem:[#allocation2 + $0x410] sm:$0xff]
    %v154 = vld [vmem:[#allocation2 + $0x418] sm:$0xff]
    %v155 = vld [vmem:[#allocation2 + $0x420] sm:$0xff]
    %v156 = vld [vmem:[#allocation2 + $0x428] sm:$0xff]
    %v157 = vld [vmem:[#allocation2 + $0x430] sm:$0xff]
    %v158 = vld [vmem:[#allocation2 + $0x438] sm:$0xff]
    %v159 = vld [vmem:[#allocation2 + $0x440] sm:$0xff]
    %v160 = vld [vmem:[#allocation2 + $0x448] sm:$0xff]
    %v161 = vld [vmem:[#allocation2 + $0x450] sm:$0xff]
    %v162 = vld [vmem:[#allocation2 + $0x458] sm:$0xff]
    %v163 = vld [vmem:[#allocation2 + $0x460] sm:$0xff]
    %v164 = vld [vmem:[#allocation2 + $0x468] sm:$0xff]
    %v165 = vld [vmem:[#allocation2 + $0x470] sm:$0xff]
    %v166 = vld [vmem:[#allocation2 + $0x478] sm:$0xff]
    %v167 = vld [vmem:[#allocation2 + $0x480] sm:$0xff]
    %v168 = vld [vmem:[#allocation2 + $0x488] sm:$0xff]
    %v169 = vld [vmem:[#allocation2 + $0x490] sm:$0xff]
    %v170 = vld [vmem:[#allocation2 + $0x498] sm:$0xff]
    %v171 = vld [vmem:[#allocation2 + $0x4a0] sm:$0xff]
    %v172 = vld [vmem:[#allocation2 + $0x4a8] sm:$0xff]
    %v173 = vld [vmem:[#allocation2 + $0x4b0] sm:$0xff]
    %v174 = vld [vmem:[#allocation2 + $0x4b8] sm:$0xff]
    %v175 = vld [vmem:[#allocation2 + $0x4c0] sm:$0xff]
    %v176 = vld [vmem:[#allocation2 + $0x4c8] sm:$0xff]
    %v177 = vld [vmem:[#allocation2 + $0x4d0] sm:$0xff]
    %v178 = vld [vmem:[#allocation2 + $0x4d8] sm:$0xff]
    %v179 = vld [vmem:[#allocation2 + $0x4e0] sm:$0xff]
    %v180 = vld [vmem:[#allocation2 + $0x4e8] sm:$0xff]
    %v181 = vld [vmem:[#allocation2 + $0x4f0] sm:$0xff]
    %v182 = vld [vmem:[#allocation2 + $0x4f8] sm:$0xff]
    %v183 = vld [vmem:[#allocation2 + $0x500] sm:$0xff]
    %v184 = vld [vmem:[#allocation2 + $0x508] sm:$0xff]
    %v185 = vld [vmem:[#allocation2 + $0x510] sm:$0xff]
    %v186 = vld [vmem:[#allocation2 + $0x518] sm:$0xff]
    %v187 = vld [vmem:[#allocation2 + $0x520] sm:$0xff]
    %v188 = vld [vmem:[#allocation2 + $0x528] sm:$0xff]
    %v189 = vld [vmem:[#allocation2 + $0x530] sm:$0xff]
    %v190 = vld [vmem:[#allocation2 + $0x538] sm:$0xff]
    %v191 = vld [vmem:[#allocation2 + $0x540] sm:$0xff]
    %v192 = vld [vmem:[#allocation2 + $0x548] sm:$0xff]
    %v193 = vld [vmem:[#allocation2 + $0x550] sm:$0xff]
    %v194 = vld [vmem:[#allocation2 + $0x558] sm:$0xff]
    %v195 = vld [vmem:[#allocation2 + $0x560] sm:$0xff]
    %v196 = vld [vmem:[#allocation2 + $0x568] sm:$0xff]
    %v197 = vld [vmem:[#allocation2 + $0x570] sm:$0xff]
    %v198 = vld [vmem:[#allocation2 + $0x578] sm:$0xff]
    %v199 = vld [vmem:[#allocation2 + $0x580] sm:$0xff]
    %v200 = vld [vmem:[#allocation2 + $0x588] sm:$0xff]
    %v201 = vld [vmem:[#allocation2 + $0x590] sm:$0xff]
    %v202 = vld [vmem:[#allocation2 + $0x598] sm:$0xff]
    %v203 = vld [vmem:[#allocation2 + $0x5a0] sm:$0xff]
    %v204 = vld [vmem:[#allocation2 + $0x5a8] sm:$0xff]
    %v205 = vld [vmem:[#allocation2 + $0x5b0] sm:$0xff]
    %v206 = vld [vmem:[#allocation2 + $0x5b8] sm:$0xff]
    %v207 = vld [vmem:[#allocation2 + $0x5c0] sm:$0xff]
    %v208 = vld [vmem:[#allocation2 + $0x5c8] sm:$0xff]
    %v209 = vld [vmem:[#allocation2 + $0x5d0] sm:$0xff]
    %v210 = vld [vmem:[#allocation2 + $0x5d8] sm:$0xff]
    %v211 = vld [vmem:[#allocation2 + $0x5e0] sm:$0xff]
    %v212 = vld [vmem:[#allocation2 + $0x5e8] sm:$0xff]
    %v213 = vld [vmem:[#allocation2 + $0x5f0] sm:$0xff]
    %v214 = vld [vmem:[#allocation2 + $0x5f8] sm:$0xff]
    %v215 = vld [vmem:[#allocation2 + $0x600] sm:$0xff]
    %v216 = vld [vmem:[#allocation2 + $0x608] sm:$0xff]
    %v217 = vld [vmem:[#allocation2 + $0x610] sm:$0xff]
    %v218 = vld [vmem:[#allocation2 + $0x618] sm:$0xff]
    %v219 = vld [vmem:[#allocation2 + $0x620] sm:$0xff]
    %v220 = vld [vmem:[#allocation2 + $0x628] sm:$0xff]
    %v221 = vld [vmem:[#allocation2 + $0x630] sm:$0xff]
    %v222 = vld [vmem:[#allocation2 + $0x638] sm:$0xff]
    %v223 = vld [vmem:[#allocation2 + $0x640] sm:$0xff]
    %v224 = vld [vmem:[#allocation2 + $0x648] sm:$0xff]
    %v225 = vld [vmem:[#allocation2 + $0x650] sm:$0xff]
    %v226 = vld [vmem:[#allocation2 + $0x658] sm:$0xff]
    %v227 = vld [vmem:[#allocation2 + $0x660] sm:$0xff]
    %v228 = vld [vmem:[#allocation2 + $0x668] sm:$0xff]
    %v229 = vld [vmem:[#allocation2 + $0x670] sm:$0xff]
    %v230 = vld [vmem:[#allocation2 + $0x678] sm:$0xff]
    %v231 = vld [vmem:[#allocation2 + $0x680] sm:$0xff]
    %v232 = vld [vmem:[#allocation2 + $0x688] sm:$0xff]
    %v233 = vld [vmem:[#allocation2 + $0x690] sm:$0xff]
    %v234 = vld [vmem:[#allocation2 + $0x698] sm:$0xff]
    %v235 = vld [vmem:[#allocation2 + $0x6a0] sm:$0xff]
    %v236 = vld [vmem:[#allocation2 + $0x6a8] sm:$0xff]
    %v237 = vld [vmem:[#allocation2 + $0x6b0] sm:$0xff]
    %v238 = vld [vmem:[#allocation2 + $0x6b8] sm:$0xff]
    %v239 = vld [vmem:[#allocation2 + $0x6c0] sm:$0xff]
    %v240 = vld [vmem:[#allocation2 + $0x6c8] sm:$0xff]
    %v241 = vld [vmem:[#allocation2 + $0x6d0] sm:$0xff]
    %v242 = vld [vmem:[#allocation2 + $0x6d8] sm:$0xff]
    %v243 = vld [vmem:[#allocation2 + $0x6e0] sm:$0xff]
    %v244 = vld [vmem:[#allocation2 + $0x6e8] sm:$0xff]
    %v245 = vld [vmem:[#allocation2 + $0x6f0] sm:$0xff]
    %v246 = vld [vmem:[#allocation2 + $0x6f8] sm:$0xff]
    %v247 = vld [vmem:[#allocation2 + $0x700] sm:$0xff]
    %v248 = vld [vmem:[#allocation2 + $0x708] sm:$0xff]
    %v249 = vld [vmem:[#allocation2 + $0x710] sm:$0xff]
    %v250 = vld [vmem:[#allocation2 + $0x718] sm:$0xff]
    %v251 = vld [vmem:[#allocation2 + $0x720] sm:$0xff]
    %v252 = vld [vmem:[#allocation2 + $0x728] sm:$0xff]
    %v253 = vld [vmem:[#allocation2 + $0x730] sm:$0xff]
    %v254 = vld [vmem:[#allocation2 + $0x738] sm:$0xff]
    %v255 = vld [vmem:[#allocation2 + $0x740] sm:$0xff]
    %v256 = vld [vmem:[#allocation2 + $0x748] sm:$0xff]
    %v257 = vld [vmem:[#allocation2 + $0x750] sm:$0xff]
    %v258 = vld [vmem:[#allocation2 + $0x758] sm:$0xff]
    %v259 = vld [vmem:[#allocation2 + $0x760] sm:$0xff]
    %v260 = vld [vmem:[#allocation2 + $0x768] sm:$0xff]
    %v261 = vld [vmem:[#allocation2 + $0x770] sm:$0xff]
    %v262 = vld [vmem:[#allocation2 + $0x778] sm:$0xff]
    %v263 = vld [vmem:[#allocation2 + $0x780] sm:$0xff]
    %v264 = vld [vmem:[#allocation2 + $0x788] sm:$0xff]
    %v265 = vld [vmem:[#allocation2 + $0x790] sm:$0xff]
    %v266 = vld [vmem:[#allocation2 + $0x798] sm:$0xff]
    %v267 = vld [vmem:[#allocation2 + $0x7a0] sm:$0xff]
    %v268 = vld [vmem:[#allocation2 + $0x7a8] sm:$0xff]
    %v269 = vld [vmem:[#allocation2 + $0x7b0] sm:$0xff]
    %v270 = vld [vmem:[#allocation2 + $0x7b8] sm:$0xff]
    %v271 = vld [vmem:[#allocation2 + $0x7c0] sm:$0xff]
    %v272 = vld [vmem:[#allocation2 + $0x7c8] sm:$0xff]
    %v273 = vld [vmem:[#allocation2 + $0x7d0] sm:$0xff]
    %v274 = vld [vmem:[#allocation2 + $0x7d8] sm:$0xff]
    %v275 = vld [vmem:[#allocation2 + $0x7e0] sm:$0xff]
    %v276 = vld [vmem:[#allocation2 + $0x7e8] sm:$0xff]
    %v277 = vld [vmem:[#allocation2 + $0x7f0] sm:$0xff]
    %v278 = vld [vmem:[#allocation2 + $0x7f8] sm:$0xff]
    %v279 = vld [vmem:[#allocation2 + $0x800] sm:$0xff]
    %v280 = vld [vmem:[#allocation2 + $0x808] sm:$0xff]
    %v281 = vld [vmem:[#allocation2 + $0x810] sm:$0xff]
    %v282 = vld [vmem:[#allocation2 + $0x818] sm:$0xff]
    %v283 = vld [vmem:[#allocation2 + $0x820] sm:$0xff]
    %v284 = vld [vmem:[#allocation2 + $0x828] sm:$0xff]
    %v285 = vld [vmem:[#allocation2 + $0x830] sm:$0xff]
    %v286 = vld [vmem:[#allocation2 + $0x838] sm:$0xff]
    %v287 = vld [vmem:[#allocation2 + $0x840] sm:$0xff]
    %v288 = vld [vmem:[#allocation2 + $0x848] sm:$0xff]
    %v289 = vld [vmem:[#allocation2 + $0x850] sm:$0xff]
    %v290 = vld [vmem:[#allocation2 + $0x858] sm:$0xff]
    %v291 = vld [vmem:[#allocation2 + $0x860] sm:$0xff]
    %v292 = vld [vmem:[#allocation2 + $0x868] sm:$0xff]
    %v293 = vld [vmem:[#allocation2 + $0x870] sm:$0xff]
    %v294 = vld [vmem:[#allocation2 + $0x878] sm:$0xff]
    %v295 = vld [vmem:[#allocation2 + $0x880] sm:$0xff]
    %v296 = vld [vmem:[#allocation2 + $0x888] sm:$0xff]
    %v297 = vld [vmem:[#allocation2 + $0x890] sm:$0xff]
    %v298 = vld [vmem:[#allocation2 + $0x898] sm:$0xff]
    %v299 = vld [vmem:[#allocation2 + $0x8a0] sm:$0xff]
    %v300 = vld [vmem:[#allocation2 + $0x8a8] sm:$0xff]
    %v301 = vld [vmem:[#allocation2 + $0x8b0] sm:$0xff]
    %v302 = vld [vmem:[#allocation2 + $0x8b8] sm:$0xff]
    %v303 = vld [vmem:[#allocation2 + $0x8c0] sm:$0xff]
    %v304 = vld [vmem:[#allocation2 + $0x8c8] sm:$0xff]
    %v305 = vld [vmem:[#allocation2 + $0x8d0] sm:$0xff]
    %v306 = vld [vmem:[#allocation2 + $0x8d8] sm:$0xff]
    %v307 = vld [vmem:[#allocation2 + $0x8e0] sm:$0xff]
    %v308 = vld [vmem:[#allocation2 + $0x8e8] sm:$0xff]
    %v309 = vld [vmem:[#allocation2 + $0x8f0] sm:$0xff]
    %v310 = vld [vmem:[#allocation2 + $0x8f8] sm:$0xff]
    %v311 = vld [vmem:[#allocation2 + $0x900] sm:$0xff]
    %v312 = vld [vmem:[#allocation2 + $0x908] sm:$0xff]
    %v313 = vld [vmem:[#allocation2 + $0x910] sm:$0xff]
    %v314 = vld [vmem:[#allocation2 + $0x918] sm:$0xff]
    %v315 = vld [vmem:[#allocation2 + $0x920] sm:$0xff]
    %v316 = vld [vmem:[#allocation2 + $0x928] sm:$0xff]
    %v317 = vld [vmem:[#allocation2 + $0x930] sm:$0xff]
    %v318 = vld [vmem:[#allocation2 + $0x938] sm:$0xff]
    %v319 = vld [vmem:[#allocation2 + $0x940] sm:$0xff]
    %v320 = vld [vmem:[#allocation2 + $0x948] sm:$0xff]
    %v321 = vld [vmem:[#allocation2 + $0x950] sm:$0xff]
    %v322 = vld [vmem:[#allocation2 + $0x958] sm:$0xff]
    %v323 = vld [vmem:[#allocation2 + $0x960] sm:$0xff]
    %v324 = vld [vmem:[#allocation2 + $0x968] sm:$0xff]
    %v325 = vld [vmem:[#allocation2 + $0x970] sm:$0xff]
    %v326 = vld [vmem:[#allocation2 + $0x978] sm:$0xff]
    %v327 = vld [vmem:[#allocation2 + $0x980] sm:$0xff]
    %v328 = vld [vmem:[#allocation2 + $0x988] sm:$0xff]
    %v329 = vld [vmem:[#allocation2 + $0x990] sm:$0xff]
    %v330 = vld [vmem:[#allocation2 + $0x998] sm:$0xff]
    %v331 = vld [vmem:[#allocation2 + $0x9a0] sm:$0xff]
    %v332 = vld [vmem:[#allocation2 + $0x9a8] sm:$0xff]
    %v333 = vld [vmem:[#allocation2 + $0x9b0] sm:$0xff]
    %v334 = vld [vmem:[#allocation2 + $0x9b8] sm:$0xff]
    %v335 = vld [vmem:[#allocation2 + $0x9c0] sm:$0xff]
    %v336 = vld [vmem:[#allocation2 + $0x9c8] sm:$0xff]
    %v337 = vld [vmem:[#allocation2 + $0x9d0] sm:$0xff]
    %v338 = vld [vmem:[#allocation2 + $0x9d8] sm:$0xff]
    %v339 = vld [vmem:[#allocation2 + $0x9e0] sm:$0xff]
    %v340 = vld [vmem:[#allocation2 + $0x9e8] sm:$0xff]
    %v341 = vld [vmem:[#allocation2 + $0x9f0] sm:$0xff]
    %v342 = vld [vmem:[#allocation2 + $0x9f8] sm:$0xff]
    %v343 = vld [vmem:[#allocation2 + $0xa00] sm:$0xff]
    %v344 = vld [vmem:[#allocation2 + $0xa08] sm:$0xff]
    %v345 = vld [vmem:[#allocation2 + $0xa10] sm:$0xff]
    %v346 = vld [vmem:[#allocation2 + $0xa18] sm:$0xff]
    %v347 = vld [vmem:[#allocation2 + $0xa20] sm:$0xff]
    %v348 = vld [vmem:[#allocation2 + $0xa28] sm:$0xff]
    %v349 = vld [vmem:[#allocation2 + $0xa30] sm:$0xff]
    %v350 = vld [vmem:[#allocation2 + $0xa38] sm:$0xff]
    %v351 = vld [vmem:[#allocation2 + $0xa40] sm:$0xff]
    %v352 = vld [vmem:[#allocation2 + $0xa48] sm:$0xff]
    %v353 = vld [vmem:[#allocation2 + $0xa50] sm:$0xff]
    %v354 = vld [vmem:[#allocation2 + $0xa58] sm:$0xff]
    %v355 = vld [vmem:[#allocation2 + $0xa60] sm:$0xff]
    %v356 = vld [vmem:[#allocation2 + $0xa68] sm:$0xff]
    %v357 = vld [vmem:[#allocation2 + $0xa70] sm:$0xff]
    %v358 = vld [vmem:[#allocation2 + $0xa78] sm:$0xff]
    %v359 = vld [vmem:[#allocation2 + $0xa80] sm:$0xff]
    %v360 = vld [vmem:[#allocation2 + $0xa88] sm:$0xff]
    %v361 = vld [vmem:[#allocation2 + $0xa90] sm:$0xff]
    %v362 = vld [vmem:[#allocation2 + $0xa98] sm:$0xff]
    %v363 = vld [vmem:[#allocation2 + $0xaa0] sm:$0xff]
    %v364 = vld [vmem:[#allocation2 + $0xaa8] sm:$0xff]
    %v365 = vld [vmem:[#allocation2 + $0xab0] sm:$0xff]
    %v366 = vld [vmem:[#allocation2 + $0xab8] sm:$0xff]
    %v367 = vld [vmem:[#allocation2 + $0xac0] sm:$0xff]
    %v368 = vld [vmem:[#allocation2 + $0xac8] sm:$0xff]
    %v369 = vld [vmem:[#allocation2 + $0xad0] sm:$0xff]
    %v370 = vld [vmem:[#allocation2 + $0xad8] sm:$0xff]
    %v371 = vld [vmem:[#allocation2 + $0xae0] sm:$0xff]
    %v372 = vld [vmem:[#allocation2 + $0xae8] sm:$0xff]
    %v373 = vld [vmem:[#allocation2 + $0xaf0] sm:$0xff]
    %v374 = vld [vmem:[#allocation2 + $0xaf8] sm:$0xff]
    %v375 = vld [vmem:[#allocation2 + $0xb00] sm:$0xff]
    %v376 = vld [vmem:[#allocation2 + $0xb08] sm:$0xff]
    %v377 = vld [vmem:[#allocation2 + $0xb10] sm:$0xff]
    %v378 = vld [vmem:[#allocation2 + $0xb18] sm:$0xff]
    %v379 = vld [vmem:[#allocation2 + $0xb20] sm:$0xff]
    %v380 = vld [vmem:[#allocation2 + $0xb28] sm:$0xff]
    %v381 = vld [vmem:[#allocation2 + $0xb30] sm:$0xff]
    %v382 = vld [vmem:[#allocation2 + $0xb38] sm:$0xff]
    %v383 = vld [vmem:[#allocation2 + $0xb40] sm:$0xff]
    %v384 = vld [vmem:[#allocation2 + $0xb48] sm:$0xff]
    %v385 = vld [vmem:[#allocation2 + $0xb50] sm:$0xff]
    %v386 = vld [vmem:[#allocation2 + $0xb58] sm:$0xff]
    %v387 = vld [vmem:[#allocation2 + $0xb60] sm:$0xff]
    %v388 = vld [vmem:[#allocation2 + $0xb68] sm:$0xff]
    %v389 = vld [vmem:[#allocation2 + $0xb70] sm:$0xff]
    %v390 = vld [vmem:[#allocation2 + $0xb78] sm:$0xff]
    %v391 = vld [vmem:[#allocation2 + $0xb80] sm:$0xff]
    %v392 = vld [vmem:[#allocation2 + $0xb88] sm:$0xff]
    %v393 = vld [vmem:[#allocation2 + $0xb90] sm:$0xff]
    %v394 = vld [vmem:[#allocation2 + $0xb98] sm:$0xff]
    %v395 = vld [vmem:[#allocation2 + $0xba0] sm:$0xff]
    %v396 = vld [vmem:[#allocation2 + $0xba8] sm:$0xff]
    %v397 = vld [vmem:[#allocation2 + $0xbb0] sm:$0xff]
    %v398 = vld [vmem:[#allocation2 + $0xbb8] sm:$0xff]
    %v399 = vld [vmem:[#allocation2 + $0xbc0] sm:$0xff]
    %v400 = vld [vmem:[#allocation2 + $0xbc8] sm:$0xff]
    %v401 = vld [vmem:[#allocation2 + $0xbd0] sm:$0xff]
    %v402 = vld [vmem:[#allocation2 + $0xbd8] sm:$0xff]
    %v403 = vld [vmem:[#allocation2 + $0xbe0] sm:$0xff]
    %v404 = vld [vmem:[#allocation2 + $0xbe8] sm:$0xff]
    %v405 = vld [vmem:[#allocation2 + $0xbf0] sm:$0xff]
    %v406 = vld [vmem:[#allocation2 + $0xbf8] sm:$0xff]
    %v407 = vld [vmem:[#allocation2 + $0xc00] sm:$0xff]
    %v408 = vld [vmem:[#allocation2 + $0xc08] sm:$0xff]
    %v409 = vld [vmem:[#allocation2 + $0xc10] sm:$0xff]
    %v410 = vld [vmem:[#allocation2 + $0xc18] sm:$0xff]
    %v411 = vld [vmem:[#allocation2 + $0xc20] sm:$0xff]
    %v412 = vld [vmem:[#allocation2 + $0xc28] sm:$0xff]
    %v413 = vld [vmem:[#allocation2 + $0xc30] sm:$0xff]
    %v414 = vld [vmem:[#allocation2 + $0xc38] sm:$0xff]
    %v415 = vld [vmem:[#allocation2 + $0xc40] sm:$0xff]
    %v416 = vld [vmem:[#allocation2 + $0xc48] sm:$0xff]
    %v417 = vld [vmem:[#allocation2 + $0xc50] sm:$0xff]
    %v418 = vld [vmem:[#allocation2 + $0xc58] sm:$0xff]
    %v419 = vld [vmem:[#allocation2 + $0xc60] sm:$0xff]
    %v420 = vld [vmem:[#allocation2 + $0xc68] sm:$0xff]
    %v421 = vld [vmem:[#allocation2 + $0xc70] sm:$0xff]
    %v422 = vld [vmem:[#allocation2 + $0xc78] sm:$0xff]
    %v423 = vld [vmem:[#allocation2 + $0xc80] sm:$0xff]
    %v424 = vld [vmem:[#allocation2 + $0xc88] sm:$0xff]
    %v425 = vld [vmem:[#allocation2 + $0xc90] sm:$0xff]
    %v426 = vld [vmem:[#allocation2 + $0xc98] sm:$0xff]
    %v427 = vld [vmem:[#allocation2 + $0xca0] sm:$0xff]
    %v428 = vld [vmem:[#allocation2 + $0xca8] sm:$0xff]
    %v429 = vld [vmem:[#allocation2 + $0xcb0] sm:$0xff]
    %v430 = vld [vmem:[#allocation2 + $0xcb8] sm:$0xff]
    %v431 = vld [vmem:[#allocation2 + $0xcc0] sm:$0xff]
    %v432 = vld [vmem:[#allocation2 + $0xcc8] sm:$0xff]
    %v433 = vld [vmem:[#allocation2 + $0xcd0] sm:$0xff]
    %v434 = vld [vmem:[#allocation2 + $0xcd8] sm:$0xff]
    %v435 = vld [vmem:[#allocation2 + $0xce0] sm:$0xff]
    %v436 = vld [vmem:[#allocation2 + $0xce8] sm:$0xff]
    %v437 = vld [vmem:[#allocation2 + $0xcf0] sm:$0xff]
    %v438 = vld [vmem:[#allocation2 + $0xcf8] sm:$0xff]
    %v439 = vld [vmem:[#allocation2 + $0xd00] sm:$0xff]
    %v440 = vld [vmem:[#allocation2 + $0xd08] sm:$0xff]
    %v441 = vld [vmem:[#allocation2 + $0xd10] sm:$0xff]
    %v442 = vld [vmem:[#allocation2 + $0xd18] sm:$0xff]
    %v443 = vld [vmem:[#allocation2 + $0xd20] sm:$0xff]
    %v444 = vld [vmem:[#allocation2 + $0xd28] sm:$0xff]
    %v445 = vld [vmem:[#allocation2 + $0xd30] sm:$0xff]
    %v446 = vld [vmem:[#allocation2 + $0xd38] sm:$0xff]
    %v447 = vld [vmem:[#allocation2 + $0xd40] sm:$0xff]
    %v448 = vld [vmem:[#allocation2 + $0xd48] sm:$0xff]
    %v449 = vld [vmem:[#allocation2 + $0xd50] sm:$0xff]
    %v450 = vld [vmem:[#allocation2 + $0xd58] sm:$0xff]
    %v451 = vld [vmem:[#allocation2 + $0xd60] sm:$0xff]
    %v452 = vld [vmem:[#allocation2 + $0xd68] sm:$0xff]
    %v453 = vld [vmem:[#allocation2 + $0xd70] sm:$0xff]
    %v454 = vld [vmem:[#allocation2 + $0xd78] sm:$0xff]
    %v455 = vld [vmem:[#allocation2 + $0xd80] sm:$0xff]
    %v456 = vld [vmem:[#allocation2 + $0xd88] sm:$0xff]
    %v457 = vld [vmem:[#allocation2 + $0xd90] sm:$0xff]
    %v458 = vld [vmem:[#allocation2 + $0xd98] sm:$0xff]
    %v459 = vld [vmem:[#allocation2 + $0xda0] sm:$0xff]
    %v460 = vld [vmem:[#allocation2 + $0xda8] sm:$0xff]
    %v461 = vld [vmem:[#allocation2 + $0xdb0] sm:$0xff]
    %v462 = vld [vmem:[#allocation2 + $0xdb8] sm:$0xff]
    %v463 = vld [vmem:[#allocation2 + $0xdc0] sm:$0xff]
    %v464 = vld [vmem:[#allocation2 + $0xdc8] sm:$0xff]
    %v465 = vld [vmem:[#allocation2 + $0xdd0] sm:$0xff]
    %v466 = vld [vmem:[#allocation2 + $0xdd8] sm:$0xff]
    %v467 = vld [vmem:[#allocation2 + $0xde0] sm:$0xff]
    %v468 = vld [vmem:[#allocation2 + $0xde8] sm:$0xff]
    %v469 = vld [vmem:[#allocation2 + $0xdf0] sm:$0xff]
    %v470 = vld [vmem:[#allocation2 + $0xdf8] sm:$0xff]
    %v471 = vld [vmem:[#allocation2 + $0xe00] sm:$0xff]
    %v472 = vld [vmem:[#allocation2 + $0xe08] sm:$0xff]
    %v473 = vld [vmem:[#allocation2 + $0xe10] sm:$0xff]
    %v474 = vld [vmem:[#allocation2 + $0xe18] sm:$0xff]
    %v475 = vld [vmem:[#allocation2 + $0xe20] sm:$0xff]
    %v476 = vld [vmem:[#allocation2 + $0xe28] sm:$0xff]
    %v477 = vld [vmem:[#allocation2 + $0xe30] sm:$0xff]
    %v478 = vld [vmem:[#allocation2 + $0xe38] sm:$0xff]
    %v479 = vld [vmem:[#allocation2 + $0xe40] sm:$0xff]
    %v480 = vld [vmem:[#allocation2 + $0xe48] sm:$0xff]
    %v481 = vld [vmem:[#allocation2 + $0xe50] sm:$0xff]
    %v482 = vld [vmem:[#allocation2 + $0xe58] sm:$0xff]
    %v483 = vld [vmem:[#allocation2 + $0xe60] sm:$0xff]
    %v484 = vld [vmem:[#allocation2 + $0xe68] sm:$0xff]
    %v485 = vld [vmem:[#allocation2 + $0xe70] sm:$0xff]
    %v486 = vld [vmem:[#allocation2 + $0xe78] sm:$0xff]
    %v487 = vld [vmem:[#allocation2 + $0xe80] sm:$0xff]
    %v488 = vld [vmem:[#allocation2 + $0xe88] sm:$0xff]
    %v489 = vld [vmem:[#allocation2 + $0xe90] sm:$0xff]
    %v490 = vld [vmem:[#allocation2 + $0xe98] sm:$0xff]
    %v491 = vld [vmem:[#allocation2 + $0xea0] sm:$0xff]
    %v492 = vld [vmem:[#allocation2 + $0xea8] sm:$0xff]
    %v493 = vld [vmem:[#allocation2 + $0xeb0] sm:$0xff]
    %v494 = vld [vmem:[#allocation2 + $0xeb8] sm:$0xff]
    %v495 = vld [vmem:[#allocation2 + $0xec0] sm:$0xff]
    %v496 = vld [vmem:[#allocation2 + $0xec8] sm:$0xff]
    %v497 = vld [vmem:[#allocation2 + $0xed0] sm:$0xff]
    %v498 = vld [vmem:[#allocation2 + $0xed8] sm:$0xff]
    %v499 = vld [vmem:[#allocation2 + $0xee0] sm:$0xff]
    %v500 = vld [vmem:[#allocation2 + $0xee8] sm:$0xff]
    %v501 = vld [vmem:[#allocation2 + $0xef0] sm:$0xff]
    %v502 = vld [vmem:[#allocation2 + $0xef8] sm:$0xff]
    %v503 = vld [vmem:[#allocation2 + $0xf00] sm:$0xff]
    %v504 = vld [vmem:[#allocation2 + $0xf08] sm:$0xff]
    %v505 = vld [vmem:[#allocation2 + $0xf10] sm:$0xff]
    %v506 = vld [vmem:[#allocation2 + $0xf18] sm:$0xff]
    %v507 = vld [vmem:[#allocation2 + $0xf20] sm:$0xff]
    %v508 = vld [vmem:[#allocation2 + $0xf28] sm:$0xff]
    %v509 = vld [vmem:[#allocation2 + $0xf30] sm:$0xff]
    %v510 = vld [vmem:[#allocation2 + $0xf38] sm:$0xff]
    %v511 = vld [vmem:[#allocation2 + $0xf40] sm:$0xff]
    %v512 = vld [vmem:[#allocation2 + $0xf48] sm:$0xff]
    %v513 = vld [vmem:[#allocation2 + $0xf50] sm:$0xff]
    %v514 = vld [vmem:[#allocation2 + $0xf58] sm:$0xff]
    %v515 = vld [vmem:[#allocation2 + $0xf60] sm:$0xff]
    %v516 = vld [vmem:[#allocation2 + $0xf68] sm:$0xff]
    %v517 = vld [vmem:[#allocation2 + $0xf70] sm:$0xff]
    %v518 = vld [vmem:[#allocation2 + $0xf78] sm:$0xff]
    %v519 = vld [vmem:[#allocation2 + $0xf80] sm:$0xff]
    %v520 = vld [vmem:[#allocation2 + $0xf88] sm:$0xff]
    %v521 = vld [vmem:[#allocation2 + $0xf90] sm:$0xff]
    %v522 = vld [vmem:[#allocation2 + $0xf98] sm:$0xff]
    %v523 = vld [vmem:[#allocation2 + $0xfa0] sm:$0xff]
    %v524 = vld [vmem:[#allocation2 + $0xfa8] sm:$0xff]
    %v525 = vld [vmem:[#allocation2 + $0xfb0] sm:$0xff]
    %v526 = vld [vmem:[#allocation2 + $0xfb8] sm:$0xff]
    %v527 = vld [vmem:[#allocation2 + $0xfc0] sm:$0xff]
    %v528 = vld [vmem:[#allocation2 + $0xfc8] sm:$0xff]
    %v529 = vld [vmem:[#allocation2 + $0xfd0] sm:$0xff]
    %v530 = vld [vmem:[#allocation2 + $0xfd8] sm:$0xff]
    %v531 = vld [vmem:[#allocation2 + $0xfe0] sm:$0xff]
    %v532 = vld [vmem:[#allocation2 + $0xfe8] sm:$0xff]
    %v533 = vld [vmem:[#allocation2 + $0xff0] sm:$0xff]
    %v534 = vld [vmem:[#allocation2 + $0xff8] sm:$0xff]
    %v535 = vmax.f32 %v23, 0.0
    %v536 = vmax.f32 %v24, 0.0
    %v537 = vmax.f32 %v25, 0.0
    %v538 = vmax.f32 %v26, 0.0
    %v539 = vmax.f32 %v27, 0.0
    %v540 = vmax.f32 %v28, 0.0
    %v541 = vmax.f32 %v29, 0.0
    %v542 = vmax.f32 %v30, 0.0
    %v543 = vmax.f32 %v31, 0.0
    %v544 = vmax.f32 %v32, 0.0
    %v545 = vmax.f32 %v33, 0.0
    %v546 = vmax.f32 %v34, 0.0
    %v547 = vmax.f32 %v35, 0.0
    %v548 = vmax.f32 %v36, 0.0
    %v549 = vmax.f32 %v37, 0.0
    %v550 = vmax.f32 %v38, 0.0
    %v551 = vmax.f32 %v39, 0.0
    %v552 = vmax.f32 %v40, 0.0
    %v553 = vmax.f32 %v41, 0.0
    %v554 = vmax.f32 %v42, 0.0
    %v555 = vmax.f32 %v43, 0.0
    %v556 = vmax.f32 %v44, 0.0
    %v557 = vmax.f32 %v45, 0.0
    %v558 = vmax.f32 %v46, 0.0
    %v559 = vmax.f32 %v47, 0.0
    %v560 = vmax.f32 %v48, 0.0
    %v561 = vmax.f32 %v49, 0.0
    %v562 = vmax.f32 %v50, 0.0
    %v563 = vmax.f32 %v51, 0.0
    %v564 = vmax.f32 %v52, 0.0
    %v565 = vmax.f32 %v53, 0.0
    %v566 = vmax.f32 %v54, 0.0
    %v567 = vmax.f32 %v55, 0.0
    %v568 = vmax.f32 %v56, 0.0
    %v569 = vmax.f32 %v57, 0.0
    %v570 = vmax.f32 %v58, 0.0
    %v571 = vmax.f32 %v59, 0.0
    %v572 = vmax.f32 %v60, 0.0
    %v573 = vmax.f32 %v61, 0.0
    %v574 = vmax.f32 %v62, 0.0
    %v575 = vmax.f32 %v63, 0.0
    %v576 = vmax.f32 %v64, 0.0
    %v577 = vmax.f32 %v65, 0.0
    %v578 = vmax.f32 %v66, 0.0
    %v579 = vmax.f32 %v67, 0.0
    %v580 = vmax.f32 %v68, 0.0
    %v581 = vmax.f32 %v69, 0.0
    %v582 = vmax.f32 %v70, 0.0
    %v583 = vmax.f32 %v71, 0.0
    %v584 = vmax.f32 %v72, 0.0
    %v585 = vmax.f32 %v73, 0.0
    %v586 = vmax.f32 %v74, 0.0
    %v587 = vmax.f32 %v75, 0.0
    %v588 = vmax.f32 %v76, 0.0
    %v589 = vmax.f32 %v77, 0.0
    %v590 = vmax.f32 %v78, 0.0
    %v591 = vmax.f32 %v79, 0.0
    %v592 = vmax.f32 %v80, 0.0
    %v593 = vmax.f32 %v81, 0.0
    %v594 = vmax.f32 %v82, 0.0
    %v595 = vmax.f32 %v83, 0.0
    %v596 = vmax.f32 %v84, 0.0
    %v597 = vmax.f32 %v85, 0.0
    %v598 = vmax.f32 %v86, 0.0
    %v599 = vmax.f32 %v87, 0.0
    %v600 = vmax.f32 %v88, 0.0
    %v601 = vmax.f32 %v89, 0.0
    %v602 = vmax.f32 %v90, 0.0
    %v603 = vmax.f32 %v91, 0.0
    %v604 = vmax.f32 %v92, 0.0
    %v605 = vmax.f32 %v93, 0.0
    %v606 = vmax.f32 %v94, 0.0
    %v607 = vmax.f32 %v95, 0.0
    %v608 = vmax.f32 %v96, 0.0
    %v609 = vmax.f32 %v97, 0.0
    %v610 = vmax.f32 %v98, 0.0
    %v611 = vmax.f32 %v99, 0.0
    %v612 = vmax.f32 %v100, 0.0
    %v613 = vmax.f32 %v101, 0.0
    %v614 = vmax.f32 %v102, 0.0
    %v615 = vmax.f32 %v103, 0.0
    %v616 = vmax.f32 %v104, 0.0
    %v617 = vmax.f32 %v105, 0.0
    %v618 = vmax.f32 %v106, 0.0
    %v619 = vmax.f32 %v107, 0.0
    %v620 = vmax.f32 %v108, 0.0
    %v621 = vmax.f32 %v109, 0.0
    %v622 = vmax.f32 %v110, 0.0
    %v623 = vmax.f32 %v111, 0.0
    %v624 = vmax.f32 %v112, 0.0
    %v625 = vmax.f32 %v113, 0.0
    %v626 = vmax.f32 %v114, 0.0
    %v627 = vmax.f32 %v115, 0.0
    %v628 = vmax.f32 %v116, 0.0
    %v629 = vmax.f32 %v117, 0.0
    %v630 = vmax.f32 %v118, 0.0
    %v631 = vmax.f32 %v119, 0.0
    %v632 = vmax.f32 %v120, 0.0
    %v633 = vmax.f32 %v121, 0.0
    %v634 = vmax.f32 %v122, 0.0
    %v635 = vmax.f32 %v123, 0.0
    %v636 = vmax.f32 %v124, 0.0
    %v637 = vmax.f32 %v125, 0.0
    %v638 = vmax.f32 %v126, 0.0
    %v639 = vmax.f32 %v127, 0.0
    %v640 = vmax.f32 %v128, 0.0
    %v641 = vmax.f32 %v129, 0.0
    %v642 = vmax.f32 %v130, 0.0
    %v643 = vmax.f32 %v131, 0.0
    %v644 = vmax.f32 %v132, 0.0
    %v645 = vmax.f32 %v133, 0.0
    %v646 = vmax.f32 %v134, 0.0
    %v647 = vmax.f32 %v135, 0.0
    %v648 = vmax.f32 %v136, 0.0
    %v649 = vmax.f32 %v137, 0.0
    %v650 = vmax.f32 %v138, 0.0
    %v651 = vmax.f32 %v139, 0.0
    %v652 = vmax.f32 %v140, 0.0
    %v653 = vmax.f32 %v141, 0.0
    %v654 = vmax.f32 %v142, 0.0
    %v655 = vmax.f32 %v143, 0.0
    %v656 = vmax.f32 %v144, 0.0
    %v657 = vmax.f32 %v145, 0.0
    %v658 = vmax.f32 %v146, 0.0
    %v659 = vmax.f32 %v147, 0.0
    %v660 = vmax.f32 %v148, 0.0
    %v661 = vmax.f32 %v149, 0.0
    %v662 = vmax.f32 %v150, 0.0
    %v663 = vmax.f32 %v151, 0.0
    %v664 = vmax.f32 %v152, 0.0
    %v665 = vmax.f32 %v153, 0.0
    %v666 = vmax.f32 %v154, 0.0
    %v667 = vmax.f32 %v155, 0.0
    %v668 = vmax.f32 %v156, 0.0
    %v669 = vmax.f32 %v157, 0.0
    %v670 = vmax.f32 %v158, 0.0
    %v671 = vmax.f32 %v159, 0.0
    %v672 = vmax.f32 %v160, 0.0
    %v673 = vmax.f32 %v161, 0.0
    %v674 = vmax.f32 %v162, 0.0
    %v675 = vmax.f32 %v163, 0.0
    %v676 = vmax.f32 %v164, 0.0
    %v677 = vmax.f32 %v165, 0.0
    %v678 = vmax.f32 %v166, 0.0
    %v679 = vmax.f32 %v167, 0.0
    %v680 = vmax.f32 %v168, 0.0
    %v681 = vmax.f32 %v169, 0.0
    %v682 = vmax.f32 %v170, 0.0
    %v683 = vmax.f32 %v171, 0.0
    %v684 = vmax.f32 %v172, 0.0
    %v685 = vmax.f32 %v173, 0.0
    %v686 = vmax.f32 %v174, 0.0
    %v687 = vmax.f32 %v175, 0.0
    %v688 = vmax.f32 %v176, 0.0
    %v689 = vmax.f32 %v177, 0.0
    %v690 = vmax.f32 %v178, 0.0
    %v691 = vmax.f32 %v179, 0.0
    %v692 = vmax.f32 %v180, 0.0
    %v693 = vmax.f32 %v181, 0.0
    %v694 = vmax.f32 %v182, 0.0
    %v695 = vmax.f32 %v183, 0.0
    %v696 = vmax.f32 %v184, 0.0
    %v697 = vmax.f32 %v185, 0.0
    %v698 = vmax.f32 %v186, 0.0
    %v699 = vmax.f32 %v187, 0.0
    %v700 = vmax.f32 %v188, 0.0
    %v701 = vmax.f32 %v189, 0.0
    %v702 = vmax.f32 %v190, 0.0
    %v703 = vmax.f32 %v191, 0.0
    %v704 = vmax.f32 %v192, 0.0
    %v705 = vmax.f32 %v193, 0.0
    %v706 = vmax.f32 %v194, 0.0
    %v707 = vmax.f32 %v195, 0.0
    %v708 = vmax.f32 %v196, 0.0
    %v709 = vmax.f32 %v197, 0.0
    %v710 = vmax.f32 %v198, 0.0
    %v711 = vmax.f32 %v199, 0.0
    %v712 = vmax.f32 %v200, 0.0
    %v713 = vmax.f32 %v201, 0.0
    %v714 = vmax.f32 %v202, 0.0
    %v715 = vmax.f32 %v203, 0.0
    %v716 = vmax.f32 %v204, 0.0
    %v717 = vmax.f32 %v205, 0.0
    %v718 = vmax.f32 %v206, 0.0
    %v719 = vmax.f32 %v207, 0.0
    %v720 = vmax.f32 %v208, 0.0
    %v721 = vmax.f32 %v209, 0.0
    %v722 = vmax.f32 %v210, 0.0
    %v723 = vmax.f32 %v211, 0.0
    %v724 = vmax.f32 %v212, 0.0
    %v725 = vmax.f32 %v213, 0.0
    %v726 = vmax.f32 %v214, 0.0
    %v727 = vmax.f32 %v215, 0.0
    %v728 = vmax.f32 %v216, 0.0
    %v729 = vmax.f32 %v217, 0.0
    %v730 = vmax.f32 %v218, 0.0
    %v731 = vmax.f32 %v219, 0.0
    %v732 = vmax.f32 %v220, 0.0
    %v733 = vmax.f32 %v221, 0.0
    %v734 = vmax.f32 %v222, 0.0
    %v735 = vmax.f32 %v223, 0.0
    %v736 = vmax.f32 %v224, 0.0
    %v737 = vmax.f32 %v225, 0.0
    %v738 = vmax.f32 %v226, 0.0
    %v739 = vmax.f32 %v227, 0.0
    %v740 = vmax.f32 %v228, 0.0
    %v741 = vmax.f32 %v229, 0.0
    %v742 = vmax.f32 %v230, 0.0
    %v743 = vmax.f32 %v231, 0.0
    %v744 = vmax.f32 %v232, 0.0
    %v745 = vmax.f32 %v233, 0.0
    %v746 = vmax.f32 %v234, 0.0
    %v747 = vmax.f32 %v235, 0.0
    %v748 = vmax.f32 %v236, 0.0
    %v749 = vmax.f32 %v237, 0.0
    %v750 = vmax.f32 %v238, 0.0
    %v751 = vmax.f32 %v239, 0.0
    %v752 = vmax.f32 %v240, 0.0
    %v753 = vmax.f32 %v241, 0.0
    %v754 = vmax.f32 %v242, 0.0
    %v755 = vmax.f32 %v243, 0.0
    %v756 = vmax.f32 %v244, 0.0
    %v757 = vmax.f32 %v245, 0.0
    %v758 = vmax.f32 %v246, 0.0
    %v759 = vmax.f32 %v247, 0.0
    %v760 = vmax.f32 %v248, 0.0
    %v761 = vmax.f32 %v249, 0.0
    %v762 = vmax.f32 %v250, 0.0
    %v763 = vmax.f32 %v251, 0.0
    %v764 = vmax.f32 %v252, 0.0
    %v765 = vmax.f32 %v253, 0.0
    %v766 = vmax.f32 %v254, 0.0
    %v767 = vmax.f32 %v255, 0.0
    %v768 = vmax.f32 %v256, 0.0
    %v769 = vmax.f32 %v257, 0.0
    %v770 = vmax.f32 %v258, 0.0
    %v771 = vmax.f32 %v259, 0.0
    %v772 = vmax.f32 %v260, 0.0
    %v773 = vmax.f32 %v261, 0.0
    %v774 = vmax.f32 %v262, 0.0
    %v775 = vmax.f32 %v263, 0.0
    %v776 = vmax.f32 %v264, 0.0
    %v777 = vmax.f32 %v265, 0.0
    %v778 = vmax.f32 %v266, 0.0
    %v779 = vmax.f32 %v267, 0.0
    %v780 = vmax.f32 %v268, 0.0
    %v781 = vmax.f32 %v269, 0.0
    %v782 = vmax.f32 %v270, 0.0
    %v783 = vmax.f32 %v271, 0.0
    %v784 = vmax.f32 %v272, 0.0
    %v785 = vmax.f32 %v273, 0.0
    %v786 = vmax.f32 %v274, 0.0
    %v787 = vmax.f32 %v275, 0.0
    %v788 = vmax.f32 %v276, 0.0
    %v789 = vmax.f32 %v277, 0.0
    %v790 = vmax.f32 %v278, 0.0
    %v791 = vmax.f32 %v279, 0.0
    %v792 = vmax.f32 %v280, 0.0
    %v793 = vmax.f32 %v281, 0.0
    %v794 = vmax.f32 %v282, 0.0
    %v795 = vmax.f32 %v283, 0.0
    %v796 = vmax.f32 %v284, 0.0
    %v797 = vmax.f32 %v285, 0.0
    %v798 = vmax.f32 %v286, 0.0
    %v799 = vmax.f32 %v287, 0.0
    %v800 = vmax.f32 %v288, 0.0
    %v801 = vmax.f32 %v289, 0.0
    %v802 = vmax.f32 %v290, 0.0
    %v803 = vmax.f32 %v291, 0.0
    %v804 = vmax.f32 %v292, 0.0
    %v805 = vmax.f32 %v293, 0.0
    %v806 = vmax.f32 %v294, 0.0
    %v807 = vmax.f32 %v295, 0.0
    %v808 = vmax.f32 %v296, 0.0
    %v809 = vmax.f32 %v297, 0.0
    %v810 = vmax.f32 %v298, 0.0
    %v811 = vmax.f32 %v299, 0.0
    %v812 = vmax.f32 %v300, 0.0
    %v813 = vmax.f32 %v301, 0.0
    %v814 = vmax.f32 %v302, 0.0
    %v815 = vmax.f32 %v303, 0.0
    %v816 = vmax.f32 %v304, 0.0
    %v817 = vmax.f32 %v305, 0.0
    %v818 = vmax.f32 %v306, 0.0
    %v819 = vmax.f32 %v307, 0.0
    %v820 = vmax.f32 %v308, 0.0
    %v821 = vmax.f32 %v309, 0.0
    %v822 = vmax.f32 %v310, 0.0
    %v823 = vmax.f32 %v311, 0.0
    %v824 = vmax.f32 %v312, 0.0
    %v825 = vmax.f32 %v313, 0.0
    %v826 = vmax.f32 %v314, 0.0
    %v827 = vmax.f32 %v315, 0.0
    %v828 = vmax.f32 %v316, 0.0
    %v829 = vmax.f32 %v317, 0.0
    %v830 = vmax.f32 %v318, 0.0
    %v831 = vmax.f32 %v319, 0.0
    %v832 = vmax.f32 %v320, 0.0
    %v833 = vmax.f32 %v321, 0.0
    %v834 = vmax.f32 %v322, 0.0
    %v835 = vmax.f32 %v323, 0.0
    %v836 = vmax.f32 %v324, 0.0
    %v837 = vmax.f32 %v325, 0.0
    %v838 = vmax.f32 %v326, 0.0
    %v839 = vmax.f32 %v327, 0.0
    %v840 = vmax.f32 %v328, 0.0
    %v841 = vmax.f32 %v329, 0.0
    %v842 = vmax.f32 %v330, 0.0
    %v843 = vmax.f32 %v331, 0.0
    %v844 = vmax.f32 %v332, 0.0
    %v845 = vmax.f32 %v333, 0.0
    %v846 = vmax.f32 %v334, 0.0
    %v847 = vmax.f32 %v335, 0.0
    %v848 = vmax.f32 %v336, 0.0
    %v849 = vmax.f32 %v337, 0.0
    %v850 = vmax.f32 %v338, 0.0
    %v851 = vmax.f32 %v339, 0.0
    %v852 = vmax.f32 %v340, 0.0
    %v853 = vmax.f32 %v341, 0.0
    %v854 = vmax.f32 %v342, 0.0
    %v855 = vmax.f32 %v343, 0.0
    %v856 = vmax.f32 %v344, 0.0
    %v857 = vmax.f32 %v345, 0.0
    %v858 = vmax.f32 %v346, 0.0
    %v859 = vmax.f32 %v347, 0.0
    %v860 = vmax.f32 %v348, 0.0
    %v861 = vmax.f32 %v349, 0.0
    %v862 = vmax.f32 %v350, 0.0
    %v863 = vmax.f32 %v351, 0.0
    %v864 = vmax.f32 %v352, 0.0
    %v865 = vmax.f32 %v353, 0.0
    %v866 = vmax.f32 %v354, 0.0
    %v867 = vmax.f32 %v355, 0.0
    %v868 = vmax.f32 %v356, 0.0
    %v869 = vmax.f32 %v357, 0.0
    %v870 = vmax.f32 %v358, 0.0
    %v871 = vmax.f32 %v359, 0.0
    %v872 = vmax.f32 %v360, 0.0
    %v873 = vmax.f32 %v361, 0.0
    %v874 = vmax.f32 %v362, 0.0
    %v875 = vmax.f32 %v363, 0.0
    %v876 = vmax.f32 %v364, 0.0
    %v877 = vmax.f32 %v365, 0.0
    %v878 = vmax.f32 %v366, 0.0
    %v879 = vmax.f32 %v367, 0.0
    %v880 = vmax.f32 %v368, 0.0
    %v881 = vmax.f32 %v369, 0.0
    %v882 = vmax.f32 %v370, 0.0
    %v883 = vmax.f32 %v371, 0.0
    %v884 = vmax.f32 %v372, 0.0
    %v885 = vmax.f32 %v373, 0.0
    %v886 = vmax.f32 %v374, 0.0
    %v887 = vmax.f32 %v375, 0.0
    %v888 = vmax.f32 %v376, 0.0
    %v889 = vmax.f32 %v377, 0.0
    %v890 = vmax.f32 %v378, 0.0
    %v891 = vmax.f32 %v379, 0.0
    %v892 = vmax.f32 %v380, 0.0
    %v893 = vmax.f32 %v381, 0.0
    %v894 = vmax.f32 %v382, 0.0
    %v895 = vmax.f32 %v383, 0.0
    %v896 = vmax.f32 %v384, 0.0
    %v897 = vmax.f32 %v385, 0.0
    %v898 = vmax.f32 %v386, 0.0
    %v899 = vmax.f32 %v387, 0.0
    %v900 = vmax.f32 %v388, 0.0
    %v901 = vmax.f32 %v389, 0.0
    %v902 = vmax.f32 %v390, 0.0
    %v903 = vmax.f32 %v391, 0.0
    %v904 = vmax.f32 %v392, 0.0
    %v905 = vmax.f32 %v393, 0.0
    %v906 = vmax.f32 %v394, 0.0
    %v907 = vmax.f32 %v395, 0.0
    %v908 = vmax.f32 %v396, 0.0
    %v909 = vmax.f32 %v397, 0.0
    %v910 = vmax.f32 %v398, 0.0
    %v911 = vmax.f32 %v399, 0.0
    %v912 = vmax.f32 %v400, 0.0
    %v913 = vmax.f32 %v401, 0.0
    %v914 = vmax.f32 %v402, 0.0
    %v915 = vmax.f32 %v403, 0.0
    %v916 = vmax.f32 %v404, 0.0
    %v917 = vmax.f32 %v405, 0.0
    %v918 = vmax.f32 %v406, 0.0
    %v919 = vmax.f32 %v407, 0.0
    %v920 = vmax.f32 %v408, 0.0
    %v921 = vmax.f32 %v409, 0.0
    %v922 = vmax.f32 %v410, 0.0
    %v923 = vmax.f32 %v411, 0.0
    %v924 = vmax.f32 %v412, 0.0
    %v925 = vmax.f32 %v413, 0.0
    %v926 = vmax.f32 %v414, 0.0
    %v927 = vmax.f32 %v415, 0.0
    %v928 = vmax.f32 %v416, 0.0
    %v929 = vmax.f32 %v417, 0.0
    %v930 = vmax.f32 %v418, 0.0
    %v931 = vmax.f32 %v419, 0.0
    %v932 = vmax.f32 %v420, 0.0
    %v933 = vmax.f32 %v421, 0.0
    %v934 = vmax.f32 %v422, 0.0
    %v935 = vmax.f32 %v423, 0.0
    %v936 = vmax.f32 %v424, 0.0
    %v937 = vmax.f32 %v425, 0.0
    %v938 = vmax.f32 %v426, 0.0
    %v939 = vmax.f32 %v427, 0.0
    %v940 = vmax.f32 %v428, 0.0
    %v941 = vmax.f32 %v429, 0.0
    %v942 = vmax.f32 %v430, 0.0
    %v943 = vmax.f32 %v431, 0.0
    %v944 = vmax.f32 %v432, 0.0
    %v945 = vmax.f32 %v433, 0.0
    %v946 = vmax.f32 %v434, 0.0
    %v947 = vmax.f32 %v435, 0.0
    %v948 = vmax.f32 %v436, 0.0
    %v949 = vmax.f32 %v437, 0.0
    %v950 = vmax.f32 %v438, 0.0
    %v951 = vmax.f32 %v439, 0.0
    %v952 = vmax.f32 %v440, 0.0
    %v953 = vmax.f32 %v441, 0.0
    %v954 = vmax.f32 %v442, 0.0
    %v955 = vmax.f32 %v443, 0.0
    %v956 = vmax.f32 %v444, 0.0
    %v957 = vmax.f32 %v445, 0.0
    %v958 = vmax.f32 %v446, 0.0
    %v959 = vmax.f32 %v447, 0.0
    %v960 = vmax.f32 %v448, 0.0
    %v961 = vmax.f32 %v449, 0.0
    %v962 = vmax.f32 %v450, 0.0
    %v963 = vmax.f32 %v451, 0.0
    %v964 = vmax.f32 %v452, 0.0
    %v965 = vmax.f32 %v453, 0.0
    %v966 = vmax.f32 %v454, 0.0
    %v967 = vmax.f32 %v455, 0.0
    %v968 = vmax.f32 %v456, 0.0
    %v969 = vmax.f32 %v457, 0.0
    %v970 = vmax.f32 %v458, 0.0
    %v971 = vmax.f32 %v459, 0.0
    %v972 = vmax.f32 %v460, 0.0
    %v973 = vmax.f32 %v461, 0.0
    %v974 = vmax.f32 %v462, 0.0
    %v975 = vmax.f32 %v463, 0.0
    %v976 = vmax.f32 %v464, 0.0
    %v977 = vmax.f32 %v465, 0.0
    %v978 = vmax.f32 %v466, 0.0
    %v979 = vmax.f32 %v467, 0.0
    %v980 = vmax.f32 %v468, 0.0
    %v981 = vmax.f32 %v469, 0.0
    %v982 = vmax.f32 %v470, 0.0
    %v983 = vmax.f32 %v471, 0.0
    %v984 = vmax.f32 %v472, 0.0
    %v985 = vmax.f32 %v473, 0.0
    %v986 = vmax.f32 %v474, 0.0
    %v987 = vmax.f32 %v475, 0.0
    %v988 = vmax.f32 %v476, 0.0
    %v989 = vmax.f32 %v477, 0.0
    %v990 = vmax.f32 %v478, 0.0
    %v991 = vmax.f32 %v479, 0.0
    %v992 = vmax.f32 %v480, 0.0
    %v993 = vmax.f32 %v481, 0.0
    %v994 = vmax.f32 %v482, 0.0
    %v995 = vmax.f32 %v483, 0.0
    %v996 = vmax.f32 %v484, 0.0
    %v997 = vmax.f32 %v485, 0.0
    %v998 = vmax.f32 %v486, 0.0
    %v999 = vmax.f32 %v487, 0.0
    %v1000 = vmax.f32 %v488, 0.0
    %v1001 = vmax.f32 %v489, 0.0
    %v1002 = vmax.f32 %v490, 0.0
    %v1003 = vmax.f32 %v491, 0.0
    %v1004 = vmax.f32 %v492, 0.0
    %v1005 = vmax.f32 %v493, 0.0
    %v1006 = vmax.f32 %v494, 0.0
    %v1007 = vmax.f32 %v495, 0.0
    %v1008 = vmax.f32 %v496, 0.0
    %v1009 = vmax.f32 %v497, 0.0
    %v1010 = vmax.f32 %v498, 0.0
    %v1011 = vmax.f32 %v499, 0.0
    %v1012 = vmax.f32 %v500, 0.0
    %v1013 = vmax.f32 %v501, 0.0
    %v1014 = vmax.f32 %v502, 0.0
    %v1015 = vmax.f32 %v503, 0.0
    %v1016 = vmax.f32 %v504, 0.0
    %v1017 = vmax.f32 %v505, 0.0
    %v1018 = vmax.f32 %v506, 0.0
    %v1019 = vmax.f32 %v507, 0.0
    %v1020 = vmax.f32 %v508, 0.0
    %v1021 = vmax.f32 %v509, 0.0
    %v1022 = vmax.f32 %v510, 0.0
    %v1023 = vmax.f32 %v511, 0.0
    %v1024 = vmax.f32 %v512, 0.0
    %v1025 = vmax.f32 %v513, 0.0
    %v1026 = vmax.f32 %v514, 0.0
    %v1027 = vmax.f32 %v515, 0.0
    %v1028 = vmax.f32 %v516, 0.0
    %v1029 = vmax.f32 %v517, 0.0
    %v1030 = vmax.f32 %v518, 0.0
    %v1031 = vmax.f32 %v519, 0.0
    %v1032 = vmax.f32 %v520, 0.0
    %v1033 = vmax.f32 %v521, 0.0
    %v1034 = vmax.f32 %v522, 0.0
    %v1035 = vmax.f32 %v523, 0.0
    %v1036 = vmax.f32 %v524, 0.0
    %v1037 = vmax.f32 %v525, 0.0
    %v1038 = vmax.f32 %v526, 0.0
    %v1039 = vmax.f32 %v527, 0.0
    %v1040 = vmax.f32 %v528, 0.0
    %v1041 = vmax.f32 %v529, 0.0
    %v1042 = vmax.f32 %v530, 0.0
    %v1043 = vmax.f32 %v531, 0.0
    %v1044 = vmax.f32 %v532, 0.0
    %v1045 = vmax.f32 %v533, 0.0
    %v1046 = vmax.f32 %v534, 0.0
    %v1047 = vand.u32 2147483647, %v23
    %v1048 = vand.u32 2147483647, %v24
    %v1049 = vand.u32 2147483647, %v25
    %v1050 = vand.u32 2147483647, %v26
    %v1051 = vand.u32 2147483647, %v27
    %v1052 = vand.u32 2147483647, %v28
    %v1053 = vand.u32 2147483647, %v29
    %v1054 = vand.u32 2147483647, %v30
    %v1055 = vand.u32 2147483647, %v31
    %v1056 = vand.u32 2147483647, %v32
    %v1057 = vand.u32 2147483647, %v33
    %v1058 = vand.u32 2147483647, %v34
    %v1059 = vand.u32 2147483647, %v35
    %v1060 = vand.u32 2147483647, %v36
    %v1061 = vand.u32 2147483647, %v37
    %v1062 = vand.u32 2147483647, %v38
    %v1063 = vand.u32 2147483647, %v39
    %v1064 = vand.u32 2147483647, %v40
    %v1065 = vand.u32 2147483647, %v41
    %v1066 = vand.u32 2147483647, %v42
    %v1067 = vand.u32 2147483647, %v43
    %v1068 = vand.u32 2147483647, %v44
    %v1069 = vand.u32 2147483647, %v45
    %v1070 = vand.u32 2147483647, %v46
    %v1071 = vand.u32 2147483647, %v47
    %v1072 = vand.u32 2147483647, %v48
    %v1073 = vand.u32 2147483647, %v49
    %v1074 = vand.u32 2147483647, %v50
    %v1075 = vand.u32 2147483647, %v51
    %v1076 = vand.u32 2147483647, %v52
    %v1077 = vand.u32 2147483647, %v53
    %v1078 = vand.u32 2147483647, %v54
    %v1079 = vand.u32 2147483647, %v55
    %v1080 = vand.u32 2147483647, %v56
    %v1081 = vand.u32 2147483647, %v57
    %v1082 = vand.u32 2147483647, %v58
    %v1083 = vand.u32 2147483647, %v59
    %v1084 = vand.u32 2147483647, %v60
    %v1085 = vand.u32 2147483647, %v61
    %v1086 = vand.u32 2147483647, %v62
    %v1087 = vand.u32 2147483647, %v63
    %v1088 = vand.u32 2147483647, %v64
    %v1089 = vand.u32 2147483647, %v65
    %v1090 = vand.u32 2147483647, %v66
    %v1091 = vand.u32 2147483647, %v67
    %v1092 = vand.u32 2147483647, %v68
    %v1093 = vand.u32 2147483647, %v69
    %v1094 = vand.u32 2147483647, %v70
    %v1095 = vand.u32 2147483647, %v71
    %v1096 = vand.u32 2147483647, %v72
    %v1097 = vand.u32 2147483647, %v73
    %v1098 = vand.u32 2147483647, %v74
    %v1099 = vand.u32 2147483647, %v75
    %v1100 = vand.u32 2147483647, %v76
    %v1101 = vand.u32 2147483647, %v77
    %v1102 = vand.u32 2147483647, %v78
    %v1103 = vand.u32 2147483647, %v79
    %v1104 = vand.u32 2147483647, %v80
    %v1105 = vand.u32 2147483647, %v81
    %v1106 = vand.u32 2147483647, %v82
    %v1107 = vand.u32 2147483647, %v83
    %v1108 = vand.u32 2147483647, %v84
    %v1109 = vand.u32 2147483647, %v85
    %v1110 = vand.u32 2147483647, %v86
    %v1111 = vand.u32 2147483647, %v87
    %v1112 = vand.u32 2147483647, %v88
    %v1113 = vand.u32 2147483647, %v89
    %v1114 = vand.u32 2147483647, %v90
    %v1115 = vand.u32 2147483647, %v91
    %v1116 = vand.u32 2147483647, %v92
    %v1117 = vand.u32 2147483647, %v93
    %v1118 = vand.u32 2147483647, %v94
    %v1119 = vand.u32 2147483647, %v95
    %v1120 = vand.u32 2147483647, %v96
    %v1121 = vand.u32 2147483647, %v97
    %v1122 = vand.u32 2147483647, %v98
    %v1123 = vand.u32 2147483647, %v99
    %v1124 = vand.u32 2147483647, %v100
    %v1125 = vand.u32 2147483647, %v101
    %v1126 = vand.u32 2147483647, %v102
    %v1127 = vand.u32 2147483647, %v103
    %v1128 = vand.u32 2147483647, %v104
    %v1129 = vand.u32 2147483647, %v105
    %v1130 = vand.u32 2147483647, %v106
    %v1131 = vand.u32 2147483647, %v107
    %v1132 = vand.u32 2147483647, %v108
    %v1133 = vand.u32 2147483647, %v109
    %v1134 = vand.u32 2147483647, %v110
    %v1135 = vand.u32 2147483647, %v111
    %v1136 = vand.u32 2147483647, %v112
    %v1137 = vand.u32 2147483647, %v113
    %v1138 = vand.u32 2147483647, %v114
    %v1139 = vand.u32 2147483647, %v115
    %v1140 = vand.u32 2147483647, %v116
    %v1141 = vand.u32 2147483647, %v117
    %v1142 = vand.u32 2147483647, %v118
    %v1143 = vand.u32 2147483647, %v119
    %v1144 = vand.u32 2147483647, %v120
    %v1145 = vand.u32 2147483647, %v121
    %v1146 = vand.u32 2147483647, %v122
    %v1147 = vand.u32 2147483647, %v123
    %v1148 = vand.u32 2147483647, %v124
    %v1149 = vand.u32 2147483647, %v125
    %v1150 = vand.u32 2147483647, %v126
    %v1151 = vand.u32 2147483647, %v127
    %v1152 = vand.u32 2147483647, %v128
    %v1153 = vand.u32 2147483647, %v129
    %v1154 = vand.u32 2147483647, %v130
    %v1155 = vand.u32 2147483647, %v131
    %v1156 = vand.u32 2147483647, %v132
    %v1157 = vand.u32 2147483647, %v133
    %v1158 = vand.u32 2147483647, %v134
    %v1159 = vand.u32 2147483647, %v135
    %v1160 = vand.u32 2147483647, %v136
    %v1161 = vand.u32 2147483647, %v137
    %v1162 = vand.u32 2147483647, %v138
    %v1163 = vand.u32 2147483647, %v139
    %v1164 = vand.u32 2147483647, %v140
    %v1165 = vand.u32 2147483647, %v141
    %v1166 = vand.u32 2147483647, %v142
    %v1167 = vand.u32 2147483647, %v143
    %v1168 = vand.u32 2147483647, %v144
    %v1169 = vand.u32 2147483647, %v145
    %v1170 = vand.u32 2147483647, %v146
    %v1171 = vand.u32 2147483647, %v147
    %v1172 = vand.u32 2147483647, %v148
    %v1173 = vand.u32 2147483647, %v149
    %v1174 = vand.u32 2147483647, %v150
    %v1175 = vand.u32 2147483647, %v151
    %v1176 = vand.u32 2147483647, %v152
    %v1177 = vand.u32 2147483647, %v153
    %v1178 = vand.u32 2147483647, %v154
    %v1179 = vand.u32 2147483647, %v155
    %v1180 = vand.u32 2147483647, %v156
    %v1181 = vand.u32 2147483647, %v157
    %v1182 = vand.u32 2147483647, %v158
    %v1183 = vand.u32 2147483647, %v159
    %v1184 = vand.u32 2147483647, %v160
    %v1185 = vand.u32 2147483647, %v161
    %v1186 = vand.u32 2147483647, %v162
    %v1187 = vand.u32 2147483647, %v163
    %v1188 = vand.u32 2147483647, %v164
    %v1189 = vand.u32 2147483647, %v165
    %v1190 = vand.u32 2147483647, %v166
    %v1191 = vand.u32 2147483647, %v167
    %v1192 = vand.u32 2147483647, %v168
    %v1193 = vand.u32 2147483647, %v169
    %v1194 = vand.u32 2147483647, %v170
    %v1195 = vand.u32 2147483647, %v171
    %v1196 = vand.u32 2147483647, %v172
    %v1197 = vand.u32 2147483647, %v173
    %v1198 = vand.u32 2147483647, %v174
    %v1199 = vand.u32 2147483647, %v175
    %v1200 = vand.u32 2147483647, %v176
    %v1201 = vand.u32 2147483647, %v177
    %v1202 = vand.u32 2147483647, %v178
    %v1203 = vand.u32 2147483647, %v179
    %v1204 = vand.u32 2147483647, %v180
    %v1205 = vand.u32 2147483647, %v181
    %v1206 = vand.u32 2147483647, %v182
    %v1207 = vand.u32 2147483647, %v183
    %v1208 = vand.u32 2147483647, %v184
    %v1209 = vand.u32 2147483647, %v185
    %v1210 = vand.u32 2147483647, %v186
    %v1211 = vand.u32 2147483647, %v187
    %v1212 = vand.u32 2147483647, %v188
    %v1213 = vand.u32 2147483647, %v189
    %v1214 = vand.u32 2147483647, %v190
    %v1215 = vand.u32 2147483647, %v191
    %v1216 = vand.u32 2147483647, %v192
    %v1217 = vand.u32 2147483647, %v193
    %v1218 = vand.u32 2147483647, %v194
    %v1219 = vand.u32 2147483647, %v195
    %v1220 = vand.u32 2147483647, %v196
    %v1221 = vand.u32 2147483647, %v197
    %v1222 = vand.u32 2147483647, %v198
    %v1223 = vand.u32 2147483647, %v199
    %v1224 = vand.u32 2147483647, %v200
    %v1225 = vand.u32 2147483647, %v201
    %v1226 = vand.u32 2147483647, %v202
    %v1227 = vand.u32 2147483647, %v203
    %v1228 = vand.u32 2147483647, %v204
    %v1229 = vand.u32 2147483647, %v205
    %v1230 = vand.u32 2147483647, %v206
    %v1231 = vand.u32 2147483647, %v207
    %v1232 = vand.u32 2147483647, %v208
    %v1233 = vand.u32 2147483647, %v209
    %v1234 = vand.u32 2147483647, %v210
    %v1235 = vand.u32 2147483647, %v211
    %v1236 = vand.u32 2147483647, %v212
    %v1237 = vand.u32 2147483647, %v213
    %v1238 = vand.u32 2147483647, %v214
    %v1239 = vand.u32 2147483647, %v215
    %v1240 = vand.u32 2147483647, %v216
    %v1241 = vand.u32 2147483647, %v217
    %v1242 = vand.u32 2147483647, %v218
    %v1243 = vand.u32 2147483647, %v219
    %v1244 = vand.u32 2147483647, %v220
    %v1245 = vand.u32 2147483647, %v221
    %v1246 = vand.u32 2147483647, %v222
    %v1247 = vand.u32 2147483647, %v223
    %v1248 = vand.u32 2147483647, %v224
    %v1249 = vand.u32 2147483647, %v225
    %v1250 = vand.u32 2147483647, %v226
    %v1251 = vand.u32 2147483647, %v227
    %v1252 = vand.u32 2147483647, %v228
    %v1253 = vand.u32 2147483647, %v229
    %v1254 = vand.u32 2147483647, %v230
    %v1255 = vand.u32 2147483647, %v231
    %v1256 = vand.u32 2147483647, %v232
    %v1257 = vand.u32 2147483647, %v233
    %v1258 = vand.u32 2147483647, %v234
    %v1259 = vand.u32 2147483647, %v235
    %v1260 = vand.u32 2147483647, %v236
    %v1261 = vand.u32 2147483647, %v237
    %v1262 = vand.u32 2147483647, %v238
    %v1263 = vand.u32 2147483647, %v239
    %v1264 = vand.u32 2147483647, %v240
    %v1265 = vand.u32 2147483647, %v241
    %v1266 = vand.u32 2147483647, %v242
    %v1267 = vand.u32 2147483647, %v243
    %v1268 = vand.u32 2147483647, %v244
    %v1269 = vand.u32 2147483647, %v245
    %v1270 = vand.u32 2147483647, %v246
    %v1271 = vand.u32 2147483647, %v247
    %v1272 = vand.u32 2147483647, %v248
    %v1273 = vand.u32 2147483647, %v249
    %v1274 = vand.u32 2147483647, %v250
    %v1275 = vand.u32 2147483647, %v251
    %v1276 = vand.u32 2147483647, %v252
    %v1277 = vand.u32 2147483647, %v253
    %v1278 = vand.u32 2147483647, %v254
    %v1279 = vand.u32 2147483647, %v255
    %v1280 = vand.u32 2147483647, %v256
    %v1281 = vand.u32 2147483647, %v257
    %v1282 = vand.u32 2147483647, %v258
    %v1283 = vand.u32 2147483647, %v259
    %v1284 = vand.u32 2147483647, %v260
    %v1285 = vand.u32 2147483647, %v261
    %v1286 = vand.u32 2147483647, %v262
    %v1287 = vand.u32 2147483647, %v263
    %v1288 = vand.u32 2147483647, %v264
    %v1289 = vand.u32 2147483647, %v265
    %v1290 = vand.u32 2147483647, %v266
    %v1291 = vand.u32 2147483647, %v267
    %v1292 = vand.u32 2147483647, %v268
    %v1293 = vand.u32 2147483647, %v269
    %v1294 = vand.u32 2147483647, %v270
    %v1295 = vand.u32 2147483647, %v271
    %v1296 = vand.u32 2147483647, %v272
    %v1297 = vand.u32 2147483647, %v273
    %v1298 = vand.u32 2147483647, %v274
    %v1299 = vand.u32 2147483647, %v275
    %v1300 = vand.u32 2147483647, %v276
    %v1301 = vand.u32 2147483647, %v277
    %v1302 = vand.u32 2147483647, %v278
    %v1303 = vand.u32 2147483647, %v279
    %v1304 = vand.u32 2147483647, %v280
    %v1305 = vand.u32 2147483647, %v281
    %v1306 = vand.u32 2147483647, %v282
    %v1307 = vand.u32 2147483647, %v283
    %v1308 = vand.u32 2147483647, %v284
    %v1309 = vand.u32 2147483647, %v285
    %v1310 = vand.u32 2147483647, %v286
    %v1311 = vand.u32 2147483647, %v287
    %v1312 = vand.u32 2147483647, %v288
    %v1313 = vand.u32 2147483647, %v289
    %v1314 = vand.u32 2147483647, %v290
    %v1315 = vand.u32 2147483647, %v291
    %v1316 = vand.u32 2147483647, %v292
    %v1317 = vand.u32 2147483647, %v293
    %v1318 = vand.u32 2147483647, %v294
    %v1319 = vand.u32 2147483647, %v295
    %v1320 = vand.u32 2147483647, %v296
    %v1321 = vand.u32 2147483647, %v297
    %v1322 = vand.u32 2147483647, %v298
    %v1323 = vand.u32 2147483647, %v299
    %v1324 = vand.u32 2147483647, %v300
    %v1325 = vand.u32 2147483647, %v301
    %v1326 = vand.u32 2147483647, %v302
    %v1327 = vand.u32 2147483647, %v303
    %v1328 = vand.u32 2147483647, %v304
    %v1329 = vand.u32 2147483647, %v305
    %v1330 = vand.u32 2147483647, %v306
    %v1331 = vand.u32 2147483647, %v307
    %v1332 = vand.u32 2147483647, %v308
    %v1333 = vand.u32 2147483647, %v309
    %v1334 = vand.u32 2147483647, %v310
    %v1335 = vand.u32 2147483647, %v311
    %v1336 = vand.u32 2147483647, %v312
    %v1337 = vand.u32 2147483647, %v313
    %v1338 = vand.u32 2147483647, %v314
    %v1339 = vand.u32 2147483647, %v315
    %v1340 = vand.u32 2147483647, %v316
    %v1341 = vand.u32 2147483647, %v317
    %v1342 = vand.u32 2147483647, %v318
    %v1343 = vand.u32 2147483647, %v319
    %v1344 = vand.u32 2147483647, %v320
    %v1345 = vand.u32 2147483647, %v321
    %v1346 = vand.u32 2147483647, %v322
    %v1347 = vand.u32 2147483647, %v323
    %v1348 = vand.u32 2147483647, %v324
    %v1349 = vand.u32 2147483647, %v325
    %v1350 = vand.u32 2147483647, %v326
    %v1351 = vand.u32 2147483647, %v327
    %v1352 = vand.u32 2147483647, %v328
    %v1353 = vand.u32 2147483647, %v329
    %v1354 = vand.u32 2147483647, %v330
    %v1355 = vand.u32 2147483647, %v331
    %v1356 = vand.u32 2147483647, %v332
    %v1357 = vand.u32 2147483647, %v333
    %v1358 = vand.u32 2147483647, %v334
    %v1359 = vand.u32 2147483647, %v335
    %v1360 = vand.u32 2147483647, %v336
    %v1361 = vand.u32 2147483647, %v337
    %v1362 = vand.u32 2147483647, %v338
    %v1363 = vand.u32 2147483647, %v339
    %v1364 = vand.u32 2147483647, %v340
    %v1365 = vand.u32 2147483647, %v341
    %v1366 = vand.u32 2147483647, %v342
    %v1367 = vand.u32 2147483647, %v343
    %v1368 = vand.u32 2147483647, %v344
    %v1369 = vand.u32 2147483647, %v345
    %v1370 = vand.u32 2147483647, %v346
    %v1371 = vand.u32 2147483647, %v347
    %v1372 = vand.u32 2147483647, %v348
    %v1373 = vand.u32 2147483647, %v349
    %v1374 = vand.u32 2147483647, %v350
    %v1375 = vand.u32 2147483647, %v351
    %v1376 = vand.u32 2147483647, %v352
    %v1377 = vand.u32 2147483647, %v353
    %v1378 = vand.u32 2147483647, %v354
    %v1379 = vand.u32 2147483647, %v355
    %v1380 = vand.u32 2147483647, %v356
    %v1381 = vand.u32 2147483647, %v357
    %v1382 = vand.u32 2147483647, %v358
    %v1383 = vand.u32 2147483647, %v359
    %v1384 = vand.u32 2147483647, %v360
    %v1385 = vand.u32 2147483647, %v361
    %v1386 = vand.u32 2147483647, %v362
    %v1387 = vand.u32 2147483647, %v363
    %v1388 = vand.u32 2147483647, %v364
    %v1389 = vand.u32 2147483647, %v365
    %v1390 = vand.u32 2147483647, %v366
    %v1391 = vand.u32 2147483647, %v367
    %v1392 = vand.u32 2147483647, %v368
    %v1393 = vand.u32 2147483647, %v369
    %v1394 = vand.u32 2147483647, %v370
    %v1395 = vand.u32 2147483647, %v371
    %v1396 = vand.u32 2147483647, %v372
    %v1397 = vand.u32 2147483647, %v373
    %v1398 = vand.u32 2147483647, %v374
    %v1399 = vand.u32 2147483647, %v375
    %v1400 = vand.u32 2147483647, %v376
    %v1401 = vand.u32 2147483647, %v377
    %v1402 = vand.u32 2147483647, %v378
    %v1403 = vand.u32 2147483647, %v379
    %v1404 = vand.u32 2147483647, %v380
    %v1405 = vand.u32 2147483647, %v381
    %v1406 = vand.u32 2147483647, %v382
    %v1407 = vand.u32 2147483647, %v383
    %v1408 = vand.u32 2147483647, %v384
    %v1409 = vand.u32 2147483647, %v385
    %v1410 = vand.u32 2147483647, %v386
    %v1411 = vand.u32 2147483647, %v387
    %v1412 = vand.u32 2147483647, %v388
    %v1413 = vand.u32 2147483647, %v389
    %v1414 = vand.u32 2147483647, %v390
    %v1415 = vand.u32 2147483647, %v391
    %v1416 = vand.u32 2147483647, %v392
    %v1417 = vand.u32 2147483647, %v393
    %v1418 = vand.u32 2147483647, %v394
    %v1419 = vand.u32 2147483647, %v395
    %v1420 = vand.u32 2147483647, %v396
    %v1421 = vand.u32 2147483647, %v397
    %v1422 = vand.u32 2147483647, %v398
    %v1423 = vand.u32 2147483647, %v399
    %v1424 = vand.u32 2147483647, %v400
    %v1425 = vand.u32 2147483647, %v401
    %v1426 = vand.u32 2147483647, %v402
    %v1427 = vand.u32 2147483647, %v403
    %v1428 = vand.u32 2147483647, %v404
    %v1429 = vand.u32 2147483647, %v405
    %v1430 = vand.u32 2147483647, %v406
    %v1431 = vand.u32 2147483647, %v407
    %v1432 = vand.u32 2147483647, %v408
    %v1433 = vand.u32 2147483647, %v409
    %v1434 = vand.u32 2147483647, %v410
    %v1435 = vand.u32 2147483647, %v411
    %v1436 = vand.u32 2147483647, %v412
    %v1437 = vand.u32 2147483647, %v413
    %v1438 = vand.u32 2147483647, %v414
    %v1439 = vand.u32 2147483647, %v415
    %v1440 = vand.u32 2147483647, %v416
    %v1441 = vand.u32 2147483647, %v417
    %v1442 = vand.u32 2147483647, %v418
    %v1443 = vand.u32 2147483647, %v419
    %v1444 = vand.u32 2147483647, %v420
    %v1445 = vand.u32 2147483647, %v421
    %v1446 = vand.u32 2147483647, %v422
    %v1447 = vand.u32 2147483647, %v423
    %v1448 = vand.u32 2147483647, %v424
    %v1449 = vand.u32 2147483647, %v425
    %v1450 = vand.u32 2147483647, %v426
    %v1451 = vand.u32 2147483647, %v427
    %v1452 = vand.u32 2147483647, %v428
    %v1453 = vand.u32 2147483647, %v429
    %v1454 = vand.u32 2147483647, %v430
    %v1455 = vand.u32 2147483647, %v431
    %v1456 = vand.u32 2147483647, %v432
    %v1457 = vand.u32 2147483647, %v433
    %v1458 = vand.u32 2147483647, %v434
    %v1459 = vand.u32 2147483647, %v435
    %v1460 = vand.u32 2147483647, %v436
    %v1461 = vand.u32 2147483647, %v437
    %v1462 = vand.u32 2147483647, %v438
    %v1463 = vand.u32 2147483647, %v439
    %v1464 = vand.u32 2147483647, %v440
    %v1465 = vand.u32 2147483647, %v441
    %v1466 = vand.u32 2147483647, %v442
    %v1467 = vand.u32 2147483647, %v443
    %v1468 = vand.u32 2147483647, %v444
    %v1469 = vand.u32 2147483647, %v445
    %v1470 = vand.u32 2147483647, %v446
    %v1471 = vand.u32 2147483647, %v447
    %v1472 = vand.u32 2147483647, %v448
    %v1473 = vand.u32 2147483647, %v449
    %v1474 = vand.u32 2147483647, %v450
    %v1475 = vand.u32 2147483647, %v451
    %v1476 = vand.u32 2147483647, %v452
    %v1477 = vand.u32 2147483647, %v453
    %v1478 = vand.u32 2147483647, %v454
    %v1479 = vand.u32 2147483647, %v455
    %v1480 = vand.u32 2147483647, %v456
    %v1481 = vand.u32 2147483647, %v457
    %v1482 = vand.u32 2147483647, %v458
    %v1483 = vand.u32 2147483647, %v459
    %v1484 = vand.u32 2147483647, %v460
    %v1485 = vand.u32 2147483647, %v461
    %v1486 = vand.u32 2147483647, %v462
    %v1487 = vand.u32 2147483647, %v463
    %v1488 = vand.u32 2147483647, %v464
    %v1489 = vand.u32 2147483647, %v465
    %v1490 = vand.u32 2147483647, %v466
    %v1491 = vand.u32 2147483647, %v467
    %v1492 = vand.u32 2147483647, %v468
    %v1493 = vand.u32 2147483647, %v469
    %v1494 = vand.u32 2147483647, %v470
    %v1495 = vand.u32 2147483647, %v471
    %v1496 = vand.u32 2147483647, %v472
    %v1497 = vand.u32 2147483647, %v473
    %v1498 = vand.u32 2147483647, %v474
    %v1499 = vand.u32 2147483647, %v475
    %v1500 = vand.u32 2147483647, %v476
    %v1501 = vand.u32 2147483647, %v477
    %v1502 = vand.u32 2147483647, %v478
    %v1503 = vand.u32 2147483647, %v479
    %v1504 = vand.u32 2147483647, %v480
    %v1505 = vand.u32 2147483647, %v481
    %v1506 = vand.u32 2147483647, %v482
    %v1507 = vand.u32 2147483647, %v483
    %v1508 = vand.u32 2147483647, %v484
    %v1509 = vand.u32 2147483647, %v485
    %v1510 = vand.u32 2147483647, %v486
    %v1511 = vand.u32 2147483647, %v487
    %v1512 = vand.u32 2147483647, %v488
    %v1513 = vand.u32 2147483647, %v489
    %v1514 = vand.u32 2147483647, %v490
    %v1515 = vand.u32 2147483647, %v491
    %v1516 = vand.u32 2147483647, %v492
    %v1517 = vand.u32 2147483647, %v493
    %v1518 = vand.u32 2147483647, %v494
    %v1519 = vand.u32 2147483647, %v495
    %v1520 = vand.u32 2147483647, %v496
    %v1521 = vand.u32 2147483647, %v497
    %v1522 = vand.u32 2147483647, %v498
    %v1523 = vand.u32 2147483647, %v499
    %v1524 = vand.u32 2147483647, %v500
    %v1525 = vand.u32 2147483647, %v501
    %v1526 = vand.u32 2147483647, %v502
    %v1527 = vand.u32 2147483647, %v503
    %v1528 = vand.u32 2147483647, %v504
    %v1529 = vand.u32 2147483647, %v505
    %v1530 = vand.u32 2147483647, %v506
    %v1531 = vand.u32 2147483647, %v507
    %v1532 = vand.u32 2147483647, %v508
    %v1533 = vand.u32 2147483647, %v509
    %v1534 = vand.u32 2147483647, %v510
    %v1535 = vand.u32 2147483647, %v511
    %v1536 = vand.u32 2147483647, %v512
    %v1537 = vand.u32 2147483647, %v513
    %v1538 = vand.u32 2147483647, %v514
    %v1539 = vand.u32 2147483647, %v515
    %v1540 = vand.u32 2147483647, %v516
    %v1541 = vand.u32 2147483647, %v517
    %v1542 = vand.u32 2147483647, %v518
    %v1543 = vand.u32 2147483647, %v519
    %v1544 = vand.u32 2147483647, %v520
    %v1545 = vand.u32 2147483647, %v521
    %v1546 = vand.u32 2147483647, %v522
    %v1547 = vand.u32 2147483647, %v523
    %v1548 = vand.u32 2147483647, %v524
    %v1549 = vand.u32 2147483647, %v525
    %v1550 = vand.u32 2147483647, %v526
    %v1551 = vand.u32 2147483647, %v527
    %v1552 = vand.u32 2147483647, %v528
    %v1553 = vand.u32 2147483647, %v529
    %v1554 = vand.u32 2147483647, %v530
    %v1555 = vand.u32 2147483647, %v531
    %v1556 = vand.u32 2147483647, %v532
    %v1557 = vand.u32 2147483647, %v533
    %v1558 = vand.u32 2147483647, %v534
    %v1559 = vsub.f32 0.0, %v1047
    %v1560 = vsub.f32 0.0, %v1048
    %v1561 = vsub.f32 0.0, %v1049
    %v1562 = vsub.f32 0.0, %v1050
    %v1563 = vsub.f32 0.0, %v1051
    %v1564 = vsub.f32 0.0, %v1052
    %v1565 = vsub.f32 0.0, %v1053
    %v1566 = vsub.f32 0.0, %v1054
    %v1567 = vsub.f32 0.0, %v1055
    %v1568 = vsub.f32 0.0, %v1056
    %v1569 = vsub.f32 0.0, %v1057
    %v1570 = vsub.f32 0.0, %v1058
    %v1571 = vsub.f32 0.0, %v1059
    %v1572 = vsub.f32 0.0, %v1060
    %v1573 = vsub.f32 0.0, %v1061
    %v1574 = vsub.f32 0.0, %v1062
    %v1575 = vsub.f32 0.0, %v1063
    %v1576 = vsub.f32 0.0, %v1064
    %v1577 = vsub.f32 0.0, %v1065
    %v1578 = vsub.f32 0.0, %v1066
    %v1579 = vsub.f32 0.0, %v1067
    %v1580 = vsub.f32 0.0, %v1068
    %v1581 = vsub.f32 0.0, %v1069
    %v1582 = vsub.f32 0.0, %v1070
    %v1583 = vsub.f32 0.0, %v1071
    %v1584 = vsub.f32 0.0, %v1072
    %v1585 = vsub.f32 0.0, %v1073
    %v1586 = vsub.f32 0.0, %v1074
    %v1587 = vsub.f32 0.0, %v1075
    %v1588 = vsub.f32 0.0, %v1076
    %v1589 = vsub.f32 0.0, %v1077
    %v1590 = vsub.f32 0.0, %v1078
    %v1591 = vsub.f32 0.0, %v1079
    %v1592 = vsub.f32 0.0, %v1080
    %v1593 = vsub.f32 0.0, %v1081
    %v1594 = vsub.f32 0.0, %v1082
    %v1595 = vsub.f32 0.0, %v1083
    %v1596 = vsub.f32 0.0, %v1084
    %v1597 = vsub.f32 0.0, %v1085
    %v1598 = vsub.f32 0.0, %v1086
    %v1599 = vsub.f32 0.0, %v1087
    %v1600 = vsub.f32 0.0, %v1088
    %v1601 = vsub.f32 0.0, %v1089
    %v1602 = vsub.f32 0.0, %v1090
    %v1603 = vsub.f32 0.0, %v1091
    %v1604 = vsub.f32 0.0, %v1092
    %v1605 = vsub.f32 0.0, %v1093
    %v1606 = vsub.f32 0.0, %v1094
    %v1607 = vsub.f32 0.0, %v1095
    %v1608 = vsub.f32 0.0, %v1096
    %v1609 = vsub.f32 0.0, %v1097
    %v1610 = vsub.f32 0.0, %v1098
    %v1611 = vsub.f32 0.0, %v1099
    %v1612 = vsub.f32 0.0, %v1100
    %v1613 = vsub.f32 0.0, %v1101
    %v1614 = vsub.f32 0.0, %v1102
    %v1615 = vsub.f32 0.0, %v1103
    %v1616 = vsub.f32 0.0, %v1104
    %v1617 = vsub.f32 0.0, %v1105
    %v1618 = vsub.f32 0.0, %v1106
    %v1619 = vsub.f32 0.0, %v1107
    %v1620 = vsub.f32 0.0, %v1108
    %v1621 = vsub.f32 0.0, %v1109
    %v1622 = vsub.f32 0.0, %v1110
    %v1623 = vsub.f32 0.0, %v1111
    %v1624 = vsub.f32 0.0, %v1112
    %v1625 = vsub.f32 0.0, %v1113
    %v1626 = vsub.f32 0.0, %v1114
    %v1627 = vsub.f32 0.0, %v1115
    %v1628 = vsub.f32 0.0, %v1116
    %v1629 = vsub.f32 0.0, %v1117
    %v1630 = vsub.f32 0.0, %v1118
    %v1631 = vsub.f32 0.0, %v1119
    %v1632 = vsub.f32 0.0, %v1120
    %v1633 = vsub.f32 0.0, %v1121
    %v1634 = vsub.f32 0.0, %v1122
    %v1635 = vsub.f32 0.0, %v1123
    %v1636 = vsub.f32 0.0, %v1124
    %v1637 = vsub.f32 0.0, %v1125
    %v1638 = vsub.f32 0.0, %v1126
    %v1639 = vsub.f32 0.0, %v1127
    %v1640 = vsub.f32 0.0, %v1128
    %v1641 = vsub.f32 0.0, %v1129
    %v1642 = vsub.f32 0.0, %v1130
    %v1643 = vsub.f32 0.0, %v1131
    %v1644 = vsub.f32 0.0, %v1132
    %v1645 = vsub.f32 0.0, %v1133
    %v1646 = vsub.f32 0.0, %v1134
    %v1647 = vsub.f32 0.0, %v1135
    %v1648 = vsub.f32 0.0, %v1136
    %v1649 = vsub.f32 0.0, %v1137
    %v1650 = vsub.f32 0.0, %v1138
    %v1651 = vsub.f32 0.0, %v1139
    %v1652 = vsub.f32 0.0, %v1140
    %v1653 = vsub.f32 0.0, %v1141
    %v1654 = vsub.f32 0.0, %v1142
    %v1655 = vsub.f32 0.0, %v1143
    %v1656 = vsub.f32 0.0, %v1144
    %v1657 = vsub.f32 0.0, %v1145
    %v1658 = vsub.f32 0.0, %v1146
    %v1659 = vsub.f32 0.0, %v1147
    %v1660 = vsub.f32 0.0, %v1148
    %v1661 = vsub.f32 0.0, %v1149
    %v1662 = vsub.f32 0.0, %v1150
    %v1663 = vsub.f32 0.0, %v1151
    %v1664 = vsub.f32 0.0, %v1152
    %v1665 = vsub.f32 0.0, %v1153
    %v1666 = vsub.f32 0.0, %v1154
    %v1667 = vsub.f32 0.0, %v1155
    %v1668 = vsub.f32 0.0, %v1156
    %v1669 = vsub.f32 0.0, %v1157
    %v1670 = vsub.f32 0.0, %v1158
    %v1671 = vsub.f32 0.0, %v1159
    %v1672 = vsub.f32 0.0, %v1160
    %v1673 = vsub.f32 0.0, %v1161
    %v1674 = vsub.f32 0.0, %v1162
    %v1675 = vsub.f32 0.0, %v1163
    %v1676 = vsub.f32 0.0, %v1164
    %v1677 = vsub.f32 0.0, %v1165
    %v1678 = vsub.f32 0.0, %v1166
    %v1679 = vsub.f32 0.0, %v1167
    %v1680 = vsub.f32 0.0, %v1168
    %v1681 = vsub.f32 0.0, %v1169
    %v1682 = vsub.f32 0.0, %v1170
    %v1683 = vsub.f32 0.0, %v1171
    %v1684 = vsub.f32 0.0, %v1172
    %v1685 = vsub.f32 0.0, %v1173
    %v1686 = vsub.f32 0.0, %v1174
    %v1687 = vsub.f32 0.0, %v1175
    %v1688 = vsub.f32 0.0, %v1176
    %v1689 = vsub.f32 0.0, %v1177
    %v1690 = vsub.f32 0.0, %v1178
    %v1691 = vsub.f32 0.0, %v1179
    %v1692 = vsub.f32 0.0, %v1180
    %v1693 = vsub.f32 0.0, %v1181
    %v1694 = vsub.f32 0.0, %v1182
    %v1695 = vsub.f32 0.0, %v1183
    %v1696 = vsub.f32 0.0, %v1184
    %v1697 = vsub.f32 0.0, %v1185
    %v1698 = vsub.f32 0.0, %v1186
    %v1699 = vsub.f32 0.0, %v1187
    %v1700 = vsub.f32 0.0, %v1188
    %v1701 = vsub.f32 0.0, %v1189
    %v1702 = vsub.f32 0.0, %v1190
    %v1703 = vsub.f32 0.0, %v1191
    %v1704 = vsub.f32 0.0, %v1192
    %v1705 = vsub.f32 0.0, %v1193
    %v1706 = vsub.f32 0.0, %v1194
    %v1707 = vsub.f32 0.0, %v1195
    %v1708 = vsub.f32 0.0, %v1196
    %v1709 = vsub.f32 0.0, %v1197
    %v1710 = vsub.f32 0.0, %v1198
    %v1711 = vsub.f32 0.0, %v1199
    %v1712 = vsub.f32 0.0, %v1200
    %v1713 = vsub.f32 0.0, %v1201
    %v1714 = vsub.f32 0.0, %v1202
    %v1715 = vsub.f32 0.0, %v1203
    %v1716 = vsub.f32 0.0, %v1204
    %v1717 = vsub.f32 0.0, %v1205
    %v1718 = vsub.f32 0.0, %v1206
    %v1719 = vsub.f32 0.0, %v1207
    %v1720 = vsub.f32 0.0, %v1208
    %v1721 = vsub.f32 0.0, %v1209
    %v1722 = vsub.f32 0.0, %v1210
    %v1723 = vsub.f32 0.0, %v1211
    %v1724 = vsub.f32 0.0, %v1212
    %v1725 = vsub.f32 0.0, %v1213
    %v1726 = vsub.f32 0.0, %v1214
    %v1727 = vsub.f32 0.0, %v1215
    %v1728 = vsub.f32 0.0, %v1216
    %v1729 = vsub.f32 0.0, %v1217
    %v1730 = vsub.f32 0.0, %v1218
    %v1731 = vsub.f32 0.0, %v1219
    %v1732 = vsub.f32 0.0, %v1220
    %v1733 = vsub.f32 0.0, %v1221
    %v1734 = vsub.f32 0.0, %v1222
    %v1735 = vsub.f32 0.0, %v1223
    %v1736 = vsub.f32 0.0, %v1224
    %v1737 = vsub.f32 0.0, %v1225
    %v1738 = vsub.f32 0.0, %v1226
    %v1739 = vsub.f32 0.0, %v1227
    %v1740 = vsub.f32 0.0, %v1228
    %v1741 = vsub.f32 0.0, %v1229
    %v1742 = vsub.f32 0.0, %v1230
    %v1743 = vsub.f32 0.0, %v1231
    %v1744 = vsub.f32 0.0, %v1232
    %v1745 = vsub.f32 0.0, %v1233
    %v1746 = vsub.f32 0.0, %v1234
    %v1747 = vsub.f32 0.0, %v1235
    %v1748 = vsub.f32 0.0, %v1236
    %v1749 = vsub.f32 0.0, %v1237
    %v1750 = vsub.f32 0.0, %v1238
    %v1751 = vsub.f32 0.0, %v1239
    %v1752 = vsub.f32 0.0, %v1240
    %v1753 = vsub.f32 0.0, %v1241
    %v1754 = vsub.f32 0.0, %v1242
    %v1755 = vsub.f32 0.0, %v1243
    %v1756 = vsub.f32 0.0, %v1244
    %v1757 = vsub.f32 0.0, %v1245
    %v1758 = vsub.f32 0.0, %v1246
    %v1759 = vsub.f32 0.0, %v1247
    %v1760 = vsub.f32 0.0, %v1248
    %v1761 = vsub.f32 0.0, %v1249
    %v1762 = vsub.f32 0.0, %v1250
    %v1763 = vsub.f32 0.0, %v1251
    %v1764 = vsub.f32 0.0, %v1252
    %v1765 = vsub.f32 0.0, %v1253
    %v1766 = vsub.f32 0.0, %v1254
    %v1767 = vsub.f32 0.0, %v1255
    %v1768 = vsub.f32 0.0, %v1256
    %v1769 = vsub.f32 0.0, %v1257
    %v1770 = vsub.f32 0.0, %v1258
    %v1771 = vsub.f32 0.0, %v1259
    %v1772 = vsub.f32 0.0, %v1260
    %v1773 = vsub.f32 0.0, %v1261
    %v1774 = vsub.f32 0.0, %v1262
    %v1775 = vsub.f32 0.0, %v1263
    %v1776 = vsub.f32 0.0, %v1264
    %v1777 = vsub.f32 0.0, %v1265
    %v1778 = vsub.f32 0.0, %v1266
    %v1779 = vsub.f32 0.0, %v1267
    %v1780 = vsub.f32 0.0, %v1268
    %v1781 = vsub.f32 0.0, %v1269
    %v1782 = vsub.f32 0.0, %v1270
    %v1783 = vsub.f32 0.0, %v1271
    %v1784 = vsub.f32 0.0, %v1272
    %v1785 = vsub.f32 0.0, %v1273
    %v1786 = vsub.f32 0.0, %v1274
    %v1787 = vsub.f32 0.0, %v1275
    %v1788 = vsub.f32 0.0, %v1276
    %v1789 = vsub.f32 0.0, %v1277
    %v1790 = vsub.f32 0.0, %v1278
    %v1791 = vsub.f32 0.0, %v1279
    %v1792 = vsub.f32 0.0, %v1280
    %v1793 = vsub.f32 0.0, %v1281
    %v1794 = vsub.f32 0.0, %v1282
    %v1795 = vsub.f32 0.0, %v1283
    %v1796 = vsub.f32 0.0, %v1284
    %v1797 = vsub.f32 0.0, %v1285
    %v1798 = vsub.f32 0.0, %v1286
    %v1799 = vsub.f32 0.0, %v1287
    %v1800 = vsub.f32 0.0, %v1288
    %v1801 = vsub.f32 0.0, %v1289
    %v1802 = vsub.f32 0.0, %v1290
    %v1803 = vsub.f32 0.0, %v1291
    %v1804 = vsub.f32 0.0, %v1292
    %v1805 = vsub.f32 0.0, %v1293
    %v1806 = vsub.f32 0.0, %v1294
    %v1807 = vsub.f32 0.0, %v1295
    %v1808 = vsub.f32 0.0, %v1296
    %v1809 = vsub.f32 0.0, %v1297
    %v1810 = vsub.f32 0.0, %v1298
    %v1811 = vsub.f32 0.0, %v1299
    %v1812 = vsub.f32 0.0, %v1300
    %v1813 = vsub.f32 0.0, %v1301
    %v1814 = vsub.f32 0.0, %v1302
    %v1815 = vsub.f32 0.0, %v1303
    %v1816 = vsub.f32 0.0, %v1304
    %v1817 = vsub.f32 0.0, %v1305
    %v1818 = vsub.f32 0.0, %v1306
    %v1819 = vsub.f32 0.0, %v1307
    %v1820 = vsub.f32 0.0, %v1308
    %v1821 = vsub.f32 0.0, %v1309
    %v1822 = vsub.f32 0.0, %v1310
    %v1823 = vsub.f32 0.0, %v1311
    %v1824 = vsub.f32 0.0, %v1312
    %v1825 = vsub.f32 0.0, %v1313
    %v1826 = vsub.f32 0.0, %v1314
    %v1827 = vsub.f32 0.0, %v1315
    %v1828 = vsub.f32 0.0, %v1316
    %v1829 = vsub.f32 0.0, %v1317
    %v1830 = vsub.f32 0.0, %v1318
    %v1831 = vsub.f32 0.0, %v1319
    %v1832 = vsub.f32 0.0, %v1320
    %v1833 = vsub.f32 0.0, %v1321
    %v1834 = vsub.f32 0.0, %v1322
    %v1835 = vsub.f32 0.0, %v1323
    %v1836 = vsub.f32 0.0, %v1324
    %v1837 = vsub.f32 0.0, %v1325
    %v1838 = vsub.f32 0.0, %v1326
    %v1839 = vsub.f32 0.0, %v1327
    %v1840 = vsub.f32 0.0, %v1328
    %v1841 = vsub.f32 0.0, %v1329
    %v1842 = vsub.f32 0.0, %v1330
    %v1843 = vsub.f32 0.0, %v1331
    %v1844 = vsub.f32 0.0, %v1332
    %v1845 = vsub.f32 0.0, %v1333
    %v1846 = vsub.f32 0.0, %v1334
    %v1847 = vsub.f32 0.0, %v1335
    %v1848 = vsub.f32 0.0, %v1336
    %v1849 = vsub.f32 0.0, %v1337
    %v1850 = vsub.f32 0.0, %v1338
    %v1851 = vsub.f32 0.0, %v1339
    %v1852 = vsub.f32 0.0, %v1340
    %v1853 = vsub.f32 0.0, %v1341
    %v1854 = vsub.f32 0.0, %v1342
    %v1855 = vsub.f32 0.0, %v1343
    %v1856 = vsub.f32 0.0, %v1344
    %v1857 = vsub.f32 0.0, %v1345
    %v1858 = vsub.f32 0.0, %v1346
    %v1859 = vsub.f32 0.0, %v1347
    %v1860 = vsub.f32 0.0, %v1348
    %v1861 = vsub.f32 0.0, %v1349
    %v1862 = vsub.f32 0.0, %v1350
    %v1863 = vsub.f32 0.0, %v1351
    %v1864 = vsub.f32 0.0, %v1352
    %v1865 = vsub.f32 0.0, %v1353
    %v1866 = vsub.f32 0.0, %v1354
    %v1867 = vsub.f32 0.0, %v1355
    %v1868 = vsub.f32 0.0, %v1356
    %v1869 = vsub.f32 0.0, %v1357
    %v1870 = vsub.f32 0.0, %v1358
    %v1871 = vsub.f32 0.0, %v1359
    %v1872 = vsub.f32 0.0, %v1360
    %v1873 = vsub.f32 0.0, %v1361
    %v1874 = vsub.f32 0.0, %v1362
    %v1875 = vsub.f32 0.0, %v1363
    %v1876 = vsub.f32 0.0, %v1364
    %v1877 = vsub.f32 0.0, %v1365
    %v1878 = vsub.f32 0.0, %v1366
    %v1879 = vsub.f32 0.0, %v1367
    %v1880 = vsub.f32 0.0, %v1368
    %v1881 = vsub.f32 0.0, %v1369
    %v1882 = vsub.f32 0.0, %v1370
    %v1883 = vsub.f32 0.0, %v1371
    %v1884 = vsub.f32 0.0, %v1372
    %v1885 = vsub.f32 0.0, %v1373
    %v1886 = vsub.f32 0.0, %v1374
    %v1887 = vsub.f32 0.0, %v1375
    %v1888 = vsub.f32 0.0, %v1376
    %v1889 = vsub.f32 0.0, %v1377
    %v1890 = vsub.f32 0.0, %v1378
    %v1891 = vsub.f32 0.0, %v1379
    %v1892 = vsub.f32 0.0, %v1380
    %v1893 = vsub.f32 0.0, %v1381
    %v1894 = vsub.f32 0.0, %v1382
    %v1895 = vsub.f32 0.0, %v1383
    %v1896 = vsub.f32 0.0, %v1384
    %v1897 = vsub.f32 0.0, %v1385
    %v1898 = vsub.f32 0.0, %v1386
    %v1899 = vsub.f32 0.0, %v1387
    %v1900 = vsub.f32 0.0, %v1388
    %v1901 = vsub.f32 0.0, %v1389
    %v1902 = vsub.f32 0.0, %v1390
    %v1903 = vsub.f32 0.0, %v1391
    %v1904 = vsub.f32 0.0, %v1392
    %v1905 = vsub.f32 0.0, %v1393
    %v1906 = vsub.f32 0.0, %v1394
    %v1907 = vsub.f32 0.0, %v1395
    %v1908 = vsub.f32 0.0, %v1396
    %v1909 = vsub.f32 0.0, %v1397
    %v1910 = vsub.f32 0.0, %v1398
    %v1911 = vsub.f32 0.0, %v1399
    %v1912 = vsub.f32 0.0, %v1400
    %v1913 = vsub.f32 0.0, %v1401
    %v1914 = vsub.f32 0.0, %v1402
    %v1915 = vsub.f32 0.0, %v1403
    %v1916 = vsub.f32 0.0, %v1404
    %v1917 = vsub.f32 0.0, %v1405
    %v1918 = vsub.f32 0.0, %v1406
    %v1919 = vsub.f32 0.0, %v1407
    %v1920 = vsub.f32 0.0, %v1408
    %v1921 = vsub.f32 0.0, %v1409
    %v1922 = vsub.f32 0.0, %v1410
    %v1923 = vsub.f32 0.0, %v1411
    %v1924 = vsub.f32 0.0, %v1412
    %v1925 = vsub.f32 0.0, %v1413
    %v1926 = vsub.f32 0.0, %v1414
    %v1927 = vsub.f32 0.0, %v1415
    %v1928 = vsub.f32 0.0, %v1416
    %v1929 = vsub.f32 0.0, %v1417
    %v1930 = vsub.f32 0.0, %v1418
    %v1931 = vsub.f32 0.0, %v1419
    %v1932 = vsub.f32 0.0, %v1420
    %v1933 = vsub.f32 0.0, %v1421
    %v1934 = vsub.f32 0.0, %v1422
    %v1935 = vsub.f32 0.0, %v1423
    %v1936 = vsub.f32 0.0, %v1424
    %v1937 = vsub.f32 0.0, %v1425
    %v1938 = vsub.f32 0.0, %v1426
    %v1939 = vsub.f32 0.0, %v1427
    %v1940 = vsub.f32 0.0, %v1428
    %v1941 = vsub.f32 0.0, %v1429
    %v1942 = vsub.f32 0.0, %v1430
    %v1943 = vsub.f32 0.0, %v1431
    %v1944 = vsub.f32 0.0, %v1432
    %v1945 = vsub.f32 0.0, %v1433
    %v1946 = vsub.f32 0.0, %v1434
    %v1947 = vsub.f32 0.0, %v1435
    %v1948 = vsub.f32 0.0, %v1436
    %v1949 = vsub.f32 0.0, %v1437
    %v1950 = vsub.f32 0.0, %v1438
    %v1951 = vsub.f32 0.0, %v1439
    %v1952 = vsub.f32 0.0, %v1440
    %v1953 = vsub.f32 0.0, %v1441
    %v1954 = vsub.f32 0.0, %v1442
    %v1955 = vsub.f32 0.0, %v1443
    %v1956 = vsub.f32 0.0, %v1444
    %v1957 = vsub.f32 0.0, %v1445
    %v1958 = vsub.f32 0.0, %v1446
    %v1959 = vsub.f32 0.0, %v1447
    %v1960 = vsub.f32 0.0, %v1448
    %v1961 = vsub.f32 0.0, %v1449
    %v1962 = vsub.f32 0.0, %v1450
    %v1963 = vsub.f32 0.0, %v1451
    %v1964 = vsub.f32 0.0, %v1452
    %v1965 = vsub.f32 0.0, %v1453
    %v1966 = vsub.f32 0.0, %v1454
    %v1967 = vsub.f32 0.0, %v1455
    %v1968 = vsub.f32 0.0, %v1456
    %v1969 = vsub.f32 0.0, %v1457
    %v1970 = vsub.f32 0.0, %v1458
    %v1971 = vsub.f32 0.0, %v1459
    %v1972 = vsub.f32 0.0, %v1460
    %v1973 = vsub.f32 0.0, %v1461
    %v1974 = vsub.f32 0.0, %v1462
    %v1975 = vsub.f32 0.0, %v1463
    %v1976 = vsub.f32 0.0, %v1464
    %v1977 = vsub.f32 0.0, %v1465
    %v1978 = vsub.f32 0.0, %v1466
    %v1979 = vsub.f32 0.0, %v1467
    %v1980 = vsub.f32 0.0, %v1468
    %v1981 = vsub.f32 0.0, %v1469
    %v1982 = vsub.f32 0.0, %v1470
    %v1983 = vsub.f32 0.0, %v1471
    %v1984 = vsub.f32 0.0, %v1472
    %v1985 = vsub.f32 0.0, %v1473
    %v1986 = vsub.f32 0.0, %v1474
    %v1987 = vsub.f32 0.0, %v1475
    %v1988 = vsub.f32 0.0, %v1476
    %v1989 = vsub.f32 0.0, %v1477
    %v1990 = vsub.f32 0.0, %v1478
    %v1991 = vsub.f32 0.0, %v1479
    %v1992 = vsub.f32 0.0, %v1480
    %v1993 = vsub.f32 0.0, %v1481
    %v1994 = vsub.f32 0.0, %v1482
    %v1995 = vsub.f32 0.0, %v1483
    %v1996 = vsub.f32 0.0, %v1484
    %v1997 = vsub.f32 0.0, %v1485
    %v1998 = vsub.f32 0.0, %v1486
    %v1999 = vsub.f32 0.0, %v1487
    %v2000 = vsub.f32 0.0, %v1488
    %v2001 = vsub.f32 0.0, %v1489
    %v2002 = vsub.f32 0.0, %v1490
    %v2003 = vsub.f32 0.0, %v1491
    %v2004 = vsub.f32 0.0, %v1492
    %v2005 = vsub.f32 0.0, %v1493
    %v2006 = vsub.f32 0.0, %v1494
    %v2007 = vsub.f32 0.0, %v1495
    %v2008 = vsub.f32 0.0, %v1496
    %v2009 = vsub.f32 0.0, %v1497
    %v2010 = vsub.f32 0.0, %v1498
    %v2011 = vsub.f32 0.0, %v1499
    %v2012 = vsub.f32 0.0, %v1500
    %v2013 = vsub.f32 0.0, %v1501
    %v2014 = vsub.f32 0.0, %v1502
    %v2015 = vsub.f32 0.0, %v1503
    %v2016 = vsub.f32 0.0, %v1504
    %v2017 = vsub.f32 0.0, %v1505
    %v2018 = vsub.f32 0.0, %v1506
    %v2019 = vsub.f32 0.0, %v1507
    %v2020 = vsub.f32 0.0, %v1508
    %v2021 = vsub.f32 0.0, %v1509
    %v2022 = vsub.f32 0.0, %v1510
    %v2023 = vsub.f32 0.0, %v1511
    %v2024 = vsub.f32 0.0, %v1512
    %v2025 = vsub.f32 0.0, %v1513
    %v2026 = vsub.f32 0.0, %v1514
    %v2027 = vsub.f32 0.0, %v1515
    %v2028 = vsub.f32 0.0, %v1516
    %v2029 = vsub.f32 0.0, %v1517
    %v2030 = vsub.f32 0.0, %v1518
    %v2031 = vsub.f32 0.0, %v1519
    %v2032 = vsub.f32 0.0, %v1520
    %v2033 = vsub.f32 0.0, %v1521
    %v2034 = vsub.f32 0.0, %v1522
    %v2035 = vsub.f32 0.0, %v1523
    %v2036 = vsub.f32 0.0, %v1524
    %v2037 = vsub.f32 0.0, %v1525
    %v2038 = vsub.f32 0.0, %v1526
    %v2039 = vsub.f32 0.0, %v1527
    %v2040 = vsub.f32 0.0, %v1528
    %v2041 = vsub.f32 0.0, %v1529
    %v2042 = vsub.f32 0.0, %v1530
    %v2043 = vsub.f32 0.0, %v1531
    %v2044 = vsub.f32 0.0, %v1532
    %v2045 = vsub.f32 0.0, %v1533
    %v2046 = vsub.f32 0.0, %v1534
    %v2047 = vsub.f32 0.0, %v1535
    %v2048 = vsub.f32 0.0, %v1536
    %v2049 = vsub.f32 0.0, %v1537
    %v2050 = vsub.f32 0.0, %v1538
    %v2051 = vsub.f32 0.0, %v1539
    %v2052 = vsub.f32 0.0, %v1540
    %v2053 = vsub.f32 0.0, %v1541
    %v2054 = vsub.f32 0.0, %v1542
    %v2055 = vsub.f32 0.0, %v1543
    %v2056 = vsub.f32 0.0, %v1544
    %v2057 = vsub.f32 0.0, %v1545
    %v2058 = vsub.f32 0.0, %v1546
    %v2059 = vsub.f32 0.0, %v1547
    %v2060 = vsub.f32 0.0, %v1548
    %v2061 = vsub.f32 0.0, %v1549
    %v2062 = vsub.f32 0.0, %v1550
    %v2063 = vsub.f32 0.0, %v1551
    %v2064 = vsub.f32 0.0, %v1552
    %v2065 = vsub.f32 0.0, %v1553
    %v2066 = vsub.f32 0.0, %v1554
    %v2067 = vsub.f32 0.0, %v1555
    %v2068 = vsub.f32 0.0, %v1556
    %v2069 = vsub.f32 0.0, %v1557
    %v2070 = vsub.f32 0.0, %v1558
    %v2071 = vmul.f32 %v1559, 1.442695
    %v2072 = vpow.pop %v2071
    %v2073 = vmul.f32 %v1560, 1.442695
    %v2074 = vpow.pop %v2073
    %v2075 = vmul.f32 %v1561, 1.442695
    %v2076 = vpow.pop %v2075
    %v2077 = vmul.f32 %v1562, 1.442695
    %v2078 = vpow.pop %v2077
    %v2079 = vmul.f32 %v1563, 1.442695
    %v2080 = vpow.pop %v2079
    %v2081 = vmul.f32 %v1564, 1.442695
    %v2082 = vpow.pop %v2081
    %v2083 = vmul.f32 %v1565, 1.442695
    %v2084 = vpow.pop %v2083
    %v2085 = vmul.f32 %v1566, 1.442695
    %v2086 = vpow.pop %v2085
    %v2087 = vmul.f32 %v1567, 1.442695
    %v2088 = vpow.pop %v2087
    %v2089 = vmul.f32 %v1568, 1.442695
    %v2090 = vpow.pop %v2089
    %v2091 = vmul.f32 %v1569, 1.442695
    %v2092 = vpow.pop %v2091
    %v2093 = vmul.f32 %v1570, 1.442695
    %v2094 = vpow.pop %v2093
    %v2095 = vmul.f32 %v1571, 1.442695
    %v2096 = vpow.pop %v2095
    %v2097 = vmul.f32 %v1572, 1.442695
    %v2098 = vpow.pop %v2097
    %v2099 = vmul.f32 %v1573, 1.442695
    %v2100 = vpow.pop %v2099
    %v2101 = vmul.f32 %v1574, 1.442695
    %v2102 = vpow.pop %v2101
    %v2103 = vmul.f32 %v1575, 1.442695
    %v2104 = vpow.pop %v2103
    %v2105 = vmul.f32 %v1576, 1.442695
    %v2106 = vpow.pop %v2105
    %v2107 = vmul.f32 %v1577, 1.442695
    %v2108 = vpow.pop %v2107
    %v2109 = vmul.f32 %v1578, 1.442695
    %v2110 = vpow.pop %v2109
    %v2111 = vmul.f32 %v1579, 1.442695
    %v2112 = vpow.pop %v2111
    %v2113 = vmul.f32 %v1580, 1.442695
    %v2114 = vpow.pop %v2113
    %v2115 = vmul.f32 %v1581, 1.442695
    %v2116 = vpow.pop %v2115
    %v2117 = vmul.f32 %v1582, 1.442695
    %v2118 = vpow.pop %v2117
    %v2119 = vmul.f32 %v1583, 1.442695
    %v2120 = vpow.pop %v2119
    %v2121 = vmul.f32 %v1584, 1.442695
    %v2122 = vpow.pop %v2121
    %v2123 = vmul.f32 %v1585, 1.442695
    %v2124 = vpow.pop %v2123
    %v2125 = vmul.f32 %v1586, 1.442695
    %v2126 = vpow.pop %v2125
    %v2127 = vmul.f32 %v1587, 1.442695
    %v2128 = vpow.pop %v2127
    %v2129 = vmul.f32 %v1588, 1.442695
    %v2130 = vpow.pop %v2129
    %v2131 = vmul.f32 %v1589, 1.442695
    %v2132 = vpow.pop %v2131
    %v2133 = vmul.f32 %v1590, 1.442695
    %v2134 = vpow.pop %v2133
    %v2135 = vmul.f32 %v1591, 1.442695
    %v2136 = vpow.pop %v2135
    %v2137 = vmul.f32 %v1592, 1.442695
    %v2138 = vpow.pop %v2137
    %v2139 = vmul.f32 %v1593, 1.442695
    %v2140 = vpow.pop %v2139
    %v2141 = vmul.f32 %v1594, 1.442695
    %v2142 = vpow.pop %v2141
    %v2143 = vmul.f32 %v1595, 1.442695
    %v2144 = vpow.pop %v2143
    %v2145 = vmul.f32 %v1596, 1.442695
    %v2146 = vpow.pop %v2145
    %v2147 = vmul.f32 %v1597, 1.442695
    %v2148 = vpow.pop %v2147
    %v2149 = vmul.f32 %v1598, 1.442695
    %v2150 = vpow.pop %v2149
    %v2151 = vmul.f32 %v1599, 1.442695
    %v2152 = vpow.pop %v2151
    %v2153 = vmul.f32 %v1600, 1.442695
    %v2154 = vpow.pop %v2153
    %v2155 = vmul.f32 %v1601, 1.442695
    %v2156 = vpow.pop %v2155
    %v2157 = vmul.f32 %v1602, 1.442695
    %v2158 = vpow.pop %v2157
    %v2159 = vmul.f32 %v1603, 1.442695
    %v2160 = vpow.pop %v2159
    %v2161 = vmul.f32 %v1604, 1.442695
    %v2162 = vpow.pop %v2161
    %v2163 = vmul.f32 %v1605, 1.442695
    %v2164 = vpow.pop %v2163
    %v2165 = vmul.f32 %v1606, 1.442695
    %v2166 = vpow.pop %v2165
    %v2167 = vmul.f32 %v1607, 1.442695
    %v2168 = vpow.pop %v2167
    %v2169 = vmul.f32 %v1608, 1.442695
    %v2170 = vpow.pop %v2169
    %v2171 = vmul.f32 %v1609, 1.442695
    %v2172 = vpow.pop %v2171
    %v2173 = vmul.f32 %v1610, 1.442695
    %v2174 = vpow.pop %v2173
    %v2175 = vmul.f32 %v1611, 1.442695
    %v2176 = vpow.pop %v2175
    %v2177 = vmul.f32 %v1612, 1.442695
    %v2178 = vpow.pop %v2177
    %v2179 = vmul.f32 %v1613, 1.442695
    %v2180 = vpow.pop %v2179
    %v2181 = vmul.f32 %v1614, 1.442695
    %v2182 = vpow.pop %v2181
    %v2183 = vmul.f32 %v1615, 1.442695
    %v2184 = vpow.pop %v2183
    %v2185 = vmul.f32 %v1616, 1.442695
    %v2186 = vpow.pop %v2185
    %v2187 = vmul.f32 %v1617, 1.442695
    %v2188 = vpow.pop %v2187
    %v2189 = vmul.f32 %v1618, 1.442695
    %v2190 = vpow.pop %v2189
    %v2191 = vmul.f32 %v1619, 1.442695
    %v2192 = vpow.pop %v2191
    %v2193 = vmul.f32 %v1620, 1.442695
    %v2194 = vpow.pop %v2193
    %v2195 = vmul.f32 %v1621, 1.442695
    %v2196 = vpow.pop %v2195
    %v2197 = vmul.f32 %v1622, 1.442695
    %v2198 = vpow.pop %v2197
    %v2199 = vmul.f32 %v1623, 1.442695
    %v2200 = vpow.pop %v2199
    %v2201 = vmul.f32 %v1624, 1.442695
    %v2202 = vpow.pop %v2201
    %v2203 = vmul.f32 %v1625, 1.442695
    %v2204 = vpow.pop %v2203
    %v2205 = vmul.f32 %v1626, 1.442695
    %v2206 = vpow.pop %v2205
    %v2207 = vmul.f32 %v1627, 1.442695
    %v2208 = vpow.pop %v2207
    %v2209 = vmul.f32 %v1628, 1.442695
    %v2210 = vpow.pop %v2209
    %v2211 = vmul.f32 %v1629, 1.442695
    %v2212 = vpow.pop %v2211
    %v2213 = vmul.f32 %v1630, 1.442695
    %v2214 = vpow.pop %v2213
    %v2215 = vmul.f32 %v1631, 1.442695
    %v2216 = vpow.pop %v2215
    %v2217 = vmul.f32 %v1632, 1.442695
    %v2218 = vpow.pop %v2217
    %v2219 = vmul.f32 %v1633, 1.442695
    %v2220 = vpow.pop %v2219
    %v2221 = vmul.f32 %v1634, 1.442695
    %v2222 = vpow.pop %v2221
    %v2223 = vmul.f32 %v1635, 1.442695
    %v2224 = vpow.pop %v2223
    %v2225 = vmul.f32 %v1636, 1.442695
    %v2226 = vpow.pop %v2225
    %v2227 = vmul.f32 %v1637, 1.442695
    %v2228 = vpow.pop %v2227
    %v2229 = vmul.f32 %v1638, 1.442695
    %v2230 = vpow.pop %v2229
    %v2231 = vmul.f32 %v1639, 1.442695
    %v2232 = vpow.pop %v2231
    %v2233 = vmul.f32 %v1640, 1.442695
    %v2234 = vpow.pop %v2233
    %v2235 = vmul.f32 %v1641, 1.442695
    %v2236 = vpow.pop %v2235
    %v2237 = vmul.f32 %v1642, 1.442695
    %v2238 = vpow.pop %v2237
    %v2239 = vmul.f32 %v1643, 1.442695
    %v2240 = vpow.pop %v2239
    %v2241 = vmul.f32 %v1644, 1.442695
    %v2242 = vpow.pop %v2241
    %v2243 = vmul.f32 %v1645, 1.442695
    %v2244 = vpow.pop %v2243
    %v2245 = vmul.f32 %v1646, 1.442695
    %v2246 = vpow.pop %v2245
    %v2247 = vmul.f32 %v1647, 1.442695
    %v2248 = vpow.pop %v2247
    %v2249 = vmul.f32 %v1648, 1.442695
    %v2250 = vpow.pop %v2249
    %v2251 = vmul.f32 %v1649, 1.442695
    %v2252 = vpow.pop %v2251
    %v2253 = vmul.f32 %v1650, 1.442695
    %v2254 = vpow.pop %v2253
    %v2255 = vmul.f32 %v1651, 1.442695
    %v2256 = vpow.pop %v2255
    %v2257 = vmul.f32 %v1652, 1.442695
    %v2258 = vpow.pop %v2257
    %v2259 = vmul.f32 %v1653, 1.442695
    %v2260 = vpow.pop %v2259
    %v2261 = vmul.f32 %v1654, 1.442695
    %v2262 = vpow.pop %v2261
    %v2263 = vmul.f32 %v1655, 1.442695
    %v2264 = vpow.pop %v2263
    %v2265 = vmul.f32 %v1656, 1.442695
    %v2266 = vpow.pop %v2265
    %v2267 = vmul.f32 %v1657, 1.442695
    %v2268 = vpow.pop %v2267
    %v2269 = vmul.f32 %v1658, 1.442695
    %v2270 = vpow.pop %v2269
    %v2271 = vmul.f32 %v1659, 1.442695
    %v2272 = vpow.pop %v2271
    %v2273 = vmul.f32 %v1660, 1.442695
    %v2274 = vpow.pop %v2273
    %v2275 = vmul.f32 %v1661, 1.442695
    %v2276 = vpow.pop %v2275
    %v2277 = vmul.f32 %v1662, 1.442695
    %v2278 = vpow.pop %v2277
    %v2279 = vmul.f32 %v1663, 1.442695
    %v2280 = vpow.pop %v2279
    %v2281 = vmul.f32 %v1664, 1.442695
    %v2282 = vpow.pop %v2281
    %v2283 = vmul.f32 %v1665, 1.442695
    %v2284 = vpow.pop %v2283
    %v2285 = vmul.f32 %v1666, 1.442695
    %v2286 = vpow.pop %v2285
    %v2287 = vmul.f32 %v1667, 1.442695
    %v2288 = vpow.pop %v2287
    %v2289 = vmul.f32 %v1668, 1.442695
    %v2290 = vpow.pop %v2289
    %v2291 = vmul.f32 %v1669, 1.442695
    %v2292 = vpow.pop %v2291
    %v2293 = vmul.f32 %v1670, 1.442695
    %v2294 = vpow.pop %v2293
    %v2295 = vmul.f32 %v1671, 1.442695
    %v2296 = vpow.pop %v2295
    %v2297 = vmul.f32 %v1672, 1.442695
    %v2298 = vpow.pop %v2297
    %v2299 = vmul.f32 %v1673, 1.442695
    %v2300 = vpow.pop %v2299
    %v2301 = vmul.f32 %v1674, 1.442695
    %v2302 = vpow.pop %v2301
    %v2303 = vmul.f32 %v1675, 1.442695
    %v2304 = vpow.pop %v2303
    %v2305 = vmul.f32 %v1676, 1.442695
    %v2306 = vpow.pop %v2305
    %v2307 = vmul.f32 %v1677, 1.442695
    %v2308 = vpow.pop %v2307
    %v2309 = vmul.f32 %v1678, 1.442695
    %v2310 = vpow.pop %v2309
    %v2311 = vmul.f32 %v1679, 1.442695
    %v2312 = vpow.pop %v2311
    %v2313 = vmul.f32 %v1680, 1.442695
    %v2314 = vpow.pop %v2313
    %v2315 = vmul.f32 %v1681, 1.442695
    %v2316 = vpow.pop %v2315
    %v2317 = vmul.f32 %v1682, 1.442695
    %v2318 = vpow.pop %v2317
    %v2319 = vmul.f32 %v1683, 1.442695
    %v2320 = vpow.pop %v2319
    %v2321 = vmul.f32 %v1684, 1.442695
    %v2322 = vpow.pop %v2321
    %v2323 = vmul.f32 %v1685, 1.442695
    %v2324 = vpow.pop %v2323
    %v2325 = vmul.f32 %v1686, 1.442695
    %v2326 = vpow.pop %v2325
    %v2327 = vmul.f32 %v1687, 1.442695
    %v2328 = vpow.pop %v2327
    %v2329 = vmul.f32 %v1688, 1.442695
    %v2330 = vpow.pop %v2329
    %v2331 = vmul.f32 %v1689, 1.442695
    %v2332 = vpow.pop %v2331
    %v2333 = vmul.f32 %v1690, 1.442695
    %v2334 = vpow.pop %v2333
    %v2335 = vmul.f32 %v1691, 1.442695
    %v2336 = vpow.pop %v2335
    %v2337 = vmul.f32 %v1692, 1.442695
    %v2338 = vpow.pop %v2337
    %v2339 = vmul.f32 %v1693, 1.442695
    %v2340 = vpow.pop %v2339
    %v2341 = vmul.f32 %v1694, 1.442695
    %v2342 = vpow.pop %v2341
    %v2343 = vmul.f32 %v1695, 1.442695
    %v2344 = vpow.pop %v2343
    %v2345 = vmul.f32 %v1696, 1.442695
    %v2346 = vpow.pop %v2345
    %v2347 = vmul.f32 %v1697, 1.442695
    %v2348 = vpow.pop %v2347
    %v2349 = vmul.f32 %v1698, 1.442695
    %v2350 = vpow.pop %v2349
    %v2351 = vmul.f32 %v1699, 1.442695
    %v2352 = vpow.pop %v2351
    %v2353 = vmul.f32 %v1700, 1.442695
    %v2354 = vpow.pop %v2353
    %v2355 = vmul.f32 %v1701, 1.442695
    %v2356 = vpow.pop %v2355
    %v2357 = vmul.f32 %v1702, 1.442695
    %v2358 = vpow.pop %v2357
    %v2359 = vmul.f32 %v1703, 1.442695
    %v2360 = vpow.pop %v2359
    %v2361 = vmul.f32 %v1704, 1.442695
    %v2362 = vpow.pop %v2361
    %v2363 = vmul.f32 %v1705, 1.442695
    %v2364 = vpow.pop %v2363
    %v2365 = vmul.f32 %v1706, 1.442695
    %v2366 = vpow.pop %v2365
    %v2367 = vmul.f32 %v1707, 1.442695
    %v2368 = vpow.pop %v2367
    %v2369 = vmul.f32 %v1708, 1.442695
    %v2370 = vpow.pop %v2369
    %v2371 = vmul.f32 %v1709, 1.442695
    %v2372 = vpow.pop %v2371
    %v2373 = vmul.f32 %v1710, 1.442695
    %v2374 = vpow.pop %v2373
    %v2375 = vmul.f32 %v1711, 1.442695
    %v2376 = vpow.pop %v2375
    %v2377 = vmul.f32 %v1712, 1.442695
    %v2378 = vpow.pop %v2377
    %v2379 = vmul.f32 %v1713, 1.442695
    %v2380 = vpow.pop %v2379
    %v2381 = vmul.f32 %v1714, 1.442695
    %v2382 = vpow.pop %v2381
    %v2383 = vmul.f32 %v1715, 1.442695
    %v2384 = vpow.pop %v2383
    %v2385 = vmul.f32 %v1716, 1.442695
    %v2386 = vpow.pop %v2385
    %v2387 = vmul.f32 %v1717, 1.442695
    %v2388 = vpow.pop %v2387
    %v2389 = vmul.f32 %v1718, 1.442695
    %v2390 = vpow.pop %v2389
    %v2391 = vmul.f32 %v1719, 1.442695
    %v2392 = vpow.pop %v2391
    %v2393 = vmul.f32 %v1720, 1.442695
    %v2394 = vpow.pop %v2393
    %v2395 = vmul.f32 %v1721, 1.442695
    %v2396 = vpow.pop %v2395
    %v2397 = vmul.f32 %v1722, 1.442695
    %v2398 = vpow.pop %v2397
    %v2399 = vmul.f32 %v1723, 1.442695
    %v2400 = vpow.pop %v2399
    %v2401 = vmul.f32 %v1724, 1.442695
    %v2402 = vpow.pop %v2401
    %v2403 = vmul.f32 %v1725, 1.442695
    %v2404 = vpow.pop %v2403
    %v2405 = vmul.f32 %v1726, 1.442695
    %v2406 = vpow.pop %v2405
    %v2407 = vmul.f32 %v1727, 1.442695
    %v2408 = vpow.pop %v2407
    %v2409 = vmul.f32 %v1728, 1.442695
    %v2410 = vpow.pop %v2409
    %v2411 = vmul.f32 %v1729, 1.442695
    %v2412 = vpow.pop %v2411
    %v2413 = vmul.f32 %v1730, 1.442695
    %v2414 = vpow.pop %v2413
    %v2415 = vmul.f32 %v1731, 1.442695
    %v2416 = vpow.pop %v2415
    %v2417 = vmul.f32 %v1732, 1.442695
    %v2418 = vpow.pop %v2417
    %v2419 = vmul.f32 %v1733, 1.442695
    %v2420 = vpow.pop %v2419
    %v2421 = vmul.f32 %v1734, 1.442695
    %v2422 = vpow.pop %v2421
    %v2423 = vmul.f32 %v1735, 1.442695
    %v2424 = vpow.pop %v2423
    %v2425 = vmul.f32 %v1736, 1.442695
    %v2426 = vpow.pop %v2425
    %v2427 = vmul.f32 %v1737, 1.442695
    %v2428 = vpow.pop %v2427
    %v2429 = vmul.f32 %v1738, 1.442695
    %v2430 = vpow.pop %v2429
    %v2431 = vmul.f32 %v1739, 1.442695
    %v2432 = vpow.pop %v2431
    %v2433 = vmul.f32 %v1740, 1.442695
    %v2434 = vpow.pop %v2433
    %v2435 = vmul.f32 %v1741, 1.442695
    %v2436 = vpow.pop %v2435
    %v2437 = vmul.f32 %v1742, 1.442695
    %v2438 = vpow.pop %v2437
    %v2439 = vmul.f32 %v1743, 1.442695
    %v2440 = vpow.pop %v2439
    %v2441 = vmul.f32 %v1744, 1.442695
    %v2442 = vpow.pop %v2441
    %v2443 = vmul.f32 %v1745, 1.442695
    %v2444 = vpow.pop %v2443
    %v2445 = vmul.f32 %v1746, 1.442695
    %v2446 = vpow.pop %v2445
    %v2447 = vmul.f32 %v1747, 1.442695
    %v2448 = vpow.pop %v2447
    %v2449 = vmul.f32 %v1748, 1.442695
    %v2450 = vpow.pop %v2449
    %v2451 = vmul.f32 %v1749, 1.442695
    %v2452 = vpow.pop %v2451
    %v2453 = vmul.f32 %v1750, 1.442695
    %v2454 = vpow.pop %v2453
    %v2455 = vmul.f32 %v1751, 1.442695
    %v2456 = vpow.pop %v2455
    %v2457 = vmul.f32 %v1752, 1.442695
    %v2458 = vpow.pop %v2457
    %v2459 = vmul.f32 %v1753, 1.442695
    %v2460 = vpow.pop %v2459
    %v2461 = vmul.f32 %v1754, 1.442695
    %v2462 = vpow.pop %v2461
    %v2463 = vmul.f32 %v1755, 1.442695
    %v2464 = vpow.pop %v2463
    %v2465 = vmul.f32 %v1756, 1.442695
    %v2466 = vpow.pop %v2465
    %v2467 = vmul.f32 %v1757, 1.442695
    %v2468 = vpow.pop %v2467
    %v2469 = vmul.f32 %v1758, 1.442695
    %v2470 = vpow.pop %v2469
    %v2471 = vmul.f32 %v1759, 1.442695
    %v2472 = vpow.pop %v2471
    %v2473 = vmul.f32 %v1760, 1.442695
    %v2474 = vpow.pop %v2473
    %v2475 = vmul.f32 %v1761, 1.442695
    %v2476 = vpow.pop %v2475
    %v2477 = vmul.f32 %v1762, 1.442695
    %v2478 = vpow.pop %v2477
    %v2479 = vmul.f32 %v1763, 1.442695
    %v2480 = vpow.pop %v2479
    %v2481 = vmul.f32 %v1764, 1.442695
    %v2482 = vpow.pop %v2481
    %v2483 = vmul.f32 %v1765, 1.442695
    %v2484 = vpow.pop %v2483
    %v2485 = vmul.f32 %v1766, 1.442695
    %v2486 = vpow.pop %v2485
    %v2487 = vmul.f32 %v1767, 1.442695
    %v2488 = vpow.pop %v2487
    %v2489 = vmul.f32 %v1768, 1.442695
    %v2490 = vpow.pop %v2489
    %v2491 = vmul.f32 %v1769, 1.442695
    %v2492 = vpow.pop %v2491
    %v2493 = vmul.f32 %v1770, 1.442695
    %v2494 = vpow.pop %v2493
    %v2495 = vmul.f32 %v1771, 1.442695
    %v2496 = vpow.pop %v2495
    %v2497 = vmul.f32 %v1772, 1.442695
    %v2498 = vpow.pop %v2497
    %v2499 = vmul.f32 %v1773, 1.442695
    %v2500 = vpow.pop %v2499
    %v2501 = vmul.f32 %v1774, 1.442695
    %v2502 = vpow.pop %v2501
    %v2503 = vmul.f32 %v1775, 1.442695
    %v2504 = vpow.pop %v2503
    %v2505 = vmul.f32 %v1776, 1.442695
    %v2506 = vpow.pop %v2505
    %v2507 = vmul.f32 %v1777, 1.442695
    %v2508 = vpow.pop %v2507
    %v2509 = vmul.f32 %v1778, 1.442695
    %v2510 = vpow.pop %v2509
    %v2511 = vmul.f32 %v1779, 1.442695
    %v2512 = vpow.pop %v2511
    %v2513 = vmul.f32 %v1780, 1.442695
    %v2514 = vpow.pop %v2513
    %v2515 = vmul.f32 %v1781, 1.442695
    %v2516 = vpow.pop %v2515
    %v2517 = vmul.f32 %v1782, 1.442695
    %v2518 = vpow.pop %v2517
    %v2519 = vmul.f32 %v1783, 1.442695
    %v2520 = vpow.pop %v2519
    %v2521 = vmul.f32 %v1784, 1.442695
    %v2522 = vpow.pop %v2521
    %v2523 = vmul.f32 %v1785, 1.442695
    %v2524 = vpow.pop %v2523
    %v2525 = vmul.f32 %v1786, 1.442695
    %v2526 = vpow.pop %v2525
    %v2527 = vmul.f32 %v1787, 1.442695
    %v2528 = vpow.pop %v2527
    %v2529 = vmul.f32 %v1788, 1.442695
    %v2530 = vpow.pop %v2529
    %v2531 = vmul.f32 %v1789, 1.442695
    %v2532 = vpow.pop %v2531
    %v2533 = vmul.f32 %v1790, 1.442695
    %v2534 = vpow.pop %v2533
    %v2535 = vmul.f32 %v1791, 1.442695
    %v2536 = vpow.pop %v2535
    %v2537 = vmul.f32 %v1792, 1.442695
    %v2538 = vpow.pop %v2537
    %v2539 = vmul.f32 %v1793, 1.442695
    %v2540 = vpow.pop %v2539
    %v2541 = vmul.f32 %v1794, 1.442695
    %v2542 = vpow.pop %v2541
    %v2543 = vmul.f32 %v1795, 1.442695
    %v2544 = vpow.pop %v2543
    %v2545 = vmul.f32 %v1796, 1.442695
    %v2546 = vpow.pop %v2545
    %v2547 = vmul.f32 %v1797, 1.442695
    %v2548 = vpow.pop %v2547
    %v2549 = vmul.f32 %v1798, 1.442695
    %v2550 = vpow.pop %v2549
    %v2551 = vmul.f32 %v1799, 1.442695
    %v2552 = vpow.pop %v2551
    %v2553 = vmul.f32 %v1800, 1.442695
    %v2554 = vpow.pop %v2553
    %v2555 = vmul.f32 %v1801, 1.442695
    %v2556 = vpow.pop %v2555
    %v2557 = vmul.f32 %v1802, 1.442695
    %v2558 = vpow.pop %v2557
    %v2559 = vmul.f32 %v1803, 1.442695
    %v2560 = vpow.pop %v2559
    %v2561 = vmul.f32 %v1804, 1.442695
    %v2562 = vpow.pop %v2561
    %v2563 = vmul.f32 %v1805, 1.442695
    %v2564 = vpow.pop %v2563
    %v2565 = vmul.f32 %v1806, 1.442695
    %v2566 = vpow.pop %v2565
    %v2567 = vmul.f32 %v1807, 1.442695
    %v2568 = vpow.pop %v2567
    %v2569 = vmul.f32 %v1808, 1.442695
    %v2570 = vpow.pop %v2569
    %v2571 = vmul.f32 %v1809, 1.442695
    %v2572 = vpow.pop %v2571
    %v2573 = vmul.f32 %v1810, 1.442695
    %v2574 = vpow.pop %v2573
    %v2575 = vmul.f32 %v1811, 1.442695
    %v2576 = vpow.pop %v2575
    %v2577 = vmul.f32 %v1812, 1.442695
    %v2578 = vpow.pop %v2577
    %v2579 = vmul.f32 %v1813, 1.442695
    %v2580 = vpow.pop %v2579
    %v2581 = vmul.f32 %v1814, 1.442695
    %v2582 = vpow.pop %v2581
    %v2583 = vmul.f32 %v1815, 1.442695
    %v2584 = vpow.pop %v2583
    %v2585 = vmul.f32 %v1816, 1.442695
    %v2586 = vpow.pop %v2585
    %v2587 = vmul.f32 %v1817, 1.442695
    %v2588 = vpow.pop %v2587
    %v2589 = vmul.f32 %v1818, 1.442695
    %v2590 = vpow.pop %v2589
    %v2591 = vmul.f32 %v1819, 1.442695
    %v2592 = vpow.pop %v2591
    %v2593 = vmul.f32 %v1820, 1.442695
    %v2594 = vpow.pop %v2593
    %v2595 = vmul.f32 %v1821, 1.442695
    %v2596 = vpow.pop %v2595
    %v2597 = vmul.f32 %v1822, 1.442695
    %v2598 = vpow.pop %v2597
    %v2599 = vmul.f32 %v1823, 1.442695
    %v2600 = vpow.pop %v2599
    %v2601 = vmul.f32 %v1824, 1.442695
    %v2602 = vpow.pop %v2601
    %v2603 = vmul.f32 %v1825, 1.442695
    %v2604 = vpow.pop %v2603
    %v2605 = vmul.f32 %v1826, 1.442695
    %v2606 = vpow.pop %v2605
    %v2607 = vmul.f32 %v1827, 1.442695
    %v2608 = vpow.pop %v2607
    %v2609 = vmul.f32 %v1828, 1.442695
    %v2610 = vpow.pop %v2609
    %v2611 = vmul.f32 %v1829, 1.442695
    %v2612 = vpow.pop %v2611
    %v2613 = vmul.f32 %v1830, 1.442695
    %v2614 = vpow.pop %v2613
    %v2615 = vmul.f32 %v1831, 1.442695
    %v2616 = vpow.pop %v2615
    %v2617 = vmul.f32 %v1832, 1.442695
    %v2618 = vpow.pop %v2617
    %v2619 = vmul.f32 %v1833, 1.442695
    %v2620 = vpow.pop %v2619
    %v2621 = vmul.f32 %v1834, 1.442695
    %v2622 = vpow.pop %v2621
    %v2623 = vmul.f32 %v1835, 1.442695
    %v2624 = vpow.pop %v2623
    %v2625 = vmul.f32 %v1836, 1.442695
    %v2626 = vpow.pop %v2625
    %v2627 = vmul.f32 %v1837, 1.442695
    %v2628 = vpow.pop %v2627
    %v2629 = vmul.f32 %v1838, 1.442695
    %v2630 = vpow.pop %v2629
    %v2631 = vmul.f32 %v1839, 1.442695
    %v2632 = vpow.pop %v2631
    %v2633 = vmul.f32 %v1840, 1.442695
    %v2634 = vpow.pop %v2633
    %v2635 = vmul.f32 %v1841, 1.442695
    %v2636 = vpow.pop %v2635
    %v2637 = vmul.f32 %v1842, 1.442695
    %v2638 = vpow.pop %v2637
    %v2639 = vmul.f32 %v1843, 1.442695
    %v2640 = vpow.pop %v2639
    %v2641 = vmul.f32 %v1844, 1.442695
    %v2642 = vpow.pop %v2641
    %v2643 = vmul.f32 %v1845, 1.442695
    %v2644 = vpow.pop %v2643
    %v2645 = vmul.f32 %v1846, 1.442695
    %v2646 = vpow.pop %v2645
    %v2647 = vmul.f32 %v1847, 1.442695
    %v2648 = vpow.pop %v2647
    %v2649 = vmul.f32 %v1848, 1.442695
    %v2650 = vpow.pop %v2649
    %v2651 = vmul.f32 %v1849, 1.442695
    %v2652 = vpow.pop %v2651
    %v2653 = vmul.f32 %v1850, 1.442695
    %v2654 = vpow.pop %v2653
    %v2655 = vmul.f32 %v1851, 1.442695
    %v2656 = vpow.pop %v2655
    %v2657 = vmul.f32 %v1852, 1.442695
    %v2658 = vpow.pop %v2657
    %v2659 = vmul.f32 %v1853, 1.442695
    %v2660 = vpow.pop %v2659
    %v2661 = vmul.f32 %v1854, 1.442695
    %v2662 = vpow.pop %v2661
    %v2663 = vmul.f32 %v1855, 1.442695
    %v2664 = vpow.pop %v2663
    %v2665 = vmul.f32 %v1856, 1.442695
    %v2666 = vpow.pop %v2665
    %v2667 = vmul.f32 %v1857, 1.442695
    %v2668 = vpow.pop %v2667
    %v2669 = vmul.f32 %v1858, 1.442695
    %v2670 = vpow.pop %v2669
    %v2671 = vmul.f32 %v1859, 1.442695
    %v2672 = vpow.pop %v2671
    %v2673 = vmul.f32 %v1860, 1.442695
    %v2674 = vpow.pop %v2673
    %v2675 = vmul.f32 %v1861, 1.442695
    %v2676 = vpow.pop %v2675
    %v2677 = vmul.f32 %v1862, 1.442695
    %v2678 = vpow.pop %v2677
    %v2679 = vmul.f32 %v1863, 1.442695
    %v2680 = vpow.pop %v2679
    %v2681 = vmul.f32 %v1864, 1.442695
    %v2682 = vpow.pop %v2681
    %v2683 = vmul.f32 %v1865, 1.442695
    %v2684 = vpow.pop %v2683
    %v2685 = vmul.f32 %v1866, 1.442695
    %v2686 = vpow.pop %v2685
    %v2687 = vmul.f32 %v1867, 1.442695
    %v2688 = vpow.pop %v2687
    %v2689 = vmul.f32 %v1868, 1.442695
    %v2690 = vpow.pop %v2689
    %v2691 = vmul.f32 %v1869, 1.442695
    %v2692 = vpow.pop %v2691
    %v2693 = vmul.f32 %v1870, 1.442695
    %v2694 = vpow.pop %v2693
    %v2695 = vmul.f32 %v1871, 1.442695
    %v2696 = vpow.pop %v2695
    %v2697 = vmul.f32 %v1872, 1.442695
    %v2698 = vpow.pop %v2697
    %v2699 = vmul.f32 %v1873, 1.442695
    %v2700 = vpow.pop %v2699
    %v2701 = vmul.f32 %v1874, 1.442695
    %v2702 = vpow.pop %v2701
    %v2703 = vmul.f32 %v1875, 1.442695
    %v2704 = vpow.pop %v2703
    %v2705 = vmul.f32 %v1876, 1.442695
    %v2706 = vpow.pop %v2705
    %v2707 = vmul.f32 %v1877, 1.442695
    %v2708 = vpow.pop %v2707
    %v2709 = vmul.f32 %v1878, 1.442695
    %v2710 = vpow.pop %v2709
    %v2711 = vmul.f32 %v1879, 1.442695
    %v2712 = vpow.pop %v2711
    %v2713 = vmul.f32 %v1880, 1.442695
    %v2714 = vpow.pop %v2713
    %v2715 = vmul.f32 %v1881, 1.442695
    %v2716 = vpow.pop %v2715
    %v2717 = vmul.f32 %v1882, 1.442695
    %v2718 = vpow.pop %v2717
    %v2719 = vmul.f32 %v1883, 1.442695
    %v2720 = vpow.pop %v2719
    %v2721 = vmul.f32 %v1884, 1.442695
    %v2722 = vpow.pop %v2721
    %v2723 = vmul.f32 %v1885, 1.442695
    %v2724 = vpow.pop %v2723
    %v2725 = vmul.f32 %v1886, 1.442695
    %v2726 = vpow.pop %v2725
    %v2727 = vmul.f32 %v1887, 1.442695
    %v2728 = vpow.pop %v2727
    %v2729 = vmul.f32 %v1888, 1.442695
    %v2730 = vpow.pop %v2729
    %v2731 = vmul.f32 %v1889, 1.442695
    %v2732 = vpow.pop %v2731
    %v2733 = vmul.f32 %v1890, 1.442695
    %v2734 = vpow.pop %v2733
    %v2735 = vmul.f32 %v1891, 1.442695
    %v2736 = vpow.pop %v2735
    %v2737 = vmul.f32 %v1892, 1.442695
    %v2738 = vpow.pop %v2737
    %v2739 = vmul.f32 %v1893, 1.442695
    %v2740 = vpow.pop %v2739
    %v2741 = vmul.f32 %v1894, 1.442695
    %v2742 = vpow.pop %v2741
    %v2743 = vmul.f32 %v1895, 1.442695
    %v2744 = vpow.pop %v2743
    %v2745 = vmul.f32 %v1896, 1.442695
    %v2746 = vpow.pop %v2745
    %v2747 = vmul.f32 %v1897, 1.442695
    %v2748 = vpow.pop %v2747
    %v2749 = vmul.f32 %v1898, 1.442695
    %v2750 = vpow.pop %v2749
    %v2751 = vmul.f32 %v1899, 1.442695
    %v2752 = vpow.pop %v2751
    %v2753 = vmul.f32 %v1900, 1.442695
    %v2754 = vpow.pop %v2753
    %v2755 = vmul.f32 %v1901, 1.442695
    %v2756 = vpow.pop %v2755
    %v2757 = vmul.f32 %v1902, 1.442695
    %v2758 = vpow.pop %v2757
    %v2759 = vmul.f32 %v1903, 1.442695
    %v2760 = vpow.pop %v2759
    %v2761 = vmul.f32 %v1904, 1.442695
    %v2762 = vpow.pop %v2761
    %v2763 = vmul.f32 %v1905, 1.442695
    %v2764 = vpow.pop %v2763
    %v2765 = vmul.f32 %v1906, 1.442695
    %v2766 = vpow.pop %v2765
    %v2767 = vmul.f32 %v1907, 1.442695
    %v2768 = vpow.pop %v2767
    %v2769 = vmul.f32 %v1908, 1.442695
    %v2770 = vpow.pop %v2769
    %v2771 = vmul.f32 %v1909, 1.442695
    %v2772 = vpow.pop %v2771
    %v2773 = vmul.f32 %v1910, 1.442695
    %v2774 = vpow.pop %v2773
    %v2775 = vmul.f32 %v1911, 1.442695
    %v2776 = vpow.pop %v2775
    %v2777 = vmul.f32 %v1912, 1.442695
    %v2778 = vpow.pop %v2777
    %v2779 = vmul.f32 %v1913, 1.442695
    %v2780 = vpow.pop %v2779
    %v2781 = vmul.f32 %v1914, 1.442695
    %v2782 = vpow.pop %v2781
    %v2783 = vmul.f32 %v1915, 1.442695
    %v2784 = vpow.pop %v2783
    %v2785 = vmul.f32 %v1916, 1.442695
    %v2786 = vpow.pop %v2785
    %v2787 = vmul.f32 %v1917, 1.442695
    %v2788 = vpow.pop %v2787
    %v2789 = vmul.f32 %v1918, 1.442695
    %v2790 = vpow.pop %v2789
    %v2791 = vmul.f32 %v1919, 1.442695
    %v2792 = vpow.pop %v2791
    %v2793 = vmul.f32 %v1920, 1.442695
    %v2794 = vpow.pop %v2793
    %v2795 = vmul.f32 %v1921, 1.442695
    %v2796 = vpow.pop %v2795
    %v2797 = vmul.f32 %v1922, 1.442695
    %v2798 = vpow.pop %v2797
    %v2799 = vmul.f32 %v1923, 1.442695
    %v2800 = vpow.pop %v2799
    %v2801 = vmul.f32 %v1924, 1.442695
    %v2802 = vpow.pop %v2801
    %v2803 = vmul.f32 %v1925, 1.442695
    %v2804 = vpow.pop %v2803
    %v2805 = vmul.f32 %v1926, 1.442695
    %v2806 = vpow.pop %v2805
    %v2807 = vmul.f32 %v1927, 1.442695
    %v2808 = vpow.pop %v2807
    %v2809 = vmul.f32 %v1928, 1.442695
    %v2810 = vpow.pop %v2809
    %v2811 = vmul.f32 %v1929, 1.442695
    %v2812 = vpow.pop %v2811
    %v2813 = vmul.f32 %v1930, 1.442695
    %v2814 = vpow.pop %v2813
    %v2815 = vmul.f32 %v1931, 1.442695
    %v2816 = vpow.pop %v2815
    %v2817 = vmul.f32 %v1932, 1.442695
    %v2818 = vpow.pop %v2817
    %v2819 = vmul.f32 %v1933, 1.442695
    %v2820 = vpow.pop %v2819
    %v2821 = vmul.f32 %v1934, 1.442695
    %v2822 = vpow.pop %v2821
    %v2823 = vmul.f32 %v1935, 1.442695
    %v2824 = vpow.pop %v2823
    %v2825 = vmul.f32 %v1936, 1.442695
    %v2826 = vpow.pop %v2825
    %v2827 = vmul.f32 %v1937, 1.442695
    %v2828 = vpow.pop %v2827
    %v2829 = vmul.f32 %v1938, 1.442695
    %v2830 = vpow.pop %v2829
    %v2831 = vmul.f32 %v1939, 1.442695
    %v2832 = vpow.pop %v2831
    %v2833 = vmul.f32 %v1940, 1.442695
    %v2834 = vpow.pop %v2833
    %v2835 = vmul.f32 %v1941, 1.442695
    %v2836 = vpow.pop %v2835
    %v2837 = vmul.f32 %v1942, 1.442695
    %v2838 = vpow.pop %v2837
    %v2839 = vmul.f32 %v1943, 1.442695
    %v2840 = vpow.pop %v2839
    %v2841 = vmul.f32 %v1944, 1.442695
    %v2842 = vpow.pop %v2841
    %v2843 = vmul.f32 %v1945, 1.442695
    %v2844 = vpow.pop %v2843
    %v2845 = vmul.f32 %v1946, 1.442695
    %v2846 = vpow.pop %v2845
    %v2847 = vmul.f32 %v1947, 1.442695
    %v2848 = vpow.pop %v2847
    %v2849 = vmul.f32 %v1948, 1.442695
    %v2850 = vpow.pop %v2849
    %v2851 = vmul.f32 %v1949, 1.442695
    %v2852 = vpow.pop %v2851
    %v2853 = vmul.f32 %v1950, 1.442695
    %v2854 = vpow.pop %v2853
    %v2855 = vmul.f32 %v1951, 1.442695
    %v2856 = vpow.pop %v2855
    %v2857 = vmul.f32 %v1952, 1.442695
    %v2858 = vpow.pop %v2857
    %v2859 = vmul.f32 %v1953, 1.442695
    %v2860 = vpow.pop %v2859
    %v2861 = vmul.f32 %v1954, 1.442695
    %v2862 = vpow.pop %v2861
    %v2863 = vmul.f32 %v1955, 1.442695
    %v2864 = vpow.pop %v2863
    %v2865 = vmul.f32 %v1956, 1.442695
    %v2866 = vpow.pop %v2865
    %v2867 = vmul.f32 %v1957, 1.442695
    %v2868 = vpow.pop %v2867
    %v2869 = vmul.f32 %v1958, 1.442695
    %v2870 = vpow.pop %v2869
    %v2871 = vmul.f32 %v1959, 1.442695
    %v2872 = vpow.pop %v2871
    %v2873 = vmul.f32 %v1960, 1.442695
    %v2874 = vpow.pop %v2873
    %v2875 = vmul.f32 %v1961, 1.442695
    %v2876 = vpow.pop %v2875
    %v2877 = vmul.f32 %v1962, 1.442695
    %v2878 = vpow.pop %v2877
    %v2879 = vmul.f32 %v1963, 1.442695
    %v2880 = vpow.pop %v2879
    %v2881 = vmul.f32 %v1964, 1.442695
    %v2882 = vpow.pop %v2881
    %v2883 = vmul.f32 %v1965, 1.442695
    %v2884 = vpow.pop %v2883
    %v2885 = vmul.f32 %v1966, 1.442695
    %v2886 = vpow.pop %v2885
    %v2887 = vmul.f32 %v1967, 1.442695
    %v2888 = vpow.pop %v2887
    %v2889 = vmul.f32 %v1968, 1.442695
    %v2890 = vpow.pop %v2889
    %v2891 = vmul.f32 %v1969, 1.442695
    %v2892 = vpow.pop %v2891
    %v2893 = vmul.f32 %v1970, 1.442695
    %v2894 = vpow.pop %v2893
    %v2895 = vmul.f32 %v1971, 1.442695
    %v2896 = vpow.pop %v2895
    %v2897 = vmul.f32 %v1972, 1.442695
    %v2898 = vpow.pop %v2897
    %v2899 = vmul.f32 %v1973, 1.442695
    %v2900 = vpow.pop %v2899
    %v2901 = vmul.f32 %v1974, 1.442695
    %v2902 = vpow.pop %v2901
    %v2903 = vmul.f32 %v1975, 1.442695
    %v2904 = vpow.pop %v2903
    %v2905 = vmul.f32 %v1976, 1.442695
    %v2906 = vpow.pop %v2905
    %v2907 = vmul.f32 %v1977, 1.442695
    %v2908 = vpow.pop %v2907
    %v2909 = vmul.f32 %v1978, 1.442695
    %v2910 = vpow.pop %v2909
    %v2911 = vmul.f32 %v1979, 1.442695
    %v2912 = vpow.pop %v2911
    %v2913 = vmul.f32 %v1980, 1.442695
    %v2914 = vpow.pop %v2913
    %v2915 = vmul.f32 %v1981, 1.442695
    %v2916 = vpow.pop %v2915
    %v2917 = vmul.f32 %v1982, 1.442695
    %v2918 = vpow.pop %v2917
    %v2919 = vmul.f32 %v1983, 1.442695
    %v2920 = vpow.pop %v2919
    %v2921 = vmul.f32 %v1984, 1.442695
    %v2922 = vpow.pop %v2921
    %v2923 = vmul.f32 %v1985, 1.442695
    %v2924 = vpow.pop %v2923
    %v2925 = vmul.f32 %v1986, 1.442695
    %v2926 = vpow.pop %v2925
    %v2927 = vmul.f32 %v1987, 1.442695
    %v2928 = vpow.pop %v2927
    %v2929 = vmul.f32 %v1988, 1.442695
    %v2930 = vpow.pop %v2929
    %v2931 = vmul.f32 %v1989, 1.442695
    %v2932 = vpow.pop %v2931
    %v2933 = vmul.f32 %v1990, 1.442695
    %v2934 = vpow.pop %v2933
    %v2935 = vmul.f32 %v1991, 1.442695
    %v2936 = vpow.pop %v2935
    %v2937 = vmul.f32 %v1992, 1.442695
    %v2938 = vpow.pop %v2937
    %v2939 = vmul.f32 %v1993, 1.442695
    %v2940 = vpow.pop %v2939
    %v2941 = vmul.f32 %v1994, 1.442695
    %v2942 = vpow.pop %v2941
    %v2943 = vmul.f32 %v1995, 1.442695
    %v2944 = vpow.pop %v2943
    %v2945 = vmul.f32 %v1996, 1.442695
    %v2946 = vpow.pop %v2945
    %v2947 = vmul.f32 %v1997, 1.442695
    %v2948 = vpow.pop %v2947
    %v2949 = vmul.f32 %v1998, 1.442695
    %v2950 = vpow.pop %v2949
    %v2951 = vmul.f32 %v1999, 1.442695
    %v2952 = vpow.pop %v2951
    %v2953 = vmul.f32 %v2000, 1.442695
    %v2954 = vpow.pop %v2953
    %v2955 = vmul.f32 %v2001, 1.442695
    %v2956 = vpow.pop %v2955
    %v2957 = vmul.f32 %v2002, 1.442695
    %v2958 = vpow.pop %v2957
    %v2959 = vmul.f32 %v2003, 1.442695
    %v2960 = vpow.pop %v2959
    %v2961 = vmul.f32 %v2004, 1.442695
    %v2962 = vpow.pop %v2961
    %v2963 = vmul.f32 %v2005, 1.442695
    %v2964 = vpow.pop %v2963
    %v2965 = vmul.f32 %v2006, 1.442695
    %v2966 = vpow.pop %v2965
    %v2967 = vmul.f32 %v2007, 1.442695
    %v2968 = vpow.pop %v2967
    %v2969 = vmul.f32 %v2008, 1.442695
    %v2970 = vpow.pop %v2969
    %v2971 = vmul.f32 %v2009, 1.442695
    %v2972 = vpow.pop %v2971
    %v2973 = vmul.f32 %v2010, 1.442695
    %v2974 = vpow.pop %v2973
    %v2975 = vmul.f32 %v2011, 1.442695
    %v2976 = vpow.pop %v2975
    %v2977 = vmul.f32 %v2012, 1.442695
    %v2978 = vpow.pop %v2977
    %v2979 = vmul.f32 %v2013, 1.442695
    %v2980 = vpow.pop %v2979
    %v2981 = vmul.f32 %v2014, 1.442695
    %v2982 = vpow.pop %v2981
    %v2983 = vmul.f32 %v2015, 1.442695
    %v2984 = vpow.pop %v2983
    %v2985 = vmul.f32 %v2016, 1.442695
    %v2986 = vpow.pop %v2985
    %v2987 = vmul.f32 %v2017, 1.442695
    %v2988 = vpow.pop %v2987
    %v2989 = vmul.f32 %v2018, 1.442695
    %v2990 = vpow.pop %v2989
    %v2991 = vmul.f32 %v2019, 1.442695
    %v2992 = vpow.pop %v2991
    %v2993 = vmul.f32 %v2020, 1.442695
    %v2994 = vpow.pop %v2993
    %v2995 = vmul.f32 %v2021, 1.442695
    %v2996 = vpow.pop %v2995
    %v2997 = vmul.f32 %v2022, 1.442695
    %v2998 = vpow.pop %v2997
    %v2999 = vmul.f32 %v2023, 1.442695
    %v3000 = vpow.pop %v2999
    %v3001 = vmul.f32 %v2024, 1.442695
    %v3002 = vpow.pop %v3001
    %v3003 = vmul.f32 %v2025, 1.442695
    %v3004 = vpow.pop %v3003
    %v3005 = vmul.f32 %v2026, 1.442695
    %v3006 = vpow.pop %v3005
    %v3007 = vmul.f32 %v2027, 1.442695
    %v3008 = vpow.pop %v3007
    %v3009 = vmul.f32 %v2028, 1.442695
    %v3010 = vpow.pop %v3009
    %v3011 = vmul.f32 %v2029, 1.442695
    %v3012 = vpow.pop %v3011
    %v3013 = vmul.f32 %v2030, 1.442695
    %v3014 = vpow.pop %v3013
    %v3015 = vmul.f32 %v2031, 1.442695
    %v3016 = vpow.pop %v3015
    %v3017 = vmul.f32 %v2032, 1.442695
    %v3018 = vpow.pop %v3017
    %v3019 = vmul.f32 %v2033, 1.442695
    %v3020 = vpow.pop %v3019
    %v3021 = vmul.f32 %v2034, 1.442695
    %v3022 = vpow.pop %v3021
    %v3023 = vmul.f32 %v2035, 1.442695
    %v3024 = vpow.pop %v3023
    %v3025 = vmul.f32 %v2036, 1.442695
    %v3026 = vpow.pop %v3025
    %v3027 = vmul.f32 %v2037, 1.442695
    %v3028 = vpow.pop %v3027
    %v3029 = vmul.f32 %v2038, 1.442695
    %v3030 = vpow.pop %v3029
    %v3031 = vmul.f32 %v2039, 1.442695
    %v3032 = vpow.pop %v3031
    %v3033 = vmul.f32 %v2040, 1.442695
    %v3034 = vpow.pop %v3033
    %v3035 = vmul.f32 %v2041, 1.442695
    %v3036 = vpow.pop %v3035
    %v3037 = vmul.f32 %v2042, 1.442695
    %v3038 = vpow.pop %v3037
    %v3039 = vmul.f32 %v2043, 1.442695
    %v3040 = vpow.pop %v3039
    %v3041 = vmul.f32 %v2044, 1.442695
    %v3042 = vpow.pop %v3041
    %v3043 = vmul.f32 %v2045, 1.442695
    %v3044 = vpow.pop %v3043
    %v3045 = vmul.f32 %v2046, 1.442695
    %v3046 = vpow.pop %v3045
    %v3047 = vmul.f32 %v2047, 1.442695
    %v3048 = vpow.pop %v3047
    %v3049 = vmul.f32 %v2048, 1.442695
    %v3050 = vpow.pop %v3049
    %v3051 = vmul.f32 %v2049, 1.442695
    %v3052 = vpow.pop %v3051
    %v3053 = vmul.f32 %v2050, 1.442695
    %v3054 = vpow.pop %v3053
    %v3055 = vmul.f32 %v2051, 1.442695
    %v3056 = vpow.pop %v3055
    %v3057 = vmul.f32 %v2052, 1.442695
    %v3058 = vpow.pop %v3057
    %v3059 = vmul.f32 %v2053, 1.442695
    %v3060 = vpow.pop %v3059
    %v3061 = vmul.f32 %v2054, 1.442695
    %v3062 = vpow.pop %v3061
    %v3063 = vmul.f32 %v2055, 1.442695
    %v3064 = vpow.pop %v3063
    %v3065 = vmul.f32 %v2056, 1.442695
    %v3066 = vpow.pop %v3065
    %v3067 = vmul.f32 %v2057, 1.442695
    %v3068 = vpow.pop %v3067
    %v3069 = vmul.f32 %v2058, 1.442695
    %v3070 = vpow.pop %v3069
    %v3071 = vmul.f32 %v2059, 1.442695
    %v3072 = vpow.pop %v3071
    %v3073 = vmul.f32 %v2060, 1.442695
    %v3074 = vpow.pop %v3073
    %v3075 = vmul.f32 %v2061, 1.442695
    %v3076 = vpow.pop %v3075
    %v3077 = vmul.f32 %v2062, 1.442695
    %v3078 = vpow.pop %v3077
    %v3079 = vmul.f32 %v2063, 1.442695
    %v3080 = vpow.pop %v3079
    %v3081 = vmul.f32 %v2064, 1.442695
    %v3082 = vpow.pop %v3081
    %v3083 = vmul.f32 %v2065, 1.442695
    %v3084 = vpow.pop %v3083
    %v3085 = vmul.f32 %v2066, 1.442695
    %v3086 = vpow.pop %v3085
    %v3087 = vmul.f32 %v2067, 1.442695
    %v3088 = vpow.pop %v3087
    %v3089 = vmul.f32 %v2068, 1.442695
    %v3090 = vpow.pop %v3089
    %v3091 = vmul.f32 %v2069, 1.442695
    %v3092 = vpow.pop %v3091
    %v3093 = vmul.f32 %v2070, 1.442695
    %v3094 = vpow.pop %v3093
    %v3095 = vadd.f32 %v2072, 1.0
    %v3096 = vlog2.pop %v3095
    %v3097 = vmul.f32 %v3096, 0.6931472
    %v3098 = vmul.f32 -0.5, %v2072
    %v3099 = vadd.f32 %v3098, 1.0
    %v3100 = vmul.f32 %v3099, %v2072
    %v3101 = vand.u32 2147483647, %v2072
    %vm3102 = vcmp.lt.f32.partialorder %v3101, 0.0004427343
    %v3103 = vsel %vm3102, %v3100, %v3097
    %v3104 = vadd.f32 %v2074, 1.0
    %v3105 = vlog2.pop %v3104
    %v3106 = vmul.f32 %v3105, 0.6931472
    %v3107 = vmul.f32 -0.5, %v2074
    %v3108 = vadd.f32 %v3107, 1.0
    %v3109 = vmul.f32 %v3108, %v2074
    %v3110 = vand.u32 2147483647, %v2074
    %vm3111 = vcmp.lt.f32.partialorder %v3110, 0.0004427343
    %v3112 = vsel %vm3111, %v3109, %v3106
    %v3113 = vadd.f32 %v2076, 1.0
    %v3114 = vlog2.pop %v3113
    %v3115 = vmul.f32 %v3114, 0.6931472
    %v3116 = vmul.f32 -0.5, %v2076
    %v3117 = vadd.f32 %v3116, 1.0
    %v3118 = vmul.f32 %v3117, %v2076
    %v3119 = vand.u32 2147483647, %v2076
    %vm3120 = vcmp.lt.f32.partialorder %v3119, 0.0004427343
    %v3121 = vsel %vm3120, %v3118, %v3115
    %v3122 = vadd.f32 %v2078, 1.0
    %v3123 = vlog2.pop %v3122
    %v3124 = vmul.f32 %v3123, 0.6931472
    %v3125 = vmul.f32 -0.5, %v2078
    %v3126 = vadd.f32 %v3125, 1.0
    %v3127 = vmul.f32 %v3126, %v2078
    %v3128 = vand.u32 2147483647, %v2078
    %vm3129 = vcmp.lt.f32.partialorder %v3128, 0.0004427343
    %v3130 = vsel %vm3129, %v3127, %v3124
    %v3131 = vadd.f32 %v2080, 1.0
    %v3132 = vlog2.pop %v3131
    %v3133 = vmul.f32 %v3132, 0.6931472
    %v3134 = vmul.f32 -0.5, %v2080
    %v3135 = vadd.f32 %v3134, 1.0
    %v3136 = vmul.f32 %v3135, %v2080
    %v3137 = vand.u32 2147483647, %v2080
    %vm3138 = vcmp.lt.f32.partialorder %v3137, 0.0004427343
    %v3139 = vsel %vm3138, %v3136, %v3133
    %v3140 = vadd.f32 %v2082, 1.0
    %v3141 = vlog2.pop %v3140
    %v3142 = vmul.f32 %v3141, 0.6931472
    %v3143 = vmul.f32 -0.5, %v2082
    %v3144 = vadd.f32 %v3143, 1.0
    %v3145 = vmul.f32 %v3144, %v2082
    %v3146 = vand.u32 2147483647, %v2082
    %vm3147 = vcmp.lt.f32.partialorder %v3146, 0.0004427343
    %v3148 = vsel %vm3147, %v3145, %v3142
    %v3149 = vadd.f32 %v2084, 1.0
    %v3150 = vlog2.pop %v3149
    %v3151 = vmul.f32 %v3150, 0.6931472
    %v3152 = vmul.f32 -0.5, %v2084
    %v3153 = vadd.f32 %v3152, 1.0
    %v3154 = vmul.f32 %v3153, %v2084
    %v3155 = vand.u32 2147483647, %v2084
    %vm3156 = vcmp.lt.f32.partialorder %v3155, 0.0004427343
    %v3157 = vsel %vm3156, %v3154, %v3151
    %v3158 = vadd.f32 %v2086, 1.0
    %v3159 = vlog2.pop %v3158
    %v3160 = vmul.f32 %v3159, 0.6931472
    %v3161 = vmul.f32 -0.5, %v2086
    %v3162 = vadd.f32 %v3161, 1.0
    %v3163 = vmul.f32 %v3162, %v2086
    %v3164 = vand.u32 2147483647, %v2086
    %vm3165 = vcmp.lt.f32.partialorder %v3164, 0.0004427343
    %v3166 = vsel %vm3165, %v3163, %v3160
    %v3167 = vadd.f32 %v2088, 1.0
    %v3168 = vlog2.pop %v3167
    %v3169 = vmul.f32 %v3168, 0.6931472
    %v3170 = vmul.f32 -0.5, %v2088
    %v3171 = vadd.f32 %v3170, 1.0
    %v3172 = vmul.f32 %v3171, %v2088
    %v3173 = vand.u32 2147483647, %v2088
    %vm3174 = vcmp.lt.f32.partialorder %v3173, 0.0004427343
    %v3175 = vsel %vm3174, %v3172, %v3169
    %v3176 = vadd.f32 %v2090, 1.0
    %v3177 = vlog2.pop %v3176
    %v3178 = vmul.f32 %v3177, 0.6931472
    %v3179 = vmul.f32 -0.5, %v2090
    %v3180 = vadd.f32 %v3179, 1.0
    %v3181 = vmul.f32 %v3180, %v2090
    %v3182 = vand.u32 2147483647, %v2090
    %vm3183 = vcmp.lt.f32.partialorder %v3182, 0.0004427343
    %v3184 = vsel %vm3183, %v3181, %v3178
    %v3185 = vadd.f32 %v2092, 1.0
    %v3186 = vlog2.pop %v3185
    %v3187 = vmul.f32 %v3186, 0.6931472
    %v3188 = vmul.f32 -0.5, %v2092
    %v3189 = vadd.f32 %v3188, 1.0
    %v3190 = vmul.f32 %v3189, %v2092
    %v3191 = vand.u32 2147483647, %v2092
    %vm3192 = vcmp.lt.f32.partialorder %v3191, 0.0004427343
    %v3193 = vsel %vm3192, %v3190, %v3187
    %v3194 = vadd.f32 %v2094, 1.0
    %v3195 = vlog2.pop %v3194
    %v3196 = vmul.f32 %v3195, 0.6931472
    %v3197 = vmul.f32 -0.5, %v2094
    %v3198 = vadd.f32 %v3197, 1.0
    %v3199 = vmul.f32 %v3198, %v2094
    %v3200 = vand.u32 2147483647, %v2094
    %vm3201 = vcmp.lt.f32.partialorder %v3200, 0.0004427343
    %v3202 = vsel %vm3201, %v3199, %v3196
    %v3203 = vadd.f32 %v2096, 1.0
    %v3204 = vlog2.pop %v3203
    %v3205 = vmul.f32 %v3204, 0.6931472
    %v3206 = vmul.f32 -0.5, %v2096
    %v3207 = vadd.f32 %v3206, 1.0
    %v3208 = vmul.f32 %v3207, %v2096
    %v3209 = vand.u32 2147483647, %v2096
    %vm3210 = vcmp.lt.f32.partialorder %v3209, 0.0004427343
    %v3211 = vsel %vm3210, %v3208, %v3205
    %v3212 = vadd.f32 %v2098, 1.0
    %v3213 = vlog2.pop %v3212
    %v3214 = vmul.f32 %v3213, 0.6931472
    %v3215 = vmul.f32 -0.5, %v2098
    %v3216 = vadd.f32 %v3215, 1.0
    %v3217 = vmul.f32 %v3216, %v2098
    %v3218 = vand.u32 2147483647, %v2098
    %vm3219 = vcmp.lt.f32.partialorder %v3218, 0.0004427343
    %v3220 = vsel %vm3219, %v3217, %v3214
    %v3221 = vadd.f32 %v2100, 1.0
    %v3222 = vlog2.pop %v3221
    %v3223 = vmul.f32 %v3222, 0.6931472
    %v3224 = vmul.f32 -0.5, %v2100
    %v3225 = vadd.f32 %v3224, 1.0
    %v3226 = vmul.f32 %v3225, %v2100
    %v3227 = vand.u32 2147483647, %v2100
    %vm3228 = vcmp.lt.f32.partialorder %v3227, 0.0004427343
    %v3229 = vsel %vm3228, %v3226, %v3223
    %v3230 = vadd.f32 %v2102, 1.0
    %v3231 = vlog2.pop %v3230
    %v3232 = vmul.f32 %v3231, 0.6931472
    %v3233 = vmul.f32 -0.5, %v2102
    %v3234 = vadd.f32 %v3233, 1.0
    %v3235 = vmul.f32 %v3234, %v2102
    %v3236 = vand.u32 2147483647, %v2102
    %vm3237 = vcmp.lt.f32.partialorder %v3236, 0.0004427343
    %v3238 = vsel %vm3237, %v3235, %v3232
    %v3239 = vadd.f32 %v2104, 1.0
    %v3240 = vlog2.pop %v3239
    %v3241 = vmul.f32 %v3240, 0.6931472
    %v3242 = vmul.f32 -0.5, %v2104
    %v3243 = vadd.f32 %v3242, 1.0
    %v3244 = vmul.f32 %v3243, %v2104
    %v3245 = vand.u32 2147483647, %v2104
    %vm3246 = vcmp.lt.f32.partialorder %v3245, 0.0004427343
    %v3247 = vsel %vm3246, %v3244, %v3241
    %v3248 = vadd.f32 %v2106, 1.0
    %v3249 = vlog2.pop %v3248
    %v3250 = vmul.f32 %v3249, 0.6931472
    %v3251 = vmul.f32 -0.5, %v2106
    %v3252 = vadd.f32 %v3251, 1.0
    %v3253 = vmul.f32 %v3252, %v2106
    %v3254 = vand.u32 2147483647, %v2106
    %vm3255 = vcmp.lt.f32.partialorder %v3254, 0.0004427343
    %v3256 = vsel %vm3255, %v3253, %v3250
    %v3257 = vadd.f32 %v2108, 1.0
    %v3258 = vlog2.pop %v3257
    %v3259 = vmul.f32 %v3258, 0.6931472
    %v3260 = vmul.f32 -0.5, %v2108
    %v3261 = vadd.f32 %v3260, 1.0
    %v3262 = vmul.f32 %v3261, %v2108
    %v3263 = vand.u32 2147483647, %v2108
    %vm3264 = vcmp.lt.f32.partialorder %v3263, 0.0004427343
    %v3265 = vsel %vm3264, %v3262, %v3259
    %v3266 = vadd.f32 %v2110, 1.0
    %v3267 = vlog2.pop %v3266
    %v3268 = vmul.f32 %v3267, 0.6931472
    %v3269 = vmul.f32 -0.5, %v2110
    %v3270 = vadd.f32 %v3269, 1.0
    %v3271 = vmul.f32 %v3270, %v2110
    %v3272 = vand.u32 2147483647, %v2110
    %vm3273 = vcmp.lt.f32.partialorder %v3272, 0.0004427343
    %v3274 = vsel %vm3273, %v3271, %v3268
    %v3275 = vadd.f32 %v2112, 1.0
    %v3276 = vlog2.pop %v3275
    %v3277 = vmul.f32 %v3276, 0.6931472
    %v3278 = vmul.f32 -0.5, %v2112
    %v3279 = vadd.f32 %v3278, 1.0
    %v3280 = vmul.f32 %v3279, %v2112
    %v3281 = vand.u32 2147483647, %v2112
    %vm3282 = vcmp.lt.f32.partialorder %v3281, 0.0004427343
    %v3283 = vsel %vm3282, %v3280, %v3277
    %v3284 = vadd.f32 %v2114, 1.0
    %v3285 = vlog2.pop %v3284
    %v3286 = vmul.f32 %v3285, 0.6931472
    %v3287 = vmul.f32 -0.5, %v2114
    %v3288 = vadd.f32 %v3287, 1.0
    %v3289 = vmul.f32 %v3288, %v2114
    %v3290 = vand.u32 2147483647, %v2114
    %vm3291 = vcmp.lt.f32.partialorder %v3290, 0.0004427343
    %v3292 = vsel %vm3291, %v3289, %v3286
    %v3293 = vadd.f32 %v2116, 1.0
    %v3294 = vlog2.pop %v3293
    %v3295 = vmul.f32 %v3294, 0.6931472
    %v3296 = vmul.f32 -0.5, %v2116
    %v3297 = vadd.f32 %v3296, 1.0
    %v3298 = vmul.f32 %v3297, %v2116
    %v3299 = vand.u32 2147483647, %v2116
    %vm3300 = vcmp.lt.f32.partialorder %v3299, 0.0004427343
    %v3301 = vsel %vm3300, %v3298, %v3295
    %v3302 = vadd.f32 %v2118, 1.0
    %v3303 = vlog2.pop %v3302
    %v3304 = vmul.f32 %v3303, 0.6931472
    %v3305 = vmul.f32 -0.5, %v2118
    %v3306 = vadd.f32 %v3305, 1.0
    %v3307 = vmul.f32 %v3306, %v2118
    %v3308 = vand.u32 2147483647, %v2118
    %vm3309 = vcmp.lt.f32.partialorder %v3308, 0.0004427343
    %v3310 = vsel %vm3309, %v3307, %v3304
    %v3311 = vadd.f32 %v2120, 1.0
    %v3312 = vlog2.pop %v3311
    %v3313 = vmul.f32 %v3312, 0.6931472
    %v3314 = vmul.f32 -0.5, %v2120
    %v3315 = vadd.f32 %v3314, 1.0
    %v3316 = vmul.f32 %v3315, %v2120
    %v3317 = vand.u32 2147483647, %v2120
    %vm3318 = vcmp.lt.f32.partialorder %v3317, 0.0004427343
    %v3319 = vsel %vm3318, %v3316, %v3313
    %v3320 = vadd.f32 %v2122, 1.0
    %v3321 = vlog2.pop %v3320
    %v3322 = vmul.f32 %v3321, 0.6931472
    %v3323 = vmul.f32 -0.5, %v2122
    %v3324 = vadd.f32 %v3323, 1.0
    %v3325 = vmul.f32 %v3324, %v2122
    %v3326 = vand.u32 2147483647, %v2122
    %vm3327 = vcmp.lt.f32.partialorder %v3326, 0.0004427343
    %v3328 = vsel %vm3327, %v3325, %v3322
    %v3329 = vadd.f32 %v2124, 1.0
    %v3330 = vlog2.pop %v3329
    %v3331 = vmul.f32 %v3330, 0.6931472
    %v3332 = vmul.f32 -0.5, %v2124
    %v3333 = vadd.f32 %v3332, 1.0
    %v3334 = vmul.f32 %v3333, %v2124
    %v3335 = vand.u32 2147483647, %v2124
    %vm3336 = vcmp.lt.f32.partialorder %v3335, 0.0004427343
    %v3337 = vsel %vm3336, %v3334, %v3331
    %v3338 = vadd.f32 %v2126, 1.0
    %v3339 = vlog2.pop %v3338
    %v3340 = vmul.f32 %v3339, 0.6931472
    %v3341 = vmul.f32 -0.5, %v2126
    %v3342 = vadd.f32 %v3341, 1.0
    %v3343 = vmul.f32 %v3342, %v2126
    %v3344 = vand.u32 2147483647, %v2126
    %vm3345 = vcmp.lt.f32.partialorder %v3344, 0.0004427343
    %v3346 = vsel %vm3345, %v3343, %v3340
    %v3347 = vadd.f32 %v2128, 1.0
    %v3348 = vlog2.pop %v3347
    %v3349 = vmul.f32 %v3348, 0.6931472
    %v3350 = vmul.f32 -0.5, %v2128
    %v3351 = vadd.f32 %v3350, 1.0
    %v3352 = vmul.f32 %v3351, %v2128
    %v3353 = vand.u32 2147483647, %v2128
    %vm3354 = vcmp.lt.f32.partialorder %v3353, 0.0004427343
    %v3355 = vsel %vm3354, %v3352, %v3349
    %v3356 = vadd.f32 %v2130, 1.0
    %v3357 = vlog2.pop %v3356
    %v3358 = vmul.f32 %v3357, 0.6931472
    %v3359 = vmul.f32 -0.5, %v2130
    %v3360 = vadd.f32 %v3359, 1.0
    %v3361 = vmul.f32 %v3360, %v2130
    %v3362 = vand.u32 2147483647, %v2130
    %vm3363 = vcmp.lt.f32.partialorder %v3362, 0.0004427343
    %v3364 = vsel %vm3363, %v3361, %v3358
    %v3365 = vadd.f32 %v2132, 1.0
    %v3366 = vlog2.pop %v3365
    %v3367 = vmul.f32 %v3366, 0.6931472
    %v3368 = vmul.f32 -0.5, %v2132
    %v3369 = vadd.f32 %v3368, 1.0
    %v3370 = vmul.f32 %v3369, %v2132
    %v3371 = vand.u32 2147483647, %v2132
    %vm3372 = vcmp.lt.f32.partialorder %v3371, 0.0004427343
    %v3373 = vsel %vm3372, %v3370, %v3367
    %v3374 = vadd.f32 %v2134, 1.0
    %v3375 = vlog2.pop %v3374
    %v3376 = vmul.f32 %v3375, 0.6931472
    %v3377 = vmul.f32 -0.5, %v2134
    %v3378 = vadd.f32 %v3377, 1.0
    %v3379 = vmul.f32 %v3378, %v2134
    %v3380 = vand.u32 2147483647, %v2134
    %vm3381 = vcmp.lt.f32.partialorder %v3380, 0.0004427343
    %v3382 = vsel %vm3381, %v3379, %v3376
    %v3383 = vadd.f32 %v2136, 1.0
    %v3384 = vlog2.pop %v3383
    %v3385 = vmul.f32 %v3384, 0.6931472
    %v3386 = vmul.f32 -0.5, %v2136
    %v3387 = vadd.f32 %v3386, 1.0
    %v3388 = vmul.f32 %v3387, %v2136
    %v3389 = vand.u32 2147483647, %v2136
    %vm3390 = vcmp.lt.f32.partialorder %v3389, 0.0004427343
    %v3391 = vsel %vm3390, %v3388, %v3385
    %v3392 = vadd.f32 %v2138, 1.0
    %v3393 = vlog2.pop %v3392
    %v3394 = vmul.f32 %v3393, 0.6931472
    %v3395 = vmul.f32 -0.5, %v2138
    %v3396 = vadd.f32 %v3395, 1.0
    %v3397 = vmul.f32 %v3396, %v2138
    %v3398 = vand.u32 2147483647, %v2138
    %vm3399 = vcmp.lt.f32.partialorder %v3398, 0.0004427343
    %v3400 = vsel %vm3399, %v3397, %v3394
    %v3401 = vadd.f32 %v2140, 1.0
    %v3402 = vlog2.pop %v3401
    %v3403 = vmul.f32 %v3402, 0.6931472
    %v3404 = vmul.f32 -0.5, %v2140
    %v3405 = vadd.f32 %v3404, 1.0
    %v3406 = vmul.f32 %v3405, %v2140
    %v3407 = vand.u32 2147483647, %v2140
    %vm3408 = vcmp.lt.f32.partialorder %v3407, 0.0004427343
    %v3409 = vsel %vm3408, %v3406, %v3403
    %v3410 = vadd.f32 %v2142, 1.0
    %v3411 = vlog2.pop %v3410
    %v3412 = vmul.f32 %v3411, 0.6931472
    %v3413 = vmul.f32 -0.5, %v2142
    %v3414 = vadd.f32 %v3413, 1.0
    %v3415 = vmul.f32 %v3414, %v2142
    %v3416 = vand.u32 2147483647, %v2142
    %vm3417 = vcmp.lt.f32.partialorder %v3416, 0.0004427343
    %v3418 = vsel %vm3417, %v3415, %v3412
    %v3419 = vadd.f32 %v2144, 1.0
    %v3420 = vlog2.pop %v3419
    %v3421 = vmul.f32 %v3420, 0.6931472
    %v3422 = vmul.f32 -0.5, %v2144
    %v3423 = vadd.f32 %v3422, 1.0
    %v3424 = vmul.f32 %v3423, %v2144
    %v3425 = vand.u32 2147483647, %v2144
    %vm3426 = vcmp.lt.f32.partialorder %v3425, 0.0004427343
    %v3427 = vsel %vm3426, %v3424, %v3421
    %v3428 = vadd.f32 %v2146, 1.0
    %v3429 = vlog2.pop %v3428
    %v3430 = vmul.f32 %v3429, 0.6931472
    %v3431 = vmul.f32 -0.5, %v2146
    %v3432 = vadd.f32 %v3431, 1.0
    %v3433 = vmul.f32 %v3432, %v2146
    %v3434 = vand.u32 2147483647, %v2146
    %vm3435 = vcmp.lt.f32.partialorder %v3434, 0.0004427343
    %v3436 = vsel %vm3435, %v3433, %v3430
    %v3437 = vadd.f32 %v2148, 1.0
    %v3438 = vlog2.pop %v3437
    %v3439 = vmul.f32 %v3438, 0.6931472
    %v3440 = vmul.f32 -0.5, %v2148
    %v3441 = vadd.f32 %v3440, 1.0
    %v3442 = vmul.f32 %v3441, %v2148
    %v3443 = vand.u32 2147483647, %v2148
    %vm3444 = vcmp.lt.f32.partialorder %v3443, 0.0004427343
    %v3445 = vsel %vm3444, %v3442, %v3439
    %v3446 = vadd.f32 %v2150, 1.0
    %v3447 = vlog2.pop %v3446
    %v3448 = vmul.f32 %v3447, 0.6931472
    %v3449 = vmul.f32 -0.5, %v2150
    %v3450 = vadd.f32 %v3449, 1.0
    %v3451 = vmul.f32 %v3450, %v2150
    %v3452 = vand.u32 2147483647, %v2150
    %vm3453 = vcmp.lt.f32.partialorder %v3452, 0.0004427343
    %v3454 = vsel %vm3453, %v3451, %v3448
    %v3455 = vadd.f32 %v2152, 1.0
    %v3456 = vlog2.pop %v3455
    %v3457 = vmul.f32 %v3456, 0.6931472
    %v3458 = vmul.f32 -0.5, %v2152
    %v3459 = vadd.f32 %v3458, 1.0
    %v3460 = vmul.f32 %v3459, %v2152
    %v3461 = vand.u32 2147483647, %v2152
    %vm3462 = vcmp.lt.f32.partialorder %v3461, 0.0004427343
    %v3463 = vsel %vm3462, %v3460, %v3457
    %v3464 = vadd.f32 %v2154, 1.0
    %v3465 = vlog2.pop %v3464
    %v3466 = vmul.f32 %v3465, 0.6931472
    %v3467 = vmul.f32 -0.5, %v2154
    %v3468 = vadd.f32 %v3467, 1.0
    %v3469 = vmul.f32 %v3468, %v2154
    %v3470 = vand.u32 2147483647, %v2154
    %vm3471 = vcmp.lt.f32.partialorder %v3470, 0.0004427343
    %v3472 = vsel %vm3471, %v3469, %v3466
    %v3473 = vadd.f32 %v2156, 1.0
    %v3474 = vlog2.pop %v3473
    %v3475 = vmul.f32 %v3474, 0.6931472
    %v3476 = vmul.f32 -0.5, %v2156
    %v3477 = vadd.f32 %v3476, 1.0
    %v3478 = vmul.f32 %v3477, %v2156
    %v3479 = vand.u32 2147483647, %v2156
    %vm3480 = vcmp.lt.f32.partialorder %v3479, 0.0004427343
    %v3481 = vsel %vm3480, %v3478, %v3475
    %v3482 = vadd.f32 %v2158, 1.0
    %v3483 = vlog2.pop %v3482
    %v3484 = vmul.f32 %v3483, 0.6931472
    %v3485 = vmul.f32 -0.5, %v2158
    %v3486 = vadd.f32 %v3485, 1.0
    %v3487 = vmul.f32 %v3486, %v2158
    %v3488 = vand.u32 2147483647, %v2158
    %vm3489 = vcmp.lt.f32.partialorder %v3488, 0.0004427343
    %v3490 = vsel %vm3489, %v3487, %v3484
    %v3491 = vadd.f32 %v2160, 1.0
    %v3492 = vlog2.pop %v3491
    %v3493 = vmul.f32 %v3492, 0.6931472
    %v3494 = vmul.f32 -0.5, %v2160
    %v3495 = vadd.f32 %v3494, 1.0
    %v3496 = vmul.f32 %v3495, %v2160
    %v3497 = vand.u32 2147483647, %v2160
    %vm3498 = vcmp.lt.f32.partialorder %v3497, 0.0004427343
    %v3499 = vsel %vm3498, %v3496, %v3493
    %v3500 = vadd.f32 %v2162, 1.0
    %v3501 = vlog2.pop %v3500
    %v3502 = vmul.f32 %v3501, 0.6931472
    %v3503 = vmul.f32 -0.5, %v2162
    %v3504 = vadd.f32 %v3503, 1.0
    %v3505 = vmul.f32 %v3504, %v2162
    %v3506 = vand.u32 2147483647, %v2162
    %vm3507 = vcmp.lt.f32.partialorder %v3506, 0.0004427343
    %v3508 = vsel %vm3507, %v3505, %v3502
    %v3509 = vadd.f32 %v2164, 1.0
    %v3510 = vlog2.pop %v3509
    %v3511 = vmul.f32 %v3510, 0.6931472
    %v3512 = vmul.f32 -0.5, %v2164
    %v3513 = vadd.f32 %v3512, 1.0
    %v3514 = vmul.f32 %v3513, %v2164
    %v3515 = vand.u32 2147483647, %v2164
    %vm3516 = vcmp.lt.f32.partialorder %v3515, 0.0004427343
    %v3517 = vsel %vm3516, %v3514, %v3511
    %v3518 = vadd.f32 %v2166, 1.0
    %v3519 = vlog2.pop %v3518
    %v3520 = vmul.f32 %v3519, 0.6931472
    %v3521 = vmul.f32 -0.5, %v2166
    %v3522 = vadd.f32 %v3521, 1.0
    %v3523 = vmul.f32 %v3522, %v2166
    %v3524 = vand.u32 2147483647, %v2166
    %vm3525 = vcmp.lt.f32.partialorder %v3524, 0.0004427343
    %v3526 = vsel %vm3525, %v3523, %v3520
    %v3527 = vadd.f32 %v2168, 1.0
    %v3528 = vlog2.pop %v3527
    %v3529 = vmul.f32 %v3528, 0.6931472
    %v3530 = vmul.f32 -0.5, %v2168
    %v3531 = vadd.f32 %v3530, 1.0
    %v3532 = vmul.f32 %v3531, %v2168
    %v3533 = vand.u32 2147483647, %v2168
    %vm3534 = vcmp.lt.f32.partialorder %v3533, 0.0004427343
    %v3535 = vsel %vm3534, %v3532, %v3529
    %v3536 = vadd.f32 %v2170, 1.0
    %v3537 = vlog2.pop %v3536
    %v3538 = vmul.f32 %v3537, 0.6931472
    %v3539 = vmul.f32 -0.5, %v2170
    %v3540 = vadd.f32 %v3539, 1.0
    %v3541 = vmul.f32 %v3540, %v2170
    %v3542 = vand.u32 2147483647, %v2170
    %vm3543 = vcmp.lt.f32.partialorder %v3542, 0.0004427343
    %v3544 = vsel %vm3543, %v3541, %v3538
    %v3545 = vadd.f32 %v2172, 1.0
    %v3546 = vlog2.pop %v3545
    %v3547 = vmul.f32 %v3546, 0.6931472
    %v3548 = vmul.f32 -0.5, %v2172
    %v3549 = vadd.f32 %v3548, 1.0
    %v3550 = vmul.f32 %v3549, %v2172
    %v3551 = vand.u32 2147483647, %v2172
    %vm3552 = vcmp.lt.f32.partialorder %v3551, 0.0004427343
    %v3553 = vsel %vm3552, %v3550, %v3547
    %v3554 = vadd.f32 %v2174, 1.0
    %v3555 = vlog2.pop %v3554
    %v3556 = vmul.f32 %v3555, 0.6931472
    %v3557 = vmul.f32 -0.5, %v2174
    %v3558 = vadd.f32 %v3557, 1.0
    %v3559 = vmul.f32 %v3558, %v2174
    %v3560 = vand.u32 2147483647, %v2174
    %vm3561 = vcmp.lt.f32.partialorder %v3560, 0.0004427343
    %v3562 = vsel %vm3561, %v3559, %v3556
    %v3563 = vadd.f32 %v2176, 1.0
    %v3564 = vlog2.pop %v3563
    %v3565 = vmul.f32 %v3564, 0.6931472
    %v3566 = vmul.f32 -0.5, %v2176
    %v3567 = vadd.f32 %v3566, 1.0
    %v3568 = vmul.f32 %v3567, %v2176
    %v3569 = vand.u32 2147483647, %v2176
    %vm3570 = vcmp.lt.f32.partialorder %v3569, 0.0004427343
    %v3571 = vsel %vm3570, %v3568, %v3565
    %v3572 = vadd.f32 %v2178, 1.0
    %v3573 = vlog2.pop %v3572
    %v3574 = vmul.f32 %v3573, 0.6931472
    %v3575 = vmul.f32 -0.5, %v2178
    %v3576 = vadd.f32 %v3575, 1.0
    %v3577 = vmul.f32 %v3576, %v2178
    %v3578 = vand.u32 2147483647, %v2178
    %vm3579 = vcmp.lt.f32.partialorder %v3578, 0.0004427343
    %v3580 = vsel %vm3579, %v3577, %v3574
    %v3581 = vadd.f32 %v2180, 1.0
    %v3582 = vlog2.pop %v3581
    %v3583 = vmul.f32 %v3582, 0.6931472
    %v3584 = vmul.f32 -0.5, %v2180
    %v3585 = vadd.f32 %v3584, 1.0
    %v3586 = vmul.f32 %v3585, %v2180
    %v3587 = vand.u32 2147483647, %v2180
    %vm3588 = vcmp.lt.f32.partialorder %v3587, 0.0004427343
    %v3589 = vsel %vm3588, %v3586, %v3583
    %v3590 = vadd.f32 %v2182, 1.0
    %v3591 = vlog2.pop %v3590
    %v3592 = vmul.f32 %v3591, 0.6931472
    %v3593 = vmul.f32 -0.5, %v2182
    %v3594 = vadd.f32 %v3593, 1.0
    %v3595 = vmul.f32 %v3594, %v2182
    %v3596 = vand.u32 2147483647, %v2182
    %vm3597 = vcmp.lt.f32.partialorder %v3596, 0.0004427343
    %v3598 = vsel %vm3597, %v3595, %v3592
    %v3599 = vadd.f32 %v2184, 1.0
    %v3600 = vlog2.pop %v3599
    %v3601 = vmul.f32 %v3600, 0.6931472
    %v3602 = vmul.f32 -0.5, %v2184
    %v3603 = vadd.f32 %v3602, 1.0
    %v3604 = vmul.f32 %v3603, %v2184
    %v3605 = vand.u32 2147483647, %v2184
    %vm3606 = vcmp.lt.f32.partialorder %v3605, 0.0004427343
    %v3607 = vsel %vm3606, %v3604, %v3601
    %v3608 = vadd.f32 %v2186, 1.0
    %v3609 = vlog2.pop %v3608
    %v3610 = vmul.f32 %v3609, 0.6931472
    %v3611 = vmul.f32 -0.5, %v2186
    %v3612 = vadd.f32 %v3611, 1.0
    %v3613 = vmul.f32 %v3612, %v2186
    %v3614 = vand.u32 2147483647, %v2186
    %vm3615 = vcmp.lt.f32.partialorder %v3614, 0.0004427343
    %v3616 = vsel %vm3615, %v3613, %v3610
    %v3617 = vadd.f32 %v2188, 1.0
    %v3618 = vlog2.pop %v3617
    %v3619 = vmul.f32 %v3618, 0.6931472
    %v3620 = vmul.f32 -0.5, %v2188
    %v3621 = vadd.f32 %v3620, 1.0
    %v3622 = vmul.f32 %v3621, %v2188
    %v3623 = vand.u32 2147483647, %v2188
    %vm3624 = vcmp.lt.f32.partialorder %v3623, 0.0004427343
    %v3625 = vsel %vm3624, %v3622, %v3619
    %v3626 = vadd.f32 %v2190, 1.0
    %v3627 = vlog2.pop %v3626
    %v3628 = vmul.f32 %v3627, 0.6931472
    %v3629 = vmul.f32 -0.5, %v2190
    %v3630 = vadd.f32 %v3629, 1.0
    %v3631 = vmul.f32 %v3630, %v2190
    %v3632 = vand.u32 2147483647, %v2190
    %vm3633 = vcmp.lt.f32.partialorder %v3632, 0.0004427343
    %v3634 = vsel %vm3633, %v3631, %v3628
    %v3635 = vadd.f32 %v2192, 1.0
    %v3636 = vlog2.pop %v3635
    %v3637 = vmul.f32 %v3636, 0.6931472
    %v3638 = vmul.f32 -0.5, %v2192
    %v3639 = vadd.f32 %v3638, 1.0
    %v3640 = vmul.f32 %v3639, %v2192
    %v3641 = vand.u32 2147483647, %v2192
    %vm3642 = vcmp.lt.f32.partialorder %v3641, 0.0004427343
    %v3643 = vsel %vm3642, %v3640, %v3637
    %v3644 = vadd.f32 %v2194, 1.0
    %v3645 = vlog2.pop %v3644
    %v3646 = vmul.f32 %v3645, 0.6931472
    %v3647 = vmul.f32 -0.5, %v2194
    %v3648 = vadd.f32 %v3647, 1.0
    %v3649 = vmul.f32 %v3648, %v2194
    %v3650 = vand.u32 2147483647, %v2194
    %vm3651 = vcmp.lt.f32.partialorder %v3650, 0.0004427343
    %v3652 = vsel %vm3651, %v3649, %v3646
    %v3653 = vadd.f32 %v2196, 1.0
    %v3654 = vlog2.pop %v3653
    %v3655 = vmul.f32 %v3654, 0.6931472
    %v3656 = vmul.f32 -0.5, %v2196
    %v3657 = vadd.f32 %v3656, 1.0
    %v3658 = vmul.f32 %v3657, %v2196
    %v3659 = vand.u32 2147483647, %v2196
    %vm3660 = vcmp.lt.f32.partialorder %v3659, 0.0004427343
    %v3661 = vsel %vm3660, %v3658, %v3655
    %v3662 = vadd.f32 %v2198, 1.0
    %v3663 = vlog2.pop %v3662
    %v3664 = vmul.f32 %v3663, 0.6931472
    %v3665 = vmul.f32 -0.5, %v2198
    %v3666 = vadd.f32 %v3665, 1.0
    %v3667 = vmul.f32 %v3666, %v2198
    %v3668 = vand.u32 2147483647, %v2198
    %vm3669 = vcmp.lt.f32.partialorder %v3668, 0.0004427343
    %v3670 = vsel %vm3669, %v3667, %v3664
    %v3671 = vadd.f32 %v2200, 1.0
    %v3672 = vlog2.pop %v3671
    %v3673 = vmul.f32 %v3672, 0.6931472
    %v3674 = vmul.f32 -0.5, %v2200
    %v3675 = vadd.f32 %v3674, 1.0
    %v3676 = vmul.f32 %v3675, %v2200
    %v3677 = vand.u32 2147483647, %v2200
    %vm3678 = vcmp.lt.f32.partialorder %v3677, 0.0004427343
    %v3679 = vsel %vm3678, %v3676, %v3673
    %v3680 = vadd.f32 %v2202, 1.0
    %v3681 = vlog2.pop %v3680
    %v3682 = vmul.f32 %v3681, 0.6931472
    %v3683 = vmul.f32 -0.5, %v2202
    %v3684 = vadd.f32 %v3683, 1.0
    %v3685 = vmul.f32 %v3684, %v2202
    %v3686 = vand.u32 2147483647, %v2202
    %vm3687 = vcmp.lt.f32.partialorder %v3686, 0.0004427343
    %v3688 = vsel %vm3687, %v3685, %v3682
    %v3689 = vadd.f32 %v2204, 1.0
    %v3690 = vlog2.pop %v3689
    %v3691 = vmul.f32 %v3690, 0.6931472
    %v3692 = vmul.f32 -0.5, %v2204
    %v3693 = vadd.f32 %v3692, 1.0
    %v3694 = vmul.f32 %v3693, %v2204
    %v3695 = vand.u32 2147483647, %v2204
    %vm3696 = vcmp.lt.f32.partialorder %v3695, 0.0004427343
    %v3697 = vsel %vm3696, %v3694, %v3691
    %v3698 = vadd.f32 %v2206, 1.0
    %v3699 = vlog2.pop %v3698
    %v3700 = vmul.f32 %v3699, 0.6931472
    %v3701 = vmul.f32 -0.5, %v2206
    %v3702 = vadd.f32 %v3701, 1.0
    %v3703 = vmul.f32 %v3702, %v2206
    %v3704 = vand.u32 2147483647, %v2206
    %vm3705 = vcmp.lt.f32.partialorder %v3704, 0.0004427343
    %v3706 = vsel %vm3705, %v3703, %v3700
    %v3707 = vadd.f32 %v2208, 1.0
    %v3708 = vlog2.pop %v3707
    %v3709 = vmul.f32 %v3708, 0.6931472
    %v3710 = vmul.f32 -0.5, %v2208
    %v3711 = vadd.f32 %v3710, 1.0
    %v3712 = vmul.f32 %v3711, %v2208
    %v3713 = vand.u32 2147483647, %v2208
    %vm3714 = vcmp.lt.f32.partialorder %v3713, 0.0004427343
    %v3715 = vsel %vm3714, %v3712, %v3709
    %v3716 = vadd.f32 %v2210, 1.0
    %v3717 = vlog2.pop %v3716
    %v3718 = vmul.f32 %v3717, 0.6931472
    %v3719 = vmul.f32 -0.5, %v2210
    %v3720 = vadd.f32 %v3719, 1.0
    %v3721 = vmul.f32 %v3720, %v2210
    %v3722 = vand.u32 2147483647, %v2210
    %vm3723 = vcmp.lt.f32.partialorder %v3722, 0.0004427343
    %v3724 = vsel %vm3723, %v3721, %v3718
    %v3725 = vadd.f32 %v2212, 1.0
    %v3726 = vlog2.pop %v3725
    %v3727 = vmul.f32 %v3726, 0.6931472
    %v3728 = vmul.f32 -0.5, %v2212
    %v3729 = vadd.f32 %v3728, 1.0
    %v3730 = vmul.f32 %v3729, %v2212
    %v3731 = vand.u32 2147483647, %v2212
    %vm3732 = vcmp.lt.f32.partialorder %v3731, 0.0004427343
    %v3733 = vsel %vm3732, %v3730, %v3727
    %v3734 = vadd.f32 %v2214, 1.0
    %v3735 = vlog2.pop %v3734
    %v3736 = vmul.f32 %v3735, 0.6931472
    %v3737 = vmul.f32 -0.5, %v2214
    %v3738 = vadd.f32 %v3737, 1.0
    %v3739 = vmul.f32 %v3738, %v2214
    %v3740 = vand.u32 2147483647, %v2214
    %vm3741 = vcmp.lt.f32.partialorder %v3740, 0.0004427343
    %v3742 = vsel %vm3741, %v3739, %v3736
    %v3743 = vadd.f32 %v2216, 1.0
    %v3744 = vlog2.pop %v3743
    %v3745 = vmul.f32 %v3744, 0.6931472
    %v3746 = vmul.f32 -0.5, %v2216
    %v3747 = vadd.f32 %v3746, 1.0
    %v3748 = vmul.f32 %v3747, %v2216
    %v3749 = vand.u32 2147483647, %v2216
    %vm3750 = vcmp.lt.f32.partialorder %v3749, 0.0004427343
    %v3751 = vsel %vm3750, %v3748, %v3745
    %v3752 = vadd.f32 %v2218, 1.0
    %v3753 = vlog2.pop %v3752
    %v3754 = vmul.f32 %v3753, 0.6931472
    %v3755 = vmul.f32 -0.5, %v2218
    %v3756 = vadd.f32 %v3755, 1.0
    %v3757 = vmul.f32 %v3756, %v2218
    %v3758 = vand.u32 2147483647, %v2218
    %vm3759 = vcmp.lt.f32.partialorder %v3758, 0.0004427343
    %v3760 = vsel %vm3759, %v3757, %v3754
    %v3761 = vadd.f32 %v2220, 1.0
    %v3762 = vlog2.pop %v3761
    %v3763 = vmul.f32 %v3762, 0.6931472
    %v3764 = vmul.f32 -0.5, %v2220
    %v3765 = vadd.f32 %v3764, 1.0
    %v3766 = vmul.f32 %v3765, %v2220
    %v3767 = vand.u32 2147483647, %v2220
    %vm3768 = vcmp.lt.f32.partialorder %v3767, 0.0004427343
    %v3769 = vsel %vm3768, %v3766, %v3763
    %v3770 = vadd.f32 %v2222, 1.0
    %v3771 = vlog2.pop %v3770
    %v3772 = vmul.f32 %v3771, 0.6931472
    %v3773 = vmul.f32 -0.5, %v2222
    %v3774 = vadd.f32 %v3773, 1.0
    %v3775 = vmul.f32 %v3774, %v2222
    %v3776 = vand.u32 2147483647, %v2222
    %vm3777 = vcmp.lt.f32.partialorder %v3776, 0.0004427343
    %v3778 = vsel %vm3777, %v3775, %v3772
    %v3779 = vadd.f32 %v2224, 1.0
    %v3780 = vlog2.pop %v3779
    %v3781 = vmul.f32 %v3780, 0.6931472
    %v3782 = vmul.f32 -0.5, %v2224
    %v3783 = vadd.f32 %v3782, 1.0
    %v3784 = vmul.f32 %v3783, %v2224
    %v3785 = vand.u32 2147483647, %v2224
    %vm3786 = vcmp.lt.f32.partialorder %v3785, 0.0004427343
    %v3787 = vsel %vm3786, %v3784, %v3781
    %v3788 = vadd.f32 %v2226, 1.0
    %v3789 = vlog2.pop %v3788
    %v3790 = vmul.f32 %v3789, 0.6931472
    %v3791 = vmul.f32 -0.5, %v2226
    %v3792 = vadd.f32 %v3791, 1.0
    %v3793 = vmul.f32 %v3792, %v2226
    %v3794 = vand.u32 2147483647, %v2226
    %vm3795 = vcmp.lt.f32.partialorder %v3794, 0.0004427343
    %v3796 = vsel %vm3795, %v3793, %v3790
    %v3797 = vadd.f32 %v2228, 1.0
    %v3798 = vlog2.pop %v3797
    %v3799 = vmul.f32 %v3798, 0.6931472
    %v3800 = vmul.f32 -0.5, %v2228
    %v3801 = vadd.f32 %v3800, 1.0
    %v3802 = vmul.f32 %v3801, %v2228
    %v3803 = vand.u32 2147483647, %v2228
    %vm3804 = vcmp.lt.f32.partialorder %v3803, 0.0004427343
    %v3805 = vsel %vm3804, %v3802, %v3799
    %v3806 = vadd.f32 %v2230, 1.0
    %v3807 = vlog2.pop %v3806
    %v3808 = vmul.f32 %v3807, 0.6931472
    %v3809 = vmul.f32 -0.5, %v2230
    %v3810 = vadd.f32 %v3809, 1.0
    %v3811 = vmul.f32 %v3810, %v2230
    %v3812 = vand.u32 2147483647, %v2230
    %vm3813 = vcmp.lt.f32.partialorder %v3812, 0.0004427343
    %v3814 = vsel %vm3813, %v3811, %v3808
    %v3815 = vadd.f32 %v2232, 1.0
    %v3816 = vlog2.pop %v3815
    %v3817 = vmul.f32 %v3816, 0.6931472
    %v3818 = vmul.f32 -0.5, %v2232
    %v3819 = vadd.f32 %v3818, 1.0
    %v3820 = vmul.f32 %v3819, %v2232
    %v3821 = vand.u32 2147483647, %v2232
    %vm3822 = vcmp.lt.f32.partialorder %v3821, 0.0004427343
    %v3823 = vsel %vm3822, %v3820, %v3817
    %v3824 = vadd.f32 %v2234, 1.0
    %v3825 = vlog2.pop %v3824
    %v3826 = vmul.f32 %v3825, 0.6931472
    %v3827 = vmul.f32 -0.5, %v2234
    %v3828 = vadd.f32 %v3827, 1.0
    %v3829 = vmul.f32 %v3828, %v2234
    %v3830 = vand.u32 2147483647, %v2234
    %vm3831 = vcmp.lt.f32.partialorder %v3830, 0.0004427343
    %v3832 = vsel %vm3831, %v3829, %v3826
    %v3833 = vadd.f32 %v2236, 1.0
    %v3834 = vlog2.pop %v3833
    %v3835 = vmul.f32 %v3834, 0.6931472
    %v3836 = vmul.f32 -0.5, %v2236
    %v3837 = vadd.f32 %v3836, 1.0
    %v3838 = vmul.f32 %v3837, %v2236
    %v3839 = vand.u32 2147483647, %v2236
    %vm3840 = vcmp.lt.f32.partialorder %v3839, 0.0004427343
    %v3841 = vsel %vm3840, %v3838, %v3835
    %v3842 = vadd.f32 %v2238, 1.0
    %v3843 = vlog2.pop %v3842
    %v3844 = vmul.f32 %v3843, 0.6931472
    %v3845 = vmul.f32 -0.5, %v2238
    %v3846 = vadd.f32 %v3845, 1.0
    %v3847 = vmul.f32 %v3846, %v2238
    %v3848 = vand.u32 2147483647, %v2238
    %vm3849 = vcmp.lt.f32.partialorder %v3848, 0.0004427343
    %v3850 = vsel %vm3849, %v3847, %v3844
    %v3851 = vadd.f32 %v2240, 1.0
    %v3852 = vlog2.pop %v3851
    %v3853 = vmul.f32 %v3852, 0.6931472
    %v3854 = vmul.f32 -0.5, %v2240
    %v3855 = vadd.f32 %v3854, 1.0
    %v3856 = vmul.f32 %v3855, %v2240
    %v3857 = vand.u32 2147483647, %v2240
    %vm3858 = vcmp.lt.f32.partialorder %v3857, 0.0004427343
    %v3859 = vsel %vm3858, %v3856, %v3853
    %v3860 = vadd.f32 %v2242, 1.0
    %v3861 = vlog2.pop %v3860
    %v3862 = vmul.f32 %v3861, 0.6931472
    %v3863 = vmul.f32 -0.5, %v2242
    %v3864 = vadd.f32 %v3863, 1.0
    %v3865 = vmul.f32 %v3864, %v2242
    %v3866 = vand.u32 2147483647, %v2242
    %vm3867 = vcmp.lt.f32.partialorder %v3866, 0.0004427343
    %v3868 = vsel %vm3867, %v3865, %v3862
    %v3869 = vadd.f32 %v2244, 1.0
    %v3870 = vlog2.pop %v3869
    %v3871 = vmul.f32 %v3870, 0.6931472
    %v3872 = vmul.f32 -0.5, %v2244
    %v3873 = vadd.f32 %v3872, 1.0
    %v3874 = vmul.f32 %v3873, %v2244
    %v3875 = vand.u32 2147483647, %v2244
    %vm3876 = vcmp.lt.f32.partialorder %v3875, 0.0004427343
    %v3877 = vsel %vm3876, %v3874, %v3871
    %v3878 = vadd.f32 %v2246, 1.0
    %v3879 = vlog2.pop %v3878
    %v3880 = vmul.f32 %v3879, 0.6931472
    %v3881 = vmul.f32 -0.5, %v2246
    %v3882 = vadd.f32 %v3881, 1.0
    %v3883 = vmul.f32 %v3882, %v2246
    %v3884 = vand.u32 2147483647, %v2246
    %vm3885 = vcmp.lt.f32.partialorder %v3884, 0.0004427343
    %v3886 = vsel %vm3885, %v3883, %v3880
    %v3887 = vadd.f32 %v2248, 1.0
    %v3888 = vlog2.pop %v3887
    %v3889 = vmul.f32 %v3888, 0.6931472
    %v3890 = vmul.f32 -0.5, %v2248
    %v3891 = vadd.f32 %v3890, 1.0
    %v3892 = vmul.f32 %v3891, %v2248
    %v3893 = vand.u32 2147483647, %v2248
    %vm3894 = vcmp.lt.f32.partialorder %v3893, 0.0004427343
    %v3895 = vsel %vm3894, %v3892, %v3889
    %v3896 = vadd.f32 %v2250, 1.0
    %v3897 = vlog2.pop %v3896
    %v3898 = vmul.f32 %v3897, 0.6931472
    %v3899 = vmul.f32 -0.5, %v2250
    %v3900 = vadd.f32 %v3899, 1.0
    %v3901 = vmul.f32 %v3900, %v2250
    %v3902 = vand.u32 2147483647, %v2250
    %vm3903 = vcmp.lt.f32.partialorder %v3902, 0.0004427343
    %v3904 = vsel %vm3903, %v3901, %v3898
    %v3905 = vadd.f32 %v2252, 1.0
    %v3906 = vlog2.pop %v3905
    %v3907 = vmul.f32 %v3906, 0.6931472
    %v3908 = vmul.f32 -0.5, %v2252
    %v3909 = vadd.f32 %v3908, 1.0
    %v3910 = vmul.f32 %v3909, %v2252
    %v3911 = vand.u32 2147483647, %v2252
    %vm3912 = vcmp.lt.f32.partialorder %v3911, 0.0004427343
    %v3913 = vsel %vm3912, %v3910, %v3907
    %v3914 = vadd.f32 %v2254, 1.0
    %v3915 = vlog2.pop %v3914
    %v3916 = vmul.f32 %v3915, 0.6931472
    %v3917 = vmul.f32 -0.5, %v2254
    %v3918 = vadd.f32 %v3917, 1.0
    %v3919 = vmul.f32 %v3918, %v2254
    %v3920 = vand.u32 2147483647, %v2254
    %vm3921 = vcmp.lt.f32.partialorder %v3920, 0.0004427343
    %v3922 = vsel %vm3921, %v3919, %v3916
    %v3923 = vadd.f32 %v2256, 1.0
    %v3924 = vlog2.pop %v3923
    %v3925 = vmul.f32 %v3924, 0.6931472
    %v3926 = vmul.f32 -0.5, %v2256
    %v3927 = vadd.f32 %v3926, 1.0
    %v3928 = vmul.f32 %v3927, %v2256
    %v3929 = vand.u32 2147483647, %v2256
    %vm3930 = vcmp.lt.f32.partialorder %v3929, 0.0004427343
    %v3931 = vsel %vm3930, %v3928, %v3925
    %v3932 = vadd.f32 %v2258, 1.0
    %v3933 = vlog2.pop %v3932
    %v3934 = vmul.f32 %v3933, 0.6931472
    %v3935 = vmul.f32 -0.5, %v2258
    %v3936 = vadd.f32 %v3935, 1.0
    %v3937 = vmul.f32 %v3936, %v2258
    %v3938 = vand.u32 2147483647, %v2258
    %vm3939 = vcmp.lt.f32.partialorder %v3938, 0.0004427343
    %v3940 = vsel %vm3939, %v3937, %v3934
    %v3941 = vadd.f32 %v2260, 1.0
    %v3942 = vlog2.pop %v3941
    %v3943 = vmul.f32 %v3942, 0.6931472
    %v3944 = vmul.f32 -0.5, %v2260
    %v3945 = vadd.f32 %v3944, 1.0
    %v3946 = vmul.f32 %v3945, %v2260
    %v3947 = vand.u32 2147483647, %v2260
    %vm3948 = vcmp.lt.f32.partialorder %v3947, 0.0004427343
    %v3949 = vsel %vm3948, %v3946, %v3943
    %v3950 = vadd.f32 %v2262, 1.0
    %v3951 = vlog2.pop %v3950
    %v3952 = vmul.f32 %v3951, 0.6931472
    %v3953 = vmul.f32 -0.5, %v2262
    %v3954 = vadd.f32 %v3953, 1.0
    %v3955 = vmul.f32 %v3954, %v2262
    %v3956 = vand.u32 2147483647, %v2262
    %vm3957 = vcmp.lt.f32.partialorder %v3956, 0.0004427343
    %v3958 = vsel %vm3957, %v3955, %v3952
    %v3959 = vadd.f32 %v2264, 1.0
    %v3960 = vlog2.pop %v3959
    %v3961 = vmul.f32 %v3960, 0.6931472
    %v3962 = vmul.f32 -0.5, %v2264
    %v3963 = vadd.f32 %v3962, 1.0
    %v3964 = vmul.f32 %v3963, %v2264
    %v3965 = vand.u32 2147483647, %v2264
    %vm3966 = vcmp.lt.f32.partialorder %v3965, 0.0004427343
    %v3967 = vsel %vm3966, %v3964, %v3961
    %v3968 = vadd.f32 %v2266, 1.0
    %v3969 = vlog2.pop %v3968
    %v3970 = vmul.f32 %v3969, 0.6931472
    %v3971 = vmul.f32 -0.5, %v2266
    %v3972 = vadd.f32 %v3971, 1.0
    %v3973 = vmul.f32 %v3972, %v2266
    %v3974 = vand.u32 2147483647, %v2266
    %vm3975 = vcmp.lt.f32.partialorder %v3974, 0.0004427343
    %v3976 = vsel %vm3975, %v3973, %v3970
    %v3977 = vadd.f32 %v2268, 1.0
    %v3978 = vlog2.pop %v3977
    %v3979 = vmul.f32 %v3978, 0.6931472
    %v3980 = vmul.f32 -0.5, %v2268
    %v3981 = vadd.f32 %v3980, 1.0
    %v3982 = vmul.f32 %v3981, %v2268
    %v3983 = vand.u32 2147483647, %v2268
    %vm3984 = vcmp.lt.f32.partialorder %v3983, 0.0004427343
    %v3985 = vsel %vm3984, %v3982, %v3979
    %v3986 = vadd.f32 %v2270, 1.0
    %v3987 = vlog2.pop %v3986
    %v3988 = vmul.f32 %v3987, 0.6931472
    %v3989 = vmul.f32 -0.5, %v2270
    %v3990 = vadd.f32 %v3989, 1.0
    %v3991 = vmul.f32 %v3990, %v2270
    %v3992 = vand.u32 2147483647, %v2270
    %vm3993 = vcmp.lt.f32.partialorder %v3992, 0.0004427343
    %v3994 = vsel %vm3993, %v3991, %v3988
    %v3995 = vadd.f32 %v2272, 1.0
    %v3996 = vlog2.pop %v3995
    %v3997 = vmul.f32 %v3996, 0.6931472
    %v3998 = vmul.f32 -0.5, %v2272
    %v3999 = vadd.f32 %v3998, 1.0
    %v4000 = vmul.f32 %v3999, %v2272
    %v4001 = vand.u32 2147483647, %v2272
    %vm4002 = vcmp.lt.f32.partialorder %v4001, 0.0004427343
    %v4003 = vsel %vm4002, %v4000, %v3997
    %v4004 = vadd.f32 %v2274, 1.0
    %v4005 = vlog2.pop %v4004
    %v4006 = vmul.f32 %v4005, 0.6931472
    %v4007 = vmul.f32 -0.5, %v2274
    %v4008 = vadd.f32 %v4007, 1.0
    %v4009 = vmul.f32 %v4008, %v2274
    %v4010 = vand.u32 2147483647, %v2274
    %vm4011 = vcmp.lt.f32.partialorder %v4010, 0.0004427343
    %v4012 = vsel %vm4011, %v4009, %v4006
    %v4013 = vadd.f32 %v2276, 1.0
    %v4014 = vlog2.pop %v4013
    %v4015 = vmul.f32 %v4014, 0.6931472
    %v4016 = vmul.f32 -0.5, %v2276
    %v4017 = vadd.f32 %v4016, 1.0
    %v4018 = vmul.f32 %v4017, %v2276
    %v4019 = vand.u32 2147483647, %v2276
    %vm4020 = vcmp.lt.f32.partialorder %v4019, 0.0004427343
    %v4021 = vsel %vm4020, %v4018, %v4015
    %v4022 = vadd.f32 %v2278, 1.0
    %v4023 = vlog2.pop %v4022
    %v4024 = vmul.f32 %v4023, 0.6931472
    %v4025 = vmul.f32 -0.5, %v2278
    %v4026 = vadd.f32 %v4025, 1.0
    %v4027 = vmul.f32 %v4026, %v2278
    %v4028 = vand.u32 2147483647, %v2278
    %vm4029 = vcmp.lt.f32.partialorder %v4028, 0.0004427343
    %v4030 = vsel %vm4029, %v4027, %v4024
    %v4031 = vadd.f32 %v2280, 1.0
    %v4032 = vlog2.pop %v4031
    %v4033 = vmul.f32 %v4032, 0.6931472
    %v4034 = vmul.f32 -0.5, %v2280
    %v4035 = vadd.f32 %v4034, 1.0
    %v4036 = vmul.f32 %v4035, %v2280
    %v4037 = vand.u32 2147483647, %v2280
    %vm4038 = vcmp.lt.f32.partialorder %v4037, 0.0004427343
    %v4039 = vsel %vm4038, %v4036, %v4033
    %v4040 = vadd.f32 %v2282, 1.0
    %v4041 = vlog2.pop %v4040
    %v4042 = vmul.f32 %v4041, 0.6931472
    %v4043 = vmul.f32 -0.5, %v2282
    %v4044 = vadd.f32 %v4043, 1.0
    %v4045 = vmul.f32 %v4044, %v2282
    %v4046 = vand.u32 2147483647, %v2282
    %vm4047 = vcmp.lt.f32.partialorder %v4046, 0.0004427343
    %v4048 = vsel %vm4047, %v4045, %v4042
    %v4049 = vadd.f32 %v2284, 1.0
    %v4050 = vlog2.pop %v4049
    %v4051 = vmul.f32 %v4050, 0.6931472
    %v4052 = vmul.f32 -0.5, %v2284
    %v4053 = vadd.f32 %v4052, 1.0
    %v4054 = vmul.f32 %v4053, %v2284
    %v4055 = vand.u32 2147483647, %v2284
    %vm4056 = vcmp.lt.f32.partialorder %v4055, 0.0004427343
    %v4057 = vsel %vm4056, %v4054, %v4051
    %v4058 = vadd.f32 %v2286, 1.0
    %v4059 = vlog2.pop %v4058
    %v4060 = vmul.f32 %v4059, 0.6931472
    %v4061 = vmul.f32 -0.5, %v2286
    %v4062 = vadd.f32 %v4061, 1.0
    %v4063 = vmul.f32 %v4062, %v2286
    %v4064 = vand.u32 2147483647, %v2286
    %vm4065 = vcmp.lt.f32.partialorder %v4064, 0.0004427343
    %v4066 = vsel %vm4065, %v4063, %v4060
    %v4067 = vadd.f32 %v2288, 1.0
    %v4068 = vlog2.pop %v4067
    %v4069 = vmul.f32 %v4068, 0.6931472
    %v4070 = vmul.f32 -0.5, %v2288
    %v4071 = vadd.f32 %v4070, 1.0
    %v4072 = vmul.f32 %v4071, %v2288
    %v4073 = vand.u32 2147483647, %v2288
    %vm4074 = vcmp.lt.f32.partialorder %v4073, 0.0004427343
    %v4075 = vsel %vm4074, %v4072, %v4069
    %v4076 = vadd.f32 %v2290, 1.0
    %v4077 = vlog2.pop %v4076
    %v4078 = vmul.f32 %v4077, 0.6931472
    %v4079 = vmul.f32 -0.5, %v2290
    %v4080 = vadd.f32 %v4079, 1.0
    %v4081 = vmul.f32 %v4080, %v2290
    %v4082 = vand.u32 2147483647, %v2290
    %vm4083 = vcmp.lt.f32.partialorder %v4082, 0.0004427343
    %v4084 = vsel %vm4083, %v4081, %v4078
    %v4085 = vadd.f32 %v2292, 1.0
    %v4086 = vlog2.pop %v4085
    %v4087 = vmul.f32 %v4086, 0.6931472
    %v4088 = vmul.f32 -0.5, %v2292
    %v4089 = vadd.f32 %v4088, 1.0
    %v4090 = vmul.f32 %v4089, %v2292
    %v4091 = vand.u32 2147483647, %v2292
    %vm4092 = vcmp.lt.f32.partialorder %v4091, 0.0004427343
    %v4093 = vsel %vm4092, %v4090, %v4087
    %v4094 = vadd.f32 %v2294, 1.0
    %v4095 = vlog2.pop %v4094
    %v4096 = vmul.f32 %v4095, 0.6931472
    %v4097 = vmul.f32 -0.5, %v2294
    %v4098 = vadd.f32 %v4097, 1.0
    %v4099 = vmul.f32 %v4098, %v2294
    %v4100 = vand.u32 2147483647, %v2294
    %vm4101 = vcmp.lt.f32.partialorder %v4100, 0.0004427343
    %v4102 = vsel %vm4101, %v4099, %v4096
    %v4103 = vadd.f32 %v2296, 1.0
    %v4104 = vlog2.pop %v4103
    %v4105 = vmul.f32 %v4104, 0.6931472
    %v4106 = vmul.f32 -0.5, %v2296
    %v4107 = vadd.f32 %v4106, 1.0
    %v4108 = vmul.f32 %v4107, %v2296
    %v4109 = vand.u32 2147483647, %v2296
    %vm4110 = vcmp.lt.f32.partialorder %v4109, 0.0004427343
    %v4111 = vsel %vm4110, %v4108, %v4105
    %v4112 = vadd.f32 %v2298, 1.0
    %v4113 = vlog2.pop %v4112
    %v4114 = vmul.f32 %v4113, 0.6931472
    %v4115 = vmul.f32 -0.5, %v2298
    %v4116 = vadd.f32 %v4115, 1.0
    %v4117 = vmul.f32 %v4116, %v2298
    %v4118 = vand.u32 2147483647, %v2298
    %vm4119 = vcmp.lt.f32.partialorder %v4118, 0.0004427343
    %v4120 = vsel %vm4119, %v4117, %v4114
    %v4121 = vadd.f32 %v2300, 1.0
    %v4122 = vlog2.pop %v4121
    %v4123 = vmul.f32 %v4122, 0.6931472
    %v4124 = vmul.f32 -0.5, %v2300
    %v4125 = vadd.f32 %v4124, 1.0
    %v4126 = vmul.f32 %v4125, %v2300
    %v4127 = vand.u32 2147483647, %v2300
    %vm4128 = vcmp.lt.f32.partialorder %v4127, 0.0004427343
    %v4129 = vsel %vm4128, %v4126, %v4123
    %v4130 = vadd.f32 %v2302, 1.0
    %v4131 = vlog2.pop %v4130
    %v4132 = vmul.f32 %v4131, 0.6931472
    %v4133 = vmul.f32 -0.5, %v2302
    %v4134 = vadd.f32 %v4133, 1.0
    %v4135 = vmul.f32 %v4134, %v2302
    %v4136 = vand.u32 2147483647, %v2302
    %vm4137 = vcmp.lt.f32.partialorder %v4136, 0.0004427343
    %v4138 = vsel %vm4137, %v4135, %v4132
    %v4139 = vadd.f32 %v2304, 1.0
    %v4140 = vlog2.pop %v4139
    %v4141 = vmul.f32 %v4140, 0.6931472
    %v4142 = vmul.f32 -0.5, %v2304
    %v4143 = vadd.f32 %v4142, 1.0
    %v4144 = vmul.f32 %v4143, %v2304
    %v4145 = vand.u32 2147483647, %v2304
    %vm4146 = vcmp.lt.f32.partialorder %v4145, 0.0004427343
    %v4147 = vsel %vm4146, %v4144, %v4141
    %v4148 = vadd.f32 %v2306, 1.0
    %v4149 = vlog2.pop %v4148
    %v4150 = vmul.f32 %v4149, 0.6931472
    %v4151 = vmul.f32 -0.5, %v2306
    %v4152 = vadd.f32 %v4151, 1.0
    %v4153 = vmul.f32 %v4152, %v2306
    %v4154 = vand.u32 2147483647, %v2306
    %vm4155 = vcmp.lt.f32.partialorder %v4154, 0.0004427343
    %v4156 = vsel %vm4155, %v4153, %v4150
    %v4157 = vadd.f32 %v2308, 1.0
    %v4158 = vlog2.pop %v4157
    %v4159 = vmul.f32 %v4158, 0.6931472
    %v4160 = vmul.f32 -0.5, %v2308
    %v4161 = vadd.f32 %v4160, 1.0
    %v4162 = vmul.f32 %v4161, %v2308
    %v4163 = vand.u32 2147483647, %v2308
    %vm4164 = vcmp.lt.f32.partialorder %v4163, 0.0004427343
    %v4165 = vsel %vm4164, %v4162, %v4159
    %v4166 = vadd.f32 %v2310, 1.0
    %v4167 = vlog2.pop %v4166
    %v4168 = vmul.f32 %v4167, 0.6931472
    %v4169 = vmul.f32 -0.5, %v2310
    %v4170 = vadd.f32 %v4169, 1.0
    %v4171 = vmul.f32 %v4170, %v2310
    %v4172 = vand.u32 2147483647, %v2310
    %vm4173 = vcmp.lt.f32.partialorder %v4172, 0.0004427343
    %v4174 = vsel %vm4173, %v4171, %v4168
    %v4175 = vadd.f32 %v2312, 1.0
    %v4176 = vlog2.pop %v4175
    %v4177 = vmul.f32 %v4176, 0.6931472
    %v4178 = vmul.f32 -0.5, %v2312
    %v4179 = vadd.f32 %v4178, 1.0
    %v4180 = vmul.f32 %v4179, %v2312
    %v4181 = vand.u32 2147483647, %v2312
    %vm4182 = vcmp.lt.f32.partialorder %v4181, 0.0004427343
    %v4183 = vsel %vm4182, %v4180, %v4177
    %v4184 = vadd.f32 %v2314, 1.0
    %v4185 = vlog2.pop %v4184
    %v4186 = vmul.f32 %v4185, 0.6931472
    %v4187 = vmul.f32 -0.5, %v2314
    %v4188 = vadd.f32 %v4187, 1.0
    %v4189 = vmul.f32 %v4188, %v2314
    %v4190 = vand.u32 2147483647, %v2314
    %vm4191 = vcmp.lt.f32.partialorder %v4190, 0.0004427343
    %v4192 = vsel %vm4191, %v4189, %v4186
    %v4193 = vadd.f32 %v2316, 1.0
    %v4194 = vlog2.pop %v4193
    %v4195 = vmul.f32 %v4194, 0.6931472
    %v4196 = vmul.f32 -0.5, %v2316
    %v4197 = vadd.f32 %v4196, 1.0
    %v4198 = vmul.f32 %v4197, %v2316
    %v4199 = vand.u32 2147483647, %v2316
    %vm4200 = vcmp.lt.f32.partialorder %v4199, 0.0004427343
    %v4201 = vsel %vm4200, %v4198, %v4195
    %v4202 = vadd.f32 %v2318, 1.0
    %v4203 = vlog2.pop %v4202
    %v4204 = vmul.f32 %v4203, 0.6931472
    %v4205 = vmul.f32 -0.5, %v2318
    %v4206 = vadd.f32 %v4205, 1.0
    %v4207 = vmul.f32 %v4206, %v2318
    %v4208 = vand.u32 2147483647, %v2318
    %vm4209 = vcmp.lt.f32.partialorder %v4208, 0.0004427343
    %v4210 = vsel %vm4209, %v4207, %v4204
    %v4211 = vadd.f32 %v2320, 1.0
    %v4212 = vlog2.pop %v4211
    %v4213 = vmul.f32 %v4212, 0.6931472
    %v4214 = vmul.f32 -0.5, %v2320
    %v4215 = vadd.f32 %v4214, 1.0
    %v4216 = vmul.f32 %v4215, %v2320
    %v4217 = vand.u32 2147483647, %v2320
    %vm4218 = vcmp.lt.f32.partialorder %v4217, 0.0004427343
    %v4219 = vsel %vm4218, %v4216, %v4213
    %v4220 = vadd.f32 %v2322, 1.0
    %v4221 = vlog2.pop %v4220
    %v4222 = vmul.f32 %v4221, 0.6931472
    %v4223 = vmul.f32 -0.5, %v2322
    %v4224 = vadd.f32 %v4223, 1.0
    %v4225 = vmul.f32 %v4224, %v2322
    %v4226 = vand.u32 2147483647, %v2322
    %vm4227 = vcmp.lt.f32.partialorder %v4226, 0.0004427343
    %v4228 = vsel %vm4227, %v4225, %v4222
    %v4229 = vadd.f32 %v2324, 1.0
    %v4230 = vlog2.pop %v4229
    %v4231 = vmul.f32 %v4230, 0.6931472
    %v4232 = vmul.f32 -0.5, %v2324
    %v4233 = vadd.f32 %v4232, 1.0
    %v4234 = vmul.f32 %v4233, %v2324
    %v4235 = vand.u32 2147483647, %v2324
    %vm4236 = vcmp.lt.f32.partialorder %v4235, 0.0004427343
    %v4237 = vsel %vm4236, %v4234, %v4231
    %v4238 = vadd.f32 %v2326, 1.0
    %v4239 = vlog2.pop %v4238
    %v4240 = vmul.f32 %v4239, 0.6931472
    %v4241 = vmul.f32 -0.5, %v2326
    %v4242 = vadd.f32 %v4241, 1.0
    %v4243 = vmul.f32 %v4242, %v2326
    %v4244 = vand.u32 2147483647, %v2326
    %vm4245 = vcmp.lt.f32.partialorder %v4244, 0.0004427343
    %v4246 = vsel %vm4245, %v4243, %v4240
    %v4247 = vadd.f32 %v2328, 1.0
    %v4248 = vlog2.pop %v4247
    %v4249 = vmul.f32 %v4248, 0.6931472
    %v4250 = vmul.f32 -0.5, %v2328
    %v4251 = vadd.f32 %v4250, 1.0
    %v4252 = vmul.f32 %v4251, %v2328
    %v4253 = vand.u32 2147483647, %v2328
    %vm4254 = vcmp.lt.f32.partialorder %v4253, 0.0004427343
    %v4255 = vsel %vm4254, %v4252, %v4249
    %v4256 = vadd.f32 %v2330, 1.0
    %v4257 = vlog2.pop %v4256
    %v4258 = vmul.f32 %v4257, 0.6931472
    %v4259 = vmul.f32 -0.5, %v2330
    %v4260 = vadd.f32 %v4259, 1.0
    %v4261 = vmul.f32 %v4260, %v2330
    %v4262 = vand.u32 2147483647, %v2330
    %vm4263 = vcmp.lt.f32.partialorder %v4262, 0.0004427343
    %v4264 = vsel %vm4263, %v4261, %v4258
    %v4265 = vadd.f32 %v2332, 1.0
    %v4266 = vlog2.pop %v4265
    %v4267 = vmul.f32 %v4266, 0.6931472
    %v4268 = vmul.f32 -0.5, %v2332
    %v4269 = vadd.f32 %v4268, 1.0
    %v4270 = vmul.f32 %v4269, %v2332
    %v4271 = vand.u32 2147483647, %v2332
    %vm4272 = vcmp.lt.f32.partialorder %v4271, 0.0004427343
    %v4273 = vsel %vm4272, %v4270, %v4267
    %v4274 = vadd.f32 %v2334, 1.0
    %v4275 = vlog2.pop %v4274
    %v4276 = vmul.f32 %v4275, 0.6931472
    %v4277 = vmul.f32 -0.5, %v2334
    %v4278 = vadd.f32 %v4277, 1.0
    %v4279 = vmul.f32 %v4278, %v2334
    %v4280 = vand.u32 2147483647, %v2334
    %vm4281 = vcmp.lt.f32.partialorder %v4280, 0.0004427343
    %v4282 = vsel %vm4281, %v4279, %v4276
    %v4283 = vadd.f32 %v2336, 1.0
    %v4284 = vlog2.pop %v4283
    %v4285 = vmul.f32 %v4284, 0.6931472
    %v4286 = vmul.f32 -0.5, %v2336
    %v4287 = vadd.f32 %v4286, 1.0
    %v4288 = vmul.f32 %v4287, %v2336
    %v4289 = vand.u32 2147483647, %v2336
    %vm4290 = vcmp.lt.f32.partialorder %v4289, 0.0004427343
    %v4291 = vsel %vm4290, %v4288, %v4285
    %v4292 = vadd.f32 %v2338, 1.0
    %v4293 = vlog2.pop %v4292
    %v4294 = vmul.f32 %v4293, 0.6931472
    %v4295 = vmul.f32 -0.5, %v2338
    %v4296 = vadd.f32 %v4295, 1.0
    %v4297 = vmul.f32 %v4296, %v2338
    %v4298 = vand.u32 2147483647, %v2338
    %vm4299 = vcmp.lt.f32.partialorder %v4298, 0.0004427343
    %v4300 = vsel %vm4299, %v4297, %v4294
    %v4301 = vadd.f32 %v2340, 1.0
    %v4302 = vlog2.pop %v4301
    %v4303 = vmul.f32 %v4302, 0.6931472
    %v4304 = vmul.f32 -0.5, %v2340
    %v4305 = vadd.f32 %v4304, 1.0
    %v4306 = vmul.f32 %v4305, %v2340
    %v4307 = vand.u32 2147483647, %v2340
    %vm4308 = vcmp.lt.f32.partialorder %v4307, 0.0004427343
    %v4309 = vsel %vm4308, %v4306, %v4303
    %v4310 = vadd.f32 %v2342, 1.0
    %v4311 = vlog2.pop %v4310
    %v4312 = vmul.f32 %v4311, 0.6931472
    %v4313 = vmul.f32 -0.5, %v2342
    %v4314 = vadd.f32 %v4313, 1.0
    %v4315 = vmul.f32 %v4314, %v2342
    %v4316 = vand.u32 2147483647, %v2342
    %vm4317 = vcmp.lt.f32.partialorder %v4316, 0.0004427343
    %v4318 = vsel %vm4317, %v4315, %v4312
    %v4319 = vadd.f32 %v2344, 1.0
    %v4320 = vlog2.pop %v4319
    %v4321 = vmul.f32 %v4320, 0.6931472
    %v4322 = vmul.f32 -0.5, %v2344
    %v4323 = vadd.f32 %v4322, 1.0
    %v4324 = vmul.f32 %v4323, %v2344
    %v4325 = vand.u32 2147483647, %v2344
    %vm4326 = vcmp.lt.f32.partialorder %v4325, 0.0004427343
    %v4327 = vsel %vm4326, %v4324, %v4321
    %v4328 = vadd.f32 %v2346, 1.0
    %v4329 = vlog2.pop %v4328
    %v4330 = vmul.f32 %v4329, 0.6931472
    %v4331 = vmul.f32 -0.5, %v2346
    %v4332 = vadd.f32 %v4331, 1.0
    %v4333 = vmul.f32 %v4332, %v2346
    %v4334 = vand.u32 2147483647, %v2346
    %vm4335 = vcmp.lt.f32.partialorder %v4334, 0.0004427343
    %v4336 = vsel %vm4335, %v4333, %v4330
    %v4337 = vadd.f32 %v2348, 1.0
    %v4338 = vlog2.pop %v4337
    %v4339 = vmul.f32 %v4338, 0.6931472
    %v4340 = vmul.f32 -0.5, %v2348
    %v4341 = vadd.f32 %v4340, 1.0
    %v4342 = vmul.f32 %v4341, %v2348
    %v4343 = vand.u32 2147483647, %v2348
    %vm4344 = vcmp.lt.f32.partialorder %v4343, 0.0004427343
    %v4345 = vsel %vm4344, %v4342, %v4339
    %v4346 = vadd.f32 %v2350, 1.0
    %v4347 = vlog2.pop %v4346
    %v4348 = vmul.f32 %v4347, 0.6931472
    %v4349 = vmul.f32 -0.5, %v2350
    %v4350 = vadd.f32 %v4349, 1.0
    %v4351 = vmul.f32 %v4350, %v2350
    %v4352 = vand.u32 2147483647, %v2350
    %vm4353 = vcmp.lt.f32.partialorder %v4352, 0.0004427343
    %v4354 = vsel %vm4353, %v4351, %v4348
    %v4355 = vadd.f32 %v2352, 1.0
    %v4356 = vlog2.pop %v4355
    %v4357 = vmul.f32 %v4356, 0.6931472
    %v4358 = vmul.f32 -0.5, %v2352
    %v4359 = vadd.f32 %v4358, 1.0
    %v4360 = vmul.f32 %v4359, %v2352
    %v4361 = vand.u32 2147483647, %v2352
    %vm4362 = vcmp.lt.f32.partialorder %v4361, 0.0004427343
    %v4363 = vsel %vm4362, %v4360, %v4357
    %v4364 = vadd.f32 %v2354, 1.0
    %v4365 = vlog2.pop %v4364
    %v4366 = vmul.f32 %v4365, 0.6931472
    %v4367 = vmul.f32 -0.5, %v2354
    %v4368 = vadd.f32 %v4367, 1.0
    %v4369 = vmul.f32 %v4368, %v2354
    %v4370 = vand.u32 2147483647, %v2354
    %vm4371 = vcmp.lt.f32.partialorder %v4370, 0.0004427343
    %v4372 = vsel %vm4371, %v4369, %v4366
    %v4373 = vadd.f32 %v2356, 1.0
    %v4374 = vlog2.pop %v4373
    %v4375 = vmul.f32 %v4374, 0.6931472
    %v4376 = vmul.f32 -0.5, %v2356
    %v4377 = vadd.f32 %v4376, 1.0
    %v4378 = vmul.f32 %v4377, %v2356
    %v4379 = vand.u32 2147483647, %v2356
    %vm4380 = vcmp.lt.f32.partialorder %v4379, 0.0004427343
    %v4381 = vsel %vm4380, %v4378, %v4375
    %v4382 = vadd.f32 %v2358, 1.0
    %v4383 = vlog2.pop %v4382
    %v4384 = vmul.f32 %v4383, 0.6931472
    %v4385 = vmul.f32 -0.5, %v2358
    %v4386 = vadd.f32 %v4385, 1.0
    %v4387 = vmul.f32 %v4386, %v2358
    %v4388 = vand.u32 2147483647, %v2358
    %vm4389 = vcmp.lt.f32.partialorder %v4388, 0.0004427343
    %v4390 = vsel %vm4389, %v4387, %v4384
    %v4391 = vadd.f32 %v2360, 1.0
    %v4392 = vlog2.pop %v4391
    %v4393 = vmul.f32 %v4392, 0.6931472
    %v4394 = vmul.f32 -0.5, %v2360
    %v4395 = vadd.f32 %v4394, 1.0
    %v4396 = vmul.f32 %v4395, %v2360
    %v4397 = vand.u32 2147483647, %v2360
    %vm4398 = vcmp.lt.f32.partialorder %v4397, 0.0004427343
    %v4399 = vsel %vm4398, %v4396, %v4393
    %v4400 = vadd.f32 %v2362, 1.0
    %v4401 = vlog2.pop %v4400
    %v4402 = vmul.f32 %v4401, 0.6931472
    %v4403 = vmul.f32 -0.5, %v2362
    %v4404 = vadd.f32 %v4403, 1.0
    %v4405 = vmul.f32 %v4404, %v2362
    %v4406 = vand.u32 2147483647, %v2362
    %vm4407 = vcmp.lt.f32.partialorder %v4406, 0.0004427343
    %v4408 = vsel %vm4407, %v4405, %v4402
    %v4409 = vadd.f32 %v2364, 1.0
    %v4410 = vlog2.pop %v4409
    %v4411 = vmul.f32 %v4410, 0.6931472
    %v4412 = vmul.f32 -0.5, %v2364
    %v4413 = vadd.f32 %v4412, 1.0
    %v4414 = vmul.f32 %v4413, %v2364
    %v4415 = vand.u32 2147483647, %v2364
    %vm4416 = vcmp.lt.f32.partialorder %v4415, 0.0004427343
    %v4417 = vsel %vm4416, %v4414, %v4411
    %v4418 = vadd.f32 %v2366, 1.0
    %v4419 = vlog2.pop %v4418
    %v4420 = vmul.f32 %v4419, 0.6931472
    %v4421 = vmul.f32 -0.5, %v2366
    %v4422 = vadd.f32 %v4421, 1.0
    %v4423 = vmul.f32 %v4422, %v2366
    %v4424 = vand.u32 2147483647, %v2366
    %vm4425 = vcmp.lt.f32.partialorder %v4424, 0.0004427343
    %v4426 = vsel %vm4425, %v4423, %v4420
    %v4427 = vadd.f32 %v2368, 1.0
    %v4428 = vlog2.pop %v4427
    %v4429 = vmul.f32 %v4428, 0.6931472
    %v4430 = vmul.f32 -0.5, %v2368
    %v4431 = vadd.f32 %v4430, 1.0
    %v4432 = vmul.f32 %v4431, %v2368
    %v4433 = vand.u32 2147483647, %v2368
    %vm4434 = vcmp.lt.f32.partialorder %v4433, 0.0004427343
    %v4435 = vsel %vm4434, %v4432, %v4429
    %v4436 = vadd.f32 %v2370, 1.0
    %v4437 = vlog2.pop %v4436
    %v4438 = vmul.f32 %v4437, 0.6931472
    %v4439 = vmul.f32 -0.5, %v2370
    %v4440 = vadd.f32 %v4439, 1.0
    %v4441 = vmul.f32 %v4440, %v2370
    %v4442 = vand.u32 2147483647, %v2370
    %vm4443 = vcmp.lt.f32.partialorder %v4442, 0.0004427343
    %v4444 = vsel %vm4443, %v4441, %v4438
    %v4445 = vadd.f32 %v2372, 1.0
    %v4446 = vlog2.pop %v4445
    %v4447 = vmul.f32 %v4446, 0.6931472
    %v4448 = vmul.f32 -0.5, %v2372
    %v4449 = vadd.f32 %v4448, 1.0
    %v4450 = vmul.f32 %v4449, %v2372
    %v4451 = vand.u32 2147483647, %v2372
    %vm4452 = vcmp.lt.f32.partialorder %v4451, 0.0004427343
    %v4453 = vsel %vm4452, %v4450, %v4447
    %v4454 = vadd.f32 %v2374, 1.0
    %v4455 = vlog2.pop %v4454
    %v4456 = vmul.f32 %v4455, 0.6931472
    %v4457 = vmul.f32 -0.5, %v2374
    %v4458 = vadd.f32 %v4457, 1.0
    %v4459 = vmul.f32 %v4458, %v2374
    %v4460 = vand.u32 2147483647, %v2374
    %vm4461 = vcmp.lt.f32.partialorder %v4460, 0.0004427343
    %v4462 = vsel %vm4461, %v4459, %v4456
    %v4463 = vadd.f32 %v2376, 1.0
    %v4464 = vlog2.pop %v4463
    %v4465 = vmul.f32 %v4464, 0.6931472
    %v4466 = vmul.f32 -0.5, %v2376
    %v4467 = vadd.f32 %v4466, 1.0
    %v4468 = vmul.f32 %v4467, %v2376
    %v4469 = vand.u32 2147483647, %v2376
    %vm4470 = vcmp.lt.f32.partialorder %v4469, 0.0004427343
    %v4471 = vsel %vm4470, %v4468, %v4465
    %v4472 = vadd.f32 %v2378, 1.0
    %v4473 = vlog2.pop %v4472
    %v4474 = vmul.f32 %v4473, 0.6931472
    %v4475 = vmul.f32 -0.5, %v2378
    %v4476 = vadd.f32 %v4475, 1.0
    %v4477 = vmul.f32 %v4476, %v2378
    %v4478 = vand.u32 2147483647, %v2378
    %vm4479 = vcmp.lt.f32.partialorder %v4478, 0.0004427343
    %v4480 = vsel %vm4479, %v4477, %v4474
    %v4481 = vadd.f32 %v2380, 1.0
    %v4482 = vlog2.pop %v4481
    %v4483 = vmul.f32 %v4482, 0.6931472
    %v4484 = vmul.f32 -0.5, %v2380
    %v4485 = vadd.f32 %v4484, 1.0
    %v4486 = vmul.f32 %v4485, %v2380
    %v4487 = vand.u32 2147483647, %v2380
    %vm4488 = vcmp.lt.f32.partialorder %v4487, 0.0004427343
    %v4489 = vsel %vm4488, %v4486, %v4483
    %v4490 = vadd.f32 %v2382, 1.0
    %v4491 = vlog2.pop %v4490
    %v4492 = vmul.f32 %v4491, 0.6931472
    %v4493 = vmul.f32 -0.5, %v2382
    %v4494 = vadd.f32 %v4493, 1.0
    %v4495 = vmul.f32 %v4494, %v2382
    %v4496 = vand.u32 2147483647, %v2382
    %vm4497 = vcmp.lt.f32.partialorder %v4496, 0.0004427343
    %v4498 = vsel %vm4497, %v4495, %v4492
    %v4499 = vadd.f32 %v2384, 1.0
    %v4500 = vlog2.pop %v4499
    %v4501 = vmul.f32 %v4500, 0.6931472
    %v4502 = vmul.f32 -0.5, %v2384
    %v4503 = vadd.f32 %v4502, 1.0
    %v4504 = vmul.f32 %v4503, %v2384
    %v4505 = vand.u32 2147483647, %v2384
    %vm4506 = vcmp.lt.f32.partialorder %v4505, 0.0004427343
    %v4507 = vsel %vm4506, %v4504, %v4501
    %v4508 = vadd.f32 %v2386, 1.0
    %v4509 = vlog2.pop %v4508
    %v4510 = vmul.f32 %v4509, 0.6931472
    %v4511 = vmul.f32 -0.5, %v2386
    %v4512 = vadd.f32 %v4511, 1.0
    %v4513 = vmul.f32 %v4512, %v2386
    %v4514 = vand.u32 2147483647, %v2386
    %vm4515 = vcmp.lt.f32.partialorder %v4514, 0.0004427343
    %v4516 = vsel %vm4515, %v4513, %v4510
    %v4517 = vadd.f32 %v2388, 1.0
    %v4518 = vlog2.pop %v4517
    %v4519 = vmul.f32 %v4518, 0.6931472
    %v4520 = vmul.f32 -0.5, %v2388
    %v4521 = vadd.f32 %v4520, 1.0
    %v4522 = vmul.f32 %v4521, %v2388
    %v4523 = vand.u32 2147483647, %v2388
    %vm4524 = vcmp.lt.f32.partialorder %v4523, 0.0004427343
    %v4525 = vsel %vm4524, %v4522, %v4519
    %v4526 = vadd.f32 %v2390, 1.0
    %v4527 = vlog2.pop %v4526
    %v4528 = vmul.f32 %v4527, 0.6931472
    %v4529 = vmul.f32 -0.5, %v2390
    %v4530 = vadd.f32 %v4529, 1.0
    %v4531 = vmul.f32 %v4530, %v2390
    %v4532 = vand.u32 2147483647, %v2390
    %vm4533 = vcmp.lt.f32.partialorder %v4532, 0.0004427343
    %v4534 = vsel %vm4533, %v4531, %v4528
    %v4535 = vadd.f32 %v2392, 1.0
    %v4536 = vlog2.pop %v4535
    %v4537 = vmul.f32 %v4536, 0.6931472
    %v4538 = vmul.f32 -0.5, %v2392
    %v4539 = vadd.f32 %v4538, 1.0
    %v4540 = vmul.f32 %v4539, %v2392
    %v4541 = vand.u32 2147483647, %v2392
    %vm4542 = vcmp.lt.f32.partialorder %v4541, 0.0004427343
    %v4543 = vsel %vm4542, %v4540, %v4537
    %v4544 = vadd.f32 %v2394, 1.0
    %v4545 = vlog2.pop %v4544
    %v4546 = vmul.f32 %v4545, 0.6931472
    %v4547 = vmul.f32 -0.5, %v2394
    %v4548 = vadd.f32 %v4547, 1.0
    %v4549 = vmul.f32 %v4548, %v2394
    %v4550 = vand.u32 2147483647, %v2394
    %vm4551 = vcmp.lt.f32.partialorder %v4550, 0.0004427343
    %v4552 = vsel %vm4551, %v4549, %v4546
    %v4553 = vadd.f32 %v2396, 1.0
    %v4554 = vlog2.pop %v4553
    %v4555 = vmul.f32 %v4554, 0.6931472
    %v4556 = vmul.f32 -0.5, %v2396
    %v4557 = vadd.f32 %v4556, 1.0
    %v4558 = vmul.f32 %v4557, %v2396
    %v4559 = vand.u32 2147483647, %v2396
    %vm4560 = vcmp.lt.f32.partialorder %v4559, 0.0004427343
    %v4561 = vsel %vm4560, %v4558, %v4555
    %v4562 = vadd.f32 %v2398, 1.0
    %v4563 = vlog2.pop %v4562
    %v4564 = vmul.f32 %v4563, 0.6931472
    %v4565 = vmul.f32 -0.5, %v2398
    %v4566 = vadd.f32 %v4565, 1.0
    %v4567 = vmul.f32 %v4566, %v2398
    %v4568 = vand.u32 2147483647, %v2398
    %vm4569 = vcmp.lt.f32.partialorder %v4568, 0.0004427343
    %v4570 = vsel %vm4569, %v4567, %v4564
    %v4571 = vadd.f32 %v2400, 1.0
    %v4572 = vlog2.pop %v4571
    %v4573 = vmul.f32 %v4572, 0.6931472
    %v4574 = vmul.f32 -0.5, %v2400
    %v4575 = vadd.f32 %v4574, 1.0
    %v4576 = vmul.f32 %v4575, %v2400
    %v4577 = vand.u32 2147483647, %v2400
    %vm4578 = vcmp.lt.f32.partialorder %v4577, 0.0004427343
    %v4579 = vsel %vm4578, %v4576, %v4573
    %v4580 = vadd.f32 %v2402, 1.0
    %v4581 = vlog2.pop %v4580
    %v4582 = vmul.f32 %v4581, 0.6931472
    %v4583 = vmul.f32 -0.5, %v2402
    %v4584 = vadd.f32 %v4583, 1.0
    %v4585 = vmul.f32 %v4584, %v2402
    %v4586 = vand.u32 2147483647, %v2402
    %vm4587 = vcmp.lt.f32.partialorder %v4586, 0.0004427343
    %v4588 = vsel %vm4587, %v4585, %v4582
    %v4589 = vadd.f32 %v2404, 1.0
    %v4590 = vlog2.pop %v4589
    %v4591 = vmul.f32 %v4590, 0.6931472
    %v4592 = vmul.f32 -0.5, %v2404
    %v4593 = vadd.f32 %v4592, 1.0
    %v4594 = vmul.f32 %v4593, %v2404
    %v4595 = vand.u32 2147483647, %v2404
    %vm4596 = vcmp.lt.f32.partialorder %v4595, 0.0004427343
    %v4597 = vsel %vm4596, %v4594, %v4591
    %v4598 = vadd.f32 %v2406, 1.0
    %v4599 = vlog2.pop %v4598
    %v4600 = vmul.f32 %v4599, 0.6931472
    %v4601 = vmul.f32 -0.5, %v2406
    %v4602 = vadd.f32 %v4601, 1.0
    %v4603 = vmul.f32 %v4602, %v2406
    %v4604 = vand.u32 2147483647, %v2406
    %vm4605 = vcmp.lt.f32.partialorder %v4604, 0.0004427343
    %v4606 = vsel %vm4605, %v4603, %v4600
    %v4607 = vadd.f32 %v2408, 1.0
    %v4608 = vlog2.pop %v4607
    %v4609 = vmul.f32 %v4608, 0.6931472
    %v4610 = vmul.f32 -0.5, %v2408
    %v4611 = vadd.f32 %v4610, 1.0
    %v4612 = vmul.f32 %v4611, %v2408
    %v4613 = vand.u32 2147483647, %v2408
    %vm4614 = vcmp.lt.f32.partialorder %v4613, 0.0004427343
    %v4615 = vsel %vm4614, %v4612, %v4609
    %v4616 = vadd.f32 %v2410, 1.0
    %v4617 = vlog2.pop %v4616
    %v4618 = vmul.f32 %v4617, 0.6931472
    %v4619 = vmul.f32 -0.5, %v2410
    %v4620 = vadd.f32 %v4619, 1.0
    %v4621 = vmul.f32 %v4620, %v2410
    %v4622 = vand.u32 2147483647, %v2410
    %vm4623 = vcmp.lt.f32.partialorder %v4622, 0.0004427343
    %v4624 = vsel %vm4623, %v4621, %v4618
    %v4625 = vadd.f32 %v2412, 1.0
    %v4626 = vlog2.pop %v4625
    %v4627 = vmul.f32 %v4626, 0.6931472
    %v4628 = vmul.f32 -0.5, %v2412
    %v4629 = vadd.f32 %v4628, 1.0
    %v4630 = vmul.f32 %v4629, %v2412
    %v4631 = vand.u32 2147483647, %v2412
    %vm4632 = vcmp.lt.f32.partialorder %v4631, 0.0004427343
    %v4633 = vsel %vm4632, %v4630, %v4627
    %v4634 = vadd.f32 %v2414, 1.0
    %v4635 = vlog2.pop %v4634
    %v4636 = vmul.f32 %v4635, 0.6931472
    %v4637 = vmul.f32 -0.5, %v2414
    %v4638 = vadd.f32 %v4637, 1.0
    %v4639 = vmul.f32 %v4638, %v2414
    %v4640 = vand.u32 2147483647, %v2414
    %vm4641 = vcmp.lt.f32.partialorder %v4640, 0.0004427343
    %v4642 = vsel %vm4641, %v4639, %v4636
    %v4643 = vadd.f32 %v2416, 1.0
    %v4644 = vlog2.pop %v4643
    %v4645 = vmul.f32 %v4644, 0.6931472
    %v4646 = vmul.f32 -0.5, %v2416
    %v4647 = vadd.f32 %v4646, 1.0
    %v4648 = vmul.f32 %v4647, %v2416
    %v4649 = vand.u32 2147483647, %v2416
    %vm4650 = vcmp.lt.f32.partialorder %v4649, 0.0004427343
    %v4651 = vsel %vm4650, %v4648, %v4645
    %v4652 = vadd.f32 %v2418, 1.0
    %v4653 = vlog2.pop %v4652
    %v4654 = vmul.f32 %v4653, 0.6931472
    %v4655 = vmul.f32 -0.5, %v2418
    %v4656 = vadd.f32 %v4655, 1.0
    %v4657 = vmul.f32 %v4656, %v2418
    %v4658 = vand.u32 2147483647, %v2418
    %vm4659 = vcmp.lt.f32.partialorder %v4658, 0.0004427343
    %v4660 = vsel %vm4659, %v4657, %v4654
    %v4661 = vadd.f32 %v2420, 1.0
    %v4662 = vlog2.pop %v4661
    %v4663 = vmul.f32 %v4662, 0.6931472
    %v4664 = vmul.f32 -0.5, %v2420
    %v4665 = vadd.f32 %v4664, 1.0
    %v4666 = vmul.f32 %v4665, %v2420
    %v4667 = vand.u32 2147483647, %v2420
    %vm4668 = vcmp.lt.f32.partialorder %v4667, 0.0004427343
    %v4669 = vsel %vm4668, %v4666, %v4663
    %v4670 = vadd.f32 %v2422, 1.0
    %v4671 = vlog2.pop %v4670
    %v4672 = vmul.f32 %v4671, 0.6931472
    %v4673 = vmul.f32 -0.5, %v2422
    %v4674 = vadd.f32 %v4673, 1.0
    %v4675 = vmul.f32 %v4674, %v2422
    %v4676 = vand.u32 2147483647, %v2422
    %vm4677 = vcmp.lt.f32.partialorder %v4676, 0.0004427343
    %v4678 = vsel %vm4677, %v4675, %v4672
    %v4679 = vadd.f32 %v2424, 1.0
    %v4680 = vlog2.pop %v4679
    %v4681 = vmul.f32 %v4680, 0.6931472
    %v4682 = vmul.f32 -0.5, %v2424
    %v4683 = vadd.f32 %v4682, 1.0
    %v4684 = vmul.f32 %v4683, %v2424
    %v4685 = vand.u32 2147483647, %v2424
    %vm4686 = vcmp.lt.f32.partialorder %v4685, 0.0004427343
    %v4687 = vsel %vm4686, %v4684, %v4681
    %v4688 = vadd.f32 %v2426, 1.0
    %v4689 = vlog2.pop %v4688
    %v4690 = vmul.f32 %v4689, 0.6931472
    %v4691 = vmul.f32 -0.5, %v2426
    %v4692 = vadd.f32 %v4691, 1.0
    %v4693 = vmul.f32 %v4692, %v2426
    %v4694 = vand.u32 2147483647, %v2426
    %vm4695 = vcmp.lt.f32.partialorder %v4694, 0.0004427343
    %v4696 = vsel %vm4695, %v4693, %v4690
    %v4697 = vadd.f32 %v2428, 1.0
    %v4698 = vlog2.pop %v4697
    %v4699 = vmul.f32 %v4698, 0.6931472
    %v4700 = vmul.f32 -0.5, %v2428
    %v4701 = vadd.f32 %v4700, 1.0
    %v4702 = vmul.f32 %v4701, %v2428
    %v4703 = vand.u32 2147483647, %v2428
    %vm4704 = vcmp.lt.f32.partialorder %v4703, 0.0004427343
    %v4705 = vsel %vm4704, %v4702, %v4699
    %v4706 = vadd.f32 %v2430, 1.0
    %v4707 = vlog2.pop %v4706
    %v4708 = vmul.f32 %v4707, 0.6931472
    %v4709 = vmul.f32 -0.5, %v2430
    %v4710 = vadd.f32 %v4709, 1.0
    %v4711 = vmul.f32 %v4710, %v2430
    %v4712 = vand.u32 2147483647, %v2430
    %vm4713 = vcmp.lt.f32.partialorder %v4712, 0.0004427343
    %v4714 = vsel %vm4713, %v4711, %v4708
    %v4715 = vadd.f32 %v2432, 1.0
    %v4716 = vlog2.pop %v4715
    %v4717 = vmul.f32 %v4716, 0.6931472
    %v4718 = vmul.f32 -0.5, %v2432
    %v4719 = vadd.f32 %v4718, 1.0
    %v4720 = vmul.f32 %v4719, %v2432
    %v4721 = vand.u32 2147483647, %v2432
    %vm4722 = vcmp.lt.f32.partialorder %v4721, 0.0004427343
    %v4723 = vsel %vm4722, %v4720, %v4717
    %v4724 = vadd.f32 %v2434, 1.0
    %v4725 = vlog2.pop %v4724
    %v4726 = vmul.f32 %v4725, 0.6931472
    %v4727 = vmul.f32 -0.5, %v2434
    %v4728 = vadd.f32 %v4727, 1.0
    %v4729 = vmul.f32 %v4728, %v2434
    %v4730 = vand.u32 2147483647, %v2434
    %vm4731 = vcmp.lt.f32.partialorder %v4730, 0.0004427343
    %v4732 = vsel %vm4731, %v4729, %v4726
    %v4733 = vadd.f32 %v2436, 1.0
    %v4734 = vlog2.pop %v4733
    %v4735 = vmul.f32 %v4734, 0.6931472
    %v4736 = vmul.f32 -0.5, %v2436
    %v4737 = vadd.f32 %v4736, 1.0
    %v4738 = vmul.f32 %v4737, %v2436
    %v4739 = vand.u32 2147483647, %v2436
    %vm4740 = vcmp.lt.f32.partialorder %v4739, 0.0004427343
    %v4741 = vsel %vm4740, %v4738, %v4735
    %v4742 = vadd.f32 %v2438, 1.0
    %v4743 = vlog2.pop %v4742
    %v4744 = vmul.f32 %v4743, 0.6931472
    %v4745 = vmul.f32 -0.5, %v2438
    %v4746 = vadd.f32 %v4745, 1.0
    %v4747 = vmul.f32 %v4746, %v2438
    %v4748 = vand.u32 2147483647, %v2438
    %vm4749 = vcmp.lt.f32.partialorder %v4748, 0.0004427343
    %v4750 = vsel %vm4749, %v4747, %v4744
    %v4751 = vadd.f32 %v2440, 1.0
    %v4752 = vlog2.pop %v4751
    %v4753 = vmul.f32 %v4752, 0.6931472
    %v4754 = vmul.f32 -0.5, %v2440
    %v4755 = vadd.f32 %v4754, 1.0
    %v4756 = vmul.f32 %v4755, %v2440
    %v4757 = vand.u32 2147483647, %v2440
    %vm4758 = vcmp.lt.f32.partialorder %v4757, 0.0004427343
    %v4759 = vsel %vm4758, %v4756, %v4753
    %v4760 = vadd.f32 %v2442, 1.0
    %v4761 = vlog2.pop %v4760
    %v4762 = vmul.f32 %v4761, 0.6931472
    %v4763 = vmul.f32 -0.5, %v2442
    %v4764 = vadd.f32 %v4763, 1.0
    %v4765 = vmul.f32 %v4764, %v2442
    %v4766 = vand.u32 2147483647, %v2442
    %vm4767 = vcmp.lt.f32.partialorder %v4766, 0.0004427343
    %v4768 = vsel %vm4767, %v4765, %v4762
    %v4769 = vadd.f32 %v2444, 1.0
    %v4770 = vlog2.pop %v4769
    %v4771 = vmul.f32 %v4770, 0.6931472
    %v4772 = vmul.f32 -0.5, %v2444
    %v4773 = vadd.f32 %v4772, 1.0
    %v4774 = vmul.f32 %v4773, %v2444
    %v4775 = vand.u32 2147483647, %v2444
    %vm4776 = vcmp.lt.f32.partialorder %v4775, 0.0004427343
    %v4777 = vsel %vm4776, %v4774, %v4771
    %v4778 = vadd.f32 %v2446, 1.0
    %v4779 = vlog2.pop %v4778
    %v4780 = vmul.f32 %v4779, 0.6931472
    %v4781 = vmul.f32 -0.5, %v2446
    %v4782 = vadd.f32 %v4781, 1.0
    %v4783 = vmul.f32 %v4782, %v2446
    %v4784 = vand.u32 2147483647, %v2446
    %vm4785 = vcmp.lt.f32.partialorder %v4784, 0.0004427343
    %v4786 = vsel %vm4785, %v4783, %v4780
    %v4787 = vadd.f32 %v2448, 1.0
    %v4788 = vlog2.pop %v4787
    %v4789 = vmul.f32 %v4788, 0.6931472
    %v4790 = vmul.f32 -0.5, %v2448
    %v4791 = vadd.f32 %v4790, 1.0
    %v4792 = vmul.f32 %v4791, %v2448
    %v4793 = vand.u32 2147483647, %v2448
    %vm4794 = vcmp.lt.f32.partialorder %v4793, 0.0004427343
    %v4795 = vsel %vm4794, %v4792, %v4789
    %v4796 = vadd.f32 %v2450, 1.0
    %v4797 = vlog2.pop %v4796
    %v4798 = vmul.f32 %v4797, 0.6931472
    %v4799 = vmul.f32 -0.5, %v2450
    %v4800 = vadd.f32 %v4799, 1.0
    %v4801 = vmul.f32 %v4800, %v2450
    %v4802 = vand.u32 2147483647, %v2450
    %vm4803 = vcmp.lt.f32.partialorder %v4802, 0.0004427343
    %v4804 = vsel %vm4803, %v4801, %v4798
    %v4805 = vadd.f32 %v2452, 1.0
    %v4806 = vlog2.pop %v4805
    %v4807 = vmul.f32 %v4806, 0.6931472
    %v4808 = vmul.f32 -0.5, %v2452
    %v4809 = vadd.f32 %v4808, 1.0
    %v4810 = vmul.f32 %v4809, %v2452
    %v4811 = vand.u32 2147483647, %v2452
    %vm4812 = vcmp.lt.f32.partialorder %v4811, 0.0004427343
    %v4813 = vsel %vm4812, %v4810, %v4807
    %v4814 = vadd.f32 %v2454, 1.0
    %v4815 = vlog2.pop %v4814
    %v4816 = vmul.f32 %v4815, 0.6931472
    %v4817 = vmul.f32 -0.5, %v2454
    %v4818 = vadd.f32 %v4817, 1.0
    %v4819 = vmul.f32 %v4818, %v2454
    %v4820 = vand.u32 2147483647, %v2454
    %vm4821 = vcmp.lt.f32.partialorder %v4820, 0.0004427343
    %v4822 = vsel %vm4821, %v4819, %v4816
    %v4823 = vadd.f32 %v2456, 1.0
    %v4824 = vlog2.pop %v4823
    %v4825 = vmul.f32 %v4824, 0.6931472
    %v4826 = vmul.f32 -0.5, %v2456
    %v4827 = vadd.f32 %v4826, 1.0
    %v4828 = vmul.f32 %v4827, %v2456
    %v4829 = vand.u32 2147483647, %v2456
    %vm4830 = vcmp.lt.f32.partialorder %v4829, 0.0004427343
    %v4831 = vsel %vm4830, %v4828, %v4825
    %v4832 = vadd.f32 %v2458, 1.0
    %v4833 = vlog2.pop %v4832
    %v4834 = vmul.f32 %v4833, 0.6931472
    %v4835 = vmul.f32 -0.5, %v2458
    %v4836 = vadd.f32 %v4835, 1.0
    %v4837 = vmul.f32 %v4836, %v2458
    %v4838 = vand.u32 2147483647, %v2458
    %vm4839 = vcmp.lt.f32.partialorder %v4838, 0.0004427343
    %v4840 = vsel %vm4839, %v4837, %v4834
    %v4841 = vadd.f32 %v2460, 1.0
    %v4842 = vlog2.pop %v4841
    %v4843 = vmul.f32 %v4842, 0.6931472
    %v4844 = vmul.f32 -0.5, %v2460
    %v4845 = vadd.f32 %v4844, 1.0
    %v4846 = vmul.f32 %v4845, %v2460
    %v4847 = vand.u32 2147483647, %v2460
    %vm4848 = vcmp.lt.f32.partialorder %v4847, 0.0004427343
    %v4849 = vsel %vm4848, %v4846, %v4843
    %v4850 = vadd.f32 %v2462, 1.0
    %v4851 = vlog2.pop %v4850
    %v4852 = vmul.f32 %v4851, 0.6931472
    %v4853 = vmul.f32 -0.5, %v2462
    %v4854 = vadd.f32 %v4853, 1.0
    %v4855 = vmul.f32 %v4854, %v2462
    %v4856 = vand.u32 2147483647, %v2462
    %vm4857 = vcmp.lt.f32.partialorder %v4856, 0.0004427343
    %v4858 = vsel %vm4857, %v4855, %v4852
    %v4859 = vadd.f32 %v2464, 1.0
    %v4860 = vlog2.pop %v4859
    %v4861 = vmul.f32 %v4860, 0.6931472
    %v4862 = vmul.f32 -0.5, %v2464
    %v4863 = vadd.f32 %v4862, 1.0
    %v4864 = vmul.f32 %v4863, %v2464
    %v4865 = vand.u32 2147483647, %v2464
    %vm4866 = vcmp.lt.f32.partialorder %v4865, 0.0004427343
    %v4867 = vsel %vm4866, %v4864, %v4861
    %v4868 = vadd.f32 %v2466, 1.0
    %v4869 = vlog2.pop %v4868
    %v4870 = vmul.f32 %v4869, 0.6931472
    %v4871 = vmul.f32 -0.5, %v2466
    %v4872 = vadd.f32 %v4871, 1.0
    %v4873 = vmul.f32 %v4872, %v2466
    %v4874 = vand.u32 2147483647, %v2466
    %vm4875 = vcmp.lt.f32.partialorder %v4874, 0.0004427343
    %v4876 = vsel %vm4875, %v4873, %v4870
    %v4877 = vadd.f32 %v2468, 1.0
    %v4878 = vlog2.pop %v4877
    %v4879 = vmul.f32 %v4878, 0.6931472
    %v4880 = vmul.f32 -0.5, %v2468
    %v4881 = vadd.f32 %v4880, 1.0
    %v4882 = vmul.f32 %v4881, %v2468
    %v4883 = vand.u32 2147483647, %v2468
    %vm4884 = vcmp.lt.f32.partialorder %v4883, 0.0004427343
    %v4885 = vsel %vm4884, %v4882, %v4879
    %v4886 = vadd.f32 %v2470, 1.0
    %v4887 = vlog2.pop %v4886
    %v4888 = vmul.f32 %v4887, 0.6931472
    %v4889 = vmul.f32 -0.5, %v2470
    %v4890 = vadd.f32 %v4889, 1.0
    %v4891 = vmul.f32 %v4890, %v2470
    %v4892 = vand.u32 2147483647, %v2470
    %vm4893 = vcmp.lt.f32.partialorder %v4892, 0.0004427343
    %v4894 = vsel %vm4893, %v4891, %v4888
    %v4895 = vadd.f32 %v2472, 1.0
    %v4896 = vlog2.pop %v4895
    %v4897 = vmul.f32 %v4896, 0.6931472
    %v4898 = vmul.f32 -0.5, %v2472
    %v4899 = vadd.f32 %v4898, 1.0
    %v4900 = vmul.f32 %v4899, %v2472
    %v4901 = vand.u32 2147483647, %v2472
    %vm4902 = vcmp.lt.f32.partialorder %v4901, 0.0004427343
    %v4903 = vsel %vm4902, %v4900, %v4897
    %v4904 = vadd.f32 %v2474, 1.0
    %v4905 = vlog2.pop %v4904
    %v4906 = vmul.f32 %v4905, 0.6931472
    %v4907 = vmul.f32 -0.5, %v2474
    %v4908 = vadd.f32 %v4907, 1.0
    %v4909 = vmul.f32 %v4908, %v2474
    %v4910 = vand.u32 2147483647, %v2474
    %vm4911 = vcmp.lt.f32.partialorder %v4910, 0.0004427343
    %v4912 = vsel %vm4911, %v4909, %v4906
    %v4913 = vadd.f32 %v2476, 1.0
    %v4914 = vlog2.pop %v4913
    %v4915 = vmul.f32 %v4914, 0.6931472
    %v4916 = vmul.f32 -0.5, %v2476
    %v4917 = vadd.f32 %v4916, 1.0
    %v4918 = vmul.f32 %v4917, %v2476
    %v4919 = vand.u32 2147483647, %v2476
    %vm4920 = vcmp.lt.f32.partialorder %v4919, 0.0004427343
    %v4921 = vsel %vm4920, %v4918, %v4915
    %v4922 = vadd.f32 %v2478, 1.0
    %v4923 = vlog2.pop %v4922
    %v4924 = vmul.f32 %v4923, 0.6931472
    %v4925 = vmul.f32 -0.5, %v2478
    %v4926 = vadd.f32 %v4925, 1.0
    %v4927 = vmul.f32 %v4926, %v2478
    %v4928 = vand.u32 2147483647, %v2478
    %vm4929 = vcmp.lt.f32.partialorder %v4928, 0.0004427343
    %v4930 = vsel %vm4929, %v4927, %v4924
    %v4931 = vadd.f32 %v2480, 1.0
    %v4932 = vlog2.pop %v4931
    %v4933 = vmul.f32 %v4932, 0.6931472
    %v4934 = vmul.f32 -0.5, %v2480
    %v4935 = vadd.f32 %v4934, 1.0
    %v4936 = vmul.f32 %v4935, %v2480
    %v4937 = vand.u32 2147483647, %v2480
    %vm4938 = vcmp.lt.f32.partialorder %v4937, 0.0004427343
    %v4939 = vsel %vm4938, %v4936, %v4933
    %v4940 = vadd.f32 %v2482, 1.0
    %v4941 = vlog2.pop %v4940
    %v4942 = vmul.f32 %v4941, 0.6931472
    %v4943 = vmul.f32 -0.5, %v2482
    %v4944 = vadd.f32 %v4943, 1.0
    %v4945 = vmul.f32 %v4944, %v2482
    %v4946 = vand.u32 2147483647, %v2482
    %vm4947 = vcmp.lt.f32.partialorder %v4946, 0.0004427343
    %v4948 = vsel %vm4947, %v4945, %v4942
    %v4949 = vadd.f32 %v2484, 1.0
    %v4950 = vlog2.pop %v4949
    %v4951 = vmul.f32 %v4950, 0.6931472
    %v4952 = vmul.f32 -0.5, %v2484
    %v4953 = vadd.f32 %v4952, 1.0
    %v4954 = vmul.f32 %v4953, %v2484
    %v4955 = vand.u32 2147483647, %v2484
    %vm4956 = vcmp.lt.f32.partialorder %v4955, 0.0004427343
    %v4957 = vsel %vm4956, %v4954, %v4951
    %v4958 = vadd.f32 %v2486, 1.0
    %v4959 = vlog2.pop %v4958
    %v4960 = vmul.f32 %v4959, 0.6931472
    %v4961 = vmul.f32 -0.5, %v2486
    %v4962 = vadd.f32 %v4961, 1.0
    %v4963 = vmul.f32 %v4962, %v2486
    %v4964 = vand.u32 2147483647, %v2486
    %vm4965 = vcmp.lt.f32.partialorder %v4964, 0.0004427343
    %v4966 = vsel %vm4965, %v4963, %v4960
    %v4967 = vadd.f32 %v2488, 1.0
    %v4968 = vlog2.pop %v4967
    %v4969 = vmul.f32 %v4968, 0.6931472
    %v4970 = vmul.f32 -0.5, %v2488
    %v4971 = vadd.f32 %v4970, 1.0
    %v4972 = vmul.f32 %v4971, %v2488
    %v4973 = vand.u32 2147483647, %v2488
    %vm4974 = vcmp.lt.f32.partialorder %v4973, 0.0004427343
    %v4975 = vsel %vm4974, %v4972, %v4969
    %v4976 = vadd.f32 %v2490, 1.0
    %v4977 = vlog2.pop %v4976
    %v4978 = vmul.f32 %v4977, 0.6931472
    %v4979 = vmul.f32 -0.5, %v2490
    %v4980 = vadd.f32 %v4979, 1.0
    %v4981 = vmul.f32 %v4980, %v2490
    %v4982 = vand.u32 2147483647, %v2490
    %vm4983 = vcmp.lt.f32.partialorder %v4982, 0.0004427343
    %v4984 = vsel %vm4983, %v4981, %v4978
    %v4985 = vadd.f32 %v2492, 1.0
    %v4986 = vlog2.pop %v4985
    %v4987 = vmul.f32 %v4986, 0.6931472
    %v4988 = vmul.f32 -0.5, %v2492
    %v4989 = vadd.f32 %v4988, 1.0
    %v4990 = vmul.f32 %v4989, %v2492
    %v4991 = vand.u32 2147483647, %v2492
    %vm4992 = vcmp.lt.f32.partialorder %v4991, 0.0004427343
    %v4993 = vsel %vm4992, %v4990, %v4987
    %v4994 = vadd.f32 %v2494, 1.0
    %v4995 = vlog2.pop %v4994
    %v4996 = vmul.f32 %v4995, 0.6931472
    %v4997 = vmul.f32 -0.5, %v2494
    %v4998 = vadd.f32 %v4997, 1.0
    %v4999 = vmul.f32 %v4998, %v2494
    %v5000 = vand.u32 2147483647, %v2494
    %vm5001 = vcmp.lt.f32.partialorder %v5000, 0.0004427343
    %v5002 = vsel %vm5001, %v4999, %v4996
    %v5003 = vadd.f32 %v2496, 1.0
    %v5004 = vlog2.pop %v5003
    %v5005 = vmul.f32 %v5004, 0.6931472
    %v5006 = vmul.f32 -0.5, %v2496
    %v5007 = vadd.f32 %v5006, 1.0
    %v5008 = vmul.f32 %v5007, %v2496
    %v5009 = vand.u32 2147483647, %v2496
    %vm5010 = vcmp.lt.f32.partialorder %v5009, 0.0004427343
    %v5011 = vsel %vm5010, %v5008, %v5005
    %v5012 = vadd.f32 %v2498, 1.0
    %v5013 = vlog2.pop %v5012
    %v5014 = vmul.f32 %v5013, 0.6931472
    %v5015 = vmul.f32 -0.5, %v2498
    %v5016 = vadd.f32 %v5015, 1.0
    %v5017 = vmul.f32 %v5016, %v2498
    %v5018 = vand.u32 2147483647, %v2498
    %vm5019 = vcmp.lt.f32.partialorder %v5018, 0.0004427343
    %v5020 = vsel %vm5019, %v5017, %v5014
    %v5021 = vadd.f32 %v2500, 1.0
    %v5022 = vlog2.pop %v5021
    %v5023 = vmul.f32 %v5022, 0.6931472
    %v5024 = vmul.f32 -0.5, %v2500
    %v5025 = vadd.f32 %v5024, 1.0
    %v5026 = vmul.f32 %v5025, %v2500
    %v5027 = vand.u32 2147483647, %v2500
    %vm5028 = vcmp.lt.f32.partialorder %v5027, 0.0004427343
    %v5029 = vsel %vm5028, %v5026, %v5023
    %v5030 = vadd.f32 %v2502, 1.0
    %v5031 = vlog2.pop %v5030
    %v5032 = vmul.f32 %v5031, 0.6931472
    %v5033 = vmul.f32 -0.5, %v2502
    %v5034 = vadd.f32 %v5033, 1.0
    %v5035 = vmul.f32 %v5034, %v2502
    %v5036 = vand.u32 2147483647, %v2502
    %vm5037 = vcmp.lt.f32.partialorder %v5036, 0.0004427343
    %v5038 = vsel %vm5037, %v5035, %v5032
    %v5039 = vadd.f32 %v2504, 1.0
    %v5040 = vlog2.pop %v5039
    %v5041 = vmul.f32 %v5040, 0.6931472
    %v5042 = vmul.f32 -0.5, %v2504
    %v5043 = vadd.f32 %v5042, 1.0
    %v5044 = vmul.f32 %v5043, %v2504
    %v5045 = vand.u32 2147483647, %v2504
    %vm5046 = vcmp.lt.f32.partialorder %v5045, 0.0004427343
    %v5047 = vsel %vm5046, %v5044, %v5041
    %v5048 = vadd.f32 %v2506, 1.0
    %v5049 = vlog2.pop %v5048
    %v5050 = vmul.f32 %v5049, 0.6931472
    %v5051 = vmul.f32 -0.5, %v2506
    %v5052 = vadd.f32 %v5051, 1.0
    %v5053 = vmul.f32 %v5052, %v2506
    %v5054 = vand.u32 2147483647, %v2506
    %vm5055 = vcmp.lt.f32.partialorder %v5054, 0.0004427343
    %v5056 = vsel %vm5055, %v5053, %v5050
    %v5057 = vadd.f32 %v2508, 1.0
    %v5058 = vlog2.pop %v5057
    %v5059 = vmul.f32 %v5058, 0.6931472
    %v5060 = vmul.f32 -0.5, %v2508
    %v5061 = vadd.f32 %v5060, 1.0
    %v5062 = vmul.f32 %v5061, %v2508
    %v5063 = vand.u32 2147483647, %v2508
    %vm5064 = vcmp.lt.f32.partialorder %v5063, 0.0004427343
    %v5065 = vsel %vm5064, %v5062, %v5059
    %v5066 = vadd.f32 %v2510, 1.0
    %v5067 = vlog2.pop %v5066
    %v5068 = vmul.f32 %v5067, 0.6931472
    %v5069 = vmul.f32 -0.5, %v2510
    %v5070 = vadd.f32 %v5069, 1.0
    %v5071 = vmul.f32 %v5070, %v2510
    %v5072 = vand.u32 2147483647, %v2510
    %vm5073 = vcmp.lt.f32.partialorder %v5072, 0.0004427343
    %v5074 = vsel %vm5073, %v5071, %v5068
    %v5075 = vadd.f32 %v2512, 1.0
    %v5076 = vlog2.pop %v5075
    %v5077 = vmul.f32 %v5076, 0.6931472
    %v5078 = vmul.f32 -0.5, %v2512
    %v5079 = vadd.f32 %v5078, 1.0
    %v5080 = vmul.f32 %v5079, %v2512
    %v5081 = vand.u32 2147483647, %v2512
    %vm5082 = vcmp.lt.f32.partialorder %v5081, 0.0004427343
    %v5083 = vsel %vm5082, %v5080, %v5077
    %v5084 = vadd.f32 %v2514, 1.0
    %v5085 = vlog2.pop %v5084
    %v5086 = vmul.f32 %v5085, 0.6931472
    %v5087 = vmul.f32 -0.5, %v2514
    %v5088 = vadd.f32 %v5087, 1.0
    %v5089 = vmul.f32 %v5088, %v2514
    %v5090 = vand.u32 2147483647, %v2514
    %vm5091 = vcmp.lt.f32.partialorder %v5090, 0.0004427343
    %v5092 = vsel %vm5091, %v5089, %v5086
    %v5093 = vadd.f32 %v2516, 1.0
    %v5094 = vlog2.pop %v5093
    %v5095 = vmul.f32 %v5094, 0.6931472
    %v5096 = vmul.f32 -0.5, %v2516
    %v5097 = vadd.f32 %v5096, 1.0
    %v5098 = vmul.f32 %v5097, %v2516
    %v5099 = vand.u32 2147483647, %v2516
    %vm5100 = vcmp.lt.f32.partialorder %v5099, 0.0004427343
    %v5101 = vsel %vm5100, %v5098, %v5095
    %v5102 = vadd.f32 %v2518, 1.0
    %v5103 = vlog2.pop %v5102
    %v5104 = vmul.f32 %v5103, 0.6931472
    %v5105 = vmul.f32 -0.5, %v2518
    %v5106 = vadd.f32 %v5105, 1.0
    %v5107 = vmul.f32 %v5106, %v2518
    %v5108 = vand.u32 2147483647, %v2518
    %vm5109 = vcmp.lt.f32.partialorder %v5108, 0.0004427343
    %v5110 = vsel %vm5109, %v5107, %v5104
    %v5111 = vadd.f32 %v2520, 1.0
    %v5112 = vlog2.pop %v5111
    %v5113 = vmul.f32 %v5112, 0.6931472
    %v5114 = vmul.f32 -0.5, %v2520
    %v5115 = vadd.f32 %v5114, 1.0
    %v5116 = vmul.f32 %v5115, %v2520
    %v5117 = vand.u32 2147483647, %v2520
    %vm5118 = vcmp.lt.f32.partialorder %v5117, 0.0004427343
    %v5119 = vsel %vm5118, %v5116, %v5113
    %v5120 = vadd.f32 %v2522, 1.0
    %v5121 = vlog2.pop %v5120
    %v5122 = vmul.f32 %v5121, 0.6931472
    %v5123 = vmul.f32 -0.5, %v2522
    %v5124 = vadd.f32 %v5123, 1.0
    %v5125 = vmul.f32 %v5124, %v2522
    %v5126 = vand.u32 2147483647, %v2522
    %vm5127 = vcmp.lt.f32.partialorder %v5126, 0.0004427343
    %v5128 = vsel %vm5127, %v5125, %v5122
    %v5129 = vadd.f32 %v2524, 1.0
    %v5130 = vlog2.pop %v5129
    %v5131 = vmul.f32 %v5130, 0.6931472
    %v5132 = vmul.f32 -0.5, %v2524
    %v5133 = vadd.f32 %v5132, 1.0
    %v5134 = vmul.f32 %v5133, %v2524
    %v5135 = vand.u32 2147483647, %v2524
    %vm5136 = vcmp.lt.f32.partialorder %v5135, 0.0004427343
    %v5137 = vsel %vm5136, %v5134, %v5131
    %v5138 = vadd.f32 %v2526, 1.0
    %v5139 = vlog2.pop %v5138
    %v5140 = vmul.f32 %v5139, 0.6931472
    %v5141 = vmul.f32 -0.5, %v2526
    %v5142 = vadd.f32 %v5141, 1.0
    %v5143 = vmul.f32 %v5142, %v2526
    %v5144 = vand.u32 2147483647, %v2526
    %vm5145 = vcmp.lt.f32.partialorder %v5144, 0.0004427343
    %v5146 = vsel %vm5145, %v5143, %v5140
    %v5147 = vadd.f32 %v2528, 1.0
    %v5148 = vlog2.pop %v5147
    %v5149 = vmul.f32 %v5148, 0.6931472
    %v5150 = vmul.f32 -0.5, %v2528
    %v5151 = vadd.f32 %v5150, 1.0
    %v5152 = vmul.f32 %v5151, %v2528
    %v5153 = vand.u32 2147483647, %v2528
    %vm5154 = vcmp.lt.f32.partialorder %v5153, 0.0004427343
    %v5155 = vsel %vm5154, %v5152, %v5149
    %v5156 = vadd.f32 %v2530, 1.0
    %v5157 = vlog2.pop %v5156
    %v5158 = vmul.f32 %v5157, 0.6931472
    %v5159 = vmul.f32 -0.5, %v2530
    %v5160 = vadd.f32 %v5159, 1.0
    %v5161 = vmul.f32 %v5160, %v2530
    %v5162 = vand.u32 2147483647, %v2530
    %vm5163 = vcmp.lt.f32.partialorder %v5162, 0.0004427343
    %v5164 = vsel %vm5163, %v5161, %v5158
    %v5165 = vadd.f32 %v2532, 1.0
    %v5166 = vlog2.pop %v5165
    %v5167 = vmul.f32 %v5166, 0.6931472
    %v5168 = vmul.f32 -0.5, %v2532
    %v5169 = vadd.f32 %v5168, 1.0
    %v5170 = vmul.f32 %v5169, %v2532
    %v5171 = vand.u32 2147483647, %v2532
    %vm5172 = vcmp.lt.f32.partialorder %v5171, 0.0004427343
    %v5173 = vsel %vm5172, %v5170, %v5167
    %v5174 = vadd.f32 %v2534, 1.0
    %v5175 = vlog2.pop %v5174
    %v5176 = vmul.f32 %v5175, 0.6931472
    %v5177 = vmul.f32 -0.5, %v2534
    %v5178 = vadd.f32 %v5177, 1.0
    %v5179 = vmul.f32 %v5178, %v2534
    %v5180 = vand.u32 2147483647, %v2534
    %vm5181 = vcmp.lt.f32.partialorder %v5180, 0.0004427343
    %v5182 = vsel %vm5181, %v5179, %v5176
    %v5183 = vadd.f32 %v2536, 1.0
    %v5184 = vlog2.pop %v5183
    %v5185 = vmul.f32 %v5184, 0.6931472
    %v5186 = vmul.f32 -0.5, %v2536
    %v5187 = vadd.f32 %v5186, 1.0
    %v5188 = vmul.f32 %v5187, %v2536
    %v5189 = vand.u32 2147483647, %v2536
    %vm5190 = vcmp.lt.f32.partialorder %v5189, 0.0004427343
    %v5191 = vsel %vm5190, %v5188, %v5185
    %v5192 = vadd.f32 %v2538, 1.0
    %v5193 = vlog2.pop %v5192
    %v5194 = vmul.f32 %v5193, 0.6931472
    %v5195 = vmul.f32 -0.5, %v2538
    %v5196 = vadd.f32 %v5195, 1.0
    %v5197 = vmul.f32 %v5196, %v2538
    %v5198 = vand.u32 2147483647, %v2538
    %vm5199 = vcmp.lt.f32.partialorder %v5198, 0.0004427343
    %v5200 = vsel %vm5199, %v5197, %v5194
    %v5201 = vadd.f32 %v2540, 1.0
    %v5202 = vlog2.pop %v5201
    %v5203 = vmul.f32 %v5202, 0.6931472
    %v5204 = vmul.f32 -0.5, %v2540
    %v5205 = vadd.f32 %v5204, 1.0
    %v5206 = vmul.f32 %v5205, %v2540
    %v5207 = vand.u32 2147483647, %v2540
    %vm5208 = vcmp.lt.f32.partialorder %v5207, 0.0004427343
    %v5209 = vsel %vm5208, %v5206, %v5203
    %v5210 = vadd.f32 %v2542, 1.0
    %v5211 = vlog2.pop %v5210
    %v5212 = vmul.f32 %v5211, 0.6931472
    %v5213 = vmul.f32 -0.5, %v2542
    %v5214 = vadd.f32 %v5213, 1.0
    %v5215 = vmul.f32 %v5214, %v2542
    %v5216 = vand.u32 2147483647, %v2542
    %vm5217 = vcmp.lt.f32.partialorder %v5216, 0.0004427343
    %v5218 = vsel %vm5217, %v5215, %v5212
    %v5219 = vadd.f32 %v2544, 1.0
    %v5220 = vlog2.pop %v5219
    %v5221 = vmul.f32 %v5220, 0.6931472
    %v5222 = vmul.f32 -0.5, %v2544
    %v5223 = vadd.f32 %v5222, 1.0
    %v5224 = vmul.f32 %v5223, %v2544
    %v5225 = vand.u32 2147483647, %v2544
    %vm5226 = vcmp.lt.f32.partialorder %v5225, 0.0004427343
    %v5227 = vsel %vm5226, %v5224, %v5221
    %v5228 = vadd.f32 %v2546, 1.0
    %v5229 = vlog2.pop %v5228
    %v5230 = vmul.f32 %v5229, 0.6931472
    %v5231 = vmul.f32 -0.5, %v2546
    %v5232 = vadd.f32 %v5231, 1.0
    %v5233 = vmul.f32 %v5232, %v2546
    %v5234 = vand.u32 2147483647, %v2546
    %vm5235 = vcmp.lt.f32.partialorder %v5234, 0.0004427343
    %v5236 = vsel %vm5235, %v5233, %v5230
    %v5237 = vadd.f32 %v2548, 1.0
    %v5238 = vlog2.pop %v5237
    %v5239 = vmul.f32 %v5238, 0.6931472
    %v5240 = vmul.f32 -0.5, %v2548
    %v5241 = vadd.f32 %v5240, 1.0
    %v5242 = vmul.f32 %v5241, %v2548
    %v5243 = vand.u32 2147483647, %v2548
    %vm5244 = vcmp.lt.f32.partialorder %v5243, 0.0004427343
    %v5245 = vsel %vm5244, %v5242, %v5239
    %v5246 = vadd.f32 %v2550, 1.0
    %v5247 = vlog2.pop %v5246
    %v5248 = vmul.f32 %v5247, 0.6931472
    %v5249 = vmul.f32 -0.5, %v2550
    %v5250 = vadd.f32 %v5249, 1.0
    %v5251 = vmul.f32 %v5250, %v2550
    %v5252 = vand.u32 2147483647, %v2550
    %vm5253 = vcmp.lt.f32.partialorder %v5252, 0.0004427343
    %v5254 = vsel %vm5253, %v5251, %v5248
    %v5255 = vadd.f32 %v2552, 1.0
    %v5256 = vlog2.pop %v5255
    %v5257 = vmul.f32 %v5256, 0.6931472
    %v5258 = vmul.f32 -0.5, %v2552
    %v5259 = vadd.f32 %v5258, 1.0
    %v5260 = vmul.f32 %v5259, %v2552
    %v5261 = vand.u32 2147483647, %v2552
    %vm5262 = vcmp.lt.f32.partialorder %v5261, 0.0004427343
    %v5263 = vsel %vm5262, %v5260, %v5257
    %v5264 = vadd.f32 %v2554, 1.0
    %v5265 = vlog2.pop %v5264
    %v5266 = vmul.f32 %v5265, 0.6931472
    %v5267 = vmul.f32 -0.5, %v2554
    %v5268 = vadd.f32 %v5267, 1.0
    %v5269 = vmul.f32 %v5268, %v2554
    %v5270 = vand.u32 2147483647, %v2554
    %vm5271 = vcmp.lt.f32.partialorder %v5270, 0.0004427343
    %v5272 = vsel %vm5271, %v5269, %v5266
    %v5273 = vadd.f32 %v2556, 1.0
    %v5274 = vlog2.pop %v5273
    %v5275 = vmul.f32 %v5274, 0.6931472
    %v5276 = vmul.f32 -0.5, %v2556
    %v5277 = vadd.f32 %v5276, 1.0
    %v5278 = vmul.f32 %v5277, %v2556
    %v5279 = vand.u32 2147483647, %v2556
    %vm5280 = vcmp.lt.f32.partialorder %v5279, 0.0004427343
    %v5281 = vsel %vm5280, %v5278, %v5275
    %v5282 = vadd.f32 %v2558, 1.0
    %v5283 = vlog2.pop %v5282
    %v5284 = vmul.f32 %v5283, 0.6931472
    %v5285 = vmul.f32 -0.5, %v2558
    %v5286 = vadd.f32 %v5285, 1.0
    %v5287 = vmul.f32 %v5286, %v2558
    %v5288 = vand.u32 2147483647, %v2558
    %vm5289 = vcmp.lt.f32.partialorder %v5288, 0.0004427343
    %v5290 = vsel %vm5289, %v5287, %v5284
    %v5291 = vadd.f32 %v2560, 1.0
    %v5292 = vlog2.pop %v5291
    %v5293 = vmul.f32 %v5292, 0.6931472
    %v5294 = vmul.f32 -0.5, %v2560
    %v5295 = vadd.f32 %v5294, 1.0
    %v5296 = vmul.f32 %v5295, %v2560
    %v5297 = vand.u32 2147483647, %v2560
    %vm5298 = vcmp.lt.f32.partialorder %v5297, 0.0004427343
    %v5299 = vsel %vm5298, %v5296, %v5293
    %v5300 = vadd.f32 %v2562, 1.0
    %v5301 = vlog2.pop %v5300
    %v5302 = vmul.f32 %v5301, 0.6931472
    %v5303 = vmul.f32 -0.5, %v2562
    %v5304 = vadd.f32 %v5303, 1.0
    %v5305 = vmul.f32 %v5304, %v2562
    %v5306 = vand.u32 2147483647, %v2562
    %vm5307 = vcmp.lt.f32.partialorder %v5306, 0.0004427343
    %v5308 = vsel %vm5307, %v5305, %v5302
    %v5309 = vadd.f32 %v2564, 1.0
    %v5310 = vlog2.pop %v5309
    %v5311 = vmul.f32 %v5310, 0.6931472
    %v5312 = vmul.f32 -0.5, %v2564
    %v5313 = vadd.f32 %v5312, 1.0
    %v5314 = vmul.f32 %v5313, %v2564
    %v5315 = vand.u32 2147483647, %v2564
    %vm5316 = vcmp.lt.f32.partialorder %v5315, 0.0004427343
    %v5317 = vsel %vm5316, %v5314, %v5311
    %v5318 = vadd.f32 %v2566, 1.0
    %v5319 = vlog2.pop %v5318
    %v5320 = vmul.f32 %v5319, 0.6931472
    %v5321 = vmul.f32 -0.5, %v2566
    %v5322 = vadd.f32 %v5321, 1.0
    %v5323 = vmul.f32 %v5322, %v2566
    %v5324 = vand.u32 2147483647, %v2566
    %vm5325 = vcmp.lt.f32.partialorder %v5324, 0.0004427343
    %v5326 = vsel %vm5325, %v5323, %v5320
    %v5327 = vadd.f32 %v2568, 1.0
    %v5328 = vlog2.pop %v5327
    %v5329 = vmul.f32 %v5328, 0.6931472
    %v5330 = vmul.f32 -0.5, %v2568
    %v5331 = vadd.f32 %v5330, 1.0
    %v5332 = vmul.f32 %v5331, %v2568
    %v5333 = vand.u32 2147483647, %v2568
    %vm5334 = vcmp.lt.f32.partialorder %v5333, 0.0004427343
    %v5335 = vsel %vm5334, %v5332, %v5329
    %v5336 = vadd.f32 %v2570, 1.0
    %v5337 = vlog2.pop %v5336
    %v5338 = vmul.f32 %v5337, 0.6931472
    %v5339 = vmul.f32 -0.5, %v2570
    %v5340 = vadd.f32 %v5339, 1.0
    %v5341 = vmul.f32 %v5340, %v2570
    %v5342 = vand.u32 2147483647, %v2570
    %vm5343 = vcmp.lt.f32.partialorder %v5342, 0.0004427343
    %v5344 = vsel %vm5343, %v5341, %v5338
    %v5345 = vadd.f32 %v2572, 1.0
    %v5346 = vlog2.pop %v5345
    %v5347 = vmul.f32 %v5346, 0.6931472
    %v5348 = vmul.f32 -0.5, %v2572
    %v5349 = vadd.f32 %v5348, 1.0
    %v5350 = vmul.f32 %v5349, %v2572
    %v5351 = vand.u32 2147483647, %v2572
    %vm5352 = vcmp.lt.f32.partialorder %v5351, 0.0004427343
    %v5353 = vsel %vm5352, %v5350, %v5347
    %v5354 = vadd.f32 %v2574, 1.0
    %v5355 = vlog2.pop %v5354
    %v5356 = vmul.f32 %v5355, 0.6931472
    %v5357 = vmul.f32 -0.5, %v2574
    %v5358 = vadd.f32 %v5357, 1.0
    %v5359 = vmul.f32 %v5358, %v2574
    %v5360 = vand.u32 2147483647, %v2574
    %vm5361 = vcmp.lt.f32.partialorder %v5360, 0.0004427343
    %v5362 = vsel %vm5361, %v5359, %v5356
    %v5363 = vadd.f32 %v2576, 1.0
    %v5364 = vlog2.pop %v5363
    %v5365 = vmul.f32 %v5364, 0.6931472
    %v5366 = vmul.f32 -0.5, %v2576
    %v5367 = vadd.f32 %v5366, 1.0
    %v5368 = vmul.f32 %v5367, %v2576
    %v5369 = vand.u32 2147483647, %v2576
    %vm5370 = vcmp.lt.f32.partialorder %v5369, 0.0004427343
    %v5371 = vsel %vm5370, %v5368, %v5365
    %v5372 = vadd.f32 %v2578, 1.0
    %v5373 = vlog2.pop %v5372
    %v5374 = vmul.f32 %v5373, 0.6931472
    %v5375 = vmul.f32 -0.5, %v2578
    %v5376 = vadd.f32 %v5375, 1.0
    %v5377 = vmul.f32 %v5376, %v2578
    %v5378 = vand.u32 2147483647, %v2578
    %vm5379 = vcmp.lt.f32.partialorder %v5378, 0.0004427343
    %v5380 = vsel %vm5379, %v5377, %v5374
    %v5381 = vadd.f32 %v2580, 1.0
    %v5382 = vlog2.pop %v5381
    %v5383 = vmul.f32 %v5382, 0.6931472
    %v5384 = vmul.f32 -0.5, %v2580
    %v5385 = vadd.f32 %v5384, 1.0
    %v5386 = vmul.f32 %v5385, %v2580
    %v5387 = vand.u32 2147483647, %v2580
    %vm5388 = vcmp.lt.f32.partialorder %v5387, 0.0004427343
    %v5389 = vsel %vm5388, %v5386, %v5383
    %v5390 = vadd.f32 %v2582, 1.0
    %v5391 = vlog2.pop %v5390
    %v5392 = vmul.f32 %v5391, 0.6931472
    %v5393 = vmul.f32 -0.5, %v2582
    %v5394 = vadd.f32 %v5393, 1.0
    %v5395 = vmul.f32 %v5394, %v2582
    %v5396 = vand.u32 2147483647, %v2582
    %vm5397 = vcmp.lt.f32.partialorder %v5396, 0.0004427343
    %v5398 = vsel %vm5397, %v5395, %v5392
    %v5399 = vadd.f32 %v2584, 1.0
    %v5400 = vlog2.pop %v5399
    %v5401 = vmul.f32 %v5400, 0.6931472
    %v5402 = vmul.f32 -0.5, %v2584
    %v5403 = vadd.f32 %v5402, 1.0
    %v5404 = vmul.f32 %v5403, %v2584
    %v5405 = vand.u32 2147483647, %v2584
    %vm5406 = vcmp.lt.f32.partialorder %v5405, 0.0004427343
    %v5407 = vsel %vm5406, %v5404, %v5401
    %v5408 = vadd.f32 %v2586, 1.0
    %v5409 = vlog2.pop %v5408
    %v5410 = vmul.f32 %v5409, 0.6931472
    %v5411 = vmul.f32 -0.5, %v2586
    %v5412 = vadd.f32 %v5411, 1.0
    %v5413 = vmul.f32 %v5412, %v2586
    %v5414 = vand.u32 2147483647, %v2586
    %vm5415 = vcmp.lt.f32.partialorder %v5414, 0.0004427343
    %v5416 = vsel %vm5415, %v5413, %v5410
    %v5417 = vadd.f32 %v2588, 1.0
    %v5418 = vlog2.pop %v5417
    %v5419 = vmul.f32 %v5418, 0.6931472
    %v5420 = vmul.f32 -0.5, %v2588
    %v5421 = vadd.f32 %v5420, 1.0
    %v5422 = vmul.f32 %v5421, %v2588
    %v5423 = vand.u32 2147483647, %v2588
    %vm5424 = vcmp.lt.f32.partialorder %v5423, 0.0004427343
    %v5425 = vsel %vm5424, %v5422, %v5419
    %v5426 = vadd.f32 %v2590, 1.0
    %v5427 = vlog2.pop %v5426
    %v5428 = vmul.f32 %v5427, 0.6931472
    %v5429 = vmul.f32 -0.5, %v2590
    %v5430 = vadd.f32 %v5429, 1.0
    %v5431 = vmul.f32 %v5430, %v2590
    %v5432 = vand.u32 2147483647, %v2590
    %vm5433 = vcmp.lt.f32.partialorder %v5432, 0.0004427343
    %v5434 = vsel %vm5433, %v5431, %v5428
    %v5435 = vadd.f32 %v2592, 1.0
    %v5436 = vlog2.pop %v5435
    %v5437 = vmul.f32 %v5436, 0.6931472
    %v5438 = vmul.f32 -0.5, %v2592
    %v5439 = vadd.f32 %v5438, 1.0
    %v5440 = vmul.f32 %v5439, %v2592
    %v5441 = vand.u32 2147483647, %v2592
    %vm5442 = vcmp.lt.f32.partialorder %v5441, 0.0004427343
    %v5443 = vsel %vm5442, %v5440, %v5437
    %v5444 = vadd.f32 %v2594, 1.0
    %v5445 = vlog2.pop %v5444
    %v5446 = vmul.f32 %v5445, 0.6931472
    %v5447 = vmul.f32 -0.5, %v2594
    %v5448 = vadd.f32 %v5447, 1.0
    %v5449 = vmul.f32 %v5448, %v2594
    %v5450 = vand.u32 2147483647, %v2594
    %vm5451 = vcmp.lt.f32.partialorder %v5450, 0.0004427343
    %v5452 = vsel %vm5451, %v5449, %v5446
    %v5453 = vadd.f32 %v2596, 1.0
    %v5454 = vlog2.pop %v5453
    %v5455 = vmul.f32 %v5454, 0.6931472
    %v5456 = vmul.f32 -0.5, %v2596
    %v5457 = vadd.f32 %v5456, 1.0
    %v5458 = vmul.f32 %v5457, %v2596
    %v5459 = vand.u32 2147483647, %v2596
    %vm5460 = vcmp.lt.f32.partialorder %v5459, 0.0004427343
    %v5461 = vsel %vm5460, %v5458, %v5455
    %v5462 = vadd.f32 %v2598, 1.0
    %v5463 = vlog2.pop %v5462
    %v5464 = vmul.f32 %v5463, 0.6931472
    %v5465 = vmul.f32 -0.5, %v2598
    %v5466 = vadd.f32 %v5465, 1.0
    %v5467 = vmul.f32 %v5466, %v2598
    %v5468 = vand.u32 2147483647, %v2598
    %vm5469 = vcmp.lt.f32.partialorder %v5468, 0.0004427343
    %v5470 = vsel %vm5469, %v5467, %v5464
    %v5471 = vadd.f32 %v2600, 1.0
    %v5472 = vlog2.pop %v5471
    %v5473 = vmul.f32 %v5472, 0.6931472
    %v5474 = vmul.f32 -0.5, %v2600
    %v5475 = vadd.f32 %v5474, 1.0
    %v5476 = vmul.f32 %v5475, %v2600
    %v5477 = vand.u32 2147483647, %v2600
    %vm5478 = vcmp.lt.f32.partialorder %v5477, 0.0004427343
    %v5479 = vsel %vm5478, %v5476, %v5473
    %v5480 = vadd.f32 %v2602, 1.0
    %v5481 = vlog2.pop %v5480
    %v5482 = vmul.f32 %v5481, 0.6931472
    %v5483 = vmul.f32 -0.5, %v2602
    %v5484 = vadd.f32 %v5483, 1.0
    %v5485 = vmul.f32 %v5484, %v2602
    %v5486 = vand.u32 2147483647, %v2602
    %vm5487 = vcmp.lt.f32.partialorder %v5486, 0.0004427343
    %v5488 = vsel %vm5487, %v5485, %v5482
    %v5489 = vadd.f32 %v2604, 1.0
    %v5490 = vlog2.pop %v5489
    %v5491 = vmul.f32 %v5490, 0.6931472
    %v5492 = vmul.f32 -0.5, %v2604
    %v5493 = vadd.f32 %v5492, 1.0
    %v5494 = vmul.f32 %v5493, %v2604
    %v5495 = vand.u32 2147483647, %v2604
    %vm5496 = vcmp.lt.f32.partialorder %v5495, 0.0004427343
    %v5497 = vsel %vm5496, %v5494, %v5491
    %v5498 = vadd.f32 %v2606, 1.0
    %v5499 = vlog2.pop %v5498
    %v5500 = vmul.f32 %v5499, 0.6931472
    %v5501 = vmul.f32 -0.5, %v2606
    %v5502 = vadd.f32 %v5501, 1.0
    %v5503 = vmul.f32 %v5502, %v2606
    %v5504 = vand.u32 2147483647, %v2606
    %vm5505 = vcmp.lt.f32.partialorder %v5504, 0.0004427343
    %v5506 = vsel %vm5505, %v5503, %v5500
    %v5507 = vadd.f32 %v2608, 1.0
    %v5508 = vlog2.pop %v5507
    %v5509 = vmul.f32 %v5508, 0.6931472
    %v5510 = vmul.f32 -0.5, %v2608
    %v5511 = vadd.f32 %v5510, 1.0
    %v5512 = vmul.f32 %v5511, %v2608
    %v5513 = vand.u32 2147483647, %v2608
    %vm5514 = vcmp.lt.f32.partialorder %v5513, 0.0004427343
    %v5515 = vsel %vm5514, %v5512, %v5509
    %v5516 = vadd.f32 %v2610, 1.0
    %v5517 = vlog2.pop %v5516
    %v5518 = vmul.f32 %v5517, 0.6931472
    %v5519 = vmul.f32 -0.5, %v2610
    %v5520 = vadd.f32 %v5519, 1.0
    %v5521 = vmul.f32 %v5520, %v2610
    %v5522 = vand.u32 2147483647, %v2610
    %vm5523 = vcmp.lt.f32.partialorder %v5522, 0.0004427343
    %v5524 = vsel %vm5523, %v5521, %v5518
    %v5525 = vadd.f32 %v2612, 1.0
    %v5526 = vlog2.pop %v5525
    %v5527 = vmul.f32 %v5526, 0.6931472
    %v5528 = vmul.f32 -0.5, %v2612
    %v5529 = vadd.f32 %v5528, 1.0
    %v5530 = vmul.f32 %v5529, %v2612
    %v5531 = vand.u32 2147483647, %v2612
    %vm5532 = vcmp.lt.f32.partialorder %v5531, 0.0004427343
    %v5533 = vsel %vm5532, %v5530, %v5527
    %v5534 = vadd.f32 %v2614, 1.0
    %v5535 = vlog2.pop %v5534
    %v5536 = vmul.f32 %v5535, 0.6931472
    %v5537 = vmul.f32 -0.5, %v2614
    %v5538 = vadd.f32 %v5537, 1.0
    %v5539 = vmul.f32 %v5538, %v2614
    %v5540 = vand.u32 2147483647, %v2614
    %vm5541 = vcmp.lt.f32.partialorder %v5540, 0.0004427343
    %v5542 = vsel %vm5541, %v5539, %v5536
    %v5543 = vadd.f32 %v2616, 1.0
    %v5544 = vlog2.pop %v5543
    %v5545 = vmul.f32 %v5544, 0.6931472
    %v5546 = vmul.f32 -0.5, %v2616
    %v5547 = vadd.f32 %v5546, 1.0
    %v5548 = vmul.f32 %v5547, %v2616
    %v5549 = vand.u32 2147483647, %v2616
    %vm5550 = vcmp.lt.f32.partialorder %v5549, 0.0004427343
    %v5551 = vsel %vm5550, %v5548, %v5545
    %v5552 = vadd.f32 %v2618, 1.0
    %v5553 = vlog2.pop %v5552
    %v5554 = vmul.f32 %v5553, 0.6931472
    %v5555 = vmul.f32 -0.5, %v2618
    %v5556 = vadd.f32 %v5555, 1.0
    %v5557 = vmul.f32 %v5556, %v2618
    %v5558 = vand.u32 2147483647, %v2618
    %vm5559 = vcmp.lt.f32.partialorder %v5558, 0.0004427343
    %v5560 = vsel %vm5559, %v5557, %v5554
    %v5561 = vadd.f32 %v2620, 1.0
    %v5562 = vlog2.pop %v5561
    %v5563 = vmul.f32 %v5562, 0.6931472
    %v5564 = vmul.f32 -0.5, %v2620
    %v5565 = vadd.f32 %v5564, 1.0
    %v5566 = vmul.f32 %v5565, %v2620
    %v5567 = vand.u32 2147483647, %v2620
    %vm5568 = vcmp.lt.f32.partialorder %v5567, 0.0004427343
    %v5569 = vsel %vm5568, %v5566, %v5563
    %v5570 = vadd.f32 %v2622, 1.0
    %v5571 = vlog2.pop %v5570
    %v5572 = vmul.f32 %v5571, 0.6931472
    %v5573 = vmul.f32 -0.5, %v2622
    %v5574 = vadd.f32 %v5573, 1.0
    %v5575 = vmul.f32 %v5574, %v2622
    %v5576 = vand.u32 2147483647, %v2622
    %vm5577 = vcmp.lt.f32.partialorder %v5576, 0.0004427343
    %v5578 = vsel %vm5577, %v5575, %v5572
    %v5579 = vadd.f32 %v2624, 1.0
    %v5580 = vlog2.pop %v5579
    %v5581 = vmul.f32 %v5580, 0.6931472
    %v5582 = vmul.f32 -0.5, %v2624
    %v5583 = vadd.f32 %v5582, 1.0
    %v5584 = vmul.f32 %v5583, %v2624
    %v5585 = vand.u32 2147483647, %v2624
    %vm5586 = vcmp.lt.f32.partialorder %v5585, 0.0004427343
    %v5587 = vsel %vm5586, %v5584, %v5581
    %v5588 = vadd.f32 %v2626, 1.0
    %v5589 = vlog2.pop %v5588
    %v5590 = vmul.f32 %v5589, 0.6931472
    %v5591 = vmul.f32 -0.5, %v2626
    %v5592 = vadd.f32 %v5591, 1.0
    %v5593 = vmul.f32 %v5592, %v2626
    %v5594 = vand.u32 2147483647, %v2626
    %vm5595 = vcmp.lt.f32.partialorder %v5594, 0.0004427343
    %v5596 = vsel %vm5595, %v5593, %v5590
    %v5597 = vadd.f32 %v2628, 1.0
    %v5598 = vlog2.pop %v5597
    %v5599 = vmul.f32 %v5598, 0.6931472
    %v5600 = vmul.f32 -0.5, %v2628
    %v5601 = vadd.f32 %v5600, 1.0
    %v5602 = vmul.f32 %v5601, %v2628
    %v5603 = vand.u32 2147483647, %v2628
    %vm5604 = vcmp.lt.f32.partialorder %v5603, 0.0004427343
    %v5605 = vsel %vm5604, %v5602, %v5599
    %v5606 = vadd.f32 %v2630, 1.0
    %v5607 = vlog2.pop %v5606
    %v5608 = vmul.f32 %v5607, 0.6931472
    %v5609 = vmul.f32 -0.5, %v2630
    %v5610 = vadd.f32 %v5609, 1.0
    %v5611 = vmul.f32 %v5610, %v2630
    %v5612 = vand.u32 2147483647, %v2630
    %vm5613 = vcmp.lt.f32.partialorder %v5612, 0.0004427343
    %v5614 = vsel %vm5613, %v5611, %v5608
    %v5615 = vadd.f32 %v2632, 1.0
    %v5616 = vlog2.pop %v5615
    %v5617 = vmul.f32 %v5616, 0.6931472
    %v5618 = vmul.f32 -0.5, %v2632
    %v5619 = vadd.f32 %v5618, 1.0
    %v5620 = vmul.f32 %v5619, %v2632
    %v5621 = vand.u32 2147483647, %v2632
    %vm5622 = vcmp.lt.f32.partialorder %v5621, 0.0004427343
    %v5623 = vsel %vm5622, %v5620, %v5617
    %v5624 = vadd.f32 %v2634, 1.0
    %v5625 = vlog2.pop %v5624
    %v5626 = vmul.f32 %v5625, 0.6931472
    %v5627 = vmul.f32 -0.5, %v2634
    %v5628 = vadd.f32 %v5627, 1.0
    %v5629 = vmul.f32 %v5628, %v2634
    %v5630 = vand.u32 2147483647, %v2634
    %vm5631 = vcmp.lt.f32.partialorder %v5630, 0.0004427343
    %v5632 = vsel %vm5631, %v5629, %v5626
    %v5633 = vadd.f32 %v2636, 1.0
    %v5634 = vlog2.pop %v5633
    %v5635 = vmul.f32 %v5634, 0.6931472
    %v5636 = vmul.f32 -0.5, %v2636
    %v5637 = vadd.f32 %v5636, 1.0
    %v5638 = vmul.f32 %v5637, %v2636
    %v5639 = vand.u32 2147483647, %v2636
    %vm5640 = vcmp.lt.f32.partialorder %v5639, 0.0004427343
    %v5641 = vsel %vm5640, %v5638, %v5635
    %v5642 = vadd.f32 %v2638, 1.0
    %v5643 = vlog2.pop %v5642
    %v5644 = vmul.f32 %v5643, 0.6931472
    %v5645 = vmul.f32 -0.5, %v2638
    %v5646 = vadd.f32 %v5645, 1.0
    %v5647 = vmul.f32 %v5646, %v2638
    %v5648 = vand.u32 2147483647, %v2638
    %vm5649 = vcmp.lt.f32.partialorder %v5648, 0.0004427343
    %v5650 = vsel %vm5649, %v5647, %v5644
    %v5651 = vadd.f32 %v2640, 1.0
    %v5652 = vlog2.pop %v5651
    %v5653 = vmul.f32 %v5652, 0.6931472
    %v5654 = vmul.f32 -0.5, %v2640
    %v5655 = vadd.f32 %v5654, 1.0
    %v5656 = vmul.f32 %v5655, %v2640
    %v5657 = vand.u32 2147483647, %v2640
    %vm5658 = vcmp.lt.f32.partialorder %v5657, 0.0004427343
    %v5659 = vsel %vm5658, %v5656, %v5653
    %v5660 = vadd.f32 %v2642, 1.0
    %v5661 = vlog2.pop %v5660
    %v5662 = vmul.f32 %v5661, 0.6931472
    %v5663 = vmul.f32 -0.5, %v2642
    %v5664 = vadd.f32 %v5663, 1.0
    %v5665 = vmul.f32 %v5664, %v2642
    %v5666 = vand.u32 2147483647, %v2642
    %vm5667 = vcmp.lt.f32.partialorder %v5666, 0.0004427343
    %v5668 = vsel %vm5667, %v5665, %v5662
    %v5669 = vadd.f32 %v2644, 1.0
    %v5670 = vlog2.pop %v5669
    %v5671 = vmul.f32 %v5670, 0.6931472
    %v5672 = vmul.f32 -0.5, %v2644
    %v5673 = vadd.f32 %v5672, 1.0
    %v5674 = vmul.f32 %v5673, %v2644
    %v5675 = vand.u32 2147483647, %v2644
    %vm5676 = vcmp.lt.f32.partialorder %v5675, 0.0004427343
    %v5677 = vsel %vm5676, %v5674, %v5671
    %v5678 = vadd.f32 %v2646, 1.0
    %v5679 = vlog2.pop %v5678
    %v5680 = vmul.f32 %v5679, 0.6931472
    %v5681 = vmul.f32 -0.5, %v2646
    %v5682 = vadd.f32 %v5681, 1.0
    %v5683 = vmul.f32 %v5682, %v2646
    %v5684 = vand.u32 2147483647, %v2646
    %vm5685 = vcmp.lt.f32.partialorder %v5684, 0.0004427343
    %v5686 = vsel %vm5685, %v5683, %v5680
    %v5687 = vadd.f32 %v2648, 1.0
    %v5688 = vlog2.pop %v5687
    %v5689 = vmul.f32 %v5688, 0.6931472
    %v5690 = vmul.f32 -0.5, %v2648
    %v5691 = vadd.f32 %v5690, 1.0
    %v5692 = vmul.f32 %v5691, %v2648
    %v5693 = vand.u32 2147483647, %v2648
    %vm5694 = vcmp.lt.f32.partialorder %v5693, 0.0004427343
    %v5695 = vsel %vm5694, %v5692, %v5689
    %v5696 = vadd.f32 %v2650, 1.0
    %v5697 = vlog2.pop %v5696
    %v5698 = vmul.f32 %v5697, 0.6931472
    %v5699 = vmul.f32 -0.5, %v2650
    %v5700 = vadd.f32 %v5699, 1.0
    %v5701 = vmul.f32 %v5700, %v2650
    %v5702 = vand.u32 2147483647, %v2650
    %vm5703 = vcmp.lt.f32.partialorder %v5702, 0.0004427343
    %v5704 = vsel %vm5703, %v5701, %v5698
    %v5705 = vadd.f32 %v2652, 1.0
    %v5706 = vlog2.pop %v5705
    %v5707 = vmul.f32 %v5706, 0.6931472
    %v5708 = vmul.f32 -0.5, %v2652
    %v5709 = vadd.f32 %v5708, 1.0
    %v5710 = vmul.f32 %v5709, %v2652
    %v5711 = vand.u32 2147483647, %v2652
    %vm5712 = vcmp.lt.f32.partialorder %v5711, 0.0004427343
    %v5713 = vsel %vm5712, %v5710, %v5707
    %v5714 = vadd.f32 %v2654, 1.0
    %v5715 = vlog2.pop %v5714
    %v5716 = vmul.f32 %v5715, 0.6931472
    %v5717 = vmul.f32 -0.5, %v2654
    %v5718 = vadd.f32 %v5717, 1.0
    %v5719 = vmul.f32 %v5718, %v2654
    %v5720 = vand.u32 2147483647, %v2654
    %vm5721 = vcmp.lt.f32.partialorder %v5720, 0.0004427343
    %v5722 = vsel %vm5721, %v5719, %v5716
    %v5723 = vadd.f32 %v2656, 1.0
    %v5724 = vlog2.pop %v5723
    %v5725 = vmul.f32 %v5724, 0.6931472
    %v5726 = vmul.f32 -0.5, %v2656
    %v5727 = vadd.f32 %v5726, 1.0
    %v5728 = vmul.f32 %v5727, %v2656
    %v5729 = vand.u32 2147483647, %v2656
    %vm5730 = vcmp.lt.f32.partialorder %v5729, 0.0004427343
    %v5731 = vsel %vm5730, %v5728, %v5725
    %v5732 = vadd.f32 %v2658, 1.0
    %v5733 = vlog2.pop %v5732
    %v5734 = vmul.f32 %v5733, 0.6931472
    %v5735 = vmul.f32 -0.5, %v2658
    %v5736 = vadd.f32 %v5735, 1.0
    %v5737 = vmul.f32 %v5736, %v2658
    %v5738 = vand.u32 2147483647, %v2658
    %vm5739 = vcmp.lt.f32.partialorder %v5738, 0.0004427343
    %v5740 = vsel %vm5739, %v5737, %v5734
    %v5741 = vadd.f32 %v2660, 1.0
    %v5742 = vlog2.pop %v5741
    %v5743 = vmul.f32 %v5742, 0.6931472
    %v5744 = vmul.f32 -0.5, %v2660
    %v5745 = vadd.f32 %v5744, 1.0
    %v5746 = vmul.f32 %v5745, %v2660
    %v5747 = vand.u32 2147483647, %v2660
    %vm5748 = vcmp.lt.f32.partialorder %v5747, 0.0004427343
    %v5749 = vsel %vm5748, %v5746, %v5743
    %v5750 = vadd.f32 %v2662, 1.0
    %v5751 = vlog2.pop %v5750
    %v5752 = vmul.f32 %v5751, 0.6931472
    %v5753 = vmul.f32 -0.5, %v2662
    %v5754 = vadd.f32 %v5753, 1.0
    %v5755 = vmul.f32 %v5754, %v2662
    %v5756 = vand.u32 2147483647, %v2662
    %vm5757 = vcmp.lt.f32.partialorder %v5756, 0.0004427343
    %v5758 = vsel %vm5757, %v5755, %v5752
    %v5759 = vadd.f32 %v2664, 1.0
    %v5760 = vlog2.pop %v5759
    %v5761 = vmul.f32 %v5760, 0.6931472
    %v5762 = vmul.f32 -0.5, %v2664
    %v5763 = vadd.f32 %v5762, 1.0
    %v5764 = vmul.f32 %v5763, %v2664
    %v5765 = vand.u32 2147483647, %v2664
    %vm5766 = vcmp.lt.f32.partialorder %v5765, 0.0004427343
    %v5767 = vsel %vm5766, %v5764, %v5761
    %v5768 = vadd.f32 %v2666, 1.0
    %v5769 = vlog2.pop %v5768
    %v5770 = vmul.f32 %v5769, 0.6931472
    %v5771 = vmul.f32 -0.5, %v2666
    %v5772 = vadd.f32 %v5771, 1.0
    %v5773 = vmul.f32 %v5772, %v2666
    %v5774 = vand.u32 2147483647, %v2666
    %vm5775 = vcmp.lt.f32.partialorder %v5774, 0.0004427343
    %v5776 = vsel %vm5775, %v5773, %v5770
    %v5777 = vadd.f32 %v2668, 1.0
    %v5778 = vlog2.pop %v5777
    %v5779 = vmul.f32 %v5778, 0.6931472
    %v5780 = vmul.f32 -0.5, %v2668
    %v5781 = vadd.f32 %v5780, 1.0
    %v5782 = vmul.f32 %v5781, %v2668
    %v5783 = vand.u32 2147483647, %v2668
    %vm5784 = vcmp.lt.f32.partialorder %v5783, 0.0004427343
    %v5785 = vsel %vm5784, %v5782, %v5779
    %v5786 = vadd.f32 %v2670, 1.0
    %v5787 = vlog2.pop %v5786
    %v5788 = vmul.f32 %v5787, 0.6931472
    %v5789 = vmul.f32 -0.5, %v2670
    %v5790 = vadd.f32 %v5789, 1.0
    %v5791 = vmul.f32 %v5790, %v2670
    %v5792 = vand.u32 2147483647, %v2670
    %vm5793 = vcmp.lt.f32.partialorder %v5792, 0.0004427343
    %v5794 = vsel %vm5793, %v5791, %v5788
    %v5795 = vadd.f32 %v2672, 1.0
    %v5796 = vlog2.pop %v5795
    %v5797 = vmul.f32 %v5796, 0.6931472
    %v5798 = vmul.f32 -0.5, %v2672
    %v5799 = vadd.f32 %v5798, 1.0
    %v5800 = vmul.f32 %v5799, %v2672
    %v5801 = vand.u32 2147483647, %v2672
    %vm5802 = vcmp.lt.f32.partialorder %v5801, 0.0004427343
    %v5803 = vsel %vm5802, %v5800, %v5797
    %v5804 = vadd.f32 %v2674, 1.0
    %v5805 = vlog2.pop %v5804
    %v5806 = vmul.f32 %v5805, 0.6931472
    %v5807 = vmul.f32 -0.5, %v2674
    %v5808 = vadd.f32 %v5807, 1.0
    %v5809 = vmul.f32 %v5808, %v2674
    %v5810 = vand.u32 2147483647, %v2674
    %vm5811 = vcmp.lt.f32.partialorder %v5810, 0.0004427343
    %v5812 = vsel %vm5811, %v5809, %v5806
    %v5813 = vadd.f32 %v2676, 1.0
    %v5814 = vlog2.pop %v5813
    %v5815 = vmul.f32 %v5814, 0.6931472
    %v5816 = vmul.f32 -0.5, %v2676
    %v5817 = vadd.f32 %v5816, 1.0
    %v5818 = vmul.f32 %v5817, %v2676
    %v5819 = vand.u32 2147483647, %v2676
    %vm5820 = vcmp.lt.f32.partialorder %v5819, 0.0004427343
    %v5821 = vsel %vm5820, %v5818, %v5815
    %v5822 = vadd.f32 %v2678, 1.0
    %v5823 = vlog2.pop %v5822
    %v5824 = vmul.f32 %v5823, 0.6931472
    %v5825 = vmul.f32 -0.5, %v2678
    %v5826 = vadd.f32 %v5825, 1.0
    %v5827 = vmul.f32 %v5826, %v2678
    %v5828 = vand.u32 2147483647, %v2678
    %vm5829 = vcmp.lt.f32.partialorder %v5828, 0.0004427343
    %v5830 = vsel %vm5829, %v5827, %v5824
    %v5831 = vadd.f32 %v2680, 1.0
    %v5832 = vlog2.pop %v5831
    %v5833 = vmul.f32 %v5832, 0.6931472
    %v5834 = vmul.f32 -0.5, %v2680
    %v5835 = vadd.f32 %v5834, 1.0
    %v5836 = vmul.f32 %v5835, %v2680
    %v5837 = vand.u32 2147483647, %v2680
    %vm5838 = vcmp.lt.f32.partialorder %v5837, 0.0004427343
    %v5839 = vsel %vm5838, %v5836, %v5833
    %v5840 = vadd.f32 %v2682, 1.0
    %v5841 = vlog2.pop %v5840
    %v5842 = vmul.f32 %v5841, 0.6931472
    %v5843 = vmul.f32 -0.5, %v2682
    %v5844 = vadd.f32 %v5843, 1.0
    %v5845 = vmul.f32 %v5844, %v2682
    %v5846 = vand.u32 2147483647, %v2682
    %vm5847 = vcmp.lt.f32.partialorder %v5846, 0.0004427343
    %v5848 = vsel %vm5847, %v5845, %v5842
    %v5849 = vadd.f32 %v2684, 1.0
    %v5850 = vlog2.pop %v5849
    %v5851 = vmul.f32 %v5850, 0.6931472
    %v5852 = vmul.f32 -0.5, %v2684
    %v5853 = vadd.f32 %v5852, 1.0
    %v5854 = vmul.f32 %v5853, %v2684
    %v5855 = vand.u32 2147483647, %v2684
    %vm5856 = vcmp.lt.f32.partialorder %v5855, 0.0004427343
    %v5857 = vsel %vm5856, %v5854, %v5851
    %v5858 = vadd.f32 %v2686, 1.0
    %v5859 = vlog2.pop %v5858
    %v5860 = vmul.f32 %v5859, 0.6931472
    %v5861 = vmul.f32 -0.5, %v2686
    %v5862 = vadd.f32 %v5861, 1.0
    %v5863 = vmul.f32 %v5862, %v2686
    %v5864 = vand.u32 2147483647, %v2686
    %vm5865 = vcmp.lt.f32.partialorder %v5864, 0.0004427343
    %v5866 = vsel %vm5865, %v5863, %v5860
    %v5867 = vadd.f32 %v2688, 1.0
    %v5868 = vlog2.pop %v5867
    %v5869 = vmul.f32 %v5868, 0.6931472
    %v5870 = vmul.f32 -0.5, %v2688
    %v5871 = vadd.f32 %v5870, 1.0
    %v5872 = vmul.f32 %v5871, %v2688
    %v5873 = vand.u32 2147483647, %v2688
    %vm5874 = vcmp.lt.f32.partialorder %v5873, 0.0004427343
    %v5875 = vsel %vm5874, %v5872, %v5869
    %v5876 = vadd.f32 %v2690, 1.0
    %v5877 = vlog2.pop %v5876
    %v5878 = vmul.f32 %v5877, 0.6931472
    %v5879 = vmul.f32 -0.5, %v2690
    %v5880 = vadd.f32 %v5879, 1.0
    %v5881 = vmul.f32 %v5880, %v2690
    %v5882 = vand.u32 2147483647, %v2690
    %vm5883 = vcmp.lt.f32.partialorder %v5882, 0.0004427343
    %v5884 = vsel %vm5883, %v5881, %v5878
    %v5885 = vadd.f32 %v2692, 1.0
    %v5886 = vlog2.pop %v5885
    %v5887 = vmul.f32 %v5886, 0.6931472
    %v5888 = vmul.f32 -0.5, %v2692
    %v5889 = vadd.f32 %v5888, 1.0
    %v5890 = vmul.f32 %v5889, %v2692
    %v5891 = vand.u32 2147483647, %v2692
    %vm5892 = vcmp.lt.f32.partialorder %v5891, 0.0004427343
    %v5893 = vsel %vm5892, %v5890, %v5887
    %v5894 = vadd.f32 %v2694, 1.0
    %v5895 = vlog2.pop %v5894
    %v5896 = vmul.f32 %v5895, 0.6931472
    %v5897 = vmul.f32 -0.5, %v2694
    %v5898 = vadd.f32 %v5897, 1.0
    %v5899 = vmul.f32 %v5898, %v2694
    %v5900 = vand.u32 2147483647, %v2694
    %vm5901 = vcmp.lt.f32.partialorder %v5900, 0.0004427343
    %v5902 = vsel %vm5901, %v5899, %v5896
    %v5903 = vadd.f32 %v2696, 1.0
    %v5904 = vlog2.pop %v5903
    %v5905 = vmul.f32 %v5904, 0.6931472
    %v5906 = vmul.f32 -0.5, %v2696
    %v5907 = vadd.f32 %v5906, 1.0
    %v5908 = vmul.f32 %v5907, %v2696
    %v5909 = vand.u32 2147483647, %v2696
    %vm5910 = vcmp.lt.f32.partialorder %v5909, 0.0004427343
    %v5911 = vsel %vm5910, %v5908, %v5905
    %v5912 = vadd.f32 %v2698, 1.0
    %v5913 = vlog2.pop %v5912
    %v5914 = vmul.f32 %v5913, 0.6931472
    %v5915 = vmul.f32 -0.5, %v2698
    %v5916 = vadd.f32 %v5915, 1.0
    %v5917 = vmul.f32 %v5916, %v2698
    %v5918 = vand.u32 2147483647, %v2698
    %vm5919 = vcmp.lt.f32.partialorder %v5918, 0.0004427343
    %v5920 = vsel %vm5919, %v5917, %v5914
    %v5921 = vadd.f32 %v2700, 1.0
    %v5922 = vlog2.pop %v5921
    %v5923 = vmul.f32 %v5922, 0.6931472
    %v5924 = vmul.f32 -0.5, %v2700
    %v5925 = vadd.f32 %v5924, 1.0
    %v5926 = vmul.f32 %v5925, %v2700
    %v5927 = vand.u32 2147483647, %v2700
    %vm5928 = vcmp.lt.f32.partialorder %v5927, 0.0004427343
    %v5929 = vsel %vm5928, %v5926, %v5923
    %v5930 = vadd.f32 %v2702, 1.0
    %v5931 = vlog2.pop %v5930
    %v5932 = vmul.f32 %v5931, 0.6931472
    %v5933 = vmul.f32 -0.5, %v2702
    %v5934 = vadd.f32 %v5933, 1.0
    %v5935 = vmul.f32 %v5934, %v2702
    %v5936 = vand.u32 2147483647, %v2702
    %vm5937 = vcmp.lt.f32.partialorder %v5936, 0.0004427343
    %v5938 = vsel %vm5937, %v5935, %v5932
    %v5939 = vadd.f32 %v2704, 1.0
    %v5940 = vlog2.pop %v5939
    %v5941 = vmul.f32 %v5940, 0.6931472
    %v5942 = vmul.f32 -0.5, %v2704
    %v5943 = vadd.f32 %v5942, 1.0
    %v5944 = vmul.f32 %v5943, %v2704
    %v5945 = vand.u32 2147483647, %v2704
    %vm5946 = vcmp.lt.f32.partialorder %v5945, 0.0004427343
    %v5947 = vsel %vm5946, %v5944, %v5941
    %v5948 = vadd.f32 %v2706, 1.0
    %v5949 = vlog2.pop %v5948
    %v5950 = vmul.f32 %v5949, 0.6931472
    %v5951 = vmul.f32 -0.5, %v2706
    %v5952 = vadd.f32 %v5951, 1.0
    %v5953 = vmul.f32 %v5952, %v2706
    %v5954 = vand.u32 2147483647, %v2706
    %vm5955 = vcmp.lt.f32.partialorder %v5954, 0.0004427343
    %v5956 = vsel %vm5955, %v5953, %v5950
    %v5957 = vadd.f32 %v2708, 1.0
    %v5958 = vlog2.pop %v5957
    %v5959 = vmul.f32 %v5958, 0.6931472
    %v5960 = vmul.f32 -0.5, %v2708
    %v5961 = vadd.f32 %v5960, 1.0
    %v5962 = vmul.f32 %v5961, %v2708
    %v5963 = vand.u32 2147483647, %v2708
    %vm5964 = vcmp.lt.f32.partialorder %v5963, 0.0004427343
    %v5965 = vsel %vm5964, %v5962, %v5959
    %v5966 = vadd.f32 %v2710, 1.0
    %v5967 = vlog2.pop %v5966
    %v5968 = vmul.f32 %v5967, 0.6931472
    %v5969 = vmul.f32 -0.5, %v2710
    %v5970 = vadd.f32 %v5969, 1.0
    %v5971 = vmul.f32 %v5970, %v2710
    %v5972 = vand.u32 2147483647, %v2710
    %vm5973 = vcmp.lt.f32.partialorder %v5972, 0.0004427343
    %v5974 = vsel %vm5973, %v5971, %v5968
    %v5975 = vadd.f32 %v2712, 1.0
    %v5976 = vlog2.pop %v5975
    %v5977 = vmul.f32 %v5976, 0.6931472
    %v5978 = vmul.f32 -0.5, %v2712
    %v5979 = vadd.f32 %v5978, 1.0
    %v5980 = vmul.f32 %v5979, %v2712
    %v5981 = vand.u32 2147483647, %v2712
    %vm5982 = vcmp.lt.f32.partialorder %v5981, 0.0004427343
    %v5983 = vsel %vm5982, %v5980, %v5977
    %v5984 = vadd.f32 %v2714, 1.0
    %v5985 = vlog2.pop %v5984
    %v5986 = vmul.f32 %v5985, 0.6931472
    %v5987 = vmul.f32 -0.5, %v2714
    %v5988 = vadd.f32 %v5987, 1.0
    %v5989 = vmul.f32 %v5988, %v2714
    %v5990 = vand.u32 2147483647, %v2714
    %vm5991 = vcmp.lt.f32.partialorder %v5990, 0.0004427343
    %v5992 = vsel %vm5991, %v5989, %v5986
    %v5993 = vadd.f32 %v2716, 1.0
    %v5994 = vlog2.pop %v5993
    %v5995 = vmul.f32 %v5994, 0.6931472
    %v5996 = vmul.f32 -0.5, %v2716
    %v5997 = vadd.f32 %v5996, 1.0
    %v5998 = vmul.f32 %v5997, %v2716
    %v5999 = vand.u32 2147483647, %v2716
    %vm6000 = vcmp.lt.f32.partialorder %v5999, 0.0004427343
    %v6001 = vsel %vm6000, %v5998, %v5995
    %v6002 = vadd.f32 %v2718, 1.0
    %v6003 = vlog2.pop %v6002
    %v6004 = vmul.f32 %v6003, 0.6931472
    %v6005 = vmul.f32 -0.5, %v2718
    %v6006 = vadd.f32 %v6005, 1.0
    %v6007 = vmul.f32 %v6006, %v2718
    %v6008 = vand.u32 2147483647, %v2718
    %vm6009 = vcmp.lt.f32.partialorder %v6008, 0.0004427343
    %v6010 = vsel %vm6009, %v6007, %v6004
    %v6011 = vadd.f32 %v2720, 1.0
    %v6012 = vlog2.pop %v6011
    %v6013 = vmul.f32 %v6012, 0.6931472
    %v6014 = vmul.f32 -0.5, %v2720
    %v6015 = vadd.f32 %v6014, 1.0
    %v6016 = vmul.f32 %v6015, %v2720
    %v6017 = vand.u32 2147483647, %v2720
    %vm6018 = vcmp.lt.f32.partialorder %v6017, 0.0004427343
    %v6019 = vsel %vm6018, %v6016, %v6013
    %v6020 = vadd.f32 %v2722, 1.0
    %v6021 = vlog2.pop %v6020
    %v6022 = vmul.f32 %v6021, 0.6931472
    %v6023 = vmul.f32 -0.5, %v2722
    %v6024 = vadd.f32 %v6023, 1.0
    %v6025 = vmul.f32 %v6024, %v2722
    %v6026 = vand.u32 2147483647, %v2722
    %vm6027 = vcmp.lt.f32.partialorder %v6026, 0.0004427343
    %v6028 = vsel %vm6027, %v6025, %v6022
    %v6029 = vadd.f32 %v2724, 1.0
    %v6030 = vlog2.pop %v6029
    %v6031 = vmul.f32 %v6030, 0.6931472
    %v6032 = vmul.f32 -0.5, %v2724
    %v6033 = vadd.f32 %v6032, 1.0
    %v6034 = vmul.f32 %v6033, %v2724
    %v6035 = vand.u32 2147483647, %v2724
    %vm6036 = vcmp.lt.f32.partialorder %v6035, 0.0004427343
    %v6037 = vsel %vm6036, %v6034, %v6031
    %v6038 = vadd.f32 %v2726, 1.0
    %v6039 = vlog2.pop %v6038
    %v6040 = vmul.f32 %v6039, 0.6931472
    %v6041 = vmul.f32 -0.5, %v2726
    %v6042 = vadd.f32 %v6041, 1.0
    %v6043 = vmul.f32 %v6042, %v2726
    %v6044 = vand.u32 2147483647, %v2726
    %vm6045 = vcmp.lt.f32.partialorder %v6044, 0.0004427343
    %v6046 = vsel %vm6045, %v6043, %v6040
    %v6047 = vadd.f32 %v2728, 1.0
    %v6048 = vlog2.pop %v6047
    %v6049 = vmul.f32 %v6048, 0.6931472
    %v6050 = vmul.f32 -0.5, %v2728
    %v6051 = vadd.f32 %v6050, 1.0
    %v6052 = vmul.f32 %v6051, %v2728
    %v6053 = vand.u32 2147483647, %v2728
    %vm6054 = vcmp.lt.f32.partialorder %v6053, 0.0004427343
    %v6055 = vsel %vm6054, %v6052, %v6049
    %v6056 = vadd.f32 %v2730, 1.0
    %v6057 = vlog2.pop %v6056
    %v6058 = vmul.f32 %v6057, 0.6931472
    %v6059 = vmul.f32 -0.5, %v2730
    %v6060 = vadd.f32 %v6059, 1.0
    %v6061 = vmul.f32 %v6060, %v2730
    %v6062 = vand.u32 2147483647, %v2730
    %vm6063 = vcmp.lt.f32.partialorder %v6062, 0.0004427343
    %v6064 = vsel %vm6063, %v6061, %v6058
    %v6065 = vadd.f32 %v2732, 1.0
    %v6066 = vlog2.pop %v6065
    %v6067 = vmul.f32 %v6066, 0.6931472
    %v6068 = vmul.f32 -0.5, %v2732
    %v6069 = vadd.f32 %v6068, 1.0
    %v6070 = vmul.f32 %v6069, %v2732
    %v6071 = vand.u32 2147483647, %v2732
    %vm6072 = vcmp.lt.f32.partialorder %v6071, 0.0004427343
    %v6073 = vsel %vm6072, %v6070, %v6067
    %v6074 = vadd.f32 %v2734, 1.0
    %v6075 = vlog2.pop %v6074
    %v6076 = vmul.f32 %v6075, 0.6931472
    %v6077 = vmul.f32 -0.5, %v2734
    %v6078 = vadd.f32 %v6077, 1.0
    %v6079 = vmul.f32 %v6078, %v2734
    %v6080 = vand.u32 2147483647, %v2734
    %vm6081 = vcmp.lt.f32.partialorder %v6080, 0.0004427343
    %v6082 = vsel %vm6081, %v6079, %v6076
    %v6083 = vadd.f32 %v2736, 1.0
    %v6084 = vlog2.pop %v6083
    %v6085 = vmul.f32 %v6084, 0.6931472
    %v6086 = vmul.f32 -0.5, %v2736
    %v6087 = vadd.f32 %v6086, 1.0
    %v6088 = vmul.f32 %v6087, %v2736
    %v6089 = vand.u32 2147483647, %v2736
    %vm6090 = vcmp.lt.f32.partialorder %v6089, 0.0004427343
    %v6091 = vsel %vm6090, %v6088, %v6085
    %v6092 = vadd.f32 %v2738, 1.0
    %v6093 = vlog2.pop %v6092
    %v6094 = vmul.f32 %v6093, 0.6931472
    %v6095 = vmul.f32 -0.5, %v2738
    %v6096 = vadd.f32 %v6095, 1.0
    %v6097 = vmul.f32 %v6096, %v2738
    %v6098 = vand.u32 2147483647, %v2738
    %vm6099 = vcmp.lt.f32.partialorder %v6098, 0.0004427343
    %v6100 = vsel %vm6099, %v6097, %v6094
    %v6101 = vadd.f32 %v2740, 1.0
    %v6102 = vlog2.pop %v6101
    %v6103 = vmul.f32 %v6102, 0.6931472
    %v6104 = vmul.f32 -0.5, %v2740
    %v6105 = vadd.f32 %v6104, 1.0
    %v6106 = vmul.f32 %v6105, %v2740
    %v6107 = vand.u32 2147483647, %v2740
    %vm6108 = vcmp.lt.f32.partialorder %v6107, 0.0004427343
    %v6109 = vsel %vm6108, %v6106, %v6103
    %v6110 = vadd.f32 %v2742, 1.0
    %v6111 = vlog2.pop %v6110
    %v6112 = vmul.f32 %v6111, 0.6931472
    %v6113 = vmul.f32 -0.5, %v2742
    %v6114 = vadd.f32 %v6113, 1.0
    %v6115 = vmul.f32 %v6114, %v2742
    %v6116 = vand.u32 2147483647, %v2742
    %vm6117 = vcmp.lt.f32.partialorder %v6116, 0.0004427343
    %v6118 = vsel %vm6117, %v6115, %v6112
    %v6119 = vadd.f32 %v2744, 1.0
    %v6120 = vlog2.pop %v6119
    %v6121 = vmul.f32 %v6120, 0.6931472
    %v6122 = vmul.f32 -0.5, %v2744
    %v6123 = vadd.f32 %v6122, 1.0
    %v6124 = vmul.f32 %v6123, %v2744
    %v6125 = vand.u32 2147483647, %v2744
    %vm6126 = vcmp.lt.f32.partialorder %v6125, 0.0004427343
    %v6127 = vsel %vm6126, %v6124, %v6121
    %v6128 = vadd.f32 %v2746, 1.0
    %v6129 = vlog2.pop %v6128
    %v6130 = vmul.f32 %v6129, 0.6931472
    %v6131 = vmul.f32 -0.5, %v2746
    %v6132 = vadd.f32 %v6131, 1.0
    %v6133 = vmul.f32 %v6132, %v2746
    %v6134 = vand.u32 2147483647, %v2746
    %vm6135 = vcmp.lt.f32.partialorder %v6134, 0.0004427343
    %v6136 = vsel %vm6135, %v6133, %v6130
    %v6137 = vadd.f32 %v2748, 1.0
    %v6138 = vlog2.pop %v6137
    %v6139 = vmul.f32 %v6138, 0.6931472
    %v6140 = vmul.f32 -0.5, %v2748
    %v6141 = vadd.f32 %v6140, 1.0
    %v6142 = vmul.f32 %v6141, %v2748
    %v6143 = vand.u32 2147483647, %v2748
    %vm6144 = vcmp.lt.f32.partialorder %v6143, 0.0004427343
    %v6145 = vsel %vm6144, %v6142, %v6139
    %v6146 = vadd.f32 %v2750, 1.0
    %v6147 = vlog2.pop %v6146
    %v6148 = vmul.f32 %v6147, 0.6931472
    %v6149 = vmul.f32 -0.5, %v2750
    %v6150 = vadd.f32 %v6149, 1.0
    %v6151 = vmul.f32 %v6150, %v2750
    %v6152 = vand.u32 2147483647, %v2750
    %vm6153 = vcmp.lt.f32.partialorder %v6152, 0.0004427343
    %v6154 = vsel %vm6153, %v6151, %v6148
    %v6155 = vadd.f32 %v2752, 1.0
    %v6156 = vlog2.pop %v6155
    %v6157 = vmul.f32 %v6156, 0.6931472
    %v6158 = vmul.f32 -0.5, %v2752
    %v6159 = vadd.f32 %v6158, 1.0
    %v6160 = vmul.f32 %v6159, %v2752
    %v6161 = vand.u32 2147483647, %v2752
    %vm6162 = vcmp.lt.f32.partialorder %v6161, 0.0004427343
    %v6163 = vsel %vm6162, %v6160, %v6157
    %v6164 = vadd.f32 %v2754, 1.0
    %v6165 = vlog2.pop %v6164
    %v6166 = vmul.f32 %v6165, 0.6931472
    %v6167 = vmul.f32 -0.5, %v2754
    %v6168 = vadd.f32 %v6167, 1.0
    %v6169 = vmul.f32 %v6168, %v2754
    %v6170 = vand.u32 2147483647, %v2754
    %vm6171 = vcmp.lt.f32.partialorder %v6170, 0.0004427343
    %v6172 = vsel %vm6171, %v6169, %v6166
    %v6173 = vadd.f32 %v2756, 1.0
    %v6174 = vlog2.pop %v6173
    %v6175 = vmul.f32 %v6174, 0.6931472
    %v6176 = vmul.f32 -0.5, %v2756
    %v6177 = vadd.f32 %v6176, 1.0
    %v6178 = vmul.f32 %v6177, %v2756
    %v6179 = vand.u32 2147483647, %v2756
    %vm6180 = vcmp.lt.f32.partialorder %v6179, 0.0004427343
    %v6181 = vsel %vm6180, %v6178, %v6175
    %v6182 = vadd.f32 %v2758, 1.0
    %v6183 = vlog2.pop %v6182
    %v6184 = vmul.f32 %v6183, 0.6931472
    %v6185 = vmul.f32 -0.5, %v2758
    %v6186 = vadd.f32 %v6185, 1.0
    %v6187 = vmul.f32 %v6186, %v2758
    %v6188 = vand.u32 2147483647, %v2758
    %vm6189 = vcmp.lt.f32.partialorder %v6188, 0.0004427343
    %v6190 = vsel %vm6189, %v6187, %v6184
    %v6191 = vadd.f32 %v2760, 1.0
    %v6192 = vlog2.pop %v6191
    %v6193 = vmul.f32 %v6192, 0.6931472
    %v6194 = vmul.f32 -0.5, %v2760
    %v6195 = vadd.f32 %v6194, 1.0
    %v6196 = vmul.f32 %v6195, %v2760
    %v6197 = vand.u32 2147483647, %v2760
    %vm6198 = vcmp.lt.f32.partialorder %v6197, 0.0004427343
    %v6199 = vsel %vm6198, %v6196, %v6193
    %v6200 = vadd.f32 %v2762, 1.0
    %v6201 = vlog2.pop %v6200
    %v6202 = vmul.f32 %v6201, 0.6931472
    %v6203 = vmul.f32 -0.5, %v2762
    %v6204 = vadd.f32 %v6203, 1.0
    %v6205 = vmul.f32 %v6204, %v2762
    %v6206 = vand.u32 2147483647, %v2762
    %vm6207 = vcmp.lt.f32.partialorder %v6206, 0.0004427343
    %v6208 = vsel %vm6207, %v6205, %v6202
    %v6209 = vadd.f32 %v2764, 1.0
    %v6210 = vlog2.pop %v6209
    %v6211 = vmul.f32 %v6210, 0.6931472
    %v6212 = vmul.f32 -0.5, %v2764
    %v6213 = vadd.f32 %v6212, 1.0
    %v6214 = vmul.f32 %v6213, %v2764
    %v6215 = vand.u32 2147483647, %v2764
    %vm6216 = vcmp.lt.f32.partialorder %v6215, 0.0004427343
    %v6217 = vsel %vm6216, %v6214, %v6211
    %v6218 = vadd.f32 %v2766, 1.0
    %v6219 = vlog2.pop %v6218
    %v6220 = vmul.f32 %v6219, 0.6931472
    %v6221 = vmul.f32 -0.5, %v2766
    %v6222 = vadd.f32 %v6221, 1.0
    %v6223 = vmul.f32 %v6222, %v2766
    %v6224 = vand.u32 2147483647, %v2766
    %vm6225 = vcmp.lt.f32.partialorder %v6224, 0.0004427343
    %v6226 = vsel %vm6225, %v6223, %v6220
    %v6227 = vadd.f32 %v2768, 1.0
    %v6228 = vlog2.pop %v6227
    %v6229 = vmul.f32 %v6228, 0.6931472
    %v6230 = vmul.f32 -0.5, %v2768
    %v6231 = vadd.f32 %v6230, 1.0
    %v6232 = vmul.f32 %v6231, %v2768
    %v6233 = vand.u32 2147483647, %v2768
    %vm6234 = vcmp.lt.f32.partialorder %v6233, 0.0004427343
    %v6235 = vsel %vm6234, %v6232, %v6229
    %v6236 = vadd.f32 %v2770, 1.0
    %v6237 = vlog2.pop %v6236
    %v6238 = vmul.f32 %v6237, 0.6931472
    %v6239 = vmul.f32 -0.5, %v2770
    %v6240 = vadd.f32 %v6239, 1.0
    %v6241 = vmul.f32 %v6240, %v2770
    %v6242 = vand.u32 2147483647, %v2770
    %vm6243 = vcmp.lt.f32.partialorder %v6242, 0.0004427343
    %v6244 = vsel %vm6243, %v6241, %v6238
    %v6245 = vadd.f32 %v2772, 1.0
    %v6246 = vlog2.pop %v6245
    %v6247 = vmul.f32 %v6246, 0.6931472
    %v6248 = vmul.f32 -0.5, %v2772
    %v6249 = vadd.f32 %v6248, 1.0
    %v6250 = vmul.f32 %v6249, %v2772
    %v6251 = vand.u32 2147483647, %v2772
    %vm6252 = vcmp.lt.f32.partialorder %v6251, 0.0004427343
    %v6253 = vsel %vm6252, %v6250, %v6247
    %v6254 = vadd.f32 %v2774, 1.0
    %v6255 = vlog2.pop %v6254
    %v6256 = vmul.f32 %v6255, 0.6931472
    %v6257 = vmul.f32 -0.5, %v2774
    %v6258 = vadd.f32 %v6257, 1.0
    %v6259 = vmul.f32 %v6258, %v2774
    %v6260 = vand.u32 2147483647, %v2774
    %vm6261 = vcmp.lt.f32.partialorder %v6260, 0.0004427343
    %v6262 = vsel %vm6261, %v6259, %v6256
    %v6263 = vadd.f32 %v2776, 1.0
    %v6264 = vlog2.pop %v6263
    %v6265 = vmul.f32 %v6264, 0.6931472
    %v6266 = vmul.f32 -0.5, %v2776
    %v6267 = vadd.f32 %v6266, 1.0
    %v6268 = vmul.f32 %v6267, %v2776
    %v6269 = vand.u32 2147483647, %v2776
    %vm6270 = vcmp.lt.f32.partialorder %v6269, 0.0004427343
    %v6271 = vsel %vm6270, %v6268, %v6265
    %v6272 = vadd.f32 %v2778, 1.0
    %v6273 = vlog2.pop %v6272
    %v6274 = vmul.f32 %v6273, 0.6931472
    %v6275 = vmul.f32 -0.5, %v2778
    %v6276 = vadd.f32 %v6275, 1.0
    %v6277 = vmul.f32 %v6276, %v2778
    %v6278 = vand.u32 2147483647, %v2778
    %vm6279 = vcmp.lt.f32.partialorder %v6278, 0.0004427343
    %v6280 = vsel %vm6279, %v6277, %v6274
    %v6281 = vadd.f32 %v2780, 1.0
    %v6282 = vlog2.pop %v6281
    %v6283 = vmul.f32 %v6282, 0.6931472
    %v6284 = vmul.f32 -0.5, %v2780
    %v6285 = vadd.f32 %v6284, 1.0
    %v6286 = vmul.f32 %v6285, %v2780
    %v6287 = vand.u32 2147483647, %v2780
    %vm6288 = vcmp.lt.f32.partialorder %v6287, 0.0004427343
    %v6289 = vsel %vm6288, %v6286, %v6283
    %v6290 = vadd.f32 %v2782, 1.0
    %v6291 = vlog2.pop %v6290
    %v6292 = vmul.f32 %v6291, 0.6931472
    %v6293 = vmul.f32 -0.5, %v2782
    %v6294 = vadd.f32 %v6293, 1.0
    %v6295 = vmul.f32 %v6294, %v2782
    %v6296 = vand.u32 2147483647, %v2782
    %vm6297 = vcmp.lt.f32.partialorder %v6296, 0.0004427343
    %v6298 = vsel %vm6297, %v6295, %v6292
    %v6299 = vadd.f32 %v2784, 1.0
    %v6300 = vlog2.pop %v6299
    %v6301 = vmul.f32 %v6300, 0.6931472
    %v6302 = vmul.f32 -0.5, %v2784
    %v6303 = vadd.f32 %v6302, 1.0
    %v6304 = vmul.f32 %v6303, %v2784
    %v6305 = vand.u32 2147483647, %v2784
    %vm6306 = vcmp.lt.f32.partialorder %v6305, 0.0004427343
    %v6307 = vsel %vm6306, %v6304, %v6301
    %v6308 = vadd.f32 %v2786, 1.0
    %v6309 = vlog2.pop %v6308
    %v6310 = vmul.f32 %v6309, 0.6931472
    %v6311 = vmul.f32 -0.5, %v2786
    %v6312 = vadd.f32 %v6311, 1.0
    %v6313 = vmul.f32 %v6312, %v2786
    %v6314 = vand.u32 2147483647, %v2786
    %vm6315 = vcmp.lt.f32.partialorder %v6314, 0.0004427343
    %v6316 = vsel %vm6315, %v6313, %v6310
    %v6317 = vadd.f32 %v2788, 1.0
    %v6318 = vlog2.pop %v6317
    %v6319 = vmul.f32 %v6318, 0.6931472
    %v6320 = vmul.f32 -0.5, %v2788
    %v6321 = vadd.f32 %v6320, 1.0
    %v6322 = vmul.f32 %v6321, %v2788
    %v6323 = vand.u32 2147483647, %v2788
    %vm6324 = vcmp.lt.f32.partialorder %v6323, 0.0004427343
    %v6325 = vsel %vm6324, %v6322, %v6319
    %v6326 = vadd.f32 %v2790, 1.0
    %v6327 = vlog2.pop %v6326
    %v6328 = vmul.f32 %v6327, 0.6931472
    %v6329 = vmul.f32 -0.5, %v2790
    %v6330 = vadd.f32 %v6329, 1.0
    %v6331 = vmul.f32 %v6330, %v2790
    %v6332 = vand.u32 2147483647, %v2790
    %vm6333 = vcmp.lt.f32.partialorder %v6332, 0.0004427343
    %v6334 = vsel %vm6333, %v6331, %v6328
    %v6335 = vadd.f32 %v2792, 1.0
    %v6336 = vlog2.pop %v6335
    %v6337 = vmul.f32 %v6336, 0.6931472
    %v6338 = vmul.f32 -0.5, %v2792
    %v6339 = vadd.f32 %v6338, 1.0
    %v6340 = vmul.f32 %v6339, %v2792
    %v6341 = vand.u32 2147483647, %v2792
    %vm6342 = vcmp.lt.f32.partialorder %v6341, 0.0004427343
    %v6343 = vsel %vm6342, %v6340, %v6337
    %v6344 = vadd.f32 %v2794, 1.0
    %v6345 = vlog2.pop %v6344
    %v6346 = vmul.f32 %v6345, 0.6931472
    %v6347 = vmul.f32 -0.5, %v2794
    %v6348 = vadd.f32 %v6347, 1.0
    %v6349 = vmul.f32 %v6348, %v2794
    %v6350 = vand.u32 2147483647, %v2794
    %vm6351 = vcmp.lt.f32.partialorder %v6350, 0.0004427343
    %v6352 = vsel %vm6351, %v6349, %v6346
    %v6353 = vadd.f32 %v2796, 1.0
    %v6354 = vlog2.pop %v6353
    %v6355 = vmul.f32 %v6354, 0.6931472
    %v6356 = vmul.f32 -0.5, %v2796
    %v6357 = vadd.f32 %v6356, 1.0
    %v6358 = vmul.f32 %v6357, %v2796
    %v6359 = vand.u32 2147483647, %v2796
    %vm6360 = vcmp.lt.f32.partialorder %v6359, 0.0004427343
    %v6361 = vsel %vm6360, %v6358, %v6355
    %v6362 = vadd.f32 %v2798, 1.0
    %v6363 = vlog2.pop %v6362
    %v6364 = vmul.f32 %v6363, 0.6931472
    %v6365 = vmul.f32 -0.5, %v2798
    %v6366 = vadd.f32 %v6365, 1.0
    %v6367 = vmul.f32 %v6366, %v2798
    %v6368 = vand.u32 2147483647, %v2798
    %vm6369 = vcmp.lt.f32.partialorder %v6368, 0.0004427343
    %v6370 = vsel %vm6369, %v6367, %v6364
    %v6371 = vadd.f32 %v2800, 1.0
    %v6372 = vlog2.pop %v6371
    %v6373 = vmul.f32 %v6372, 0.6931472
    %v6374 = vmul.f32 -0.5, %v2800
    %v6375 = vadd.f32 %v6374, 1.0
    %v6376 = vmul.f32 %v6375, %v2800
    %v6377 = vand.u32 2147483647, %v2800
    %vm6378 = vcmp.lt.f32.partialorder %v6377, 0.0004427343
    %v6379 = vsel %vm6378, %v6376, %v6373
    %v6380 = vadd.f32 %v2802, 1.0
    %v6381 = vlog2.pop %v6380
    %v6382 = vmul.f32 %v6381, 0.6931472
    %v6383 = vmul.f32 -0.5, %v2802
    %v6384 = vadd.f32 %v6383, 1.0
    %v6385 = vmul.f32 %v6384, %v2802
    %v6386 = vand.u32 2147483647, %v2802
    %vm6387 = vcmp.lt.f32.partialorder %v6386, 0.0004427343
    %v6388 = vsel %vm6387, %v6385, %v6382
    %v6389 = vadd.f32 %v2804, 1.0
    %v6390 = vlog2.pop %v6389
    %v6391 = vmul.f32 %v6390, 0.6931472
    %v6392 = vmul.f32 -0.5, %v2804
    %v6393 = vadd.f32 %v6392, 1.0
    %v6394 = vmul.f32 %v6393, %v2804
    %v6395 = vand.u32 2147483647, %v2804
    %vm6396 = vcmp.lt.f32.partialorder %v6395, 0.0004427343
    %v6397 = vsel %vm6396, %v6394, %v6391
    %v6398 = vadd.f32 %v2806, 1.0
    %v6399 = vlog2.pop %v6398
    %v6400 = vmul.f32 %v6399, 0.6931472
    %v6401 = vmul.f32 -0.5, %v2806
    %v6402 = vadd.f32 %v6401, 1.0
    %v6403 = vmul.f32 %v6402, %v2806
    %v6404 = vand.u32 2147483647, %v2806
    %vm6405 = vcmp.lt.f32.partialorder %v6404, 0.0004427343
    %v6406 = vsel %vm6405, %v6403, %v6400
    %v6407 = vadd.f32 %v2808, 1.0
    %v6408 = vlog2.pop %v6407
    %v6409 = vmul.f32 %v6408, 0.6931472
    %v6410 = vmul.f32 -0.5, %v2808
    %v6411 = vadd.f32 %v6410, 1.0
    %v6412 = vmul.f32 %v6411, %v2808
    %v6413 = vand.u32 2147483647, %v2808
    %vm6414 = vcmp.lt.f32.partialorder %v6413, 0.0004427343
    %v6415 = vsel %vm6414, %v6412, %v6409
    %v6416 = vadd.f32 %v2810, 1.0
    %v6417 = vlog2.pop %v6416
    %v6418 = vmul.f32 %v6417, 0.6931472
    %v6419 = vmul.f32 -0.5, %v2810
    %v6420 = vadd.f32 %v6419, 1.0
    %v6421 = vmul.f32 %v6420, %v2810
    %v6422 = vand.u32 2147483647, %v2810
    %vm6423 = vcmp.lt.f32.partialorder %v6422, 0.0004427343
    %v6424 = vsel %vm6423, %v6421, %v6418
    %v6425 = vadd.f32 %v2812, 1.0
    %v6426 = vlog2.pop %v6425
    %v6427 = vmul.f32 %v6426, 0.6931472
    %v6428 = vmul.f32 -0.5, %v2812
    %v6429 = vadd.f32 %v6428, 1.0
    %v6430 = vmul.f32 %v6429, %v2812
    %v6431 = vand.u32 2147483647, %v2812
    %vm6432 = vcmp.lt.f32.partialorder %v6431, 0.0004427343
    %v6433 = vsel %vm6432, %v6430, %v6427
    %v6434 = vadd.f32 %v2814, 1.0
    %v6435 = vlog2.pop %v6434
    %v6436 = vmul.f32 %v6435, 0.6931472
    %v6437 = vmul.f32 -0.5, %v2814
    %v6438 = vadd.f32 %v6437, 1.0
    %v6439 = vmul.f32 %v6438, %v2814
    %v6440 = vand.u32 2147483647, %v2814
    %vm6441 = vcmp.lt.f32.partialorder %v6440, 0.0004427343
    %v6442 = vsel %vm6441, %v6439, %v6436
    %v6443 = vadd.f32 %v2816, 1.0
    %v6444 = vlog2.pop %v6443
    %v6445 = vmul.f32 %v6444, 0.6931472
    %v6446 = vmul.f32 -0.5, %v2816
    %v6447 = vadd.f32 %v6446, 1.0
    %v6448 = vmul.f32 %v6447, %v2816
    %v6449 = vand.u32 2147483647, %v2816
    %vm6450 = vcmp.lt.f32.partialorder %v6449, 0.0004427343
    %v6451 = vsel %vm6450, %v6448, %v6445
    %v6452 = vadd.f32 %v2818, 1.0
    %v6453 = vlog2.pop %v6452
    %v6454 = vmul.f32 %v6453, 0.6931472
    %v6455 = vmul.f32 -0.5, %v2818
    %v6456 = vadd.f32 %v6455, 1.0
    %v6457 = vmul.f32 %v6456, %v2818
    %v6458 = vand.u32 2147483647, %v2818
    %vm6459 = vcmp.lt.f32.partialorder %v6458, 0.0004427343
    %v6460 = vsel %vm6459, %v6457, %v6454
    %v6461 = vadd.f32 %v2820, 1.0
    %v6462 = vlog2.pop %v6461
    %v6463 = vmul.f32 %v6462, 0.6931472
    %v6464 = vmul.f32 -0.5, %v2820
    %v6465 = vadd.f32 %v6464, 1.0
    %v6466 = vmul.f32 %v6465, %v2820
    %v6467 = vand.u32 2147483647, %v2820
    %vm6468 = vcmp.lt.f32.partialorder %v6467, 0.0004427343
    %v6469 = vsel %vm6468, %v6466, %v6463
    %v6470 = vadd.f32 %v2822, 1.0
    %v6471 = vlog2.pop %v6470
    %v6472 = vmul.f32 %v6471, 0.6931472
    %v6473 = vmul.f32 -0.5, %v2822
    %v6474 = vadd.f32 %v6473, 1.0
    %v6475 = vmul.f32 %v6474, %v2822
    %v6476 = vand.u32 2147483647, %v2822
    %vm6477 = vcmp.lt.f32.partialorder %v6476, 0.0004427343
    %v6478 = vsel %vm6477, %v6475, %v6472
    %v6479 = vadd.f32 %v2824, 1.0
    %v6480 = vlog2.pop %v6479
    %v6481 = vmul.f32 %v6480, 0.6931472
    %v6482 = vmul.f32 -0.5, %v2824
    %v6483 = vadd.f32 %v6482, 1.0
    %v6484 = vmul.f32 %v6483, %v2824
    %v6485 = vand.u32 2147483647, %v2824
    %vm6486 = vcmp.lt.f32.partialorder %v6485, 0.0004427343
    %v6487 = vsel %vm6486, %v6484, %v6481
    %v6488 = vadd.f32 %v2826, 1.0
    %v6489 = vlog2.pop %v6488
    %v6490 = vmul.f32 %v6489, 0.6931472
    %v6491 = vmul.f32 -0.5, %v2826
    %v6492 = vadd.f32 %v6491, 1.0
    %v6493 = vmul.f32 %v6492, %v2826
    %v6494 = vand.u32 2147483647, %v2826
    %vm6495 = vcmp.lt.f32.partialorder %v6494, 0.0004427343
    %v6496 = vsel %vm6495, %v6493, %v6490
    %v6497 = vadd.f32 %v2828, 1.0
    %v6498 = vlog2.pop %v6497
    %v6499 = vmul.f32 %v6498, 0.6931472
    %v6500 = vmul.f32 -0.5, %v2828
    %v6501 = vadd.f32 %v6500, 1.0
    %v6502 = vmul.f32 %v6501, %v2828
    %v6503 = vand.u32 2147483647, %v2828
    %vm6504 = vcmp.lt.f32.partialorder %v6503, 0.0004427343
    %v6505 = vsel %vm6504, %v6502, %v6499
    %v6506 = vadd.f32 %v2830, 1.0
    %v6507 = vlog2.pop %v6506
    %v6508 = vmul.f32 %v6507, 0.6931472
    %v6509 = vmul.f32 -0.5, %v2830
    %v6510 = vadd.f32 %v6509, 1.0
    %v6511 = vmul.f32 %v6510, %v2830
    %v6512 = vand.u32 2147483647, %v2830
    %vm6513 = vcmp.lt.f32.partialorder %v6512, 0.0004427343
    %v6514 = vsel %vm6513, %v6511, %v6508
    %v6515 = vadd.f32 %v2832, 1.0
    %v6516 = vlog2.pop %v6515
    %v6517 = vmul.f32 %v6516, 0.6931472
    %v6518 = vmul.f32 -0.5, %v2832
    %v6519 = vadd.f32 %v6518, 1.0
    %v6520 = vmul.f32 %v6519, %v2832
    %v6521 = vand.u32 2147483647, %v2832
    %vm6522 = vcmp.lt.f32.partialorder %v6521, 0.0004427343
    %v6523 = vsel %vm6522, %v6520, %v6517
    %v6524 = vadd.f32 %v2834, 1.0
    %v6525 = vlog2.pop %v6524
    %v6526 = vmul.f32 %v6525, 0.6931472
    %v6527 = vmul.f32 -0.5, %v2834
    %v6528 = vadd.f32 %v6527, 1.0
    %v6529 = vmul.f32 %v6528, %v2834
    %v6530 = vand.u32 2147483647, %v2834
    %vm6531 = vcmp.lt.f32.partialorder %v6530, 0.0004427343
    %v6532 = vsel %vm6531, %v6529, %v6526
    %v6533 = vadd.f32 %v2836, 1.0
    %v6534 = vlog2.pop %v6533
    %v6535 = vmul.f32 %v6534, 0.6931472
    %v6536 = vmul.f32 -0.5, %v2836
    %v6537 = vadd.f32 %v6536, 1.0
    %v6538 = vmul.f32 %v6537, %v2836
    %v6539 = vand.u32 2147483647, %v2836
    %vm6540 = vcmp.lt.f32.partialorder %v6539, 0.0004427343
    %v6541 = vsel %vm6540, %v6538, %v6535
    %v6542 = vadd.f32 %v2838, 1.0
    %v6543 = vlog2.pop %v6542
    %v6544 = vmul.f32 %v6543, 0.6931472
    %v6545 = vmul.f32 -0.5, %v2838
    %v6546 = vadd.f32 %v6545, 1.0
    %v6547 = vmul.f32 %v6546, %v2838
    %v6548 = vand.u32 2147483647, %v2838
    %vm6549 = vcmp.lt.f32.partialorder %v6548, 0.0004427343
    %v6550 = vsel %vm6549, %v6547, %v6544
    %v6551 = vadd.f32 %v2840, 1.0
    %v6552 = vlog2.pop %v6551
    %v6553 = vmul.f32 %v6552, 0.6931472
    %v6554 = vmul.f32 -0.5, %v2840
    %v6555 = vadd.f32 %v6554, 1.0
    %v6556 = vmul.f32 %v6555, %v2840
    %v6557 = vand.u32 2147483647, %v2840
    %vm6558 = vcmp.lt.f32.partialorder %v6557, 0.0004427343
    %v6559 = vsel %vm6558, %v6556, %v6553
    %v6560 = vadd.f32 %v2842, 1.0
    %v6561 = vlog2.pop %v6560
    %v6562 = vmul.f32 %v6561, 0.6931472
    %v6563 = vmul.f32 -0.5, %v2842
    %v6564 = vadd.f32 %v6563, 1.0
    %v6565 = vmul.f32 %v6564, %v2842
    %v6566 = vand.u32 2147483647, %v2842
    %vm6567 = vcmp.lt.f32.partialorder %v6566, 0.0004427343
    %v6568 = vsel %vm6567, %v6565, %v6562
    %v6569 = vadd.f32 %v2844, 1.0
    %v6570 = vlog2.pop %v6569
    %v6571 = vmul.f32 %v6570, 0.6931472
    %v6572 = vmul.f32 -0.5, %v2844
    %v6573 = vadd.f32 %v6572, 1.0
    %v6574 = vmul.f32 %v6573, %v2844
    %v6575 = vand.u32 2147483647, %v2844
    %vm6576 = vcmp.lt.f32.partialorder %v6575, 0.0004427343
    %v6577 = vsel %vm6576, %v6574, %v6571
    %v6578 = vadd.f32 %v2846, 1.0
    %v6579 = vlog2.pop %v6578
    %v6580 = vmul.f32 %v6579, 0.6931472
    %v6581 = vmul.f32 -0.5, %v2846
    %v6582 = vadd.f32 %v6581, 1.0
    %v6583 = vmul.f32 %v6582, %v2846
    %v6584 = vand.u32 2147483647, %v2846
    %vm6585 = vcmp.lt.f32.partialorder %v6584, 0.0004427343
    %v6586 = vsel %vm6585, %v6583, %v6580
    %v6587 = vadd.f32 %v2848, 1.0
    %v6588 = vlog2.pop %v6587
    %v6589 = vmul.f32 %v6588, 0.6931472
    %v6590 = vmul.f32 -0.5, %v2848
    %v6591 = vadd.f32 %v6590, 1.0
    %v6592 = vmul.f32 %v6591, %v2848
    %v6593 = vand.u32 2147483647, %v2848
    %vm6594 = vcmp.lt.f32.partialorder %v6593, 0.0004427343
    %v6595 = vsel %vm6594, %v6592, %v6589
    %v6596 = vadd.f32 %v2850, 1.0
    %v6597 = vlog2.pop %v6596
    %v6598 = vmul.f32 %v6597, 0.6931472
    %v6599 = vmul.f32 -0.5, %v2850
    %v6600 = vadd.f32 %v6599, 1.0
    %v6601 = vmul.f32 %v6600, %v2850
    %v6602 = vand.u32 2147483647, %v2850
    %vm6603 = vcmp.lt.f32.partialorder %v6602, 0.0004427343
    %v6604 = vsel %vm6603, %v6601, %v6598
    %v6605 = vadd.f32 %v2852, 1.0
    %v6606 = vlog2.pop %v6605
    %v6607 = vmul.f32 %v6606, 0.6931472
    %v6608 = vmul.f32 -0.5, %v2852
    %v6609 = vadd.f32 %v6608, 1.0
    %v6610 = vmul.f32 %v6609, %v2852
    %v6611 = vand.u32 2147483647, %v2852
    %vm6612 = vcmp.lt.f32.partialorder %v6611, 0.0004427343
    %v6613 = vsel %vm6612, %v6610, %v6607
    %v6614 = vadd.f32 %v2854, 1.0
    %v6615 = vlog2.pop %v6614
    %v6616 = vmul.f32 %v6615, 0.6931472
    %v6617 = vmul.f32 -0.5, %v2854
    %v6618 = vadd.f32 %v6617, 1.0
    %v6619 = vmul.f32 %v6618, %v2854
    %v6620 = vand.u32 2147483647, %v2854
    %vm6621 = vcmp.lt.f32.partialorder %v6620, 0.0004427343
    %v6622 = vsel %vm6621, %v6619, %v6616
    %v6623 = vadd.f32 %v2856, 1.0
    %v6624 = vlog2.pop %v6623
    %v6625 = vmul.f32 %v6624, 0.6931472
    %v6626 = vmul.f32 -0.5, %v2856
    %v6627 = vadd.f32 %v6626, 1.0
    %v6628 = vmul.f32 %v6627, %v2856
    %v6629 = vand.u32 2147483647, %v2856
    %vm6630 = vcmp.lt.f32.partialorder %v6629, 0.0004427343
    %v6631 = vsel %vm6630, %v6628, %v6625
    %v6632 = vadd.f32 %v2858, 1.0
    %v6633 = vlog2.pop %v6632
    %v6634 = vmul.f32 %v6633, 0.6931472
    %v6635 = vmul.f32 -0.5, %v2858
    %v6636 = vadd.f32 %v6635, 1.0
    %v6637 = vmul.f32 %v6636, %v2858
    %v6638 = vand.u32 2147483647, %v2858
    %vm6639 = vcmp.lt.f32.partialorder %v6638, 0.0004427343
    %v6640 = vsel %vm6639, %v6637, %v6634
    %v6641 = vadd.f32 %v2860, 1.0
    %v6642 = vlog2.pop %v6641
    %v6643 = vmul.f32 %v6642, 0.6931472
    %v6644 = vmul.f32 -0.5, %v2860
    %v6645 = vadd.f32 %v6644, 1.0
    %v6646 = vmul.f32 %v6645, %v2860
    %v6647 = vand.u32 2147483647, %v2860
    %vm6648 = vcmp.lt.f32.partialorder %v6647, 0.0004427343
    %v6649 = vsel %vm6648, %v6646, %v6643
    %v6650 = vadd.f32 %v2862, 1.0
    %v6651 = vlog2.pop %v6650
    %v6652 = vmul.f32 %v6651, 0.6931472
    %v6653 = vmul.f32 -0.5, %v2862
    %v6654 = vadd.f32 %v6653, 1.0
    %v6655 = vmul.f32 %v6654, %v2862
    %v6656 = vand.u32 2147483647, %v2862
    %vm6657 = vcmp.lt.f32.partialorder %v6656, 0.0004427343
    %v6658 = vsel %vm6657, %v6655, %v6652
    %v6659 = vadd.f32 %v2864, 1.0
    %v6660 = vlog2.pop %v6659
    %v6661 = vmul.f32 %v6660, 0.6931472
    %v6662 = vmul.f32 -0.5, %v2864
    %v6663 = vadd.f32 %v6662, 1.0
    %v6664 = vmul.f32 %v6663, %v2864
    %v6665 = vand.u32 2147483647, %v2864
    %vm6666 = vcmp.lt.f32.partialorder %v6665, 0.0004427343
    %v6667 = vsel %vm6666, %v6664, %v6661
    %v6668 = vadd.f32 %v2866, 1.0
    %v6669 = vlog2.pop %v6668
    %v6670 = vmul.f32 %v6669, 0.6931472
    %v6671 = vmul.f32 -0.5, %v2866
    %v6672 = vadd.f32 %v6671, 1.0
    %v6673 = vmul.f32 %v6672, %v2866
    %v6674 = vand.u32 2147483647, %v2866
    %vm6675 = vcmp.lt.f32.partialorder %v6674, 0.0004427343
    %v6676 = vsel %vm6675, %v6673, %v6670
    %v6677 = vadd.f32 %v2868, 1.0
    %v6678 = vlog2.pop %v6677
    %v6679 = vmul.f32 %v6678, 0.6931472
    %v6680 = vmul.f32 -0.5, %v2868
    %v6681 = vadd.f32 %v6680, 1.0
    %v6682 = vmul.f32 %v6681, %v2868
    %v6683 = vand.u32 2147483647, %v2868
    %vm6684 = vcmp.lt.f32.partialorder %v6683, 0.0004427343
    %v6685 = vsel %vm6684, %v6682, %v6679
    %v6686 = vadd.f32 %v2870, 1.0
    %v6687 = vlog2.pop %v6686
    %v6688 = vmul.f32 %v6687, 0.6931472
    %v6689 = vmul.f32 -0.5, %v2870
    %v6690 = vadd.f32 %v6689, 1.0
    %v6691 = vmul.f32 %v6690, %v2870
    %v6692 = vand.u32 2147483647, %v2870
    %vm6693 = vcmp.lt.f32.partialorder %v6692, 0.0004427343
    %v6694 = vsel %vm6693, %v6691, %v6688
    %v6695 = vadd.f32 %v2872, 1.0
    %v6696 = vlog2.pop %v6695
    %v6697 = vmul.f32 %v6696, 0.6931472
    %v6698 = vmul.f32 -0.5, %v2872
    %v6699 = vadd.f32 %v6698, 1.0
    %v6700 = vmul.f32 %v6699, %v2872
    %v6701 = vand.u32 2147483647, %v2872
    %vm6702 = vcmp.lt.f32.partialorder %v6701, 0.0004427343
    %v6703 = vsel %vm6702, %v6700, %v6697
    %v6704 = vadd.f32 %v2874, 1.0
    %v6705 = vlog2.pop %v6704
    %v6706 = vmul.f32 %v6705, 0.6931472
    %v6707 = vmul.f32 -0.5, %v2874
    %v6708 = vadd.f32 %v6707, 1.0
    %v6709 = vmul.f32 %v6708, %v2874
    %v6710 = vand.u32 2147483647, %v2874
    %vm6711 = vcmp.lt.f32.partialorder %v6710, 0.0004427343
    %v6712 = vsel %vm6711, %v6709, %v6706
    %v6713 = vadd.f32 %v2876, 1.0
    %v6714 = vlog2.pop %v6713
    %v6715 = vmul.f32 %v6714, 0.6931472
    %v6716 = vmul.f32 -0.5, %v2876
    %v6717 = vadd.f32 %v6716, 1.0
    %v6718 = vmul.f32 %v6717, %v2876
    %v6719 = vand.u32 2147483647, %v2876
    %vm6720 = vcmp.lt.f32.partialorder %v6719, 0.0004427343
    %v6721 = vsel %vm6720, %v6718, %v6715
    %v6722 = vadd.f32 %v2878, 1.0
    %v6723 = vlog2.pop %v6722
    %v6724 = vmul.f32 %v6723, 0.6931472
    %v6725 = vmul.f32 -0.5, %v2878
    %v6726 = vadd.f32 %v6725, 1.0
    %v6727 = vmul.f32 %v6726, %v2878
    %v6728 = vand.u32 2147483647, %v2878
    %vm6729 = vcmp.lt.f32.partialorder %v6728, 0.0004427343
    %v6730 = vsel %vm6729, %v6727, %v6724
    %v6731 = vadd.f32 %v2880, 1.0
    %v6732 = vlog2.pop %v6731
    %v6733 = vmul.f32 %v6732, 0.6931472
    %v6734 = vmul.f32 -0.5, %v2880
    %v6735 = vadd.f32 %v6734, 1.0
    %v6736 = vmul.f32 %v6735, %v2880
    %v6737 = vand.u32 2147483647, %v2880
    %vm6738 = vcmp.lt.f32.partialorder %v6737, 0.0004427343
    %v6739 = vsel %vm6738, %v6736, %v6733
    %v6740 = vadd.f32 %v2882, 1.0
    %v6741 = vlog2.pop %v6740
    %v6742 = vmul.f32 %v6741, 0.6931472
    %v6743 = vmul.f32 -0.5, %v2882
    %v6744 = vadd.f32 %v6743, 1.0
    %v6745 = vmul.f32 %v6744, %v2882
    %v6746 = vand.u32 2147483647, %v2882
    %vm6747 = vcmp.lt.f32.partialorder %v6746, 0.0004427343
    %v6748 = vsel %vm6747, %v6745, %v6742
    %v6749 = vadd.f32 %v2884, 1.0
    %v6750 = vlog2.pop %v6749
    %v6751 = vmul.f32 %v6750, 0.6931472
    %v6752 = vmul.f32 -0.5, %v2884
    %v6753 = vadd.f32 %v6752, 1.0
    %v6754 = vmul.f32 %v6753, %v2884
    %v6755 = vand.u32 2147483647, %v2884
    %vm6756 = vcmp.lt.f32.partialorder %v6755, 0.0004427343
    %v6757 = vsel %vm6756, %v6754, %v6751
    %v6758 = vadd.f32 %v2886, 1.0
    %v6759 = vlog2.pop %v6758
    %v6760 = vmul.f32 %v6759, 0.6931472
    %v6761 = vmul.f32 -0.5, %v2886
    %v6762 = vadd.f32 %v6761, 1.0
    %v6763 = vmul.f32 %v6762, %v2886
    %v6764 = vand.u32 2147483647, %v2886
    %vm6765 = vcmp.lt.f32.partialorder %v6764, 0.0004427343
    %v6766 = vsel %vm6765, %v6763, %v6760
    %v6767 = vadd.f32 %v2888, 1.0
    %v6768 = vlog2.pop %v6767
    %v6769 = vmul.f32 %v6768, 0.6931472
    %v6770 = vmul.f32 -0.5, %v2888
    %v6771 = vadd.f32 %v6770, 1.0
    %v6772 = vmul.f32 %v6771, %v2888
    %v6773 = vand.u32 2147483647, %v2888
    %vm6774 = vcmp.lt.f32.partialorder %v6773, 0.0004427343
    %v6775 = vsel %vm6774, %v6772, %v6769
    %v6776 = vadd.f32 %v2890, 1.0
    %v6777 = vlog2.pop %v6776
    %v6778 = vmul.f32 %v6777, 0.6931472
    %v6779 = vmul.f32 -0.5, %v2890
    %v6780 = vadd.f32 %v6779, 1.0
    %v6781 = vmul.f32 %v6780, %v2890
    %v6782 = vand.u32 2147483647, %v2890
    %vm6783 = vcmp.lt.f32.partialorder %v6782, 0.0004427343
    %v6784 = vsel %vm6783, %v6781, %v6778
    %v6785 = vadd.f32 %v2892, 1.0
    %v6786 = vlog2.pop %v6785
    %v6787 = vmul.f32 %v6786, 0.6931472
    %v6788 = vmul.f32 -0.5, %v2892
    %v6789 = vadd.f32 %v6788, 1.0
    %v6790 = vmul.f32 %v6789, %v2892
    %v6791 = vand.u32 2147483647, %v2892
    %vm6792 = vcmp.lt.f32.partialorder %v6791, 0.0004427343
    %v6793 = vsel %vm6792, %v6790, %v6787
    %v6794 = vadd.f32 %v2894, 1.0
    %v6795 = vlog2.pop %v6794
    %v6796 = vmul.f32 %v6795, 0.6931472
    %v6797 = vmul.f32 -0.5, %v2894
    %v6798 = vadd.f32 %v6797, 1.0
    %v6799 = vmul.f32 %v6798, %v2894
    %v6800 = vand.u32 2147483647, %v2894
    %vm6801 = vcmp.lt.f32.partialorder %v6800, 0.0004427343
    %v6802 = vsel %vm6801, %v6799, %v6796
    %v6803 = vadd.f32 %v2896, 1.0
    %v6804 = vlog2.pop %v6803
    %v6805 = vmul.f32 %v6804, 0.6931472
    %v6806 = vmul.f32 -0.5, %v2896
    %v6807 = vadd.f32 %v6806, 1.0
    %v6808 = vmul.f32 %v6807, %v2896
    %v6809 = vand.u32 2147483647, %v2896
    %vm6810 = vcmp.lt.f32.partialorder %v6809, 0.0004427343
    %v6811 = vsel %vm6810, %v6808, %v6805
    %v6812 = vadd.f32 %v2898, 1.0
    %v6813 = vlog2.pop %v6812
    %v6814 = vmul.f32 %v6813, 0.6931472
    %v6815 = vmul.f32 -0.5, %v2898
    %v6816 = vadd.f32 %v6815, 1.0
    %v6817 = vmul.f32 %v6816, %v2898
    %v6818 = vand.u32 2147483647, %v2898
    %vm6819 = vcmp.lt.f32.partialorder %v6818, 0.0004427343
    %v6820 = vsel %vm6819, %v6817, %v6814
    %v6821 = vadd.f32 %v2900, 1.0
    %v6822 = vlog2.pop %v6821
    %v6823 = vmul.f32 %v6822, 0.6931472
    %v6824 = vmul.f32 -0.5, %v2900
    %v6825 = vadd.f32 %v6824, 1.0
    %v6826 = vmul.f32 %v6825, %v2900
    %v6827 = vand.u32 2147483647, %v2900
    %vm6828 = vcmp.lt.f32.partialorder %v6827, 0.0004427343
    %v6829 = vsel %vm6828, %v6826, %v6823
    %v6830 = vadd.f32 %v2902, 1.0
    %v6831 = vlog2.pop %v6830
    %v6832 = vmul.f32 %v6831, 0.6931472
    %v6833 = vmul.f32 -0.5, %v2902
    %v6834 = vadd.f32 %v6833, 1.0
    %v6835 = vmul.f32 %v6834, %v2902
    %v6836 = vand.u32 2147483647, %v2902
    %vm6837 = vcmp.lt.f32.partialorder %v6836, 0.0004427343
    %v6838 = vsel %vm6837, %v6835, %v6832
    %v6839 = vadd.f32 %v2904, 1.0
    %v6840 = vlog2.pop %v6839
    %v6841 = vmul.f32 %v6840, 0.6931472
    %v6842 = vmul.f32 -0.5, %v2904
    %v6843 = vadd.f32 %v6842, 1.0
    %v6844 = vmul.f32 %v6843, %v2904
    %v6845 = vand.u32 2147483647, %v2904
    %vm6846 = vcmp.lt.f32.partialorder %v6845, 0.0004427343
    %v6847 = vsel %vm6846, %v6844, %v6841
    %v6848 = vadd.f32 %v2906, 1.0
    %v6849 = vlog2.pop %v6848
    %v6850 = vmul.f32 %v6849, 0.6931472
    %v6851 = vmul.f32 -0.5, %v2906
    %v6852 = vadd.f32 %v6851, 1.0
    %v6853 = vmul.f32 %v6852, %v2906
    %v6854 = vand.u32 2147483647, %v2906
    %vm6855 = vcmp.lt.f32.partialorder %v6854, 0.0004427343
    %v6856 = vsel %vm6855, %v6853, %v6850
    %v6857 = vadd.f32 %v2908, 1.0
    %v6858 = vlog2.pop %v6857
    %v6859 = vmul.f32 %v6858, 0.6931472
    %v6860 = vmul.f32 -0.5, %v2908
    %v6861 = vadd.f32 %v6860, 1.0
    %v6862 = vmul.f32 %v6861, %v2908
    %v6863 = vand.u32 2147483647, %v2908
    %vm6864 = vcmp.lt.f32.partialorder %v6863, 0.0004427343
    %v6865 = vsel %vm6864, %v6862, %v6859
    %v6866 = vadd.f32 %v2910, 1.0
    %v6867 = vlog2.pop %v6866
    %v6868 = vmul.f32 %v6867, 0.6931472
    %v6869 = vmul.f32 -0.5, %v2910
    %v6870 = vadd.f32 %v6869, 1.0
    %v6871 = vmul.f32 %v6870, %v2910
    %v6872 = vand.u32 2147483647, %v2910
    %vm6873 = vcmp.lt.f32.partialorder %v6872, 0.0004427343
    %v6874 = vsel %vm6873, %v6871, %v6868
    %v6875 = vadd.f32 %v2912, 1.0
    %v6876 = vlog2.pop %v6875
    %v6877 = vmul.f32 %v6876, 0.6931472
    %v6878 = vmul.f32 -0.5, %v2912
    %v6879 = vadd.f32 %v6878, 1.0
    %v6880 = vmul.f32 %v6879, %v2912
    %v6881 = vand.u32 2147483647, %v2912
    %vm6882 = vcmp.lt.f32.partialorder %v6881, 0.0004427343
    %v6883 = vsel %vm6882, %v6880, %v6877
    %v6884 = vadd.f32 %v2914, 1.0
    %v6885 = vlog2.pop %v6884
    %v6886 = vmul.f32 %v6885, 0.6931472
    %v6887 = vmul.f32 -0.5, %v2914
    %v6888 = vadd.f32 %v6887, 1.0
    %v6889 = vmul.f32 %v6888, %v2914
    %v6890 = vand.u32 2147483647, %v2914
    %vm6891 = vcmp.lt.f32.partialorder %v6890, 0.0004427343
    %v6892 = vsel %vm6891, %v6889, %v6886
    %v6893 = vadd.f32 %v2916, 1.0
    %v6894 = vlog2.pop %v6893
    %v6895 = vmul.f32 %v6894, 0.6931472
    %v6896 = vmul.f32 -0.5, %v2916
    %v6897 = vadd.f32 %v6896, 1.0
    %v6898 = vmul.f32 %v6897, %v2916
    %v6899 = vand.u32 2147483647, %v2916
    %vm6900 = vcmp.lt.f32.partialorder %v6899, 0.0004427343
    %v6901 = vsel %vm6900, %v6898, %v6895
    %v6902 = vadd.f32 %v2918, 1.0
    %v6903 = vlog2.pop %v6902
    %v6904 = vmul.f32 %v6903, 0.6931472
    %v6905 = vmul.f32 -0.5, %v2918
    %v6906 = vadd.f32 %v6905, 1.0
    %v6907 = vmul.f32 %v6906, %v2918
    %v6908 = vand.u32 2147483647, %v2918
    %vm6909 = vcmp.lt.f32.partialorder %v6908, 0.0004427343
    %v6910 = vsel %vm6909, %v6907, %v6904
    %v6911 = vadd.f32 %v2920, 1.0
    %v6912 = vlog2.pop %v6911
    %v6913 = vmul.f32 %v6912, 0.6931472
    %v6914 = vmul.f32 -0.5, %v2920
    %v6915 = vadd.f32 %v6914, 1.0
    %v6916 = vmul.f32 %v6915, %v2920
    %v6917 = vand.u32 2147483647, %v2920
    %vm6918 = vcmp.lt.f32.partialorder %v6917, 0.0004427343
    %v6919 = vsel %vm6918, %v6916, %v6913
    %v6920 = vadd.f32 %v2922, 1.0
    %v6921 = vlog2.pop %v6920
    %v6922 = vmul.f32 %v6921, 0.6931472
    %v6923 = vmul.f32 -0.5, %v2922
    %v6924 = vadd.f32 %v6923, 1.0
    %v6925 = vmul.f32 %v6924, %v2922
    %v6926 = vand.u32 2147483647, %v2922
    %vm6927 = vcmp.lt.f32.partialorder %v6926, 0.0004427343
    %v6928 = vsel %vm6927, %v6925, %v6922
    %v6929 = vadd.f32 %v2924, 1.0
    %v6930 = vlog2.pop %v6929
    %v6931 = vmul.f32 %v6930, 0.6931472
    %v6932 = vmul.f32 -0.5, %v2924
    %v6933 = vadd.f32 %v6932, 1.0
    %v6934 = vmul.f32 %v6933, %v2924
    %v6935 = vand.u32 2147483647, %v2924
    %vm6936 = vcmp.lt.f32.partialorder %v6935, 0.0004427343
    %v6937 = vsel %vm6936, %v6934, %v6931
    %v6938 = vadd.f32 %v2926, 1.0
    %v6939 = vlog2.pop %v6938
    %v6940 = vmul.f32 %v6939, 0.6931472
    %v6941 = vmul.f32 -0.5, %v2926
    %v6942 = vadd.f32 %v6941, 1.0
    %v6943 = vmul.f32 %v6942, %v2926
    %v6944 = vand.u32 2147483647, %v2926
    %vm6945 = vcmp.lt.f32.partialorder %v6944, 0.0004427343
    %v6946 = vsel %vm6945, %v6943, %v6940
    %v6947 = vadd.f32 %v2928, 1.0
    %v6948 = vlog2.pop %v6947
    %v6949 = vmul.f32 %v6948, 0.6931472
    %v6950 = vmul.f32 -0.5, %v2928
    %v6951 = vadd.f32 %v6950, 1.0
    %v6952 = vmul.f32 %v6951, %v2928
    %v6953 = vand.u32 2147483647, %v2928
    %vm6954 = vcmp.lt.f32.partialorder %v6953, 0.0004427343
    %v6955 = vsel %vm6954, %v6952, %v6949
    %v6956 = vadd.f32 %v2930, 1.0
    %v6957 = vlog2.pop %v6956
    %v6958 = vmul.f32 %v6957, 0.6931472
    %v6959 = vmul.f32 -0.5, %v2930
    %v6960 = vadd.f32 %v6959, 1.0
    %v6961 = vmul.f32 %v6960, %v2930
    %v6962 = vand.u32 2147483647, %v2930
    %vm6963 = vcmp.lt.f32.partialorder %v6962, 0.0004427343
    %v6964 = vsel %vm6963, %v6961, %v6958
    %v6965 = vadd.f32 %v2932, 1.0
    %v6966 = vlog2.pop %v6965
    %v6967 = vmul.f32 %v6966, 0.6931472
    %v6968 = vmul.f32 -0.5, %v2932
    %v6969 = vadd.f32 %v6968, 1.0
    %v6970 = vmul.f32 %v6969, %v2932
    %v6971 = vand.u32 2147483647, %v2932
    %vm6972 = vcmp.lt.f32.partialorder %v6971, 0.0004427343
    %v6973 = vsel %vm6972, %v6970, %v6967
    %v6974 = vadd.f32 %v2934, 1.0
    %v6975 = vlog2.pop %v6974
    %v6976 = vmul.f32 %v6975, 0.6931472
    %v6977 = vmul.f32 -0.5, %v2934
    %v6978 = vadd.f32 %v6977, 1.0
    %v6979 = vmul.f32 %v6978, %v2934
    %v6980 = vand.u32 2147483647, %v2934
    %vm6981 = vcmp.lt.f32.partialorder %v6980, 0.0004427343
    %v6982 = vsel %vm6981, %v6979, %v6976
    %v6983 = vadd.f32 %v2936, 1.0
    %v6984 = vlog2.pop %v6983
    %v6985 = vmul.f32 %v6984, 0.6931472
    %v6986 = vmul.f32 -0.5, %v2936
    %v6987 = vadd.f32 %v6986, 1.0
    %v6988 = vmul.f32 %v6987, %v2936
    %v6989 = vand.u32 2147483647, %v2936
    %vm6990 = vcmp.lt.f32.partialorder %v6989, 0.0004427343
    %v6991 = vsel %vm6990, %v6988, %v6985
    %v6992 = vadd.f32 %v2938, 1.0
    %v6993 = vlog2.pop %v6992
    %v6994 = vmul.f32 %v6993, 0.6931472
    %v6995 = vmul.f32 -0.5, %v2938
    %v6996 = vadd.f32 %v6995, 1.0
    %v6997 = vmul.f32 %v6996, %v2938
    %v6998 = vand.u32 2147483647, %v2938
    %vm6999 = vcmp.lt.f32.partialorder %v6998, 0.0004427343
    %v7000 = vsel %vm6999, %v6997, %v6994
    %v7001 = vadd.f32 %v2940, 1.0
    %v7002 = vlog2.pop %v7001
    %v7003 = vmul.f32 %v7002, 0.6931472
    %v7004 = vmul.f32 -0.5, %v2940
    %v7005 = vadd.f32 %v7004, 1.0
    %v7006 = vmul.f32 %v7005, %v2940
    %v7007 = vand.u32 2147483647, %v2940
    %vm7008 = vcmp.lt.f32.partialorder %v7007, 0.0004427343
    %v7009 = vsel %vm7008, %v7006, %v7003
    %v7010 = vadd.f32 %v2942, 1.0
    %v7011 = vlog2.pop %v7010
    %v7012 = vmul.f32 %v7011, 0.6931472
    %v7013 = vmul.f32 -0.5, %v2942
    %v7014 = vadd.f32 %v7013, 1.0
    %v7015 = vmul.f32 %v7014, %v2942
    %v7016 = vand.u32 2147483647, %v2942
    %vm7017 = vcmp.lt.f32.partialorder %v7016, 0.0004427343
    %v7018 = vsel %vm7017, %v7015, %v7012
    %v7019 = vadd.f32 %v2944, 1.0
    %v7020 = vlog2.pop %v7019
    %v7021 = vmul.f32 %v7020, 0.6931472
    %v7022 = vmul.f32 -0.5, %v2944
    %v7023 = vadd.f32 %v7022, 1.0
    %v7024 = vmul.f32 %v7023, %v2944
    %v7025 = vand.u32 2147483647, %v2944
    %vm7026 = vcmp.lt.f32.partialorder %v7025, 0.0004427343
    %v7027 = vsel %vm7026, %v7024, %v7021
    %v7028 = vadd.f32 %v2946, 1.0
    %v7029 = vlog2.pop %v7028
    %v7030 = vmul.f32 %v7029, 0.6931472
    %v7031 = vmul.f32 -0.5, %v2946
    %v7032 = vadd.f32 %v7031, 1.0
    %v7033 = vmul.f32 %v7032, %v2946
    %v7034 = vand.u32 2147483647, %v2946
    %vm7035 = vcmp.lt.f32.partialorder %v7034, 0.0004427343
    %v7036 = vsel %vm7035, %v7033, %v7030
    %v7037 = vadd.f32 %v2948, 1.0
    %v7038 = vlog2.pop %v7037
    %v7039 = vmul.f32 %v7038, 0.6931472
    %v7040 = vmul.f32 -0.5, %v2948
    %v7041 = vadd.f32 %v7040, 1.0
    %v7042 = vmul.f32 %v7041, %v2948
    %v7043 = vand.u32 2147483647, %v2948
    %vm7044 = vcmp.lt.f32.partialorder %v7043, 0.0004427343
    %v7045 = vsel %vm7044, %v7042, %v7039
    %v7046 = vadd.f32 %v2950, 1.0
    %v7047 = vlog2.pop %v7046
    %v7048 = vmul.f32 %v7047, 0.6931472
    %v7049 = vmul.f32 -0.5, %v2950
    %v7050 = vadd.f32 %v7049, 1.0
    %v7051 = vmul.f32 %v7050, %v2950
    %v7052 = vand.u32 2147483647, %v2950
    %vm7053 = vcmp.lt.f32.partialorder %v7052, 0.0004427343
    %v7054 = vsel %vm7053, %v7051, %v7048
    %v7055 = vadd.f32 %v2952, 1.0
    %v7056 = vlog2.pop %v7055
    %v7057 = vmul.f32 %v7056, 0.6931472
    %v7058 = vmul.f32 -0.5, %v2952
    %v7059 = vadd.f32 %v7058, 1.0
    %v7060 = vmul.f32 %v7059, %v2952
    %v7061 = vand.u32 2147483647, %v2952
    %vm7062 = vcmp.lt.f32.partialorder %v7061, 0.0004427343
    %v7063 = vsel %vm7062, %v7060, %v7057
    %v7064 = vadd.f32 %v2954, 1.0
    %v7065 = vlog2.pop %v7064
    %v7066 = vmul.f32 %v7065, 0.6931472
    %v7067 = vmul.f32 -0.5, %v2954
    %v7068 = vadd.f32 %v7067, 1.0
    %v7069 = vmul.f32 %v7068, %v2954
    %v7070 = vand.u32 2147483647, %v2954
    %vm7071 = vcmp.lt.f32.partialorder %v7070, 0.0004427343
    %v7072 = vsel %vm7071, %v7069, %v7066
    %v7073 = vadd.f32 %v2956, 1.0
    %v7074 = vlog2.pop %v7073
    %v7075 = vmul.f32 %v7074, 0.6931472
    %v7076 = vmul.f32 -0.5, %v2956
    %v7077 = vadd.f32 %v7076, 1.0
    %v7078 = vmul.f32 %v7077, %v2956
    %v7079 = vand.u32 2147483647, %v2956
    %vm7080 = vcmp.lt.f32.partialorder %v7079, 0.0004427343
    %v7081 = vsel %vm7080, %v7078, %v7075
    %v7082 = vadd.f32 %v2958, 1.0
    %v7083 = vlog2.pop %v7082
    %v7084 = vmul.f32 %v7083, 0.6931472
    %v7085 = vmul.f32 -0.5, %v2958
    %v7086 = vadd.f32 %v7085, 1.0
    %v7087 = vmul.f32 %v7086, %v2958
    %v7088 = vand.u32 2147483647, %v2958
    %vm7089 = vcmp.lt.f32.partialorder %v7088, 0.0004427343
    %v7090 = vsel %vm7089, %v7087, %v7084
    %v7091 = vadd.f32 %v2960, 1.0
    %v7092 = vlog2.pop %v7091
    %v7093 = vmul.f32 %v7092, 0.6931472
    %v7094 = vmul.f32 -0.5, %v2960
    %v7095 = vadd.f32 %v7094, 1.0
    %v7096 = vmul.f32 %v7095, %v2960
    %v7097 = vand.u32 2147483647, %v2960
    %vm7098 = vcmp.lt.f32.partialorder %v7097, 0.0004427343
    %v7099 = vsel %vm7098, %v7096, %v7093
    %v7100 = vadd.f32 %v2962, 1.0
    %v7101 = vlog2.pop %v7100
    %v7102 = vmul.f32 %v7101, 0.6931472
    %v7103 = vmul.f32 -0.5, %v2962
    %v7104 = vadd.f32 %v7103, 1.0
    %v7105 = vmul.f32 %v7104, %v2962
    %v7106 = vand.u32 2147483647, %v2962
    %vm7107 = vcmp.lt.f32.partialorder %v7106, 0.0004427343
    %v7108 = vsel %vm7107, %v7105, %v7102
    %v7109 = vadd.f32 %v2964, 1.0
    %v7110 = vlog2.pop %v7109
    %v7111 = vmul.f32 %v7110, 0.6931472
    %v7112 = vmul.f32 -0.5, %v2964
    %v7113 = vadd.f32 %v7112, 1.0
    %v7114 = vmul.f32 %v7113, %v2964
    %v7115 = vand.u32 2147483647, %v2964
    %vm7116 = vcmp.lt.f32.partialorder %v7115, 0.0004427343
    %v7117 = vsel %vm7116, %v7114, %v7111
    %v7118 = vadd.f32 %v2966, 1.0
    %v7119 = vlog2.pop %v7118
    %v7120 = vmul.f32 %v7119, 0.6931472
    %v7121 = vmul.f32 -0.5, %v2966
    %v7122 = vadd.f32 %v7121, 1.0
    %v7123 = vmul.f32 %v7122, %v2966
    %v7124 = vand.u32 2147483647, %v2966
    %vm7125 = vcmp.lt.f32.partialorder %v7124, 0.0004427343
    %v7126 = vsel %vm7125, %v7123, %v7120
    %v7127 = vadd.f32 %v2968, 1.0
    %v7128 = vlog2.pop %v7127
    %v7129 = vmul.f32 %v7128, 0.6931472
    %v7130 = vmul.f32 -0.5, %v2968
    %v7131 = vadd.f32 %v7130, 1.0
    %v7132 = vmul.f32 %v7131, %v2968
    %v7133 = vand.u32 2147483647, %v2968
    %vm7134 = vcmp.lt.f32.partialorder %v7133, 0.0004427343
    %v7135 = vsel %vm7134, %v7132, %v7129
    %v7136 = vadd.f32 %v2970, 1.0
    %v7137 = vlog2.pop %v7136
    %v7138 = vmul.f32 %v7137, 0.6931472
    %v7139 = vmul.f32 -0.5, %v2970
    %v7140 = vadd.f32 %v7139, 1.0
    %v7141 = vmul.f32 %v7140, %v2970
    %v7142 = vand.u32 2147483647, %v2970
    %vm7143 = vcmp.lt.f32.partialorder %v7142, 0.0004427343
    %v7144 = vsel %vm7143, %v7141, %v7138
    %v7145 = vadd.f32 %v2972, 1.0
    %v7146 = vlog2.pop %v7145
    %v7147 = vmul.f32 %v7146, 0.6931472
    %v7148 = vmul.f32 -0.5, %v2972
    %v7149 = vadd.f32 %v7148, 1.0
    %v7150 = vmul.f32 %v7149, %v2972
    %v7151 = vand.u32 2147483647, %v2972
    %vm7152 = vcmp.lt.f32.partialorder %v7151, 0.0004427343
    %v7153 = vsel %vm7152, %v7150, %v7147
    %v7154 = vadd.f32 %v2974, 1.0
    %v7155 = vlog2.pop %v7154
    %v7156 = vmul.f32 %v7155, 0.6931472
    %v7157 = vmul.f32 -0.5, %v2974
    %v7158 = vadd.f32 %v7157, 1.0
    %v7159 = vmul.f32 %v7158, %v2974
    %v7160 = vand.u32 2147483647, %v2974
    %vm7161 = vcmp.lt.f32.partialorder %v7160, 0.0004427343
    %v7162 = vsel %vm7161, %v7159, %v7156
    %v7163 = vadd.f32 %v2976, 1.0
    %v7164 = vlog2.pop %v7163
    %v7165 = vmul.f32 %v7164, 0.6931472
    %v7166 = vmul.f32 -0.5, %v2976
    %v7167 = vadd.f32 %v7166, 1.0
    %v7168 = vmul.f32 %v7167, %v2976
    %v7169 = vand.u32 2147483647, %v2976
    %vm7170 = vcmp.lt.f32.partialorder %v7169, 0.0004427343
    %v7171 = vsel %vm7170, %v7168, %v7165
    %v7172 = vadd.f32 %v2978, 1.0
    %v7173 = vlog2.pop %v7172
    %v7174 = vmul.f32 %v7173, 0.6931472
    %v7175 = vmul.f32 -0.5, %v2978
    %v7176 = vadd.f32 %v7175, 1.0
    %v7177 = vmul.f32 %v7176, %v2978
    %v7178 = vand.u32 2147483647, %v2978
    %vm7179 = vcmp.lt.f32.partialorder %v7178, 0.0004427343
    %v7180 = vsel %vm7179, %v7177, %v7174
    %v7181 = vadd.f32 %v2980, 1.0
    %v7182 = vlog2.pop %v7181
    %v7183 = vmul.f32 %v7182, 0.6931472
    %v7184 = vmul.f32 -0.5, %v2980
    %v7185 = vadd.f32 %v7184, 1.0
    %v7186 = vmul.f32 %v7185, %v2980
    %v7187 = vand.u32 2147483647, %v2980
    %vm7188 = vcmp.lt.f32.partialorder %v7187, 0.0004427343
    %v7189 = vsel %vm7188, %v7186, %v7183
    %v7190 = vadd.f32 %v2982, 1.0
    %v7191 = vlog2.pop %v7190
    %v7192 = vmul.f32 %v7191, 0.6931472
    %v7193 = vmul.f32 -0.5, %v2982
    %v7194 = vadd.f32 %v7193, 1.0
    %v7195 = vmul.f32 %v7194, %v2982
    %v7196 = vand.u32 2147483647, %v2982
    %vm7197 = vcmp.lt.f32.partialorder %v7196, 0.0004427343
    %v7198 = vsel %vm7197, %v7195, %v7192
    %v7199 = vadd.f32 %v2984, 1.0
    %v7200 = vlog2.pop %v7199
    %v7201 = vmul.f32 %v7200, 0.6931472
    %v7202 = vmul.f32 -0.5, %v2984
    %v7203 = vadd.f32 %v7202, 1.0
    %v7204 = vmul.f32 %v7203, %v2984
    %v7205 = vand.u32 2147483647, %v2984
    %vm7206 = vcmp.lt.f32.partialorder %v7205, 0.0004427343
    %v7207 = vsel %vm7206, %v7204, %v7201
    %v7208 = vadd.f32 %v2986, 1.0
    %v7209 = vlog2.pop %v7208
    %v7210 = vmul.f32 %v7209, 0.6931472
    %v7211 = vmul.f32 -0.5, %v2986
    %v7212 = vadd.f32 %v7211, 1.0
    %v7213 = vmul.f32 %v7212, %v2986
    %v7214 = vand.u32 2147483647, %v2986
    %vm7215 = vcmp.lt.f32.partialorder %v7214, 0.0004427343
    %v7216 = vsel %vm7215, %v7213, %v7210
    %v7217 = vadd.f32 %v2988, 1.0
    %v7218 = vlog2.pop %v7217
    %v7219 = vmul.f32 %v7218, 0.6931472
    %v7220 = vmul.f32 -0.5, %v2988
    %v7221 = vadd.f32 %v7220, 1.0
    %v7222 = vmul.f32 %v7221, %v2988
    %v7223 = vand.u32 2147483647, %v2988
    %vm7224 = vcmp.lt.f32.partialorder %v7223, 0.0004427343
    %v7225 = vsel %vm7224, %v7222, %v7219
    %v7226 = vadd.f32 %v2990, 1.0
    %v7227 = vlog2.pop %v7226
    %v7228 = vmul.f32 %v7227, 0.6931472
    %v7229 = vmul.f32 -0.5, %v2990
    %v7230 = vadd.f32 %v7229, 1.0
    %v7231 = vmul.f32 %v7230, %v2990
    %v7232 = vand.u32 2147483647, %v2990
    %vm7233 = vcmp.lt.f32.partialorder %v7232, 0.0004427343
    %v7234 = vsel %vm7233, %v7231, %v7228
    %v7235 = vadd.f32 %v2992, 1.0
    %v7236 = vlog2.pop %v7235
    %v7237 = vmul.f32 %v7236, 0.6931472
    %v7238 = vmul.f32 -0.5, %v2992
    %v7239 = vadd.f32 %v7238, 1.0
    %v7240 = vmul.f32 %v7239, %v2992
    %v7241 = vand.u32 2147483647, %v2992
    %vm7242 = vcmp.lt.f32.partialorder %v7241, 0.0004427343
    %v7243 = vsel %vm7242, %v7240, %v7237
    %v7244 = vadd.f32 %v2994, 1.0
    %v7245 = vlog2.pop %v7244
    %v7246 = vmul.f32 %v7245, 0.6931472
    %v7247 = vmul.f32 -0.5, %v2994
    %v7248 = vadd.f32 %v7247, 1.0
    %v7249 = vmul.f32 %v7248, %v2994
    %v7250 = vand.u32 2147483647, %v2994
    %vm7251 = vcmp.lt.f32.partialorder %v7250, 0.0004427343
    %v7252 = vsel %vm7251, %v7249, %v7246
    %v7253 = vadd.f32 %v2996, 1.0
    %v7254 = vlog2.pop %v7253
    %v7255 = vmul.f32 %v7254, 0.6931472
    %v7256 = vmul.f32 -0.5, %v2996
    %v7257 = vadd.f32 %v7256, 1.0
    %v7258 = vmul.f32 %v7257, %v2996
    %v7259 = vand.u32 2147483647, %v2996
    %vm7260 = vcmp.lt.f32.partialorder %v7259, 0.0004427343
    %v7261 = vsel %vm7260, %v7258, %v7255
    %v7262 = vadd.f32 %v2998, 1.0
    %v7263 = vlog2.pop %v7262
    %v7264 = vmul.f32 %v7263, 0.6931472
    %v7265 = vmul.f32 -0.5, %v2998
    %v7266 = vadd.f32 %v7265, 1.0
    %v7267 = vmul.f32 %v7266, %v2998
    %v7268 = vand.u32 2147483647, %v2998
    %vm7269 = vcmp.lt.f32.partialorder %v7268, 0.0004427343
    %v7270 = vsel %vm7269, %v7267, %v7264
    %v7271 = vadd.f32 %v3000, 1.0
    %v7272 = vlog2.pop %v7271
    %v7273 = vmul.f32 %v7272, 0.6931472
    %v7274 = vmul.f32 -0.5, %v3000
    %v7275 = vadd.f32 %v7274, 1.0
    %v7276 = vmul.f32 %v7275, %v3000
    %v7277 = vand.u32 2147483647, %v3000
    %vm7278 = vcmp.lt.f32.partialorder %v7277, 0.0004427343
    %v7279 = vsel %vm7278, %v7276, %v7273
    %v7280 = vadd.f32 %v3002, 1.0
    %v7281 = vlog2.pop %v7280
    %v7282 = vmul.f32 %v7281, 0.6931472
    %v7283 = vmul.f32 -0.5, %v3002
    %v7284 = vadd.f32 %v7283, 1.0
    %v7285 = vmul.f32 %v7284, %v3002
    %v7286 = vand.u32 2147483647, %v3002
    %vm7287 = vcmp.lt.f32.partialorder %v7286, 0.0004427343
    %v7288 = vsel %vm7287, %v7285, %v7282
    %v7289 = vadd.f32 %v3004, 1.0
    %v7290 = vlog2.pop %v7289
    %v7291 = vmul.f32 %v7290, 0.6931472
    %v7292 = vmul.f32 -0.5, %v3004
    %v7293 = vadd.f32 %v7292, 1.0
    %v7294 = vmul.f32 %v7293, %v3004
    %v7295 = vand.u32 2147483647, %v3004
    %vm7296 = vcmp.lt.f32.partialorder %v7295, 0.0004427343
    %v7297 = vsel %vm7296, %v7294, %v7291
    %v7298 = vadd.f32 %v3006, 1.0
    %v7299 = vlog2.pop %v7298
    %v7300 = vmul.f32 %v7299, 0.6931472
    %v7301 = vmul.f32 -0.5, %v3006
    %v7302 = vadd.f32 %v7301, 1.0
    %v7303 = vmul.f32 %v7302, %v3006
    %v7304 = vand.u32 2147483647, %v3006
    %vm7305 = vcmp.lt.f32.partialorder %v7304, 0.0004427343
    %v7306 = vsel %vm7305, %v7303, %v7300
    %v7307 = vadd.f32 %v3008, 1.0
    %v7308 = vlog2.pop %v7307
    %v7309 = vmul.f32 %v7308, 0.6931472
    %v7310 = vmul.f32 -0.5, %v3008
    %v7311 = vadd.f32 %v7310, 1.0
    %v7312 = vmul.f32 %v7311, %v3008
    %v7313 = vand.u32 2147483647, %v3008
    %vm7314 = vcmp.lt.f32.partialorder %v7313, 0.0004427343
    %v7315 = vsel %vm7314, %v7312, %v7309
    %v7316 = vadd.f32 %v3010, 1.0
    %v7317 = vlog2.pop %v7316
    %v7318 = vmul.f32 %v7317, 0.6931472
    %v7319 = vmul.f32 -0.5, %v3010
    %v7320 = vadd.f32 %v7319, 1.0
    %v7321 = vmul.f32 %v7320, %v3010
    %v7322 = vand.u32 2147483647, %v3010
    %vm7323 = vcmp.lt.f32.partialorder %v7322, 0.0004427343
    %v7324 = vsel %vm7323, %v7321, %v7318
    %v7325 = vadd.f32 %v3012, 1.0
    %v7326 = vlog2.pop %v7325
    %v7327 = vmul.f32 %v7326, 0.6931472
    %v7328 = vmul.f32 -0.5, %v3012
    %v7329 = vadd.f32 %v7328, 1.0
    %v7330 = vmul.f32 %v7329, %v3012
    %v7331 = vand.u32 2147483647, %v3012
    %vm7332 = vcmp.lt.f32.partialorder %v7331, 0.0004427343
    %v7333 = vsel %vm7332, %v7330, %v7327
    %v7334 = vadd.f32 %v3014, 1.0
    %v7335 = vlog2.pop %v7334
    %v7336 = vmul.f32 %v7335, 0.6931472
    %v7337 = vmul.f32 -0.5, %v3014
    %v7338 = vadd.f32 %v7337, 1.0
    %v7339 = vmul.f32 %v7338, %v3014
    %v7340 = vand.u32 2147483647, %v3014
    %vm7341 = vcmp.lt.f32.partialorder %v7340, 0.0004427343
    %v7342 = vsel %vm7341, %v7339, %v7336
    %v7343 = vadd.f32 %v3016, 1.0
    %v7344 = vlog2.pop %v7343
    %v7345 = vmul.f32 %v7344, 0.6931472
    %v7346 = vmul.f32 -0.5, %v3016
    %v7347 = vadd.f32 %v7346, 1.0
    %v7348 = vmul.f32 %v7347, %v3016
    %v7349 = vand.u32 2147483647, %v3016
    %vm7350 = vcmp.lt.f32.partialorder %v7349, 0.0004427343
    %v7351 = vsel %vm7350, %v7348, %v7345
    %v7352 = vadd.f32 %v3018, 1.0
    %v7353 = vlog2.pop %v7352
    %v7354 = vmul.f32 %v7353, 0.6931472
    %v7355 = vmul.f32 -0.5, %v3018
    %v7356 = vadd.f32 %v7355, 1.0
    %v7357 = vmul.f32 %v7356, %v3018
    %v7358 = vand.u32 2147483647, %v3018
    %vm7359 = vcmp.lt.f32.partialorder %v7358, 0.0004427343
    %v7360 = vsel %vm7359, %v7357, %v7354
    %v7361 = vadd.f32 %v3020, 1.0
    %v7362 = vlog2.pop %v7361
    %v7363 = vmul.f32 %v7362, 0.6931472
    %v7364 = vmul.f32 -0.5, %v3020
    %v7365 = vadd.f32 %v7364, 1.0
    %v7366 = vmul.f32 %v7365, %v3020
    %v7367 = vand.u32 2147483647, %v3020
    %vm7368 = vcmp.lt.f32.partialorder %v7367, 0.0004427343
    %v7369 = vsel %vm7368, %v7366, %v7363
    %v7370 = vadd.f32 %v3022, 1.0
    %v7371 = vlog2.pop %v7370
    %v7372 = vmul.f32 %v7371, 0.6931472
    %v7373 = vmul.f32 -0.5, %v3022
    %v7374 = vadd.f32 %v7373, 1.0
    %v7375 = vmul.f32 %v7374, %v3022
    %v7376 = vand.u32 2147483647, %v3022
    %vm7377 = vcmp.lt.f32.partialorder %v7376, 0.0004427343
    %v7378 = vsel %vm7377, %v7375, %v7372
    %v7379 = vadd.f32 %v3024, 1.0
    %v7380 = vlog2.pop %v7379
    %v7381 = vmul.f32 %v7380, 0.6931472
    %v7382 = vmul.f32 -0.5, %v3024
    %v7383 = vadd.f32 %v7382, 1.0
    %v7384 = vmul.f32 %v7383, %v3024
    %v7385 = vand.u32 2147483647, %v3024
    %vm7386 = vcmp.lt.f32.partialorder %v7385, 0.0004427343
    %v7387 = vsel %vm7386, %v7384, %v7381
    %v7388 = vadd.f32 %v3026, 1.0
    %v7389 = vlog2.pop %v7388
    %v7390 = vmul.f32 %v7389, 0.6931472
    %v7391 = vmul.f32 -0.5, %v3026
    %v7392 = vadd.f32 %v7391, 1.0
    %v7393 = vmul.f32 %v7392, %v3026
    %v7394 = vand.u32 2147483647, %v3026
    %vm7395 = vcmp.lt.f32.partialorder %v7394, 0.0004427343
    %v7396 = vsel %vm7395, %v7393, %v7390
    %v7397 = vadd.f32 %v3028, 1.0
    %v7398 = vlog2.pop %v7397
    %v7399 = vmul.f32 %v7398, 0.6931472
    %v7400 = vmul.f32 -0.5, %v3028
    %v7401 = vadd.f32 %v7400, 1.0
    %v7402 = vmul.f32 %v7401, %v3028
    %v7403 = vand.u32 2147483647, %v3028
    %vm7404 = vcmp.lt.f32.partialorder %v7403, 0.0004427343
    %v7405 = vsel %vm7404, %v7402, %v7399
    %v7406 = vadd.f32 %v3030, 1.0
    %v7407 = vlog2.pop %v7406
    %v7408 = vmul.f32 %v7407, 0.6931472
    %v7409 = vmul.f32 -0.5, %v3030
    %v7410 = vadd.f32 %v7409, 1.0
    %v7411 = vmul.f32 %v7410, %v3030
    %v7412 = vand.u32 2147483647, %v3030
    %vm7413 = vcmp.lt.f32.partialorder %v7412, 0.0004427343
    %v7414 = vsel %vm7413, %v7411, %v7408
    %v7415 = vadd.f32 %v3032, 1.0
    %v7416 = vlog2.pop %v7415
    %v7417 = vmul.f32 %v7416, 0.6931472
    %v7418 = vmul.f32 -0.5, %v3032
    %v7419 = vadd.f32 %v7418, 1.0
    %v7420 = vmul.f32 %v7419, %v3032
    %v7421 = vand.u32 2147483647, %v3032
    %vm7422 = vcmp.lt.f32.partialorder %v7421, 0.0004427343
    %v7423 = vsel %vm7422, %v7420, %v7417
    %v7424 = vadd.f32 %v3034, 1.0
    %v7425 = vlog2.pop %v7424
    %v7426 = vmul.f32 %v7425, 0.6931472
    %v7427 = vmul.f32 -0.5, %v3034
    %v7428 = vadd.f32 %v7427, 1.0
    %v7429 = vmul.f32 %v7428, %v3034
    %v7430 = vand.u32 2147483647, %v3034
    %vm7431 = vcmp.lt.f32.partialorder %v7430, 0.0004427343
    %v7432 = vsel %vm7431, %v7429, %v7426
    %v7433 = vadd.f32 %v3036, 1.0
    %v7434 = vlog2.pop %v7433
    %v7435 = vmul.f32 %v7434, 0.6931472
    %v7436 = vmul.f32 -0.5, %v3036
    %v7437 = vadd.f32 %v7436, 1.0
    %v7438 = vmul.f32 %v7437, %v3036
    %v7439 = vand.u32 2147483647, %v3036
    %vm7440 = vcmp.lt.f32.partialorder %v7439, 0.0004427343
    %v7441 = vsel %vm7440, %v7438, %v7435
    %v7442 = vadd.f32 %v3038, 1.0
    %v7443 = vlog2.pop %v7442
    %v7444 = vmul.f32 %v7443, 0.6931472
    %v7445 = vmul.f32 -0.5, %v3038
    %v7446 = vadd.f32 %v7445, 1.0
    %v7447 = vmul.f32 %v7446, %v3038
    %v7448 = vand.u32 2147483647, %v3038
    %vm7449 = vcmp.lt.f32.partialorder %v7448, 0.0004427343
    %v7450 = vsel %vm7449, %v7447, %v7444
    %v7451 = vadd.f32 %v3040, 1.0
    %v7452 = vlog2.pop %v7451
    %v7453 = vmul.f32 %v7452, 0.6931472
    %v7454 = vmul.f32 -0.5, %v3040
    %v7455 = vadd.f32 %v7454, 1.0
    %v7456 = vmul.f32 %v7455, %v3040
    %v7457 = vand.u32 2147483647, %v3040
    %vm7458 = vcmp.lt.f32.partialorder %v7457, 0.0004427343
    %v7459 = vsel %vm7458, %v7456, %v7453
    %v7460 = vadd.f32 %v3042, 1.0
    %v7461 = vlog2.pop %v7460
    %v7462 = vmul.f32 %v7461, 0.6931472
    %v7463 = vmul.f32 -0.5, %v3042
    %v7464 = vadd.f32 %v7463, 1.0
    %v7465 = vmul.f32 %v7464, %v3042
    %v7466 = vand.u32 2147483647, %v3042
    %vm7467 = vcmp.lt.f32.partialorder %v7466, 0.0004427343
    %v7468 = vsel %vm7467, %v7465, %v7462
    %v7469 = vadd.f32 %v3044, 1.0
    %v7470 = vlog2.pop %v7469
    %v7471 = vmul.f32 %v7470, 0.6931472
    %v7472 = vmul.f32 -0.5, %v3044
    %v7473 = vadd.f32 %v7472, 1.0
    %v7474 = vmul.f32 %v7473, %v3044
    %v7475 = vand.u32 2147483647, %v3044
    %vm7476 = vcmp.lt.f32.partialorder %v7475, 0.0004427343
    %v7477 = vsel %vm7476, %v7474, %v7471
    %v7478 = vadd.f32 %v3046, 1.0
    %v7479 = vlog2.pop %v7478
    %v7480 = vmul.f32 %v7479, 0.6931472
    %v7481 = vmul.f32 -0.5, %v3046
    %v7482 = vadd.f32 %v7481, 1.0
    %v7483 = vmul.f32 %v7482, %v3046
    %v7484 = vand.u32 2147483647, %v3046
    %vm7485 = vcmp.lt.f32.partialorder %v7484, 0.0004427343
    %v7486 = vsel %vm7485, %v7483, %v7480
    %v7487 = vadd.f32 %v3048, 1.0
    %v7488 = vlog2.pop %v7487
    %v7489 = vmul.f32 %v7488, 0.6931472
    %v7490 = vmul.f32 -0.5, %v3048
    %v7491 = vadd.f32 %v7490, 1.0
    %v7492 = vmul.f32 %v7491, %v3048
    %v7493 = vand.u32 2147483647, %v3048
    %vm7494 = vcmp.lt.f32.partialorder %v7493, 0.0004427343
    %v7495 = vsel %vm7494, %v7492, %v7489
    %v7496 = vadd.f32 %v3050, 1.0
    %v7497 = vlog2.pop %v7496
    %v7498 = vmul.f32 %v7497, 0.6931472
    %v7499 = vmul.f32 -0.5, %v3050
    %v7500 = vadd.f32 %v7499, 1.0
    %v7501 = vmul.f32 %v7500, %v3050
    %v7502 = vand.u32 2147483647, %v3050
    %vm7503 = vcmp.lt.f32.partialorder %v7502, 0.0004427343
    %v7504 = vsel %vm7503, %v7501, %v7498
    %v7505 = vadd.f32 %v3052, 1.0
    %v7506 = vlog2.pop %v7505
    %v7507 = vmul.f32 %v7506, 0.6931472
    %v7508 = vmul.f32 -0.5, %v3052
    %v7509 = vadd.f32 %v7508, 1.0
    %v7510 = vmul.f32 %v7509, %v3052
    %v7511 = vand.u32 2147483647, %v3052
    %vm7512 = vcmp.lt.f32.partialorder %v7511, 0.0004427343
    %v7513 = vsel %vm7512, %v7510, %v7507
    %v7514 = vadd.f32 %v3054, 1.0
    %v7515 = vlog2.pop %v7514
    %v7516 = vmul.f32 %v7515, 0.6931472
    %v7517 = vmul.f32 -0.5, %v3054
    %v7518 = vadd.f32 %v7517, 1.0
    %v7519 = vmul.f32 %v7518, %v3054
    %v7520 = vand.u32 2147483647, %v3054
    %vm7521 = vcmp.lt.f32.partialorder %v7520, 0.0004427343
    %v7522 = vsel %vm7521, %v7519, %v7516
    %v7523 = vadd.f32 %v3056, 1.0
    %v7524 = vlog2.pop %v7523
    %v7525 = vmul.f32 %v7524, 0.6931472
    %v7526 = vmul.f32 -0.5, %v3056
    %v7527 = vadd.f32 %v7526, 1.0
    %v7528 = vmul.f32 %v7527, %v3056
    %v7529 = vand.u32 2147483647, %v3056
    %vm7530 = vcmp.lt.f32.partialorder %v7529, 0.0004427343
    %v7531 = vsel %vm7530, %v7528, %v7525
    %v7532 = vadd.f32 %v3058, 1.0
    %v7533 = vlog2.pop %v7532
    %v7534 = vmul.f32 %v7533, 0.6931472
    %v7535 = vmul.f32 -0.5, %v3058
    %v7536 = vadd.f32 %v7535, 1.0
    %v7537 = vmul.f32 %v7536, %v3058
    %v7538 = vand.u32 2147483647, %v3058
    %vm7539 = vcmp.lt.f32.partialorder %v7538, 0.0004427343
    %v7540 = vsel %vm7539, %v7537, %v7534
    %v7541 = vadd.f32 %v3060, 1.0
    %v7542 = vlog2.pop %v7541
    %v7543 = vmul.f32 %v7542, 0.6931472
    %v7544 = vmul.f32 -0.5, %v3060
    %v7545 = vadd.f32 %v7544, 1.0
    %v7546 = vmul.f32 %v7545, %v3060
    %v7547 = vand.u32 2147483647, %v3060
    %vm7548 = vcmp.lt.f32.partialorder %v7547, 0.0004427343
    %v7549 = vsel %vm7548, %v7546, %v7543
    %v7550 = vadd.f32 %v3062, 1.0
    %v7551 = vlog2.pop %v7550
    %v7552 = vmul.f32 %v7551, 0.6931472
    %v7553 = vmul.f32 -0.5, %v3062
    %v7554 = vadd.f32 %v7553, 1.0
    %v7555 = vmul.f32 %v7554, %v3062
    %v7556 = vand.u32 2147483647, %v3062
    %vm7557 = vcmp.lt.f32.partialorder %v7556, 0.0004427343
    %v7558 = vsel %vm7557, %v7555, %v7552
    %v7559 = vadd.f32 %v3064, 1.0
    %v7560 = vlog2.pop %v7559
    %v7561 = vmul.f32 %v7560, 0.6931472
    %v7562 = vmul.f32 -0.5, %v3064
    %v7563 = vadd.f32 %v7562, 1.0
    %v7564 = vmul.f32 %v7563, %v3064
    %v7565 = vand.u32 2147483647, %v3064
    %vm7566 = vcmp.lt.f32.partialorder %v7565, 0.0004427343
    %v7567 = vsel %vm7566, %v7564, %v7561
    %v7568 = vadd.f32 %v3066, 1.0
    %v7569 = vlog2.pop %v7568
    %v7570 = vmul.f32 %v7569, 0.6931472
    %v7571 = vmul.f32 -0.5, %v3066
    %v7572 = vadd.f32 %v7571, 1.0
    %v7573 = vmul.f32 %v7572, %v3066
    %v7574 = vand.u32 2147483647, %v3066
    %vm7575 = vcmp.lt.f32.partialorder %v7574, 0.0004427343
    %v7576 = vsel %vm7575, %v7573, %v7570
    %v7577 = vadd.f32 %v3068, 1.0
    %v7578 = vlog2.pop %v7577
    %v7579 = vmul.f32 %v7578, 0.6931472
    %v7580 = vmul.f32 -0.5, %v3068
    %v7581 = vadd.f32 %v7580, 1.0
    %v7582 = vmul.f32 %v7581, %v3068
    %v7583 = vand.u32 2147483647, %v3068
    %vm7584 = vcmp.lt.f32.partialorder %v7583, 0.0004427343
    %v7585 = vsel %vm7584, %v7582, %v7579
    %v7586 = vadd.f32 %v3070, 1.0
    %v7587 = vlog2.pop %v7586
    %v7588 = vmul.f32 %v7587, 0.6931472
    %v7589 = vmul.f32 -0.5, %v3070
    %v7590 = vadd.f32 %v7589, 1.0
    %v7591 = vmul.f32 %v7590, %v3070
    %v7592 = vand.u32 2147483647, %v3070
    %vm7593 = vcmp.lt.f32.partialorder %v7592, 0.0004427343
    %v7594 = vsel %vm7593, %v7591, %v7588
    %v7595 = vadd.f32 %v3072, 1.0
    %v7596 = vlog2.pop %v7595
    %v7597 = vmul.f32 %v7596, 0.6931472
    %v7598 = vmul.f32 -0.5, %v3072
    %v7599 = vadd.f32 %v7598, 1.0
    %v7600 = vmul.f32 %v7599, %v3072
    %v7601 = vand.u32 2147483647, %v3072
    %vm7602 = vcmp.lt.f32.partialorder %v7601, 0.0004427343
    %v7603 = vsel %vm7602, %v7600, %v7597
    %v7604 = vadd.f32 %v3074, 1.0
    %v7605 = vlog2.pop %v7604
    %v7606 = vmul.f32 %v7605, 0.6931472
    %v7607 = vmul.f32 -0.5, %v3074
    %v7608 = vadd.f32 %v7607, 1.0
    %v7609 = vmul.f32 %v7608, %v3074
    %v7610 = vand.u32 2147483647, %v3074
    %vm7611 = vcmp.lt.f32.partialorder %v7610, 0.0004427343
    %v7612 = vsel %vm7611, %v7609, %v7606
    %v7613 = vadd.f32 %v3076, 1.0
    %v7614 = vlog2.pop %v7613
    %v7615 = vmul.f32 %v7614, 0.6931472
    %v7616 = vmul.f32 -0.5, %v3076
    %v7617 = vadd.f32 %v7616, 1.0
    %v7618 = vmul.f32 %v7617, %v3076
    %v7619 = vand.u32 2147483647, %v3076
    %vm7620 = vcmp.lt.f32.partialorder %v7619, 0.0004427343
    %v7621 = vsel %vm7620, %v7618, %v7615
    %v7622 = vadd.f32 %v3078, 1.0
    %v7623 = vlog2.pop %v7622
    %v7624 = vmul.f32 %v7623, 0.6931472
    %v7625 = vmul.f32 -0.5, %v3078
    %v7626 = vadd.f32 %v7625, 1.0
    %v7627 = vmul.f32 %v7626, %v3078
    %v7628 = vand.u32 2147483647, %v3078
    %vm7629 = vcmp.lt.f32.partialorder %v7628, 0.0004427343
    %v7630 = vsel %vm7629, %v7627, %v7624
    %v7631 = vadd.f32 %v3080, 1.0
    %v7632 = vlog2.pop %v7631
    %v7633 = vmul.f32 %v7632, 0.6931472
    %v7634 = vmul.f32 -0.5, %v3080
    %v7635 = vadd.f32 %v7634, 1.0
    %v7636 = vmul.f32 %v7635, %v3080
    %v7637 = vand.u32 2147483647, %v3080
    %vm7638 = vcmp.lt.f32.partialorder %v7637, 0.0004427343
    %v7639 = vsel %vm7638, %v7636, %v7633
    %v7640 = vadd.f32 %v3082, 1.0
    %v7641 = vlog2.pop %v7640
    %v7642 = vmul.f32 %v7641, 0.6931472
    %v7643 = vmul.f32 -0.5, %v3082
    %v7644 = vadd.f32 %v7643, 1.0
    %v7645 = vmul.f32 %v7644, %v3082
    %v7646 = vand.u32 2147483647, %v3082
    %vm7647 = vcmp.lt.f32.partialorder %v7646, 0.0004427343
    %v7648 = vsel %vm7647, %v7645, %v7642
    %v7649 = vadd.f32 %v3084, 1.0
    %v7650 = vlog2.pop %v7649
    %v7651 = vmul.f32 %v7650, 0.6931472
    %v7652 = vmul.f32 -0.5, %v3084
    %v7653 = vadd.f32 %v7652, 1.0
    %v7654 = vmul.f32 %v7653, %v3084
    %v7655 = vand.u32 2147483647, %v3084
    %vm7656 = vcmp.lt.f32.partialorder %v7655, 0.0004427343
    %v7657 = vsel %vm7656, %v7654, %v7651
    %v7658 = vadd.f32 %v3086, 1.0
    %v7659 = vlog2.pop %v7658
    %v7660 = vmul.f32 %v7659, 0.6931472
    %v7661 = vmul.f32 -0.5, %v3086
    %v7662 = vadd.f32 %v7661, 1.0
    %v7663 = vmul.f32 %v7662, %v3086
    %v7664 = vand.u32 2147483647, %v3086
    %vm7665 = vcmp.lt.f32.partialorder %v7664, 0.0004427343
    %v7666 = vsel %vm7665, %v7663, %v7660
    %v7667 = vadd.f32 %v3088, 1.0
    %v7668 = vlog2.pop %v7667
    %v7669 = vmul.f32 %v7668, 0.6931472
    %v7670 = vmul.f32 -0.5, %v3088
    %v7671 = vadd.f32 %v7670, 1.0
    %v7672 = vmul.f32 %v7671, %v3088
    %v7673 = vand.u32 2147483647, %v3088
    %vm7674 = vcmp.lt.f32.partialorder %v7673, 0.0004427343
    %v7675 = vsel %vm7674, %v7672, %v7669
    %v7676 = vadd.f32 %v3090, 1.0
    %v7677 = vlog2.pop %v7676
    %v7678 = vmul.f32 %v7677, 0.6931472
    %v7679 = vmul.f32 -0.5, %v3090
    %v7680 = vadd.f32 %v7679, 1.0
    %v7681 = vmul.f32 %v7680, %v3090
    %v7682 = vand.u32 2147483647, %v3090
    %vm7683 = vcmp.lt.f32.partialorder %v7682, 0.0004427343
    %v7684 = vsel %vm7683, %v7681, %v7678
    %v7685 = vadd.f32 %v3092, 1.0
    %v7686 = vlog2.pop %v7685
    %v7687 = vmul.f32 %v7686, 0.6931472
    %v7688 = vmul.f32 -0.5, %v3092
    %v7689 = vadd.f32 %v7688, 1.0
    %v7690 = vmul.f32 %v7689, %v3092
    %v7691 = vand.u32 2147483647, %v3092
    %vm7692 = vcmp.lt.f32.partialorder %v7691, 0.0004427343
    %v7693 = vsel %vm7692, %v7690, %v7687
    %v7694 = vadd.f32 %v3094, 1.0
    %v7695 = vlog2.pop %v7694
    %v7696 = vmul.f32 %v7695, 0.6931472
    %v7697 = vmul.f32 -0.5, %v3094
    %v7698 = vadd.f32 %v7697, 1.0
    %v7699 = vmul.f32 %v7698, %v3094
    %v7700 = vand.u32 2147483647, %v3094
    %vm7701 = vcmp.lt.f32.partialorder %v7700, 0.0004427343
    %v7702 = vsel %vm7701, %v7699, %v7696
    %v7703 = vadd.f32 %v535, %v3103
    %v7704 = vadd.f32 %v536, %v3112
    %v7705 = vadd.f32 %v537, %v3121
    %v7706 = vadd.f32 %v538, %v3130
    %v7707 = vadd.f32 %v539, %v3139
    %v7708 = vadd.f32 %v540, %v3148
    %v7709 = vadd.f32 %v541, %v3157
    %v7710 = vadd.f32 %v542, %v3166
    %v7711 = vadd.f32 %v543, %v3175
    %v7712 = vadd.f32 %v544, %v3184
    %v7713 = vadd.f32 %v545, %v3193
    %v7714 = vadd.f32 %v546, %v3202
    %v7715 = vadd.f32 %v547, %v3211
    %v7716 = vadd.f32 %v548, %v3220
    %v7717 = vadd.f32 %v549, %v3229
    %v7718 = vadd.f32 %v550, %v3238
    %v7719 = vadd.f32 %v551, %v3247
    %v7720 = vadd.f32 %v552, %v3256
    %v7721 = vadd.f32 %v553, %v3265
    %v7722 = vadd.f32 %v554, %v3274
    %v7723 = vadd.f32 %v555, %v3283
    %v7724 = vadd.f32 %v556, %v3292
    %v7725 = vadd.f32 %v557, %v3301
    %v7726 = vadd.f32 %v558, %v3310
    %v7727 = vadd.f32 %v559, %v3319
    %v7728 = vadd.f32 %v560, %v3328
    %v7729 = vadd.f32 %v561, %v3337
    %v7730 = vadd.f32 %v562, %v3346
    %v7731 = vadd.f32 %v563, %v3355
    %v7732 = vadd.f32 %v564, %v3364
    %v7733 = vadd.f32 %v565, %v3373
    %v7734 = vadd.f32 %v566, %v3382
    %v7735 = vadd.f32 %v567, %v3391
    %v7736 = vadd.f32 %v568, %v3400
    %v7737 = vadd.f32 %v569, %v3409
    %v7738 = vadd.f32 %v570, %v3418
    %v7739 = vadd.f32 %v571, %v3427
    %v7740 = vadd.f32 %v572, %v3436
    %v7741 = vadd.f32 %v573, %v3445
    %v7742 = vadd.f32 %v574, %v3454
    %v7743 = vadd.f32 %v575, %v3463
    %v7744 = vadd.f32 %v576, %v3472
    %v7745 = vadd.f32 %v577, %v3481
    %v7746 = vadd.f32 %v578, %v3490
    %v7747 = vadd.f32 %v579, %v3499
    %v7748 = vadd.f32 %v580, %v3508
    %v7749 = vadd.f32 %v581, %v3517
    %v7750 = vadd.f32 %v582, %v3526
    %v7751 = vadd.f32 %v583, %v3535
    %v7752 = vadd.f32 %v584, %v3544
    %v7753 = vadd.f32 %v585, %v3553
    %v7754 = vadd.f32 %v586, %v3562
    %v7755 = vadd.f32 %v587, %v3571
    %v7756 = vadd.f32 %v588, %v3580
    %v7757 = vadd.f32 %v589, %v3589
    %v7758 = vadd.f32 %v590, %v3598
    %v7759 = vadd.f32 %v591, %v3607
    %v7760 = vadd.f32 %v592, %v3616
    %v7761 = vadd.f32 %v593, %v3625
    %v7762 = vadd.f32 %v594, %v3634
    %v7763 = vadd.f32 %v595, %v3643
    %v7764 = vadd.f32 %v596, %v3652
    %v7765 = vadd.f32 %v597, %v3661
    %v7766 = vadd.f32 %v598, %v3670
    %v7767 = vadd.f32 %v599, %v3679
    %v7768 = vadd.f32 %v600, %v3688
    %v7769 = vadd.f32 %v601, %v3697
    %v7770 = vadd.f32 %v602, %v3706
    %v7771 = vadd.f32 %v603, %v3715
    %v7772 = vadd.f32 %v604, %v3724
    %v7773 = vadd.f32 %v605, %v3733
    %v7774 = vadd.f32 %v606, %v3742
    %v7775 = vadd.f32 %v607, %v3751
    %v7776 = vadd.f32 %v608, %v3760
    %v7777 = vadd.f32 %v609, %v3769
    %v7778 = vadd.f32 %v610, %v3778
    %v7779 = vadd.f32 %v611, %v3787
    %v7780 = vadd.f32 %v612, %v3796
    %v7781 = vadd.f32 %v613, %v3805
    %v7782 = vadd.f32 %v614, %v3814
    %v7783 = vadd.f32 %v615, %v3823
    %v7784 = vadd.f32 %v616, %v3832
    %v7785 = vadd.f32 %v617, %v3841
    %v7786 = vadd.f32 %v618, %v3850
    %v7787 = vadd.f32 %v619, %v3859
    %v7788 = vadd.f32 %v620, %v3868
    %v7789 = vadd.f32 %v621, %v3877
    %v7790 = vadd.f32 %v622, %v3886
    %v7791 = vadd.f32 %v623, %v3895
    %v7792 = vadd.f32 %v624, %v3904
    %v7793 = vadd.f32 %v625, %v3913
    %v7794 = vadd.f32 %v626, %v3922
    %v7795 = vadd.f32 %v627, %v3931
    %v7796 = vadd.f32 %v628, %v3940
    %v7797 = vadd.f32 %v629, %v3949
    %v7798 = vadd.f32 %v630, %v3958
    %v7799 = vadd.f32 %v631, %v3967
    %v7800 = vadd.f32 %v632, %v3976
    %v7801 = vadd.f32 %v633, %v3985
    %v7802 = vadd.f32 %v634, %v3994
    %v7803 = vadd.f32 %v635, %v4003
    %v7804 = vadd.f32 %v636, %v4012
    %v7805 = vadd.f32 %v637, %v4021
    %v7806 = vadd.f32 %v638, %v4030
    %v7807 = vadd.f32 %v639, %v4039
    %v7808 = vadd.f32 %v640, %v4048
    %v7809 = vadd.f32 %v641, %v4057
    %v7810 = vadd.f32 %v642, %v4066
    %v7811 = vadd.f32 %v643, %v4075
    %v7812 = vadd.f32 %v644, %v4084
    %v7813 = vadd.f32 %v645, %v4093
    %v7814 = vadd.f32 %v646, %v4102
    %v7815 = vadd.f32 %v647, %v4111
    %v7816 = vadd.f32 %v648, %v4120
    %v7817 = vadd.f32 %v649, %v4129
    %v7818 = vadd.f32 %v650, %v4138
    %v7819 = vadd.f32 %v651, %v4147
    %v7820 = vadd.f32 %v652, %v4156
    %v7821 = vadd.f32 %v653, %v4165
    %v7822 = vadd.f32 %v654, %v4174
    %v7823 = vadd.f32 %v655, %v4183
    %v7824 = vadd.f32 %v656, %v4192
    %v7825 = vadd.f32 %v657, %v4201
    %v7826 = vadd.f32 %v658, %v4210
    %v7827 = vadd.f32 %v659, %v4219
    %v7828 = vadd.f32 %v660, %v4228
    %v7829 = vadd.f32 %v661, %v4237
    %v7830 = vadd.f32 %v662, %v4246
    %v7831 = vadd.f32 %v663, %v4255
    %v7832 = vadd.f32 %v664, %v4264
    %v7833 = vadd.f32 %v665, %v4273
    %v7834 = vadd.f32 %v666, %v4282
    %v7835 = vadd.f32 %v667, %v4291
    %v7836 = vadd.f32 %v668, %v4300
    %v7837 = vadd.f32 %v669, %v4309
    %v7838 = vadd.f32 %v670, %v4318
    %v7839 = vadd.f32 %v671, %v4327
    %v7840 = vadd.f32 %v672, %v4336
    %v7841 = vadd.f32 %v673, %v4345
    %v7842 = vadd.f32 %v674, %v4354
    %v7843 = vadd.f32 %v675, %v4363
    %v7844 = vadd.f32 %v676, %v4372
    %v7845 = vadd.f32 %v677, %v4381
    %v7846 = vadd.f32 %v678, %v4390
    %v7847 = vadd.f32 %v679, %v4399
    %v7848 = vadd.f32 %v680, %v4408
    %v7849 = vadd.f32 %v681, %v4417
    %v7850 = vadd.f32 %v682, %v4426
    %v7851 = vadd.f32 %v683, %v4435
    %v7852 = vadd.f32 %v684, %v4444
    %v7853 = vadd.f32 %v685, %v4453
    %v7854 = vadd.f32 %v686, %v4462
    %v7855 = vadd.f32 %v687, %v4471
    %v7856 = vadd.f32 %v688, %v4480
    %v7857 = vadd.f32 %v689, %v4489
    %v7858 = vadd.f32 %v690, %v4498
    %v7859 = vadd.f32 %v691, %v4507
    %v7860 = vadd.f32 %v692, %v4516
    %v7861 = vadd.f32 %v693, %v4525
    %v7862 = vadd.f32 %v694, %v4534
    %v7863 = vadd.f32 %v695, %v4543
    %v7864 = vadd.f32 %v696, %v4552
    %v7865 = vadd.f32 %v697, %v4561
    %v7866 = vadd.f32 %v698, %v4570
    %v7867 = vadd.f32 %v699, %v4579
    %v7868 = vadd.f32 %v700, %v4588
    %v7869 = vadd.f32 %v701, %v4597
    %v7870 = vadd.f32 %v702, %v4606
    %v7871 = vadd.f32 %v703, %v4615
    %v7872 = vadd.f32 %v704, %v4624
    %v7873 = vadd.f32 %v705, %v4633
    %v7874 = vadd.f32 %v706, %v4642
    %v7875 = vadd.f32 %v707, %v4651
    %v7876 = vadd.f32 %v708, %v4660
    %v7877 = vadd.f32 %v709, %v4669
    %v7878 = vadd.f32 %v710, %v4678
    %v7879 = vadd.f32 %v711, %v4687
    %v7880 = vadd.f32 %v712, %v4696
    %v7881 = vadd.f32 %v713, %v4705
    %v7882 = vadd.f32 %v714, %v4714
    %v7883 = vadd.f32 %v715, %v4723
    %v7884 = vadd.f32 %v716, %v4732
    %v7885 = vadd.f32 %v717, %v4741
    %v7886 = vadd.f32 %v718, %v4750
    %v7887 = vadd.f32 %v719, %v4759
    %v7888 = vadd.f32 %v720, %v4768
    %v7889 = vadd.f32 %v721, %v4777
    %v7890 = vadd.f32 %v722, %v4786
    %v7891 = vadd.f32 %v723, %v4795
    %v7892 = vadd.f32 %v724, %v4804
    %v7893 = vadd.f32 %v725, %v4813
    %v7894 = vadd.f32 %v726, %v4822
    %v7895 = vadd.f32 %v727, %v4831
    %v7896 = vadd.f32 %v728, %v4840
    %v7897 = vadd.f32 %v729, %v4849
    %v7898 = vadd.f32 %v730, %v4858
    %v7899 = vadd.f32 %v731, %v4867
    %v7900 = vadd.f32 %v732, %v4876
    %v7901 = vadd.f32 %v733, %v4885
    %v7902 = vadd.f32 %v734, %v4894
    %v7903 = vadd.f32 %v735, %v4903
    %v7904 = vadd.f32 %v736, %v4912
    %v7905 = vadd.f32 %v737, %v4921
    %v7906 = vadd.f32 %v738, %v4930
    %v7907 = vadd.f32 %v739, %v4939
    %v7908 = vadd.f32 %v740, %v4948
    %v7909 = vadd.f32 %v741, %v4957
    %v7910 = vadd.f32 %v742, %v4966
    %v7911 = vadd.f32 %v743, %v4975
    %v7912 = vadd.f32 %v744, %v4984
    %v7913 = vadd.f32 %v745, %v4993
    %v7914 = vadd.f32 %v746, %v5002
    %v7915 = vadd.f32 %v747, %v5011
    %v7916 = vadd.f32 %v748, %v5020
    %v7917 = vadd.f32 %v749, %v5029
    %v7918 = vadd.f32 %v750, %v5038
    %v7919 = vadd.f32 %v751, %v5047
    %v7920 = vadd.f32 %v752, %v5056
    %v7921 = vadd.f32 %v753, %v5065
    %v7922 = vadd.f32 %v754, %v5074
    %v7923 = vadd.f32 %v755, %v5083
    %v7924 = vadd.f32 %v756, %v5092
    %v7925 = vadd.f32 %v757, %v5101
    %v7926 = vadd.f32 %v758, %v5110
    %v7927 = vadd.f32 %v759, %v5119
    %v7928 = vadd.f32 %v760, %v5128
    %v7929 = vadd.f32 %v761, %v5137
    %v7930 = vadd.f32 %v762, %v5146
    %v7931 = vadd.f32 %v763, %v5155
    %v7932 = vadd.f32 %v764, %v5164
    %v7933 = vadd.f32 %v765, %v5173
    %v7934 = vadd.f32 %v766, %v5182
    %v7935 = vadd.f32 %v767, %v5191
    %v7936 = vadd.f32 %v768, %v5200
    %v7937 = vadd.f32 %v769, %v5209
    %v7938 = vadd.f32 %v770, %v5218
    %v7939 = vadd.f32 %v771, %v5227
    %v7940 = vadd.f32 %v772, %v5236
    %v7941 = vadd.f32 %v773, %v5245
    %v7942 = vadd.f32 %v774, %v5254
    %v7943 = vadd.f32 %v775, %v5263
    %v7944 = vadd.f32 %v776, %v5272
    %v7945 = vadd.f32 %v777, %v5281
    %v7946 = vadd.f32 %v778, %v5290
    %v7947 = vadd.f32 %v779, %v5299
    %v7948 = vadd.f32 %v780, %v5308
    %v7949 = vadd.f32 %v781, %v5317
    %v7950 = vadd.f32 %v782, %v5326
    %v7951 = vadd.f32 %v783, %v5335
    %v7952 = vadd.f32 %v784, %v5344
    %v7953 = vadd.f32 %v785, %v5353
    %v7954 = vadd.f32 %v786, %v5362
    %v7955 = vadd.f32 %v787, %v5371
    %v7956 = vadd.f32 %v788, %v5380
    %v7957 = vadd.f32 %v789, %v5389
    %v7958 = vadd.f32 %v790, %v5398
    %v7959 = vadd.f32 %v791, %v5407
    %v7960 = vadd.f32 %v792, %v5416
    %v7961 = vadd.f32 %v793, %v5425
    %v7962 = vadd.f32 %v794, %v5434
    %v7963 = vadd.f32 %v795, %v5443
    %v7964 = vadd.f32 %v796, %v5452
    %v7965 = vadd.f32 %v797, %v5461
    %v7966 = vadd.f32 %v798, %v5470
    %v7967 = vadd.f32 %v799, %v5479
    %v7968 = vadd.f32 %v800, %v5488
    %v7969 = vadd.f32 %v801, %v5497
    %v7970 = vadd.f32 %v802, %v5506
    %v7971 = vadd.f32 %v803, %v5515
    %v7972 = vadd.f32 %v804, %v5524
    %v7973 = vadd.f32 %v805, %v5533
    %v7974 = vadd.f32 %v806, %v5542
    %v7975 = vadd.f32 %v807, %v5551
    %v7976 = vadd.f32 %v808, %v5560
    %v7977 = vadd.f32 %v809, %v5569
    %v7978 = vadd.f32 %v810, %v5578
    %v7979 = vadd.f32 %v811, %v5587
    %v7980 = vadd.f32 %v812, %v5596
    %v7981 = vadd.f32 %v813, %v5605
    %v7982 = vadd.f32 %v814, %v5614
    %v7983 = vadd.f32 %v815, %v5623
    %v7984 = vadd.f32 %v816, %v5632
    %v7985 = vadd.f32 %v817, %v5641
    %v7986 = vadd.f32 %v818, %v5650
    %v7987 = vadd.f32 %v819, %v5659
    %v7988 = vadd.f32 %v820, %v5668
    %v7989 = vadd.f32 %v821, %v5677
    %v7990 = vadd.f32 %v822, %v5686
    %v7991 = vadd.f32 %v823, %v5695
    %v7992 = vadd.f32 %v824, %v5704
    %v7993 = vadd.f32 %v825, %v5713
    %v7994 = vadd.f32 %v826, %v5722
    %v7995 = vadd.f32 %v827, %v5731
    %v7996 = vadd.f32 %v828, %v5740
    %v7997 = vadd.f32 %v829, %v5749
    %v7998 = vadd.f32 %v830, %v5758
    %v7999 = vadd.f32 %v831, %v5767
    %v8000 = vadd.f32 %v832, %v5776
    %v8001 = vadd.f32 %v833, %v5785
    %v8002 = vadd.f32 %v834, %v5794
    %v8003 = vadd.f32 %v835, %v5803
    %v8004 = vadd.f32 %v836, %v5812
    %v8005 = vadd.f32 %v837, %v5821
    %v8006 = vadd.f32 %v838, %v5830
    %v8007 = vadd.f32 %v839, %v5839
    %v8008 = vadd.f32 %v840, %v5848
    %v8009 = vadd.f32 %v841, %v5857
    %v8010 = vadd.f32 %v842, %v5866
    %v8011 = vadd.f32 %v843, %v5875
    %v8012 = vadd.f32 %v844, %v5884
    %v8013 = vadd.f32 %v845, %v5893
    %v8014 = vadd.f32 %v846, %v5902
    %v8015 = vadd.f32 %v847, %v5911
    %v8016 = vadd.f32 %v848, %v5920
    %v8017 = vadd.f32 %v849, %v5929
    %v8018 = vadd.f32 %v850, %v5938
    %v8019 = vadd.f32 %v851, %v5947
    %v8020 = vadd.f32 %v852, %v5956
    %v8021 = vadd.f32 %v853, %v5965
    %v8022 = vadd.f32 %v854, %v5974
    %v8023 = vadd.f32 %v855, %v5983
    %v8024 = vadd.f32 %v856, %v5992
    %v8025 = vadd.f32 %v857, %v6001
    %v8026 = vadd.f32 %v858, %v6010
    %v8027 = vadd.f32 %v859, %v6019
    %v8028 = vadd.f32 %v860, %v6028
    %v8029 = vadd.f32 %v861, %v6037
    %v8030 = vadd.f32 %v862, %v6046
    %v8031 = vadd.f32 %v863, %v6055
    %v8032 = vadd.f32 %v864, %v6064
    %v8033 = vadd.f32 %v865, %v6073
    %v8034 = vadd.f32 %v866, %v6082
    %v8035 = vadd.f32 %v867, %v6091
    %v8036 = vadd.f32 %v868, %v6100
    %v8037 = vadd.f32 %v869, %v6109
    %v8038 = vadd.f32 %v870, %v6118
    %v8039 = vadd.f32 %v871, %v6127
    %v8040 = vadd.f32 %v872, %v6136
    %v8041 = vadd.f32 %v873, %v6145
    %v8042 = vadd.f32 %v874, %v6154
    %v8043 = vadd.f32 %v875, %v6163
    %v8044 = vadd.f32 %v876, %v6172
    %v8045 = vadd.f32 %v877, %v6181
    %v8046 = vadd.f32 %v878, %v6190
    %v8047 = vadd.f32 %v879, %v6199
    %v8048 = vadd.f32 %v880, %v6208
    %v8049 = vadd.f32 %v881, %v6217
    %v8050 = vadd.f32 %v882, %v6226
    %v8051 = vadd.f32 %v883, %v6235
    %v8052 = vadd.f32 %v884, %v6244
    %v8053 = vadd.f32 %v885, %v6253
    %v8054 = vadd.f32 %v886, %v6262
    %v8055 = vadd.f32 %v887, %v6271
    %v8056 = vadd.f32 %v888, %v6280
    %v8057 = vadd.f32 %v889, %v6289
    %v8058 = vadd.f32 %v890, %v6298
    %v8059 = vadd.f32 %v891, %v6307
    %v8060 = vadd.f32 %v892, %v6316
    %v8061 = vadd.f32 %v893, %v6325
    %v8062 = vadd.f32 %v894, %v6334
    %v8063 = vadd.f32 %v895, %v6343
    %v8064 = vadd.f32 %v896, %v6352
    %v8065 = vadd.f32 %v897, %v6361
    %v8066 = vadd.f32 %v898, %v6370
    %v8067 = vadd.f32 %v899, %v6379
    %v8068 = vadd.f32 %v900, %v6388
    %v8069 = vadd.f32 %v901, %v6397
    %v8070 = vadd.f32 %v902, %v6406
    %v8071 = vadd.f32 %v903, %v6415
    %v8072 = vadd.f32 %v904, %v6424
    %v8073 = vadd.f32 %v905, %v6433
    %v8074 = vadd.f32 %v906, %v6442
    %v8075 = vadd.f32 %v907, %v6451
    %v8076 = vadd.f32 %v908, %v6460
    %v8077 = vadd.f32 %v909, %v6469
    %v8078 = vadd.f32 %v910, %v6478
    %v8079 = vadd.f32 %v911, %v6487
    %v8080 = vadd.f32 %v912, %v6496
    %v8081 = vadd.f32 %v913, %v6505
    %v8082 = vadd.f32 %v914, %v6514
    %v8083 = vadd.f32 %v915, %v6523
    %v8084 = vadd.f32 %v916, %v6532
    %v8085 = vadd.f32 %v917, %v6541
    %v8086 = vadd.f32 %v918, %v6550
    %v8087 = vadd.f32 %v919, %v6559
    %v8088 = vadd.f32 %v920, %v6568
    %v8089 = vadd.f32 %v921, %v6577
    %v8090 = vadd.f32 %v922, %v6586
    %v8091 = vadd.f32 %v923, %v6595
    %v8092 = vadd.f32 %v924, %v6604
    %v8093 = vadd.f32 %v925, %v6613
    %v8094 = vadd.f32 %v926, %v6622
    %v8095 = vadd.f32 %v927, %v6631
    %v8096 = vadd.f32 %v928, %v6640
    %v8097 = vadd.f32 %v929, %v6649
    %v8098 = vadd.f32 %v930, %v6658
    %v8099 = vadd.f32 %v931, %v6667
    %v8100 = vadd.f32 %v932, %v6676
    %v8101 = vadd.f32 %v933, %v6685
    %v8102 = vadd.f32 %v934, %v6694
    %v8103 = vadd.f32 %v935, %v6703
    %v8104 = vadd.f32 %v936, %v6712
    %v8105 = vadd.f32 %v937, %v6721
    %v8106 = vadd.f32 %v938, %v6730
    %v8107 = vadd.f32 %v939, %v6739
    %v8108 = vadd.f32 %v940, %v6748
    %v8109 = vadd.f32 %v941, %v6757
    %v8110 = vadd.f32 %v942, %v6766
    %v8111 = vadd.f32 %v943, %v6775
    %v8112 = vadd.f32 %v944, %v6784
    %v8113 = vadd.f32 %v945, %v6793
    %v8114 = vadd.f32 %v946, %v6802
    %v8115 = vadd.f32 %v947, %v6811
    %v8116 = vadd.f32 %v948, %v6820
    %v8117 = vadd.f32 %v949, %v6829
    %v8118 = vadd.f32 %v950, %v6838
    %v8119 = vadd.f32 %v951, %v6847
    %v8120 = vadd.f32 %v952, %v6856
    %v8121 = vadd.f32 %v953, %v6865
    %v8122 = vadd.f32 %v954, %v6874
    %v8123 = vadd.f32 %v955, %v6883
    %v8124 = vadd.f32 %v956, %v6892
    %v8125 = vadd.f32 %v957, %v6901
    %v8126 = vadd.f32 %v958, %v6910
    %v8127 = vadd.f32 %v959, %v6919
    %v8128 = vadd.f32 %v960, %v6928
    %v8129 = vadd.f32 %v961, %v6937
    %v8130 = vadd.f32 %v962, %v6946
    %v8131 = vadd.f32 %v963, %v6955
    %v8132 = vadd.f32 %v964, %v6964
    %v8133 = vadd.f32 %v965, %v6973
    %v8134 = vadd.f32 %v966, %v6982
    %v8135 = vadd.f32 %v967, %v6991
    %v8136 = vadd.f32 %v968, %v7000
    %v8137 = vadd.f32 %v969, %v7009
    %v8138 = vadd.f32 %v970, %v7018
    %v8139 = vadd.f32 %v971, %v7027
    %v8140 = vadd.f32 %v972, %v7036
    %v8141 = vadd.f32 %v973, %v7045
    %v8142 = vadd.f32 %v974, %v7054
    %v8143 = vadd.f32 %v975, %v7063
    %v8144 = vadd.f32 %v976, %v7072
    %v8145 = vadd.f32 %v977, %v7081
    %v8146 = vadd.f32 %v978, %v7090
    %v8147 = vadd.f32 %v979, %v7099
    %v8148 = vadd.f32 %v980, %v7108
    %v8149 = vadd.f32 %v981, %v7117
    %v8150 = vadd.f32 %v982, %v7126
    %v8151 = vadd.f32 %v983, %v7135
    %v8152 = vadd.f32 %v984, %v7144
    %v8153 = vadd.f32 %v985, %v7153
    %v8154 = vadd.f32 %v986, %v7162
    %v8155 = vadd.f32 %v987, %v7171
    %v8156 = vadd.f32 %v988, %v7180
    %v8157 = vadd.f32 %v989, %v7189
    %v8158 = vadd.f32 %v990, %v7198
    %v8159 = vadd.f32 %v991, %v7207
    %v8160 = vadd.f32 %v992, %v7216
    %v8161 = vadd.f32 %v993, %v7225
    %v8162 = vadd.f32 %v994, %v7234
    %v8163 = vadd.f32 %v995, %v7243
    %v8164 = vadd.f32 %v996, %v7252
    %v8165 = vadd.f32 %v997, %v7261
    %v8166 = vadd.f32 %v998, %v7270
    %v8167 = vadd.f32 %v999, %v7279
    %v8168 = vadd.f32 %v1000, %v7288
    %v8169 = vadd.f32 %v1001, %v7297
    %v8170 = vadd.f32 %v1002, %v7306
    %v8171 = vadd.f32 %v1003, %v7315
    %v8172 = vadd.f32 %v1004, %v7324
    %v8173 = vadd.f32 %v1005, %v7333
    %v8174 = vadd.f32 %v1006, %v7342
    %v8175 = vadd.f32 %v1007, %v7351
    %v8176 = vadd.f32 %v1008, %v7360
    %v8177 = vadd.f32 %v1009, %v7369
    %v8178 = vadd.f32 %v1010, %v7378
    %v8179 = vadd.f32 %v1011, %v7387
    %v8180 = vadd.f32 %v1012, %v7396
    %v8181 = vadd.f32 %v1013, %v7405
    %v8182 = vadd.f32 %v1014, %v7414
    %v8183 = vadd.f32 %v1015, %v7423
    %v8184 = vadd.f32 %v1016, %v7432
    %v8185 = vadd.f32 %v1017, %v7441
    %v8186 = vadd.f32 %v1018, %v7450
    %v8187 = vadd.f32 %v1019, %v7459
    %v8188 = vadd.f32 %v1020, %v7468
    %v8189 = vadd.f32 %v1021, %v7477
    %v8190 = vadd.f32 %v1022, %v7486
    %v8191 = vadd.f32 %v1023, %v7495
    %v8192 = vadd.f32 %v1024, %v7504
    %v8193 = vadd.f32 %v1025, %v7513
    %v8194 = vadd.f32 %v1026, %v7522
    %v8195 = vadd.f32 %v1027, %v7531
    %v8196 = vadd.f32 %v1028, %v7540
    %v8197 = vadd.f32 %v1029, %v7549
    %v8198 = vadd.f32 %v1030, %v7558
    %v8199 = vadd.f32 %v1031, %v7567
    %v8200 = vadd.f32 %v1032, %v7576
    %v8201 = vadd.f32 %v1033, %v7585
    %v8202 = vadd.f32 %v1034, %v7594
    %v8203 = vadd.f32 %v1035, %v7603
    %v8204 = vadd.f32 %v1036, %v7612
    %v8205 = vadd.f32 %v1037, %v7621
    %v8206 = vadd.f32 %v1038, %v7630
    %v8207 = vadd.f32 %v1039, %v7639
    %v8208 = vadd.f32 %v1040, %v7648
    %v8209 = vadd.f32 %v1041, %v7657
    %v8210 = vadd.f32 %v1042, %v7666
    %v8211 = vadd.f32 %v1043, %v7675
    %v8212 = vadd.f32 %v1044, %v7684
    %v8213 = vadd.f32 %v1045, %v7693
    %v8214 = vadd.f32 %v1046, %v7702
    %8215 = vst [vmem:[#allocation5] sm:$0xff] %v7703
    %8216 = vst [vmem:[#allocation5 + $0x8] sm:$0xff] %v7704
    %8217 = vst [vmem:[#allocation5 + $0x10] sm:$0xff] %v7705
    %8218 = vst [vmem:[#allocation5 + $0x18] sm:$0xff] %v7706
    %8219 = vst [vmem:[#allocation5 + $0x20] sm:$0xff] %v7707
    %8220 = vst [vmem:[#allocation5 + $0x28] sm:$0xff] %v7708
    %8221 = vst [vmem:[#allocation5 + $0x30] sm:$0xff] %v7709
    %8222 = vst [vmem:[#allocation5 + $0x38] sm:$0xff] %v7710
    %8223 = vst [vmem:[#allocation5 + $0x40] sm:$0xff] %v7711
    %8224 = vst [vmem:[#allocation5 + $0x48] sm:$0xff] %v7712
    %8225 = vst [vmem:[#allocation5 + $0x50] sm:$0xff] %v7713
    %8226 = vst [vmem:[#allocation5 + $0x58] sm:$0xff] %v7714
    %8227 = vst [vmem:[#allocation5 + $0x60] sm:$0xff] %v7715
    %8228 = vst [vmem:[#allocation5 + $0x68] sm:$0xff] %v7716
    %8229 = vst [vmem:[#allocation5 + $0x70] sm:$0xff] %v7717
    %8230 = vst [vmem:[#allocation5 + $0x78] sm:$0xff] %v7718
    %8231 = vst [vmem:[#allocation5 + $0x80] sm:$0xff] %v7719
    %8232 = vst [vmem:[#allocation5 + $0x88] sm:$0xff] %v7720
    %8233 = vst [vmem:[#allocation5 + $0x90] sm:$0xff] %v7721
    %8234 = vst [vmem:[#allocation5 + $0x98] sm:$0xff] %v7722
    %8235 = vst [vmem:[#allocation5 + $0xa0] sm:$0xff] %v7723
    %8236 = vst [vmem:[#allocation5 + $0xa8] sm:$0xff] %v7724
    %8237 = vst [vmem:[#allocation5 + $0xb0] sm:$0xff] %v7725
    %8238 = vst [vmem:[#allocation5 + $0xb8] sm:$0xff] %v7726
    %8239 = vst [vmem:[#allocation5 + $0xc0] sm:$0xff] %v7727
    %8240 = vst [vmem:[#allocation5 + $0xc8] sm:$0xff] %v7728
    %8241 = vst [vmem:[#allocation5 + $0xd0] sm:$0xff] %v7729
    %8242 = vst [vmem:[#allocation5 + $0xd8] sm:$0xff] %v7730
    %8243 = vst [vmem:[#allocation5 + $0xe0] sm:$0xff] %v7731
    %8244 = vst [vmem:[#allocation5 + $0xe8] sm:$0xff] %v7732
    %8245 = vst [vmem:[#allocation5 + $0xf0] sm:$0xff] %v7733
    %8246 = vst [vmem:[#allocation5 + $0xf8] sm:$0xff] %v7734
    %8247 = vst [vmem:[#allocation5 + $0x100] sm:$0xff] %v7735
    %8248 = vst [vmem:[#allocation5 + $0x108] sm:$0xff] %v7736
    %8249 = vst [vmem:[#allocation5 + $0x110] sm:$0xff] %v7737
    %8250 = vst [vmem:[#allocation5 + $0x118] sm:$0xff] %v7738
    %8251 = vst [vmem:[#allocation5 + $0x120] sm:$0xff] %v7739
    %8252 = vst [vmem:[#allocation5 + $0x128] sm:$0xff] %v7740
    %8253 = vst [vmem:[#allocation5 + $0x130] sm:$0xff] %v7741
    %8254 = vst [vmem:[#allocation5 + $0x138] sm:$0xff] %v7742
    %8255 = vst [vmem:[#allocation5 + $0x140] sm:$0xff] %v7743
    %8256 = vst [vmem:[#allocation5 + $0x148] sm:$0xff] %v7744
    %8257 = vst [vmem:[#allocation5 + $0x150] sm:$0xff] %v7745
    %8258 = vst [vmem:[#allocation5 + $0x158] sm:$0xff] %v7746
    %8259 = vst [vmem:[#allocation5 + $0x160] sm:$0xff] %v7747
    %8260 = vst [vmem:[#allocation5 + $0x168] sm:$0xff] %v7748
    %8261 = vst [vmem:[#allocation5 + $0x170] sm:$0xff] %v7749
    %8262 = vst [vmem:[#allocation5 + $0x178] sm:$0xff] %v7750
    %8263 = vst [vmem:[#allocation5 + $0x180] sm:$0xff] %v7751
    %8264 = vst [vmem:[#allocation5 + $0x188] sm:$0xff] %v7752
    %8265 = vst [vmem:[#allocation5 + $0x190] sm:$0xff] %v7753
    %8266 = vst [vmem:[#allocation5 + $0x198] sm:$0xff] %v7754
    %8267 = vst [vmem:[#allocation5 + $0x1a0] sm:$0xff] %v7755
    %8268 = vst [vmem:[#allocation5 + $0x1a8] sm:$0xff] %v7756
    %8269 = vst [vmem:[#allocation5 + $0x1b0] sm:$0xff] %v7757
    %8270 = vst [vmem:[#allocation5 + $0x1b8] sm:$0xff] %v7758
    %8271 = vst [vmem:[#allocation5 + $0x1c0] sm:$0xff] %v7759
    %8272 = vst [vmem:[#allocation5 + $0x1c8] sm:$0xff] %v7760
    %8273 = vst [vmem:[#allocation5 + $0x1d0] sm:$0xff] %v7761
    %8274 = vst [vmem:[#allocation5 + $0x1d8] sm:$0xff] %v7762
    %8275 = vst [vmem:[#allocation5 + $0x1e0] sm:$0xff] %v7763
    %8276 = vst [vmem:[#allocation5 + $0x1e8] sm:$0xff] %v7764
    %8277 = vst [vmem:[#allocation5 + $0x1f0] sm:$0xff] %v7765
    %8278 = vst [vmem:[#allocation5 + $0x1f8] sm:$0xff] %v7766
    %8279 = vst [vmem:[#allocation5 + $0x200] sm:$0xff] %v7767
    %8280 = vst [vmem:[#allocation5 + $0x208] sm:$0xff] %v7768
    %8281 = vst [vmem:[#allocation5 + $0x210] sm:$0xff] %v7769
    %8282 = vst [vmem:[#allocation5 + $0x218] sm:$0xff] %v7770
    %8283 = vst [vmem:[#allocation5 + $0x220] sm:$0xff] %v7771
    %8284 = vst [vmem:[#allocation5 + $0x228] sm:$0xff] %v7772
    %8285 = vst [vmem:[#allocation5 + $0x230] sm:$0xff] %v7773
    %8286 = vst [vmem:[#allocation5 + $0x238] sm:$0xff] %v7774
    %8287 = vst [vmem:[#allocation5 + $0x240] sm:$0xff] %v7775
    %8288 = vst [vmem:[#allocation5 + $0x248] sm:$0xff] %v7776
    %8289 = vst [vmem:[#allocation5 + $0x250] sm:$0xff] %v7777
    %8290 = vst [vmem:[#allocation5 + $0x258] sm:$0xff] %v7778
    %8291 = vst [vmem:[#allocation5 + $0x260] sm:$0xff] %v7779
    %8292 = vst [vmem:[#allocation5 + $0x268] sm:$0xff] %v7780
    %8293 = vst [vmem:[#allocation5 + $0x270] sm:$0xff] %v7781
    %8294 = vst [vmem:[#allocation5 + $0x278] sm:$0xff] %v7782
    %8295 = vst [vmem:[#allocation5 + $0x280] sm:$0xff] %v7783
    %8296 = vst [vmem:[#allocation5 + $0x288] sm:$0xff] %v7784
    %8297 = vst [vmem:[#allocation5 + $0x290] sm:$0xff] %v7785
    %8298 = vst [vmem:[#allocation5 + $0x298] sm:$0xff] %v7786
    %8299 = vst [vmem:[#allocation5 + $0x2a0] sm:$0xff] %v7787
    %8300 = vst [vmem:[#allocation5 + $0x2a8] sm:$0xff] %v7788
    %8301 = vst [vmem:[#allocation5 + $0x2b0] sm:$0xff] %v7789
    %8302 = vst [vmem:[#allocation5 + $0x2b8] sm:$0xff] %v7790
    %8303 = vst [vmem:[#allocation5 + $0x2c0] sm:$0xff] %v7791
    %8304 = vst [vmem:[#allocation5 + $0x2c8] sm:$0xff] %v7792
    %8305 = vst [vmem:[#allocation5 + $0x2d0] sm:$0xff] %v7793
    %8306 = vst [vmem:[#allocation5 + $0x2d8] sm:$0xff] %v7794
    %8307 = vst [vmem:[#allocation5 + $0x2e0] sm:$0xff] %v7795
    %8308 = vst [vmem:[#allocation5 + $0x2e8] sm:$0xff] %v7796
    %8309 = vst [vmem:[#allocation5 + $0x2f0] sm:$0xff] %v7797
    %8310 = vst [vmem:[#allocation5 + $0x2f8] sm:$0xff] %v7798
    %8311 = vst [vmem:[#allocation5 + $0x300] sm:$0xff] %v7799
    %8312 = vst [vmem:[#allocation5 + $0x308] sm:$0xff] %v7800
    %8313 = vst [vmem:[#allocation5 + $0x310] sm:$0xff] %v7801
    %8314 = vst [vmem:[#allocation5 + $0x318] sm:$0xff] %v7802
    %8315 = vst [vmem:[#allocation5 + $0x320] sm:$0xff] %v7803
    %8316 = vst [vmem:[#allocation5 + $0x328] sm:$0xff] %v7804
    %8317 = vst [vmem:[#allocation5 + $0x330] sm:$0xff] %v7805
    %8318 = vst [vmem:[#allocation5 + $0x338] sm:$0xff] %v7806
    %8319 = vst [vmem:[#allocation5 + $0x340] sm:$0xff] %v7807
    %8320 = vst [vmem:[#allocation5 + $0x348] sm:$0xff] %v7808
    %8321 = vst [vmem:[#allocation5 + $0x350] sm:$0xff] %v7809
    %8322 = vst [vmem:[#allocation5 + $0x358] sm:$0xff] %v7810
    %8323 = vst [vmem:[#allocation5 + $0x360] sm:$0xff] %v7811
    %8324 = vst [vmem:[#allocation5 + $0x368] sm:$0xff] %v7812
    %8325 = vst [vmem:[#allocation5 + $0x370] sm:$0xff] %v7813
    %8326 = vst [vmem:[#allocation5 + $0x378] sm:$0xff] %v7814
    %8327 = vst [vmem:[#allocation5 + $0x380] sm:$0xff] %v7815
    %8328 = vst [vmem:[#allocation5 + $0x388] sm:$0xff] %v7816
    %8329 = vst [vmem:[#allocation5 + $0x390] sm:$0xff] %v7817
    %8330 = vst [vmem:[#allocation5 + $0x398] sm:$0xff] %v7818
    %8331 = vst [vmem:[#allocation5 + $0x3a0] sm:$0xff] %v7819
    %8332 = vst [vmem:[#allocation5 + $0x3a8] sm:$0xff] %v7820
    %8333 = vst [vmem:[#allocation5 + $0x3b0] sm:$0xff] %v7821
    %8334 = vst [vmem:[#allocation5 + $0x3b8] sm:$0xff] %v7822
    %8335 = vst [vmem:[#allocation5 + $0x3c0] sm:$0xff] %v7823
    %8336 = vst [vmem:[#allocation5 + $0x3c8] sm:$0xff] %v7824
    %8337 = vst [vmem:[#allocation5 + $0x3d0] sm:$0xff] %v7825
    %8338 = vst [vmem:[#allocation5 + $0x3d8] sm:$0xff] %v7826
    %8339 = vst [vmem:[#allocation5 + $0x3e0] sm:$0xff] %v7827
    %8340 = vst [vmem:[#allocation5 + $0x3e8] sm:$0xff] %v7828
    %8341 = vst [vmem:[#allocation5 + $0x3f0] sm:$0xff] %v7829
    %8342 = vst [vmem:[#allocation5 + $0x3f8] sm:$0xff] %v7830
    %8343 = vst [vmem:[#allocation5 + $0x400] sm:$0xff] %v7831
    %8344 = vst [vmem:[#allocation5 + $0x408] sm:$0xff] %v7832
    %8345 = vst [vmem:[#allocation5 + $0x410] sm:$0xff] %v7833
    %8346 = vst [vmem:[#allocation5 + $0x418] sm:$0xff] %v7834
    %8347 = vst [vmem:[#allocation5 + $0x420] sm:$0xff] %v7835
    %8348 = vst [vmem:[#allocation5 + $0x428] sm:$0xff] %v7836
    %8349 = vst [vmem:[#allocation5 + $0x430] sm:$0xff] %v7837
    %8350 = vst [vmem:[#allocation5 + $0x438] sm:$0xff] %v7838
    %8351 = vst [vmem:[#allocation5 + $0x440] sm:$0xff] %v7839
    %8352 = vst [vmem:[#allocation5 + $0x448] sm:$0xff] %v7840
    %8353 = vst [vmem:[#allocation5 + $0x450] sm:$0xff] %v7841
    %8354 = vst [vmem:[#allocation5 + $0x458] sm:$0xff] %v7842
    %8355 = vst [vmem:[#allocation5 + $0x460] sm:$0xff] %v7843
    %8356 = vst [vmem:[#allocation5 + $0x468] sm:$0xff] %v7844
    %8357 = vst [vmem:[#allocation5 + $0x470] sm:$0xff] %v7845
    %8358 = vst [vmem:[#allocation5 + $0x478] sm:$0xff] %v7846
    %8359 = vst [vmem:[#allocation5 + $0x480] sm:$0xff] %v7847
    %8360 = vst [vmem:[#allocation5 + $0x488] sm:$0xff] %v7848
    %8361 = vst [vmem:[#allocation5 + $0x490] sm:$0xff] %v7849
    %8362 = vst [vmem:[#allocation5 + $0x498] sm:$0xff] %v7850
    %8363 = vst [vmem:[#allocation5 + $0x4a0] sm:$0xff] %v7851
    %8364 = vst [vmem:[#allocation5 + $0x4a8] sm:$0xff] %v7852
    %8365 = vst [vmem:[#allocation5 + $0x4b0] sm:$0xff] %v7853
    %8366 = vst [vmem:[#allocation5 + $0x4b8] sm:$0xff] %v7854
    %8367 = vst [vmem:[#allocation5 + $0x4c0] sm:$0xff] %v7855
    %8368 = vst [vmem:[#allocation5 + $0x4c8] sm:$0xff] %v7856
    %8369 = vst [vmem:[#allocation5 + $0x4d0] sm:$0xff] %v7857
    %8370 = vst [vmem:[#allocation5 + $0x4d8] sm:$0xff] %v7858
    %8371 = vst [vmem:[#allocation5 + $0x4e0] sm:$0xff] %v7859
    %8372 = vst [vmem:[#allocation5 + $0x4e8] sm:$0xff] %v7860
    %8373 = vst [vmem:[#allocation5 + $0x4f0] sm:$0xff] %v7861
    %8374 = vst [vmem:[#allocation5 + $0x4f8] sm:$0xff] %v7862
    %8375 = vst [vmem:[#allocation5 + $0x500] sm:$0xff] %v7863
    %8376 = vst [vmem:[#allocation5 + $0x508] sm:$0xff] %v7864
    %8377 = vst [vmem:[#allocation5 + $0x510] sm:$0xff] %v7865
    %8378 = vst [vmem:[#allocation5 + $0x518] sm:$0xff] %v7866
    %8379 = vst [vmem:[#allocation5 + $0x520] sm:$0xff] %v7867
    %8380 = vst [vmem:[#allocation5 + $0x528] sm:$0xff] %v7868
    %8381 = vst [vmem:[#allocation5 + $0x530] sm:$0xff] %v7869
    %8382 = vst [vmem:[#allocation5 + $0x538] sm:$0xff] %v7870
    %8383 = vst [vmem:[#allocation5 + $0x540] sm:$0xff] %v7871
    %8384 = vst [vmem:[#allocation5 + $0x548] sm:$0xff] %v7872
    %8385 = vst [vmem:[#allocation5 + $0x550] sm:$0xff] %v7873
    %8386 = vst [vmem:[#allocation5 + $0x558] sm:$0xff] %v7874
    %8387 = vst [vmem:[#allocation5 + $0x560] sm:$0xff] %v7875
    %8388 = vst [vmem:[#allocation5 + $0x568] sm:$0xff] %v7876
    %8389 = vst [vmem:[#allocation5 + $0x570] sm:$0xff] %v7877
    %8390 = vst [vmem:[#allocation5 + $0x578] sm:$0xff] %v7878
    %8391 = vst [vmem:[#allocation5 + $0x580] sm:$0xff] %v7879
    %8392 = vst [vmem:[#allocation5 + $0x588] sm:$0xff] %v7880
    %8393 = vst [vmem:[#allocation5 + $0x590] sm:$0xff] %v7881
    %8394 = vst [vmem:[#allocation5 + $0x598] sm:$0xff] %v7882
    %8395 = vst [vmem:[#allocation5 + $0x5a0] sm:$0xff] %v7883
    %8396 = vst [vmem:[#allocation5 + $0x5a8] sm:$0xff] %v7884
    %8397 = vst [vmem:[#allocation5 + $0x5b0] sm:$0xff] %v7885
    %8398 = vst [vmem:[#allocation5 + $0x5b8] sm:$0xff] %v7886
    %8399 = vst [vmem:[#allocation5 + $0x5c0] sm:$0xff] %v7887
    %8400 = vst [vmem:[#allocation5 + $0x5c8] sm:$0xff] %v7888
    %8401 = vst [vmem:[#allocation5 + $0x5d0] sm:$0xff] %v7889
    %8402 = vst [vmem:[#allocation5 + $0x5d8] sm:$0xff] %v7890
    %8403 = vst [vmem:[#allocation5 + $0x5e0] sm:$0xff] %v7891
    %8404 = vst [vmem:[#allocation5 + $0x5e8] sm:$0xff] %v7892
    %8405 = vst [vmem:[#allocation5 + $0x5f0] sm:$0xff] %v7893
    %8406 = vst [vmem:[#allocation5 + $0x5f8] sm:$0xff] %v7894
    %8407 = vst [vmem:[#allocation5 + $0x600] sm:$0xff] %v7895
    %8408 = vst [vmem:[#allocation5 + $0x608] sm:$0xff] %v7896
    %8409 = vst [vmem:[#allocation5 + $0x610] sm:$0xff] %v7897
    %8410 = vst [vmem:[#allocation5 + $0x618] sm:$0xff] %v7898
    %8411 = vst [vmem:[#allocation5 + $0x620] sm:$0xff] %v7899
    %8412 = vst [vmem:[#allocation5 + $0x628] sm:$0xff] %v7900
    %8413 = vst [vmem:[#allocation5 + $0x630] sm:$0xff] %v7901
    %8414 = vst [vmem:[#allocation5 + $0x638] sm:$0xff] %v7902
    %8415 = vst [vmem:[#allocation5 + $0x640] sm:$0xff] %v7903
    %8416 = vst [vmem:[#allocation5 + $0x648] sm:$0xff] %v7904
    %8417 = vst [vmem:[#allocation5 + $0x650] sm:$0xff] %v7905
    %8418 = vst [vmem:[#allocation5 + $0x658] sm:$0xff] %v7906
    %8419 = vst [vmem:[#allocation5 + $0x660] sm:$0xff] %v7907
    %8420 = vst [vmem:[#allocation5 + $0x668] sm:$0xff] %v7908
    %8421 = vst [vmem:[#allocation5 + $0x670] sm:$0xff] %v7909
    %8422 = vst [vmem:[#allocation5 + $0x678] sm:$0xff] %v7910
    %8423 = vst [vmem:[#allocation5 + $0x680] sm:$0xff] %v7911
    %8424 = vst [vmem:[#allocation5 + $0x688] sm:$0xff] %v7912
    %8425 = vst [vmem:[#allocation5 + $0x690] sm:$0xff] %v7913
    %8426 = vst [vmem:[#allocation5 + $0x698] sm:$0xff] %v7914
    %8427 = vst [vmem:[#allocation5 + $0x6a0] sm:$0xff] %v7915
    %8428 = vst [vmem:[#allocation5 + $0x6a8] sm:$0xff] %v7916
    %8429 = vst [vmem:[#allocation5 + $0x6b0] sm:$0xff] %v7917
    %8430 = vst [vmem:[#allocation5 + $0x6b8] sm:$0xff] %v7918
    %8431 = vst [vmem:[#allocation5 + $0x6c0] sm:$0xff] %v7919
    %8432 = vst [vmem:[#allocation5 + $0x6c8] sm:$0xff] %v7920
    %8433 = vst [vmem:[#allocation5 + $0x6d0] sm:$0xff] %v7921
    %8434 = vst [vmem:[#allocation5 + $0x6d8] sm:$0xff] %v7922
    %8435 = vst [vmem:[#allocation5 + $0x6e0] sm:$0xff] %v7923
    %8436 = vst [vmem:[#allocation5 + $0x6e8] sm:$0xff] %v7924
    %8437 = vst [vmem:[#allocation5 + $0x6f0] sm:$0xff] %v7925
    %8438 = vst [vmem:[#allocation5 + $0x6f8] sm:$0xff] %v7926
    %8439 = vst [vmem:[#allocation5 + $0x700] sm:$0xff] %v7927
    %8440 = vst [vmem:[#allocation5 + $0x708] sm:$0xff] %v7928
    %8441 = vst [vmem:[#allocation5 + $0x710] sm:$0xff] %v7929
    %8442 = vst [vmem:[#allocation5 + $0x718] sm:$0xff] %v7930
    %8443 = vst [vmem:[#allocation5 + $0x720] sm:$0xff] %v7931
    %8444 = vst [vmem:[#allocation5 + $0x728] sm:$0xff] %v7932
    %8445 = vst [vmem:[#allocation5 + $0x730] sm:$0xff] %v7933
    %8446 = vst [vmem:[#allocation5 + $0x738] sm:$0xff] %v7934
    %8447 = vst [vmem:[#allocation5 + $0x740] sm:$0xff] %v7935
    %8448 = vst [vmem:[#allocation5 + $0x748] sm:$0xff] %v7936
    %8449 = vst [vmem:[#allocation5 + $0x750] sm:$0xff] %v7937
    %8450 = vst [vmem:[#allocation5 + $0x758] sm:$0xff] %v7938
    %8451 = vst [vmem:[#allocation5 + $0x760] sm:$0xff] %v7939
    %8452 = vst [vmem:[#allocation5 + $0x768] sm:$0xff] %v7940
    %8453 = vst [vmem:[#allocation5 + $0x770] sm:$0xff] %v7941
    %8454 = vst [vmem:[#allocation5 + $0x778] sm:$0xff] %v7942
    %8455 = vst [vmem:[#allocation5 + $0x780] sm:$0xff] %v7943
    %8456 = vst [vmem:[#allocation5 + $0x788] sm:$0xff] %v7944
    %8457 = vst [vmem:[#allocation5 + $0x790] sm:$0xff] %v7945
    %8458 = vst [vmem:[#allocation5 + $0x798] sm:$0xff] %v7946
    %8459 = vst [vmem:[#allocation5 + $0x7a0] sm:$0xff] %v7947
    %8460 = vst [vmem:[#allocation5 + $0x7a8] sm:$0xff] %v7948
    %8461 = vst [vmem:[#allocation5 + $0x7b0] sm:$0xff] %v7949
    %8462 = vst [vmem:[#allocation5 + $0x7b8] sm:$0xff] %v7950
    %8463 = vst [vmem:[#allocation5 + $0x7c0] sm:$0xff] %v7951
    %8464 = vst [vmem:[#allocation5 + $0x7c8] sm:$0xff] %v7952
    %8465 = vst [vmem:[#allocation5 + $0x7d0] sm:$0xff] %v7953
    %8466 = vst [vmem:[#allocation5 + $0x7d8] sm:$0xff] %v7954
    %8467 = vst [vmem:[#allocation5 + $0x7e0] sm:$0xff] %v7955
    %8468 = vst [vmem:[#allocation5 + $0x7e8] sm:$0xff] %v7956
    %8469 = vst [vmem:[#allocation5 + $0x7f0] sm:$0xff] %v7957
    %8470 = vst [vmem:[#allocation5 + $0x7f8] sm:$0xff] %v7958
    %8471 = vst [vmem:[#allocation5 + $0x800] sm:$0xff] %v7959
    %8472 = vst [vmem:[#allocation5 + $0x808] sm:$0xff] %v7960
    %8473 = vst [vmem:[#allocation5 + $0x810] sm:$0xff] %v7961
    %8474 = vst [vmem:[#allocation5 + $0x818] sm:$0xff] %v7962
    %8475 = vst [vmem:[#allocation5 + $0x820] sm:$0xff] %v7963
    %8476 = vst [vmem:[#allocation5 + $0x828] sm:$0xff] %v7964
    %8477 = vst [vmem:[#allocation5 + $0x830] sm:$0xff] %v7965
    %8478 = vst [vmem:[#allocation5 + $0x838] sm:$0xff] %v7966
    %8479 = vst [vmem:[#allocation5 + $0x840] sm:$0xff] %v7967
    %8480 = vst [vmem:[#allocation5 + $0x848] sm:$0xff] %v7968
    %8481 = vst [vmem:[#allocation5 + $0x850] sm:$0xff] %v7969
    %8482 = vst [vmem:[#allocation5 + $0x858] sm:$0xff] %v7970
    %8483 = vst [vmem:[#allocation5 + $0x860] sm:$0xff] %v7971
    %8484 = vst [vmem:[#allocation5 + $0x868] sm:$0xff] %v7972
    %8485 = vst [vmem:[#allocation5 + $0x870] sm:$0xff] %v7973
    %8486 = vst [vmem:[#allocation5 + $0x878] sm:$0xff] %v7974
    %8487 = vst [vmem:[#allocation5 + $0x880] sm:$0xff] %v7975
    %8488 = vst [vmem:[#allocation5 + $0x888] sm:$0xff] %v7976
    %8489 = vst [vmem:[#allocation5 + $0x890] sm:$0xff] %v7977
    %8490 = vst [vmem:[#allocation5 + $0x898] sm:$0xff] %v7978
    %8491 = vst [vmem:[#allocation5 + $0x8a0] sm:$0xff] %v7979
    %8492 = vst [vmem:[#allocation5 + $0x8a8] sm:$0xff] %v7980
    %8493 = vst [vmem:[#allocation5 + $0x8b0] sm:$0xff] %v7981
    %8494 = vst [vmem:[#allocation5 + $0x8b8] sm:$0xff] %v7982
    %8495 = vst [vmem:[#allocation5 + $0x8c0] sm:$0xff] %v7983
    %8496 = vst [vmem:[#allocation5 + $0x8c8] sm:$0xff] %v7984
    %8497 = vst [vmem:[#allocation5 + $0x8d0] sm:$0xff] %v7985
    %8498 = vst [vmem:[#allocation5 + $0x8d8] sm:$0xff] %v7986
    %8499 = vst [vmem:[#allocation5 + $0x8e0] sm:$0xff] %v7987
    %8500 = vst [vmem:[#allocation5 + $0x8e8] sm:$0xff] %v7988
    %8501 = vst [vmem:[#allocation5 + $0x8f0] sm:$0xff] %v7989
    %8502 = vst [vmem:[#allocation5 + $0x8f8] sm:$0xff] %v7990
    %8503 = vst [vmem:[#allocation5 + $0x900] sm:$0xff] %v7991
    %8504 = vst [vmem:[#allocation5 + $0x908] sm:$0xff] %v7992
    %8505 = vst [vmem:[#allocation5 + $0x910] sm:$0xff] %v7993
    %8506 = vst [vmem:[#allocation5 + $0x918] sm:$0xff] %v7994
    %8507 = vst [vmem:[#allocation5 + $0x920] sm:$0xff] %v7995
    %8508 = vst [vmem:[#allocation5 + $0x928] sm:$0xff] %v7996
    %8509 = vst [vmem:[#allocation5 + $0x930] sm:$0xff] %v7997
    %8510 = vst [vmem:[#allocation5 + $0x938] sm:$0xff] %v7998
    %8511 = vst [vmem:[#allocation5 + $0x940] sm:$0xff] %v7999
    %8512 = vst [vmem:[#allocation5 + $0x948] sm:$0xff] %v8000
    %8513 = vst [vmem:[#allocation5 + $0x950] sm:$0xff] %v8001
    %8514 = vst [vmem:[#allocation5 + $0x958] sm:$0xff] %v8002
    %8515 = vst [vmem:[#allocation5 + $0x960] sm:$0xff] %v8003
    %8516 = vst [vmem:[#allocation5 + $0x968] sm:$0xff] %v8004
    %8517 = vst [vmem:[#allocation5 + $0x970] sm:$0xff] %v8005
    %8518 = vst [vmem:[#allocation5 + $0x978] sm:$0xff] %v8006
    %8519 = vst [vmem:[#allocation5 + $0x980] sm:$0xff] %v8007
    %8520 = vst [vmem:[#allocation5 + $0x988] sm:$0xff] %v8008
    %8521 = vst [vmem:[#allocation5 + $0x990] sm:$0xff] %v8009
    %8522 = vst [vmem:[#allocation5 + $0x998] sm:$0xff] %v8010
    %8523 = vst [vmem:[#allocation5 + $0x9a0] sm:$0xff] %v8011
    %8524 = vst [vmem:[#allocation5 + $0x9a8] sm:$0xff] %v8012
    %8525 = vst [vmem:[#allocation5 + $0x9b0] sm:$0xff] %v8013
    %8526 = vst [vmem:[#allocation5 + $0x9b8] sm:$0xff] %v8014
    %8527 = vst [vmem:[#allocation5 + $0x9c0] sm:$0xff] %v8015
    %8528 = vst [vmem:[#allocation5 + $0x9c8] sm:$0xff] %v8016
    %8529 = vst [vmem:[#allocation5 + $0x9d0] sm:$0xff] %v8017
    %8530 = vst [vmem:[#allocation5 + $0x9d8] sm:$0xff] %v8018
    %8531 = vst [vmem:[#allocation5 + $0x9e0] sm:$0xff] %v8019
    %8532 = vst [vmem:[#allocation5 + $0x9e8] sm:$0xff] %v8020
    %8533 = vst [vmem:[#allocation5 + $0x9f0] sm:$0xff] %v8021
    %8534 = vst [vmem:[#allocation5 + $0x9f8] sm:$0xff] %v8022
    %8535 = vst [vmem:[#allocation5 + $0xa00] sm:$0xff] %v8023
    %8536 = vst [vmem:[#allocation5 + $0xa08] sm:$0xff] %v8024
    %8537 = vst [vmem:[#allocation5 + $0xa10] sm:$0xff] %v8025
    %8538 = vst [vmem:[#allocation5 + $0xa18] sm:$0xff] %v8026
    %8539 = vst [vmem:[#allocation5 + $0xa20] sm:$0xff] %v8027
    %8540 = vst [vmem:[#allocation5 + $0xa28] sm:$0xff] %v8028
    %8541 = vst [vmem:[#allocation5 + $0xa30] sm:$0xff] %v8029
    %8542 = vst [vmem:[#allocation5 + $0xa38] sm:$0xff] %v8030
    %8543 = vst [vmem:[#allocation5 + $0xa40] sm:$0xff] %v8031
    %8544 = vst [vmem:[#allocation5 + $0xa48] sm:$0xff] %v8032
    %8545 = vst [vmem:[#allocation5 + $0xa50] sm:$0xff] %v8033
    %8546 = vst [vmem:[#allocation5 + $0xa58] sm:$0xff] %v8034
    %8547 = vst [vmem:[#allocation5 + $0xa60] sm:$0xff] %v8035
    %8548 = vst [vmem:[#allocation5 + $0xa68] sm:$0xff] %v8036
    %8549 = vst [vmem:[#allocation5 + $0xa70] sm:$0xff] %v8037
    %8550 = vst [vmem:[#allocation5 + $0xa78] sm:$0xff] %v8038
    %8551 = vst [vmem:[#allocation5 + $0xa80] sm:$0xff] %v8039
    %8552 = vst [vmem:[#allocation5 + $0xa88] sm:$0xff] %v8040
    %8553 = vst [vmem:[#allocation5 + $0xa90] sm:$0xff] %v8041
    %8554 = vst [vmem:[#allocation5 + $0xa98] sm:$0xff] %v8042
    %8555 = vst [vmem:[#allocation5 + $0xaa0] sm:$0xff] %v8043
    %8556 = vst [vmem:[#allocation5 + $0xaa8] sm:$0xff] %v8044
    %8557 = vst [vmem:[#allocation5 + $0xab0] sm:$0xff] %v8045
    %8558 = vst [vmem:[#allocation5 + $0xab8] sm:$0xff] %v8046
    %8559 = vst [vmem:[#allocation5 + $0xac0] sm:$0xff] %v8047
    %8560 = vst [vmem:[#allocation5 + $0xac8] sm:$0xff] %v8048
    %8561 = vst [vmem:[#allocation5 + $0xad0] sm:$0xff] %v8049
    %8562 = vst [vmem:[#allocation5 + $0xad8] sm:$0xff] %v8050
    %8563 = vst [vmem:[#allocation5 + $0xae0] sm:$0xff] %v8051
    %8564 = vst [vmem:[#allocation5 + $0xae8] sm:$0xff] %v8052
    %8565 = vst [vmem:[#allocation5 + $0xaf0] sm:$0xff] %v8053
    %8566 = vst [vmem:[#allocation5 + $0xaf8] sm:$0xff] %v8054
    %8567 = vst [vmem:[#allocation5 + $0xb00] sm:$0xff] %v8055
    %8568 = vst [vmem:[#allocation5 + $0xb08] sm:$0xff] %v8056
    %8569 = vst [vmem:[#allocation5 + $0xb10] sm:$0xff] %v8057
    %8570 = vst [vmem:[#allocation5 + $0xb18] sm:$0xff] %v8058
    %8571 = vst [vmem:[#allocation5 + $0xb20] sm:$0xff] %v8059
    %8572 = vst [vmem:[#allocation5 + $0xb28] sm:$0xff] %v8060
    %8573 = vst [vmem:[#allocation5 + $0xb30] sm:$0xff] %v8061
    %8574 = vst [vmem:[#allocation5 + $0xb38] sm:$0xff] %v8062
    %8575 = vst [vmem:[#allocation5 + $0xb40] sm:$0xff] %v8063
    %8576 = vst [vmem:[#allocation5 + $0xb48] sm:$0xff] %v8064
    %8577 = vst [vmem:[#allocation5 + $0xb50] sm:$0xff] %v8065
    %8578 = vst [vmem:[#allocation5 + $0xb58] sm:$0xff] %v8066
    %8579 = vst [vmem:[#allocation5 + $0xb60] sm:$0xff] %v8067
    %8580 = vst [vmem:[#allocation5 + $0xb68] sm:$0xff] %v8068
    %8581 = vst [vmem:[#allocation5 + $0xb70] sm:$0xff] %v8069
    %8582 = vst [vmem:[#allocation5 + $0xb78] sm:$0xff] %v8070
    %8583 = vst [vmem:[#allocation5 + $0xb80] sm:$0xff] %v8071
    %8584 = vst [vmem:[#allocation5 + $0xb88] sm:$0xff] %v8072
    %8585 = vst [vmem:[#allocation5 + $0xb90] sm:$0xff] %v8073
    %8586 = vst [vmem:[#allocation5 + $0xb98] sm:$0xff] %v8074
    %8587 = vst [vmem:[#allocation5 + $0xba0] sm:$0xff] %v8075
    %8588 = vst [vmem:[#allocation5 + $0xba8] sm:$0xff] %v8076
    %8589 = vst [vmem:[#allocation5 + $0xbb0] sm:$0xff] %v8077
    %8590 = vst [vmem:[#allocation5 + $0xbb8] sm:$0xff] %v8078
    %8591 = vst [vmem:[#allocation5 + $0xbc0] sm:$0xff] %v8079
    %8592 = vst [vmem:[#allocation5 + $0xbc8] sm:$0xff] %v8080
    %8593 = vst [vmem:[#allocation5 + $0xbd0] sm:$0xff] %v8081
    %8594 = vst [vmem:[#allocation5 + $0xbd8] sm:$0xff] %v8082
    %8595 = vst [vmem:[#allocation5 + $0xbe0] sm:$0xff] %v8083
    %8596 = vst [vmem:[#allocation5 + $0xbe8] sm:$0xff] %v8084
    %8597 = vst [vmem:[#allocation5 + $0xbf0] sm:$0xff] %v8085
    %8598 = vst [vmem:[#allocation5 + $0xbf8] sm:$0xff] %v8086
    %8599 = vst [vmem:[#allocation5 + $0xc00] sm:$0xff] %v8087
    %8600 = vst [vmem:[#allocation5 + $0xc08] sm:$0xff] %v8088
    %8601 = vst [vmem:[#allocation5 + $0xc10] sm:$0xff] %v8089
    %8602 = vst [vmem:[#allocation5 + $0xc18] sm:$0xff] %v8090
    %8603 = vst [vmem:[#allocation5 + $0xc20] sm:$0xff] %v8091
    %8604 = vst [vmem:[#allocation5 + $0xc28] sm:$0xff] %v8092
    %8605 = vst [vmem:[#allocation5 + $0xc30] sm:$0xff] %v8093
    %8606 = vst [vmem:[#allocation5 + $0xc38] sm:$0xff] %v8094
    %8607 = vst [vmem:[#allocation5 + $0xc40] sm:$0xff] %v8095
    %8608 = vst [vmem:[#allocation5 + $0xc48] sm:$0xff] %v8096
    %8609 = vst [vmem:[#allocation5 + $0xc50] sm:$0xff] %v8097
    %8610 = vst [vmem:[#allocation5 + $0xc58] sm:$0xff] %v8098
    %8611 = vst [vmem:[#allocation5 + $0xc60] sm:$0xff] %v8099
    %8612 = vst [vmem:[#allocation5 + $0xc68] sm:$0xff] %v8100
    %8613 = vst [vmem:[#allocation5 + $0xc70] sm:$0xff] %v8101
    %8614 = vst [vmem:[#allocation5 + $0xc78] sm:$0xff] %v8102
    %8615 = vst [vmem:[#allocation5 + $0xc80] sm:$0xff] %v8103
    %8616 = vst [vmem:[#allocation5 + $0xc88] sm:$0xff] %v8104
    %8617 = vst [vmem:[#allocation5 + $0xc90] sm:$0xff] %v8105
    %8618 = vst [vmem:[#allocation5 + $0xc98] sm:$0xff] %v8106
    %8619 = vst [vmem:[#allocation5 + $0xca0] sm:$0xff] %v8107
    %8620 = vst [vmem:[#allocation5 + $0xca8] sm:$0xff] %v8108
    %8621 = vst [vmem:[#allocation5 + $0xcb0] sm:$0xff] %v8109
    %8622 = vst [vmem:[#allocation5 + $0xcb8] sm:$0xff] %v8110
    %8623 = vst [vmem:[#allocation5 + $0xcc0] sm:$0xff] %v8111
    %8624 = vst [vmem:[#allocation5 + $0xcc8] sm:$0xff] %v8112
    %8625 = vst [vmem:[#allocation5 + $0xcd0] sm:$0xff] %v8113
    %8626 = vst [vmem:[#allocation5 + $0xcd8] sm:$0xff] %v8114
    %8627 = vst [vmem:[#allocation5 + $0xce0] sm:$0xff] %v8115
    %8628 = vst [vmem:[#allocation5 + $0xce8] sm:$0xff] %v8116
    %8629 = vst [vmem:[#allocation5 + $0xcf0] sm:$0xff] %v8117
    %8630 = vst [vmem:[#allocation5 + $0xcf8] sm:$0xff] %v8118
    %8631 = vst [vmem:[#allocation5 + $0xd00] sm:$0xff] %v8119
    %8632 = vst [vmem:[#allocation5 + $0xd08] sm:$0xff] %v8120
    %8633 = vst [vmem:[#allocation5 + $0xd10] sm:$0xff] %v8121
    %8634 = vst [vmem:[#allocation5 + $0xd18] sm:$0xff] %v8122
    %8635 = vst [vmem:[#allocation5 + $0xd20] sm:$0xff] %v8123
    %8636 = vst [vmem:[#allocation5 + $0xd28] sm:$0xff] %v8124
    %8637 = vst [vmem:[#allocation5 + $0xd30] sm:$0xff] %v8125
    %8638 = vst [vmem:[#allocation5 + $0xd38] sm:$0xff] %v8126
    %8639 = vst [vmem:[#allocation5 + $0xd40] sm:$0xff] %v8127
    %8640 = vst [vmem:[#allocation5 + $0xd48] sm:$0xff] %v8128
    %8641 = vst [vmem:[#allocation5 + $0xd50] sm:$0xff] %v8129
    %8642 = vst [vmem:[#allocation5 + $0xd58] sm:$0xff] %v8130
    %8643 = vst [vmem:[#allocation5 + $0xd60] sm:$0xff] %v8131
    %8644 = vst [vmem:[#allocation5 + $0xd68] sm:$0xff] %v8132
    %8645 = vst [vmem:[#allocation5 + $0xd70] sm:$0xff] %v8133
    %8646 = vst [vmem:[#allocation5 + $0xd78] sm:$0xff] %v8134
    %8647 = vst [vmem:[#allocation5 + $0xd80] sm:$0xff] %v8135
    %8648 = vst [vmem:[#allocation5 + $0xd88] sm:$0xff] %v8136
    %8649 = vst [vmem:[#allocation5 + $0xd90] sm:$0xff] %v8137
    %8650 = vst [vmem:[#allocation5 + $0xd98] sm:$0xff] %v8138
    %8651 = vst [vmem:[#allocation5 + $0xda0] sm:$0xff] %v8139
    %8652 = vst [vmem:[#allocation5 + $0xda8] sm:$0xff] %v8140
    %8653 = vst [vmem:[#allocation5 + $0xdb0] sm:$0xff] %v8141
    %8654 = vst [vmem:[#allocation5 + $0xdb8] sm:$0xff] %v8142
    %8655 = vst [vmem:[#allocation5 + $0xdc0] sm:$0xff] %v8143
    %8656 = vst [vmem:[#allocation5 + $0xdc8] sm:$0xff] %v8144
    %8657 = vst [vmem:[#allocation5 + $0xdd0] sm:$0xff] %v8145
    %8658 = vst [vmem:[#allocation5 + $0xdd8] sm:$0xff] %v8146
    %8659 = vst [vmem:[#allocation5 + $0xde0] sm:$0xff] %v8147
    %8660 = vst [vmem:[#allocation5 + $0xde8] sm:$0xff] %v8148
    %8661 = vst [vmem:[#allocation5 + $0xdf0] sm:$0xff] %v8149
    %8662 = vst [vmem:[#allocation5 + $0xdf8] sm:$0xff] %v8150
    %8663 = vst [vmem:[#allocation5 + $0xe00] sm:$0xff] %v8151
    %8664 = vst [vmem:[#allocation5 + $0xe08] sm:$0xff] %v8152
    %8665 = vst [vmem:[#allocation5 + $0xe10] sm:$0xff] %v8153
    %8666 = vst [vmem:[#allocation5 + $0xe18] sm:$0xff] %v8154
    %8667 = vst [vmem:[#allocation5 + $0xe20] sm:$0xff] %v8155
    %8668 = vst [vmem:[#allocation5 + $0xe28] sm:$0xff] %v8156
    %8669 = vst [vmem:[#allocation5 + $0xe30] sm:$0xff] %v8157
    %8670 = vst [vmem:[#allocation5 + $0xe38] sm:$0xff] %v8158
    %8671 = vst [vmem:[#allocation5 + $0xe40] sm:$0xff] %v8159
    %8672 = vst [vmem:[#allocation5 + $0xe48] sm:$0xff] %v8160
    %8673 = vst [vmem:[#allocation5 + $0xe50] sm:$0xff] %v8161
    %8674 = vst [vmem:[#allocation5 + $0xe58] sm:$0xff] %v8162
    %8675 = vst [vmem:[#allocation5 + $0xe60] sm:$0xff] %v8163
    %8676 = vst [vmem:[#allocation5 + $0xe68] sm:$0xff] %v8164
    %8677 = vst [vmem:[#allocation5 + $0xe70] sm:$0xff] %v8165
    %8678 = vst [vmem:[#allocation5 + $0xe78] sm:$0xff] %v8166
    %8679 = vst [vmem:[#allocation5 + $0xe80] sm:$0xff] %v8167
    %8680 = vst [vmem:[#allocation5 + $0xe88] sm:$0xff] %v8168
    %8681 = vst [vmem:[#allocation5 + $0xe90] sm:$0xff] %v8169
    %8682 = vst [vmem:[#allocation5 + $0xe98] sm:$0xff] %v8170
    %8683 = vst [vmem:[#allocation5 + $0xea0] sm:$0xff] %v8171
    %8684 = vst [vmem:[#allocation5 + $0xea8] sm:$0xff] %v8172
    %8685 = vst [vmem:[#allocation5 + $0xeb0] sm:$0xff] %v8173
    %8686 = vst [vmem:[#allocation5 + $0xeb8] sm:$0xff] %v8174
    %8687 = vst [vmem:[#allocation5 + $0xec0] sm:$0xff] %v8175
    %8688 = vst [vmem:[#allocation5 + $0xec8] sm:$0xff] %v8176
    %8689 = vst [vmem:[#allocation5 + $0xed0] sm:$0xff] %v8177
    %8690 = vst [vmem:[#allocation5 + $0xed8] sm:$0xff] %v8178
    %8691 = vst [vmem:[#allocation5 + $0xee0] sm:$0xff] %v8179
    %8692 = vst [vmem:[#allocation5 + $0xee8] sm:$0xff] %v8180
    %8693 = vst [vmem:[#allocation5 + $0xef0] sm:$0xff] %v8181
    %8694 = vst [vmem:[#allocation5 + $0xef8] sm:$0xff] %v8182
    %8695 = vst [vmem:[#allocation5 + $0xf00] sm:$0xff] %v8183
    %8696 = vst [vmem:[#allocation5 + $0xf08] sm:$0xff] %v8184
    %8697 = vst [vmem:[#allocation5 + $0xf10] sm:$0xff] %v8185
    %8698 = vst [vmem:[#allocation5 + $0xf18] sm:$0xff] %v8186
    %8699 = vst [vmem:[#allocation5 + $0xf20] sm:$0xff] %v8187
    %8700 = vst [vmem:[#allocation5 + $0xf28] sm:$0xff] %v8188
    %8701 = vst [vmem:[#allocation5 + $0xf30] sm:$0xff] %v8189
    %8702 = vst [vmem:[#allocation5 + $0xf38] sm:$0xff] %v8190
    %8703 = vst [vmem:[#allocation5 + $0xf40] sm:$0xff] %v8191
    %8704 = vst [vmem:[#allocation5 + $0xf48] sm:$0xff] %v8192
    %8705 = vst [vmem:[#allocation5 + $0xf50] sm:$0xff] %v8193
    %8706 = vst [vmem:[#allocation5 + $0xf58] sm:$0xff] %v8194
    %8707 = vst [vmem:[#allocation5 + $0xf60] sm:$0xff] %v8195
    %8708 = vst [vmem:[#allocation5 + $0xf68] sm:$0xff] %v8196
    %8709 = vst [vmem:[#allocation5 + $0xf70] sm:$0xff] %v8197
    %8710 = vst [vmem:[#allocation5 + $0xf78] sm:$0xff] %v8198
    %8711 = vst [vmem:[#allocation5 + $0xf80] sm:$0xff] %v8199
    %8712 = vst [vmem:[#allocation5 + $0xf88] sm:$0xff] %v8200
    %8713 = vst [vmem:[#allocation5 + $0xf90] sm:$0xff] %v8201
    %8714 = vst [vmem:[#allocation5 + $0xf98] sm:$0xff] %v8202
    %8715 = vst [vmem:[#allocation5 + $0xfa0] sm:$0xff] %v8203
    %8716 = vst [vmem:[#allocation5 + $0xfa8] sm:$0xff] %v8204
    %8717 = vst [vmem:[#allocation5 + $0xfb0] sm:$0xff] %v8205
    %8718 = vst [vmem:[#allocation5 + $0xfb8] sm:$0xff] %v8206
    %8719 = vst [vmem:[#allocation5 + $0xfc0] sm:$0xff] %v8207
    %8720 = vst [vmem:[#allocation5 + $0xfc8] sm:$0xff] %v8208
    %8721 = vst [vmem:[#allocation5 + $0xfd0] sm:$0xff] %v8209
    %8722 = vst [vmem:[#allocation5 + $0xfd8] sm:$0xff] %v8210
    %8723 = vst [vmem:[#allocation5 + $0xfe0] sm:$0xff] %v8211
    %8724 = vst [vmem:[#allocation5 + $0xfe8] sm:$0xff] %v8212
    %8725 = vst [vmem:[#allocation5 + $0xff0] sm:$0xff] %v8213
    %8726 = vst [vmem:[#allocation5 + $0xff8] sm:$0xff] %v8214
    // Predicated region
    $region10: #{tpu_custom_call.1} parent=1 // pred_check
      _
    $region11: #{tpu_custom_call.1} parent=1 // pred_check_branch
      %8728 = sbr.rel (0) target = $region13
    $region12: #{tpu_custom_call.1} parent=1 // pred_region
      %s8730 = ssub.s32 65536, 65536
      %8731 = vsyncadd [#allocation4], %s8730
      %s8732 = sshll.u32 [#allocation5], 4
      %s8733 = int_to_ptr.vmem [resolvable:$true] %s8732
      %8738 = dma.vmem_to_hbm [thread:$0]  %s8733, 65536, %s1, [#allocation4], 1024, 1024, 64
    $region13: #{tpu_custom_call.1} parent=1 // pred_fallthru
      _
    // Predicated region
    $region14: #{tpu_custom_call.1} parent=1 // pred_check
      _
    $region15: #{tpu_custom_call.1} parent=1 // pred_check_branch
      %8740 = sbr.rel (0) target = $region17
    $region16: #{tpu_custom_call.1} parent=1 // pred_region
      %8741 = dma.done [#allocation4], 65536
    $region17: #{tpu_custom_call.1} parent=1 // pred_fallthru
      _
    %8742 = vsyncpa [#allocation3], 1
    %8743 = vsyncpa [#allocation4], 1

</llo_original>
